<compile_context>
chip_gen: v6e
topology: v6e:2x2x1
jax: 0.10.0
libtpu: 0.0.40
codegen_flags: <defaults>
</compile_context>

<pallas_src>
import functools
import math

import jax
import jax.numpy as jnp
from jax.experimental import pallas as pl
from jax.experimental.pallas import tpu as pltpu

MXU_DTYPE = jnp.bfloat16   # MXU operand dtype; accumulation is always f32.


# ----------------------------------------------------------------------------
# In-kernel building blocks
# ----------------------------------------------------------------------------
def _layer_norm(r, g, b):
    mean = jnp.mean(r, axis=-1, keepdims=True)
    var = jnp.mean((r - mean) ** 2, axis=-1, keepdims=True)
    return (r - mean) * jax.lax.rsqrt(var + 1e-5) * g + b


def _infini_attention(x_q, x_kv, keep, gate, wq_ref, wkv_ref, wo_ref, bo_ref,
                      attn_sc, mem_ref, z_ref, *, Hq, Hkv, D, causal, sm_scale,
                      cdt):
    """Returns x_q + MHA(x_q, x_kv); writes compressive memory/z (per kv-head)."""
    Sq, Skv = x_q.shape[0], x_kv.shape[0]

    # Fused projections: Q in one GEMM, [K|V] in one GEMM (bf16 MXU, f32 acc).
    q_all = jnp.dot(x_q.astype(cdt), wq_ref[...],
                    preferred_element_type=jnp.float32)                # (Sq, Hq*D)
    kv_all = jnp.dot(x_kv.astype(cdt), wkv_ref[...],
                     preferred_element_type=jnp.float32)               # (Skv, 2*Hkv*D)

    # Mask synthesized in-kernel from the per-key keep vector (no (S,S) DMA).
    mask = jnp.broadcast_to(keep > 0.0, (Sq, Skv))
    if causal:
        row = jax.lax.broadcasted_iota(jnp.int32, (Sq, Skv), 0)
        col = jax.lax.broadcasted_iota(jnp.int32, (Sq, Skv), 1)
        mask = jnp.logical_and(mask, col <= row)

    group = Hq // Hkv
    mem_parts, z_parts = [], []
    for kvh in range(Hkv):
        # K/V for this kv-head loaded once, shared by its whole GQA group.
        k = kv_all[:, kvh * D:(kvh + 1) * D]                           # (Skv, D)
        v = kv_all[:, (Hkv + kvh) * D:(Hkv + kvh + 1) * D]             # (Skv, D)
        k_c = k.astype(cdt)
        v_c = v.astype(cdt)

        # Compressive memory, sigma = ELU + 1 (f32 elementwise).  With zero
        # initial memory the linear and delta rules coincide:
        #   M' = sigma(K)^T V ,  z' = sum_s sigma(K).
        sk = jnp.where(k > 0.0, k + 1.0, jnp.exp(k))
        mem_parts.append(jax.lax.dot_general(
            sk.astype(cdt), v_c, (((0,), (0,)), ((), ())),
            preferred_element_type=jnp.float32))                       # (D, D)
        z_parts.append(jnp.sum(sk, axis=0, keepdims=True))             # (1, D)

        for g in range(group):
            h = kvh * group + g
            q = (q_all[:, h * D:(h + 1) * D] * sm_scale).astype(cdt)
            s = jax.lax.dot_general(q, k_c, (((1,), (1,)), ((), ())),
                                    preferred_element_type=jnp.float32)
            s = jnp.where(mask, s, -1e30)
            s = s - jnp.max(s, axis=-1, keepdims=True)
            p = jnp.exp(s)
            p = p * pl.reciprocal(jnp.sum(p, axis=-1, keepdims=True), approx=True)
            attn_sc[:, h * D:(h + 1) * D] = jnp.dot(
                p.astype(cdt), v_c, preferred_element_type=jnp.float32)

    # One lane-dense store per output (per kv-head; wrapper expands to q-heads).
    mem_ref[0] = jnp.concatenate(mem_parts, axis=-1)                   # (D, Hkv*D)
    z_ref[0] = jnp.concatenate(z_parts, axis=-1)                       # (1, Hkv*D)

    # A_mem == 0 for zero initial memory => out = (1 - sigmoid(beta)) * A_dot,
    # applied as one broadcast multiply on the whole head slab.
    attn = attn_sc[...] * gate                                         # (Sq, Hq*D)
    proj = jnp.dot(attn.astype(cdt), wo_ref[...],
                   preferred_element_type=jnp.float32)
    if bo_ref is not None:
        proj = proj + bo_ref[...]
    return x_q + proj


def _pffn(x, w1_ref, b1_ref, w2_ref, b2_ref, *, cdt):
    h = jnp.dot(x.astype(cdt), w1_ref[...], preferred_element_type=jnp.float32)
    if b1_ref is not None:
        h = h + b1_ref[...]
    h = jnp.maximum(h, 0.0)
    f = jnp.dot(h.astype(cdt), w2_ref[...], preferred_element_type=jnp.float32)
    if b2_ref is not None:
        f = f + b2_ref[...]
    return x + f


# ----------------------------------------------------------------------------
# Fused per-layer kernels
# ----------------------------------------------------------------------------
def _make_encoder_layer_kernel(Hq, Hkv, D, attn_bias, ffn_bias, sm_scale, cdt):
    def kernel(*refs):
        it = iter(refs)
        keep_ref, gate_ref, x_ref = next(it), next(it), next(it)
        wq, wkv, wo = next(it), next(it), next(it)
        bo = next(it) if attn_bias else None
        ln1_g, ln1_b = next(it), next(it)
        w1 = next(it)
        b1 = next(it) if ffn_bias else None
        w2 = next(it)
        b2 = next(it) if ffn_bias else None
        ln2_g, ln2_b = next(it), next(it)
        y_ref, mem_ref, z_ref = next(it), next(it), next(it)
        attn_sc = next(it)

        x = x_ref[0]                                                   # (S, E)
        r = _infini_attention(x, x, keep_ref[0], gate_ref[...], wq, wkv, wo, bo,
                              attn_sc, mem_ref, z_ref, Hq=Hq, Hkv=Hkv, D=D,
                              causal=False, sm_scale=sm_scale, cdt=cdt)
        x1 = _layer_norm(r, ln1_g[...], ln1_b[...])
        r = _pffn(x1, w1, b1, w2, b2, cdt=cdt)
        y_ref[0] = _layer_norm(r, ln2_g[...], ln2_b[...])
    return kernel


def _make_decoder_layer_kernel(Hq, Hkv, D, attn_bias, ffn_bias, sm_scale, cdt):
    def kernel(*refs):
        it = iter(refs)
        tkeep, skeep = next(it), next(it)
        gate1, gate2 = next(it), next(it)
        x_ref, enc_ref = next(it), next(it)
        wq1, wkv1, wo1 = next(it), next(it), next(it)
        bo1 = next(it) if attn_bias else None
        ln1_g, ln1_b = next(it), next(it)
        wq2, wkv2, wo2 = next(it), next(it), next(it)
        bo2 = next(it) if attn_bias else None
        ln2_g, ln2_b = next(it), next(it)
        w1 = next(it)
        b1 = next(it) if ffn_bias else None
        w2 = next(it)
        b2 = next(it) if ffn_bias else None
        ln3_g, ln3_b = next(it), next(it)
        y_ref, mem1_ref, z1_ref, mem2_ref, z2_ref = (next(it), next(it), next(it),
                                                     next(it), next(it))
        attn_sc = next(it)

        x = x_ref[0]                                                   # (St, E)
        enc = enc_ref[0]                                               # (Ss, E)
        r = _infini_attention(x, x, tkeep[0], gate1[...], wq1, wkv1, wo1, bo1,
                              attn_sc, mem1_ref, z1_ref, Hq=Hq, Hkv=Hkv, D=D,
                              causal=True, sm_scale=sm_scale, cdt=cdt)
        x1 = _layer_norm(r, ln1_g[...], ln1_b[...])
        r = _infini_attention(x1, enc, skeep[0], gate2[...], wq2, wkv2, wo2, bo2,
                              attn_sc, mem2_ref, z2_ref, Hq=Hq, Hkv=Hkv, D=D,
                              causal=False, sm_scale=sm_scale, cdt=cdt)
        x2 = _layer_norm(r, ln2_g[...], ln2_b[...])
        r = _pffn(x2, w1, b1, w2, b2, cdt=cdt)
        y_ref[0] = _layer_norm(r, ln3_g[...], ln3_b[...])
    return kernel


# ----------------------------------------------------------------------------
# BlockSpec helpers and Pallas wrappers
# ----------------------------------------------------------------------------
def _rep_spec(shape):
    zeros = (0,) * len(shape)
    return pl.BlockSpec(shape, lambda b: zeros)


def _batch_spec(shape):
    tail = (0,) * (len(shape) - 1)
    return pl.BlockSpec(shape, lambda b: (b,) + tail)


def _expand_ctx(mem, z, Hq, Hkv, D):
    """(B, D, Hkv*D), (B, 1, Hkv*D) -> per-q-head (B, Hq, D, D), (B, Hq, 1, D)."""
    B = mem.shape[0]
    group = Hq // Hkv
    m = mem.reshape(B, D, Hkv, D).transpose(0, 2, 1, 3)                # (B, Hkv, D, D)
    zz = z.reshape(B, 1, Hkv, D).transpose(0, 2, 1, 3)                 # (B, Hkv, 1, D)
    return jnp.repeat(m, group, axis=1), jnp.repeat(zz, group, axis=1)


def encoder_layer(x, src_keep, p, cfg):
    B, S, E = x.shape
    Hq, Hkv, D = cfg["num_query_heads"], cfg["num_key_value_heads"], cfg["attn_head_dim"]
    a, f = p["attn"], p["ffn"]
    F = f["w1"].shape[1]
    gate = jnp.repeat(1.0 - jax.nn.sigmoid(a["beta"]), D, axis=1)      # (1, Hq*D)

    inputs = [src_keep, gate, x, a["wq"], a["wkv"], a["wo"]]
    in_specs = [_batch_spec((1, 1, S)), _rep_spec((1, Hq * D)), _batch_spec((1, S, E)),
                _rep_spec((E, Hq * D)), _rep_spec((E, 2 * Hkv * D)),
                _rep_spec((Hq * D, E))]
    if cfg["use_attn_linear_bias"]:
        inputs.append(a["bo"]); in_specs.append(_rep_spec((1, E)))
    inputs += [p["ln1_g"], p["ln1_b"], f["w1"]]
    in_specs += [_rep_spec((1, E)), _rep_spec((1, E)), _rep_spec((E, F))]
    if cfg["use_pffn_bias"]:
        inputs.append(f["b1"]); in_specs.append(_rep_spec((1, F)))
    inputs.append(f["w2"]); in_specs.append(_rep_spec((F, E)))
    if cfg["use_pffn_bias"]:
        inputs.append(f["b2"]); in_specs.append(_rep_spec((1, E)))
    inputs += [p["ln2_g"], p["ln2_b"]]
    in_specs += [_rep_spec((1, E)), _rep_spec((1, E))]

    kern = _make_encoder_layer_kernel(
        Hq, Hkv, D, cfg["use_attn_linear_bias"], cfg["use_pffn_bias"],
        1.0 / math.sqrt(D), a["wq"].dtype)

    y, mem, z = pl.pallas_call(
        kern,
        grid=(B,),
        in_specs=in_specs,
        out_specs=[_batch_spec((1, S, E)),
                   _batch_spec((1, D, Hkv * D)),
                   _batch_spec((1, 1, Hkv * D))],
        out_shape=(jax.ShapeDtypeStruct((B, S, E), jnp.float32),
                   jax.ShapeDtypeStruct((B, D, Hkv * D), jnp.float32),
                   jax.ShapeDtypeStruct((B, 1, Hkv * D), jnp.float32)),
        scratch_shapes=[pltpu.VMEM((S, Hq * D), jnp.float32)],
        compiler_params=pltpu.CompilerParams(dimension_semantics=("parallel",)),
    )(*inputs)
    return y, _expand_ctx(mem, z, Hq, Hkv, D)


def decoder_layer(x, enc, tgt_keep, src_keep, p, cfg):
    B, St, E = x.shape
    Ss = enc.shape[1]
    Hq, Hkv, D = cfg["num_query_heads"], cfg["num_key_value_heads"], cfg["attn_head_dim"]
    a1, a2, f = p["attn1"], p["attn2"], p["ffn"]
    F = f["w1"].shape[1]
    gate1 = jnp.repeat(1.0 - jax.nn.sigmoid(a1["beta"]), D, axis=1)
    gate2 = jnp.repeat(1.0 - jax.nn.sigmoid(a2["beta"]), D, axis=1)

    inputs = [tgt_keep, src_keep, gate1, gate2, x, enc]
    in_specs = [_batch_spec((1, 1, St)), _batch_spec((1, 1, Ss)),
                _rep_spec((1, Hq * D)), _rep_spec((1, Hq * D)),
                _batch_spec((1, St, E)), _batch_spec((1, Ss, E))]

    def add_attn(ap):
        inputs.extend([ap["wq"], ap["wkv"], ap["wo"]])
        in_specs.extend([_rep_spec((E, Hq * D)), _rep_spec((E, 2 * Hkv * D)),
                         _rep_spec((Hq * D, E))])
        if cfg["use_attn_linear_bias"]:
            inputs.append(ap["bo"]); in_specs.append(_rep_spec((1, E)))

    add_attn(a1)
    inputs.extend([p["ln1_g"], p["ln1_b"]]); in_specs.extend([_rep_spec((1, E))] * 2)
    add_attn(a2)
    inputs.extend([p["ln2_g"], p["ln2_b"]]); in_specs.extend([_rep_spec((1, E))] * 2)
    inputs.append(f["w1"]); in_specs.append(_rep_spec((E, F)))
    if cfg["use_pffn_bias"]:
        inputs.append(f["b1"]); in_specs.append(_rep_spec((1, F)))
    inputs.append(f["w2"]); in_specs.append(_rep_spec((F, E)))
    if cfg["use_pffn_bias"]:
        inputs.append(f["b2"]); in_specs.append(_rep_spec((1, E)))
    inputs.extend([p["ln3_g"], p["ln3_b"]]); in_specs.extend([_rep_spec((1, E))] * 2)

    kern = _make_decoder_layer_kernel(
        Hq, Hkv, D, cfg["use_attn_linear_bias"], cfg["use_pffn_bias"],
        1.0 / math.sqrt(D), a1["wq"].dtype)

    y, mem1, z1, mem2, z2 = pl.pallas_call(
        kern,
        grid=(B,),
        in_specs=in_specs,
        out_specs=[_batch_spec((1, St, E)),
                   _batch_spec((1, D, Hkv * D)), _batch_spec((1, 1, Hkv * D)),
                   _batch_spec((1, D, Hkv * D)), _batch_spec((1, 1, Hkv * D))],
        out_shape=(jax.ShapeDtypeStruct((B, St, E), jnp.float32),
                   jax.ShapeDtypeStruct((B, D, Hkv * D), jnp.float32),
                   jax.ShapeDtypeStruct((B, 1, Hkv * D), jnp.float32),
                   jax.ShapeDtypeStruct((B, D, Hkv * D), jnp.float32),
                   jax.ShapeDtypeStruct((B, 1, Hkv * D), jnp.float32)),
        scratch_shapes=[pltpu.VMEM((St, Hq * D), jnp.float32)],
        compiler_params=pltpu.CompilerParams(dimension_semantics=("parallel",)),
    )(*inputs)
    ctx1 = _expand_ctx(mem1, z1, Hq, Hkv, D)
    ctx2 = _expand_ctx(mem2, z2, Hq, Hkv, D)
    return y, (ctx1, ctx2)


# ----------------------------------------------------------------------------
# Model glue (plain JAX only for embedding gather / PE / orchestration)
# ----------------------------------------------------------------------------
def sinusoidal_pe(max_len, dim):
    pos = jnp.arange(max_len, dtype=jnp.float32)[:, None]
    i = jnp.arange(0, dim, 2, dtype=jnp.float32)
    div = jnp.exp(-jnp.log(10000.0) * i / dim)
    pe = jnp.zeros((max_len, dim), jnp.float32)
    pe = pe.at[:, 0::2].set(jnp.sin(pos * div))
    pe = pe.at[:, 1::2].set(jnp.cos(pos * div))
    return pe


def transformer_forward(params, src_ids, tgt_ids, cfg):
    E = cfg["embedding_dim"]
    scale = math.sqrt(E)
    B, Ss = src_ids.shape
    _, St = tgt_ids.shape

    # Per-key keep vectors; the causal part is synthesized inside the kernel.
    src_keep = (src_ids != cfg["src_pad_idx"]).astype(jnp.float32)[:, None, :]
    tgt_keep = (tgt_ids != cfg["tgt_pad_idx"]).astype(jnp.float32)[:, None, :]

    pe = params["pe"]
    # TODO(synk): embedding gather + positional encoding stay in plain JAX.
    src = params["src_emb"][src_ids] * scale + pe[:Ss][None]
    tgt = params["tgt_emb"][tgt_ids] * scale + pe[:St][None]

    enc_ctx = []
    for p in params["enc"]:
        src, ctx = encoder_layer(src, src_keep, p, cfg)
        enc_ctx.append(ctx)

    dec_ctx = []
    for p in params["dec"]:
        tgt, ctx = decoder_layer(tgt, src, tgt_keep, src_keep, p, cfg)
        dec_ctx.append(ctx)

    return tgt, enc_ctx, dec_ctx


# ----------------------------------------------------------------------------
# Deterministic parameter init (GEMM weights stored in bf16, rest f32)
# ----------------------------------------------------------------------------
def init_params(key, cfg):
    E, D = cfg["embedding_dim"], cfg["attn_head_dim"]
    Hq, Hkv, F = cfg["num_query_heads"], cfg["num_key_value_heads"], cfg["ffn_dim"]
    keys = iter(jax.random.split(key, 512))

    def nrm(shape, std=0.02):
        return jax.random.normal(next(keys), shape, jnp.float32) * std

    def attn_params():
        wk = nrm((E, Hkv * D))
        wv = nrm((E, Hkv * D))
        return {
            "wq": nrm((E, Hq * D)).astype(MXU_DTYPE),
            "wkv": jnp.concatenate([wk, wv], axis=1).astype(MXU_DTYPE),
            "wo": nrm((Hq * D, E)).astype(MXU_DTYPE),
            "bo": jnp.zeros((1, E), jnp.float32),
            "beta": jnp.zeros((1, Hq), jnp.float32),
        }

    def ffn_params():
        return {"w1": nrm((E, F)).astype(MXU_DTYPE),
                "b1": jnp.zeros((1, F), jnp.float32),
                "w2": nrm((F, E)).astype(MXU_DTYPE),
                "b2": jnp.zeros((1, E), jnp.float32)}

    def ln():
        return jnp.ones((1, E), jnp.float32), jnp.zeros((1, E), jnp.float32)

    def enc_layer():
        g1, b1 = ln(); g2, b2 = ln()
        return {"attn": attn_params(), "ffn": ffn_params(),
                "ln1_g": g1, "ln1_b": b1, "ln2_g": g2, "ln2_b": b2}

    def dec_layer():
        g1, b1 = ln(); g2, b2 = ln(); g3, b3 = ln()
        return {"attn1": attn_params(), "attn2": attn_params(), "ffn": ffn_params(),
                "ln1_g": g1, "ln1_b": b1, "ln2_g": g2, "ln2_b": b2,
                "ln3_g": g3, "ln3_b": b3}

    return {
        "src_emb": nrm((cfg["src_vocab_size"], E), 1.0),
        "tgt_emb": nrm((cfg["tgt_vocab_size"], E), 1.0),
        "pe": sinusoidal_pe(cfg["max_length"], E),
        "enc": [enc_layer() for _ in range(cfg["num_enc_layers"])],
        "dec": [dec_layer() for _ in range(cfg["num_dec_layers"])],
    }


# ----------------------------------------------------------------------------
# Pure-JAX reference (same dtype plan) for a tolerance check
# ----------------------------------------------------------------------------
def _ref_ln(r, g, b):
    mean = jnp.mean(r, axis=-1, keepdims=True)
    var = jnp.mean((r - mean) ** 2, axis=-1, keepdims=True)
    return (r - mean) * jax.lax.rsqrt(var + 1e-5) * g + b


def _ref_attention(x_q, x_kv, keep, ap, cfg, causal):
    Hq, Hkv, D = cfg["num_query_heads"], cfg["num_key_value_heads"], cfg["attn_head_dim"]
    B, Sq, _ = x_q.shape
    Skv = x_kv.shape[1]
    group = Hq // Hkv
    cdt = ap["wq"].dtype
    q = jnp.dot(x_q.astype(cdt), ap["wq"], preferred_element_type=jnp.float32)
    kv = jnp.dot(x_kv.astype(cdt), ap["wkv"], preferred_element_type=jnp.float32)
    qh = q.reshape(B, Sq, Hq, D)
    kh = kv[..., :Hkv * D].reshape(B, Skv, Hkv, D)
    vh = kv[..., Hkv * D:].reshape(B, Skv, Hkv, D)

    sk = jnp.where(kh > 0.0, kh + 1.0, jnp.exp(kh))
    mem = jnp.einsum("bshd,bshe->bhde", sk.astype(cdt), vh.astype(cdt),
                     preferred_element_type=jnp.float32)               # (B,Hkv,D,D)
    zz = jnp.sum(sk, axis=1)[:, :, None, :]                            # (B,Hkv,1,D)

    khr = jnp.repeat(kh, group, axis=2)
    vhr = jnp.repeat(vh, group, axis=2)
    s = jnp.einsum("bqhd,bkhd->bhqk", (qh * (1.0 / math.sqrt(D))).astype(cdt),
                   khr.astype(cdt), preferred_element_type=jnp.float32)
    km = keep[:, 0] > 0.0                                              # (B, Skv)
    mask = jnp.broadcast_to(km[:, None, None, :], (B, 1, Sq, Skv))
    if causal:
        mask = jnp.logical_and(mask, jnp.tril(jnp.ones((Sq, Skv), bool))[None, None])
    s = jnp.where(mask, s, -1e30)
    s = s - jnp.max(s, axis=-1, keepdims=True)
    p = jnp.exp(s)
    p = p / jnp.sum(p, axis=-1, keepdims=True)
    a = jnp.einsum("bhqk,bkhd->bqhd", p.astype(cdt), vhr.astype(cdt),
                   preferred_element_type=jnp.float32)
    gate = 1.0 - jax.nn.sigmoid(ap["beta"])                            # (1, Hq)
    a = a * gate[0][None, None, :, None]
    proj = jnp.dot(a.reshape(B, Sq, Hq * D).astype(cdt), ap["wo"],
                   preferred_element_type=jnp.float32)
    if cfg["use_attn_linear_bias"]:
        proj = proj + ap["bo"]
    ctx = (jnp.repeat(mem, group, axis=1), jnp.repeat(zz, group, axis=1))
    return x_q + proj, ctx


def _ref_ffn(x, fp, cfg):
    cdt = fp["w1"].dtype
    h = jnp.dot(x.astype(cdt), fp["w1"], preferred_element_type=jnp.float32)
    if cfg["use_pffn_bias"]:
        h = h + fp["b1"]
    h = jnp.maximum(h, 0.0)
    f = jnp.dot(h.astype(cdt), fp["w2"], preferred_element_type=jnp.float32)
    if cfg["use_pffn_bias"]:
        f = f + fp["b2"]
    return x + f


def _ref_forward(params, src_ids, tgt_ids, cfg):
    E = cfg["embedding_dim"]
    scale = math.sqrt(E)
    B, Ss = src_ids.shape
    _, St = tgt_ids.shape
    src_keep = (src_ids != cfg["src_pad_idx"]).astype(jnp.float32)[:, None, :]
    tgt_keep = (tgt_ids != cfg["tgt_pad_idx"]).astype(jnp.float32)[:, None, :]
    pe = params["pe"]
    src = params["src_emb"][src_ids] * scale + pe[:Ss][None]
    tgt = params["tgt_emb"][tgt_ids] * scale + pe[:St][None]
    enc_ctx, dec_ctx = [], []
    for p in params["enc"]:
        r, ctx = _ref_attention(src, src, src_keep, p["attn"], cfg, causal=False)
        x1 = _ref_ln(r, p["ln1_g"], p["ln1_b"])
        src = _ref_ln(_ref_ffn(x1, p["ffn"], cfg), p["ln2_g"], p["ln2_b"])
        enc_ctx.append(ctx)
    for p in params["dec"]:
        r, c1 = _ref_attention(tgt, tgt, tgt_keep, p["attn1"], cfg, causal=True)
        x1 = _ref_ln(r, p["ln1_g"], p["ln1_b"])
        r, c2 = _ref_attention(x1, src, src_keep, p["attn2"], cfg, causal=False)
        x2 = _ref_ln(r, p["ln2_g"], p["ln2_b"])
        tgt = _ref_ln(_ref_ffn(x2, p["ffn"], cfg), p["ln3_g"], p["ln3_b"])
        dec_ctx.append((c1, c2))
    return tgt, enc_ctx, dec_ctx


# ----------------------------------------------------------------------------
if __name__ == "__main__":
    cfg = dict(
        num_enc_layers=2, num_dec_layers=2,
        src_vocab_size=11, tgt_vocab_size=13,
        src_pad_idx=0, tgt_pad_idx=0,
        max_length=16, embedding_dim=32, attn_head_dim=8,
        num_query_heads=4, num_key_value_heads=2, ffn_dim=64,
        dropout_rate=0.0,               # eval mode: dropout is identity
        use_delta_update_rule=False,    # identical to linear rule for zero memory
        use_attn_linear_bias=False,
        use_pffn_bias=True,
    )

    key = jax.random.PRNGKey(0)
    k_param, k_src, k_tgt = jax.random.split(key, 3)
    params = init_params(k_param, cfg)

    # Different source / target lengths exercise cross-attention (Sq != Skv).
    B, Ss, St = 2, 16, 8
    src_ids = jax.random.randint(k_src, (B, Ss), 1, cfg["src_vocab_size"], jnp.int32)
    tgt_ids = jax.random.randint(k_tgt, (B, St), 1, cfg["tgt_vocab_size"], jnp.int32)
    # A little padding to exercise the masks.
    src_ids = src_ids.at[0, -2:].set(cfg["src_pad_idx"])
    tgt_ids = tgt_ids.at[1, -2:].set(cfg["tgt_pad_idx"])

    fwd = jax.jit(functools.partial(transformer_forward, cfg=cfg))
    tgt_out, enc_ctx, dec_ctx = fwd(params, src_ids, tgt_ids)
    jax.block_until_ready((tgt_out, enc_ctx, dec_ctx))

    Hq, D = cfg["num_query_heads"], cfg["attn_head_dim"]
    assert tgt_out.shape == (B, St, cfg["embedding_dim"])
    assert jnp.all(jnp.isfinite(tgt_out))
    assert enc_ctx[0][0].shape == (B, Hq, D, D)
    assert enc_ctx[0][1].shape == (B, Hq, 1, D)
    assert dec_ctx[0][0][0].shape == (B, Hq, D, D)

    # Pure-JAX reference check (kernel uses an approx reciprocal in softmax,
    # so allow a modest tolerance).
    ref_out, ref_enc, ref_dec = jax.jit(functools.partial(_ref_forward, cfg=cfg))(
        params, src_ids, tgt_ids)
    jax.block_until_ready(ref_out)

    def close(a, b, tol=3e-2):
        return bool(jnp.max(jnp.abs(a - b)) <= tol + tol * jnp.max(jnp.abs(b)))

    assert close(tgt_out, ref_out)
    assert close(enc_ctx[0][0], ref_enc[0][0])
    assert close(enc_ctx[0][1], ref_enc[0][1])
    assert close(dec_ctx[0][0][0], ref_dec[0][0][0])
    assert close(dec_ctx[0][1][0], ref_dec[0][1][0])

    print("KERNEL_OK")
</pallas_src>

<mosaic_0001>
module attributes {stable_mosaic.version = 11 : i64} {
  func.func @kernel(%arg0: i32, %arg1: memref<1x1x8xf32, #tpu.memory_space<vmem>>, %arg2: memref<1x1x16xf32, #tpu.memory_space<vmem>>, %arg3: memref<1x32xf32, #tpu.memory_space<vmem>>, %arg4: memref<1x32xf32, #tpu.memory_space<vmem>>, %arg5: memref<1x8x32xf32, #tpu.memory_space<vmem>>, %arg6: memref<1x16x32xf32, #tpu.memory_space<vmem>>, %arg7: memref<32x32xbf16, #tpu.memory_space<vmem>>, %arg8: memref<32x32xbf16, #tpu.memory_space<vmem>>, %arg9: memref<32x32xbf16, #tpu.memory_space<vmem>>, %arg10: memref<1x32xf32, #tpu.memory_space<vmem>>, %arg11: memref<1x32xf32, #tpu.memory_space<vmem>>, %arg12: memref<32x32xbf16, #tpu.memory_space<vmem>>, %arg13: memref<32x32xbf16, #tpu.memory_space<vmem>>, %arg14: memref<32x32xbf16, #tpu.memory_space<vmem>>, %arg15: memref<1x32xf32, #tpu.memory_space<vmem>>, %arg16: memref<1x32xf32, #tpu.memory_space<vmem>>, %arg17: memref<32x64xbf16, #tpu.memory_space<vmem>>, %arg18: memref<1x64xf32, #tpu.memory_space<vmem>>, %arg19: memref<64x32xbf16, #tpu.memory_space<vmem>>, %arg20: memref<1x32xf32, #tpu.memory_space<vmem>>, %arg21: memref<1x32xf32, #tpu.memory_space<vmem>>, %arg22: memref<1x32xf32, #tpu.memory_space<vmem>>, %arg23: memref<1x8x32xf32, #tpu.memory_space<vmem>>, %arg24: memref<1x8x16xf32, #tpu.memory_space<vmem>>, %arg25: memref<1x1x16xf32, #tpu.memory_space<vmem>>, %arg26: memref<1x8x16xf32, #tpu.memory_space<vmem>>, %arg27: memref<1x1x16xf32, #tpu.memory_space<vmem>>, %arg28: memref<8x32xf32, #tpu.memory_space<vmem>>) attributes {dimension_semantics = [#tpu.dimension_semantics<parallel>], iteration_bounds = array<i64: 2>, scalar_prefetch = 0 : i64, scratch_operands = 1 : i64, tpu.core_type = #tpu.core_type<tc>, window_params = [{transform_indices = @transform_0, window_bounds = array<i64: 1, 1, 8>}, {transform_indices = @transform_1, window_bounds = array<i64: 1, 1, 16>}, {pipeline_mode = #tpu.pipeline_mode<synchronous>, transform_indices = @transform_2, window_bounds = array<i64: 1, 32>}, {pipeline_mode = #tpu.pipeline_mode<synchronous>, transform_indices = @transform_3, window_bounds = array<i64: 1, 32>}, {transform_indices = @transform_4, window_bounds = array<i64: 1, 8, 32>}, {transform_indices = @transform_5, window_bounds = array<i64: 1, 16, 32>}, {pipeline_mode = #tpu.pipeline_mode<synchronous>, transform_indices = @transform_6, window_bounds = array<i64: 32, 32>}, {pipeline_mode = #tpu.pipeline_mode<synchronous>, transform_indices = @transform_7, window_bounds = array<i64: 32, 32>}, {pipeline_mode = #tpu.pipeline_mode<synchronous>, transform_indices = @transform_8, window_bounds = array<i64: 32, 32>}, {pipeline_mode = #tpu.pipeline_mode<synchronous>, transform_indices = @transform_9, window_bounds = array<i64: 1, 32>}, {pipeline_mode = #tpu.pipeline_mode<synchronous>, transform_indices = @transform_10, window_bounds = array<i64: 1, 32>}, {pipeline_mode = #tpu.pipeline_mode<synchronous>, transform_indices = @transform_11, window_bounds = array<i64: 32, 32>}, {pipeline_mode = #tpu.pipeline_mode<synchronous>, transform_indices = @transform_12, window_bounds = array<i64: 32, 32>}, {pipeline_mode = #tpu.pipeline_mode<synchronous>, transform_indices = @transform_13, window_bounds = array<i64: 32, 32>}, {pipeline_mode = #tpu.pipeline_mode<synchronous>, transform_indices = @transform_14, window_bounds = array<i64: 1, 32>}, {pipeline_mode = #tpu.pipeline_mode<synchronous>, transform_indices = @transform_15, window_bounds = array<i64: 1, 32>}, {pipeline_mode = #tpu.pipeline_mode<synchronous>, transform_indices = @transform_16, window_bounds = array<i64: 32, 64>}, {pipeline_mode = #tpu.pipeline_mode<synchronous>, transform_indices = @transform_17, window_bounds = array<i64: 1, 64>}, {pipeline_mode = #tpu.pipeline_mode<synchronous>, transform_indices = @transform_18, window_bounds = array<i64: 64, 32>}, {pipeline_mode = #tpu.pipeline_mode<synchronous>, transform_indices = @transform_19, window_bounds = array<i64: 1, 32>}, {pipeline_mode = #tpu.pipeline_mode<synchronous>, transform_indices = @transform_20, window_bounds = array<i64: 1, 32>}, {pipeline_mode = #tpu.pipeline_mode<synchronous>, transform_indices = @transform_21, window_bounds = array<i64: 1, 32>}, {transform_indices = @transform_22, window_bounds = array<i64: 1, 8, 32>}, {transform_indices = @transform_23, window_bounds = array<i64: 1, 8, 16>}, {transform_indices = @transform_24, window_bounds = array<i64: 1, 1, 16>}, {transform_indices = @transform_25, window_bounds = array<i64: 1, 8, 16>}, {transform_indices = @transform_26, window_bounds = array<i64: 1, 1, 16>}]} {
    %c0 = arith.constant 0 : index
    %c0_0 = arith.constant 0 : index
    %c0_1 = arith.constant 0 : index
    %0 = vector.load %arg5[%c0, %c0_0, %c0_1] : memref<1x8x32xf32, #tpu.memory_space<vmem>>, vector<1x8x32xf32>
    %1 = vector.shape_cast %0 : vector<1x8x32xf32> to vector<8x32xf32>
    %c0_2 = arith.constant 0 : index
    %c0_3 = arith.constant 0 : index
    %c0_4 = arith.constant 0 : index
    %2 = vector.load %arg6[%c0_2, %c0_3, %c0_4] : memref<1x16x32xf32, #tpu.memory_space<vmem>>, vector<1x16x32xf32>
    %3 = vector.shape_cast %2 : vector<1x16x32xf32> to vector<16x32xf32>
    %c0_5 = arith.constant 0 : index
    %c0_6 = arith.constant 0 : index
    %c0_7 = arith.constant 0 : index
    %4 = vector.load %arg1[%c0_5, %c0_6, %c0_7] : memref<1x1x8xf32, #tpu.memory_space<vmem>>, vector<1x1x8xf32>
    %5 = vector.shape_cast %4 : vector<1x1x8xf32> to vector<1x8xf32>
    %c0_8 = arith.constant 0 : index
    %c0_9 = arith.constant 0 : index
    %6 = vector.load %arg3[%c0_8, %c0_9] : memref<1x32xf32, #tpu.memory_space<vmem>>, vector<1x32xf32>
    %7 = arith.truncf %1 : vector<8x32xf32> to vector<8x32xbf16>
    %c0_10 = arith.constant 0 : index
    %c0_11 = arith.constant 0 : index
    %8 = vector.load %arg7[%c0_10, %c0_11] : memref<32x32xbf16, #tpu.memory_space<vmem>>, vector<32x32xbf16>
    %cst = arith.constant dense<0.000000e+00> : vector<8x32xf32>
    %9 = tpu.matmul %7, %8, %cst {dimension_numbers = #tpu.dot_dimension_numbers<[1], [0], [0], [1], [0, 0, 1, 1], [], []>} : vector<8x32xbf16>, vector<32x32xbf16>, vector<8x32xf32> -> vector<8x32xf32>
    %10 = arith.truncf %1 : vector<8x32xf32> to vector<8x32xbf16>
    %c0_12 = arith.constant 0 : index
    %c0_13 = arith.constant 0 : index
    %11 = vector.load %arg8[%c0_12, %c0_13] : memref<32x32xbf16, #tpu.memory_space<vmem>>, vector<32x32xbf16>
    %cst_14 = arith.constant dense<0.000000e+00> : vector<8x32xf32>
    %12 = tpu.matmul %10, %11, %cst_14 {dimension_numbers = #tpu.dot_dimension_numbers<[1], [0], [0], [1], [0, 0, 1, 1], [], []>} : vector<8x32xbf16>, vector<32x32xbf16>, vector<8x32xf32> -> vector<8x32xf32>
    %cst_15 = arith.constant 0.000000e+00 : f32
    %13 = vector.broadcast %cst_15 : f32 to vector<1x8xf32>
    %14 = arith.cmpf ogt, %5, %13 : vector<1x8xf32>
    %15 = vector.shape_cast %14 : vector<1x8xi1> to vector<1x8xi1>
    %16 = vector.broadcast %15 : vector<1x8xi1> to vector<8x8xi1>
    %17 = tpu.iota {dimensions = array<i32: 0>} : vector<8x8xi32>
    %18 = tpu.iota {dimensions = array<i32: 1>} : vector<8x8xi32>
    %19 = arith.cmpi sle, %18, %17 : vector<8x8xi32>
    %20 = arith.andi %16, %19 : vector<8x8xi1>
    %21 = vector.extract_strided_slice %12 {offsets = [0, 0], sizes = [8, 8], strides = [1, 1]} : vector<8x32xf32> to vector<8x8xf32>
    %22 = vector.extract_strided_slice %12 {offsets = [0, 16], sizes = [8, 8], strides = [1, 1]} : vector<8x32xf32> to vector<8x8xf32>
    %23 = arith.truncf %21 : vector<8x8xf32> to vector<8x8xbf16>
    %24 = arith.truncf %22 : vector<8x8xf32> to vector<8x8xbf16>
    %cst_16 = arith.constant 0.000000e+00 : f32
    %25 = vector.broadcast %cst_16 : f32 to vector<8x8xf32>
    %26 = arith.cmpf ogt, %21, %25 : vector<8x8xf32>
    %cst_17 = arith.constant 1.000000e+00 : f32
    %27 = vector.broadcast %cst_17 : f32 to vector<8x8xf32>
    %28 = arith.addf %21, %27 : vector<8x8xf32>
    %29 = math.exp %21 : vector<8x8xf32>
    %30 = arith.select %26, %28, %29 : vector<8x8xi1>, vector<8x8xf32>
    %31 = arith.truncf %30 : vector<8x8xf32> to vector<8x8xbf16>
    %cst_18 = arith.constant dense<0.000000e+00> : vector<8x8xf32>
    %32 = tpu.matmul %31, %24, %cst_18 {dimension_numbers = #tpu.dot_dimension_numbers<[0], [0], [1], [1], [0, 1, 1, 1], [], []>} : vector<8x8xbf16>, vector<8x8xbf16>, vector<8x8xf32> -> vector<8x8xf32>
    %cst_19 = arith.constant dense<0.000000e+00> : vector<8xf32>
    %33 = vector.multi_reduction <add>, %30, %cst_19 [0] : vector<8x8xf32> to vector<8xf32>
    %34 = vector.shape_cast %33 : vector<8xf32> to vector<1x8xf32>
    %35 = vector.extract_strided_slice %9 {offsets = [0, 0], sizes = [8, 8], strides = [1, 1]} : vector<8x32xf32> to vector<8x8xf32>
    %cst_20 = arith.constant 0.353553385 : f32
    %36 = vector.broadcast %cst_20 : f32 to vector<8x8xf32>
    %37 = arith.mulf %35, %36 : vector<8x8xf32>
    %38 = arith.truncf %37 : vector<8x8xf32> to vector<8x8xbf16>
    %cst_21 = arith.constant dense<0.000000e+00> : vector<8x8xf32>
    %39 = tpu.matmul %38, %23, %cst_21 {dimension_numbers = #tpu.dot_dimension_numbers<[1], [1], [0], [0], [0, 0, 1, 0], [], []>} : vector<8x8xbf16>, vector<8x8xbf16>, vector<8x8xf32> -> vector<8x8xf32>
    %cst_22 = arith.constant -1.000000e+30 : f32
    %40 = vector.broadcast %cst_22 : f32 to vector<8x8xf32>
    %41 = arith.select %20, %39, %40 : vector<8x8xi1>, vector<8x8xf32>
    %cst_23 = arith.constant dense<0xFF800000> : vector<8xf32>
    %42 = vector.multi_reduction <maximumf>, %41, %cst_23 [1] : vector<8x8xf32> to vector<8xf32>
    %43 = vector.shape_cast %42 : vector<8xf32> to vector<8x1xf32>
    %44 = vector.broadcast %43 : vector<8x1xf32> to vector<8x8xf32>
    %45 = arith.subf %41, %44 : vector<8x8xf32>
    %46 = math.exp %45 : vector<8x8xf32>
    %cst_24 = arith.constant dense<0.000000e+00> : vector<8xf32>
    %47 = vector.multi_reduction <add>, %46, %cst_24 [1] : vector<8x8xf32> to vector<8xf32>
    %48 = vector.shape_cast %47 : vector<8xf32> to vector<8x1xf32>
    %49 = tpu.reciprocal %48 {approx = true} : vector<8x1xf32> -> vector<8x1xf32>
    %50 = vector.broadcast %49 : vector<8x1xf32> to vector<8x8xf32>
    %51 = arith.mulf %46, %50 : vector<8x8xf32>
    %52 = arith.truncf %51 : vector<8x8xf32> to vector<8x8xbf16>
    %cst_25 = arith.constant dense<0.000000e+00> : vector<8x8xf32>
    %53 = tpu.matmul %52, %24, %cst_25 {dimension_numbers = #tpu.dot_dimension_numbers<[1], [0], [0], [1], [0, 0, 1, 1], [], []>} : vector<8x8xbf16>, vector<8x8xbf16>, vector<8x8xf32> -> vector<8x8xf32>
    %c0_26 = arith.constant 0 : index
    %c0_27 = arith.constant 0 : index
    %54 = vector.load %arg28[%c0_26, %c0_27] : memref<8x32xf32, #tpu.memory_space<vmem>>, vector<8x8xf32>
    tpu.vector_store %arg28[%c0_26, %c0_27], %53 {strides = array<i32>} : memref<8x32xf32, #tpu.memory_space<vmem>>, vector<8x8xf32>,
    %55 = vector.extract_strided_slice %9 {offsets = [0, 8], sizes = [8, 8], strides = [1, 1]} : vector<8x32xf32> to vector<8x8xf32>
    %cst_28 = arith.constant 0.353553385 : f32
    %56 = vector.broadcast %cst_28 : f32 to vector<8x8xf32>
    %57 = arith.mulf %55, %56 : vector<8x8xf32>
    %58 = arith.truncf %57 : vector<8x8xf32> to vector<8x8xbf16>
    %cst_29 = arith.constant dense<0.000000e+00> : vector<8x8xf32>
    %59 = tpu.matmul %58, %23, %cst_29 {dimension_numbers = #tpu.dot_dimension_numbers<[1], [1], [0], [0], [0, 0, 1, 0], [], []>} : vector<8x8xbf16>, vector<8x8xbf16>, vector<8x8xf32> -> vector<8x8xf32>
    %cst_30 = arith.constant -1.000000e+30 : f32
    %60 = vector.broadcast %cst_30 : f32 to vector<8x8xf32>
    %61 = arith.select %20, %59, %60 : vector<8x8xi1>, vector<8x8xf32>
    %cst_31 = arith.constant dense<0xFF800000> : vector<8xf32>
    %62 = vector.multi_reduction <maximumf>, %61, %cst_31 [1] : vector<8x8xf32> to vector<8xf32>
    %63 = vector.shape_cast %62 : vector<8xf32> to vector<8x1xf32>
    %64 = vector.broadcast %63 : vector<8x1xf32> to vector<8x8xf32>
    %65 = arith.subf %61, %64 : vector<8x8xf32>
    %66 = math.exp %65 : vector<8x8xf32>
    %cst_32 = arith.constant dense<0.000000e+00> : vector<8xf32>
    %67 = vector.multi_reduction <add>, %66, %cst_32 [1] : vector<8x8xf32> to vector<8xf32>
    %68 = vector.shape_cast %67 : vector<8xf32> to vector<8x1xf32>
    %69 = tpu.reciprocal %68 {approx = true} : vector<8x1xf32> -> vector<8x1xf32>
    %70 = vector.broadcast %69 : vector<8x1xf32> to vector<8x8xf32>
    %71 = arith.mulf %66, %70 : vector<8x8xf32>
    %72 = arith.truncf %71 : vector<8x8xf32> to vector<8x8xbf16>
    %cst_33 = arith.constant dense<0.000000e+00> : vector<8x8xf32>
    %73 = tpu.matmul %72, %24, %cst_33 {dimension_numbers = #tpu.dot_dimension_numbers<[1], [0], [0], [1], [0, 0, 1, 1], [], []>} : vector<8x8xbf16>, vector<8x8xbf16>, vector<8x8xf32> -> vector<8x8xf32>
    %c0_34 = arith.constant 0 : index
    %c8 = arith.constant 8 : index
    %74 = vector.load %arg28[%c0_34, %c8] : memref<8x32xf32, #tpu.memory_space<vmem>>, vector<8x8xf32>
    tpu.vector_store %arg28[%c0_34, %c8], %73 {strides = array<i32>} : memref<8x32xf32, #tpu.memory_space<vmem>>, vector<8x8xf32>,
    %75 = vector.extract_strided_slice %12 {offsets = [0, 8], sizes = [8, 8], strides = [1, 1]} : vector<8x32xf32> to vector<8x8xf32>
    %76 = vector.extract_strided_slice %12 {offsets = [0, 24], sizes = [8, 8], strides = [1, 1]} : vector<8x32xf32> to vector<8x8xf32>
    %77 = arith.truncf %75 : vector<8x8xf32> to vector<8x8xbf16>
    %78 = arith.truncf %76 : vector<8x8xf32> to vector<8x8xbf16>
    %cst_35 = arith.constant 0.000000e+00 : f32
    %79 = vector.broadcast %cst_35 : f32 to vector<8x8xf32>
    %80 = arith.cmpf ogt, %75, %79 : vector<8x8xf32>
    %cst_36 = arith.constant 1.000000e+00 : f32
    %81 = vector.broadcast %cst_36 : f32 to vector<8x8xf32>
    %82 = arith.addf %75, %81 : vector<8x8xf32>
    %83 = math.exp %75 : vector<8x8xf32>
    %84 = arith.select %80, %82, %83 : vector<8x8xi1>, vector<8x8xf32>
    %85 = arith.truncf %84 : vector<8x8xf32> to vector<8x8xbf16>
    %cst_37 = arith.constant dense<0.000000e+00> : vector<8x8xf32>
    %86 = tpu.matmul %85, %78, %cst_37 {dimension_numbers = #tpu.dot_dimension_numbers<[0], [0], [1], [1], [0, 1, 1, 1], [], []>} : vector<8x8xbf16>, vector<8x8xbf16>, vector<8x8xf32> -> vector<8x8xf32>
    %cst_38 = arith.constant dense<0.000000e+00> : vector<8xf32>
    %87 = vector.multi_reduction <add>, %84, %cst_38 [0] : vector<8x8xf32> to vector<8xf32>
    %88 = vector.shape_cast %87 : vector<8xf32> to vector<1x8xf32>
    %89 = vector.extract_strided_slice %9 {offsets = [0, 16], sizes = [8, 8], strides = [1, 1]} : vector<8x32xf32> to vector<8x8xf32>
    %cst_39 = arith.constant 0.353553385 : f32
    %90 = vector.broadcast %cst_39 : f32 to vector<8x8xf32>
    %91 = arith.mulf %89, %90 : vector<8x8xf32>
    %92 = arith.truncf %91 : vector<8x8xf32> to vector<8x8xbf16>
    %cst_40 = arith.constant dense<0.000000e+00> : vector<8x8xf32>
    %93 = tpu.matmul %92, %77, %cst_40 {dimension_numbers = #tpu.dot_dimension_numbers<[1], [1], [0], [0], [0, 0, 1, 0], [], []>} : vector<8x8xbf16>, vector<8x8xbf16>, vector<8x8xf32> -> vector<8x8xf32>
    %cst_41 = arith.constant -1.000000e+30 : f32
    %94 = vector.broadcast %cst_41 : f32 to vector<8x8xf32>
    %95 = arith.select %20, %93, %94 : vector<8x8xi1>, vector<8x8xf32>
    %cst_42 = arith.constant dense<0xFF800000> : vector<8xf32>
    %96 = vector.multi_reduction <maximumf>, %95, %cst_42 [1] : vector<8x8xf32> to vector<8xf32>
    %97 = vector.shape_cast %96 : vector<8xf32> to vector<8x1xf32>
    %98 = vector.broadcast %97 : vector<8x1xf32> to vector<8x8xf32>
    %99 = arith.subf %95, %98 : vector<8x8xf32>
    %100 = math.exp %99 : vector<8x8xf32>
    %cst_43 = arith.constant dense<0.000000e+00> : vector<8xf32>
    %101 = vector.multi_reduction <add>, %100, %cst_43 [1] : vector<8x8xf32> to vector<8xf32>
    %102 = vector.shape_cast %101 : vector<8xf32> to vector<8x1xf32>
    %103 = tpu.reciprocal %102 {approx = true} : vector<8x1xf32> -> vector<8x1xf32>
    %104 = vector.broadcast %103 : vector<8x1xf32> to vector<8x8xf32>
    %105 = arith.mulf %100, %104 : vector<8x8xf32>
    %106 = arith.truncf %105 : vector<8x8xf32> to vector<8x8xbf16>
    %cst_44 = arith.constant dense<0.000000e+00> : vector<8x8xf32>
    %107 = tpu.matmul %106, %78, %cst_44 {dimension_numbers = #tpu.dot_dimension_numbers<[1], [0], [0], [1], [0, 0, 1, 1], [], []>} : vector<8x8xbf16>, vector<8x8xbf16>, vector<8x8xf32> -> vector<8x8xf32>
    %c0_45 = arith.constant 0 : index
    %c16 = arith.constant 16 : index
    %108 = vector.load %arg28[%c0_45, %c16] : memref<8x32xf32, #tpu.memory_space<vmem>>, vector<8x8xf32>
    tpu.vector_store %arg28[%c0_45, %c16], %107 {strides = array<i32>} : memref<8x32xf32, #tpu.memory_space<vmem>>, vector<8x8xf32>,
    %109 = vector.extract_strided_slice %9 {offsets = [0, 24], sizes = [8, 8], strides = [1, 1]} : vector<8x32xf32> to vector<8x8xf32>
    %cst_46 = arith.constant 0.353553385 : f32
    %110 = vector.broadcast %cst_46 : f32 to vector<8x8xf32>
    %111 = arith.mulf %109, %110 : vector<8x8xf32>
    %112 = arith.truncf %111 : vector<8x8xf32> to vector<8x8xbf16>
    %cst_47 = arith.constant dense<0.000000e+00> : vector<8x8xf32>
    %113 = tpu.matmul %112, %77, %cst_47 {dimension_numbers = #tpu.dot_dimension_numbers<[1], [1], [0], [0], [0, 0, 1, 0], [], []>} : vector<8x8xbf16>, vector<8x8xbf16>, vector<8x8xf32> -> vector<8x8xf32>
    %cst_48 = arith.constant -1.000000e+30 : f32
    %114 = vector.broadcast %cst_48 : f32 to vector<8x8xf32>
    %115 = arith.select %20, %113, %114 : vector<8x8xi1>, vector<8x8xf32>
    %cst_49 = arith.constant dense<0xFF800000> : vector<8xf32>
    %116 = vector.multi_reduction <maximumf>, %115, %cst_49 [1] : vector<8x8xf32> to vector<8xf32>
    %117 = vector.shape_cast %116 : vector<8xf32> to vector<8x1xf32>
    %118 = vector.broadcast %117 : vector<8x1xf32> to vector<8x8xf32>
    %119 = arith.subf %115, %118 : vector<8x8xf32>
    %120 = math.exp %119 : vector<8x8xf32>
    %cst_50 = arith.constant dense<0.000000e+00> : vector<8xf32>
    %121 = vector.multi_reduction <add>, %120, %cst_50 [1] : vector<8x8xf32> to vector<8xf32>
    %122 = vector.shape_cast %121 : vector<8xf32> to vector<8x1xf32>
    %123 = tpu.reciprocal %122 {approx = true} : vector<8x1xf32> -> vector<8x1xf32>
    %124 = vector.broadcast %123 : vector<8x1xf32> to vector<8x8xf32>
    %125 = arith.mulf %120, %124 : vector<8x8xf32>
    %126 = arith.truncf %125 : vector<8x8xf32> to vector<8x8xbf16>
    %cst_51 = arith.constant dense<0.000000e+00> : vector<8x8xf32>
    %127 = tpu.matmul %126, %78, %cst_51 {dimension_numbers = #tpu.dot_dimension_numbers<[1], [0], [0], [1], [0, 0, 1, 1], [], []>} : vector<8x8xbf16>, vector<8x8xbf16>, vector<8x8xf32> -> vector<8x8xf32>
    %c0_52 = arith.constant 0 : index
    %c24 = arith.constant 24 : index
    %128 = vector.load %arg28[%c0_52, %c24] : memref<8x32xf32, #tpu.memory_space<vmem>>, vector<8x8xf32>
    tpu.vector_store %arg28[%c0_52, %c24], %127 {strides = array<i32>} : memref<8x32xf32, #tpu.memory_space<vmem>>, vector<8x8xf32>,
    %129 = tpu.concatenate %32, %86 in 1 : vector<8x8xf32>, vector<8x8xf32> -> vector<8x16xf32>
    %c0_53 = arith.constant 0 : index
    %c0_54 = arith.constant 0 : index
    %c0_55 = arith.constant 0 : index
    %130 = vector.load %arg24[%c0_53, %c0_54, %c0_55] : memref<1x8x16xf32, #tpu.memory_space<vmem>>, vector<1x8x16xf32>
    %131 = vector.shape_cast %130 : vector<1x8x16xf32> to vector<8x16xf32>
    %132 = vector.shape_cast %129 : vector<8x16xf32> to vector<1x8x16xf32>
    tpu.vector_store %arg24[%c0_53, %c0_54, %c0_55], %132 {strides = array<i32>} : memref<1x8x16xf32, #tpu.memory_space<vmem>>, vector<1x8x16xf32>,
    %133 = tpu.concatenate %34, %88 in 1 : vector<1x8xf32>, vector<1x8xf32> -> vector<1x16xf32>
    %c0_56 = arith.constant 0 : index
    %c0_57 = arith.constant 0 : index
    %c0_58 = arith.constant 0 : index
    %134 = vector.load %arg25[%c0_56, %c0_57, %c0_58] : memref<1x1x16xf32, #tpu.memory_space<vmem>>, vector<1x1x16xf32>
    %135 = vector.shape_cast %134 : vector<1x1x16xf32> to vector<1x16xf32>
    %136 = vector.shape_cast %133 : vector<1x16xf32> to vector<1x1x16xf32>
    tpu.vector_store %arg25[%c0_56, %c0_57, %c0_58], %136 {strides = array<i32>} : memref<1x1x16xf32, #tpu.memory_space<vmem>>, vector<1x1x16xf32>,
    %c0_59 = arith.constant 0 : index
    %c0_60 = arith.constant 0 : index
    %137 = vector.load %arg28[%c0_59, %c0_60] : memref<8x32xf32, #tpu.memory_space<vmem>>, vector<8x32xf32>
    %138 = vector.broadcast %6 : vector<1x32xf32> to vector<8x32xf32>
    %139 = arith.mulf %137, %138 : vector<8x32xf32>
    %140 = arith.truncf %139 : vector<8x32xf32> to vector<8x32xbf16>
    %c0_61 = arith.constant 0 : index
    %c0_62 = arith.constant 0 : index
    %141 = vector.load %arg9[%c0_61, %c0_62] : memref<32x32xbf16, #tpu.memory_space<vmem>>, vector<32x32xbf16>
    %cst_63 = arith.constant dense<0.000000e+00> : vector<8x32xf32>
    %142 = tpu.matmul %140, %141, %cst_63 {dimension_numbers = #tpu.dot_dimension_numbers<[1], [0], [0], [1], [0, 0, 1, 1], [], []>} : vector<8x32xbf16>, vector<32x32xbf16>, vector<8x32xf32> -> vector<8x32xf32>
    %143 = arith.addf %1, %142 : vector<8x32xf32>
    %c0_64 = arith.constant 0 : index
    %c0_65 = arith.constant 0 : index
    %144 = vector.load %arg10[%c0_64, %c0_65] : memref<1x32xf32, #tpu.memory_space<vmem>>, vector<1x32xf32>
    %c0_66 = arith.constant 0 : index
    %c0_67 = arith.constant 0 : index
    %145 = vector.load %arg11[%c0_66, %c0_67] : memref<1x32xf32, #tpu.memory_space<vmem>>, vector<1x32xf32>
    %cst_68 = arith.constant dense<0.000000e+00> : vector<8xf32>
    %146 = vector.multi_reduction <add>, %143, %cst_68 [1] : vector<8x32xf32> to vector<8xf32>
    %147 = vector.shape_cast %146 : vector<8xf32> to vector<8x1xf32>
    %cst_69 = arith.constant 3.200000e+01 : f32
    %148 = vector.broadcast %cst_69 : f32 to vector<8x1xf32>
    %149 = arith.divf %147, %148 : vector<8x1xf32>
    %150 = vector.broadcast %149 : vector<8x1xf32> to vector<8x32xf32>
    %151 = arith.subf %143, %150 : vector<8x32xf32>
    %152 = arith.mulf %151, %151 : vector<8x32xf32>
    %cst_70 = arith.constant dense<0.000000e+00> : vector<8xf32>
    %153 = vector.multi_reduction <add>, %152, %cst_70 [1] : vector<8x32xf32> to vector<8xf32>
    %154 = vector.shape_cast %153 : vector<8xf32> to vector<8x1xf32>
    %cst_71 = arith.constant 3.200000e+01 : f32
    %155 = vector.broadcast %cst_71 : f32 to vector<8x1xf32>
    %156 = arith.divf %154, %155 : vector<8x1xf32>
    %157 = vector.broadcast %149 : vector<8x1xf32> to vector<8x32xf32>
    %158 = arith.subf %143, %157 : vector<8x32xf32>
    %cst_72 = arith.constant 9.99999974E-6 : f32
    %159 = vector.broadcast %cst_72 : f32 to vector<8x1xf32>
    %160 = arith.addf %156, %159 : vector<8x1xf32>
    %161 = math.rsqrt %160 : vector<8x1xf32>
    %162 = vector.broadcast %161 : vector<8x1xf32> to vector<8x32xf32>
    %163 = arith.mulf %158, %162 : vector<8x32xf32>
    %164 = vector.broadcast %144 : vector<1x32xf32> to vector<8x32xf32>
    %165 = arith.mulf %163, %164 : vector<8x32xf32>
    %166 = vector.broadcast %145 : vector<1x32xf32> to vector<8x32xf32>
    %167 = arith.addf %165, %166 : vector<8x32xf32>
    %c0_73 = arith.constant 0 : index
    %c0_74 = arith.constant 0 : index
    %c0_75 = arith.constant 0 : index
    %168 = vector.load %arg2[%c0_73, %c0_74, %c0_75] : memref<1x1x16xf32, #tpu.memory_space<vmem>>, vector<1x1x16xf32>
    %169 = vector.shape_cast %168 : vector<1x1x16xf32> to vector<1x16xf32>
    %c0_76 = arith.constant 0 : index
    %c0_77 = arith.constant 0 : index
    %170 = vector.load %arg4[%c0_76, %c0_77] : memref<1x32xf32, #tpu.memory_space<vmem>>, vector<1x32xf32>
    %171 = arith.truncf %167 : vector<8x32xf32> to vector<8x32xbf16>
    %c0_78 = arith.constant 0 : index
    %c0_79 = arith.constant 0 : index
    %172 = vector.load %arg12[%c0_78, %c0_79] : memref<32x32xbf16, #tpu.memory_space<vmem>>, vector<32x32xbf16>
    %cst_80 = arith.constant dense<0.000000e+00> : vector<8x32xf32>
    %173 = tpu.matmul %171, %172, %cst_80 {dimension_numbers = #tpu.dot_dimension_numbers<[1], [0], [0], [1], [0, 0, 1, 1], [], []>} : vector<8x32xbf16>, vector<32x32xbf16>, vector<8x32xf32> -> vector<8x32xf32>
    %174 = arith.truncf %3 : vector<16x32xf32> to vector<16x32xbf16>
    %c0_81 = arith.constant 0 : index
    %c0_82 = arith.constant 0 : index
    %175 = vector.load %arg13[%c0_81, %c0_82] : memref<32x32xbf16, #tpu.memory_space<vmem>>, vector<32x32xbf16>
    %cst_83 = arith.constant dense<0.000000e+00> : vector<16x32xf32>
    %176 = tpu.matmul %174, %175, %cst_83 {dimension_numbers = #tpu.dot_dimension_numbers<[1], [0], [0], [1], [0, 0, 1, 1], [], []>} : vector<16x32xbf16>, vector<32x32xbf16>, vector<16x32xf32> -> vector<16x32xf32>
    %cst_84 = arith.constant 0.000000e+00 : f32
    %177 = vector.broadcast %cst_84 : f32 to vector<1x16xf32>
    %178 = arith.cmpf ogt, %169, %177 : vector<1x16xf32>
    %179 = vector.shape_cast %178 : vector<1x16xi1> to vector<1x16xi1>
    %180 = vector.broadcast %179 : vector<1x16xi1> to vector<8x16xi1>
    %181 = vector.extract_strided_slice %176 {offsets = [0, 0], sizes = [16, 8], strides = [1, 1]} : vector<16x32xf32> to vector<16x8xf32>
    %182 = vector.extract_strided_slice %176 {offsets = [0, 16], sizes = [16, 8], strides = [1, 1]} : vector<16x32xf32> to vector<16x8xf32>
    %183 = arith.truncf %181 : vector<16x8xf32> to vector<16x8xbf16>
    %184 = arith.truncf %182 : vector<16x8xf32> to vector<16x8xbf16>
    %cst_85 = arith.constant 0.000000e+00 : f32
    %185 = vector.broadcast %cst_85 : f32 to vector<16x8xf32>
    %186 = arith.cmpf ogt, %181, %185 : vector<16x8xf32>
    %cst_86 = arith.constant 1.000000e+00 : f32
    %187 = vector.broadcast %cst_86 : f32 to vector<16x8xf32>
    %188 = arith.addf %181, %187 : vector<16x8xf32>
    %189 = math.exp %181 : vector<16x8xf32>
    %190 = arith.select %186, %188, %189 : vector<16x8xi1>, vector<16x8xf32>
    %191 = arith.truncf %190 : vector<16x8xf32> to vector<16x8xbf16>
    %cst_87 = arith.constant dense<0.000000e+00> : vector<8x8xf32>
    %192 = tpu.matmul %191, %184, %cst_87 {dimension_numbers = #tpu.dot_dimension_numbers<[0], [0], [1], [1], [0, 1, 1, 1], [], []>} : vector<16x8xbf16>, vector<16x8xbf16>, vector<8x8xf32> -> vector<8x8xf32>
    %cst_88 = arith.constant dense<0.000000e+00> : vector<8xf32>
    %193 = vector.multi_reduction <add>, %190, %cst_88 [0] : vector<16x8xf32> to vector<8xf32>
    %194 = vector.shape_cast %193 : vector<8xf32> to vector<1x8xf32>
    %195 = vector.extract_strided_slice %173 {offsets = [0, 0], sizes = [8, 8], strides = [1, 1]} : vector<8x32xf32> to vector<8x8xf32>
    %cst_89 = arith.constant 0.353553385 : f32
    %196 = vector.broadcast %cst_89 : f32 to vector<8x8xf32>
    %197 = arith.mulf %195, %196 : vector<8x8xf32>
    %198 = arith.truncf %197 : vector<8x8xf32> to vector<8x8xbf16>
    %cst_90 = arith.constant dense<0.000000e+00> : vector<8x16xf32>
    %199 = tpu.matmul %198, %183, %cst_90 {dimension_numbers = #tpu.dot_dimension_numbers<[1], [1], [0], [0], [0, 0, 1, 0], [], []>} : vector<8x8xbf16>, vector<16x8xbf16>, vector<8x16xf32> -> vector<8x16xf32>
    %cst_91 = arith.constant -1.000000e+30 : f32
    %200 = vector.broadcast %cst_91 : f32 to vector<8x16xf32>
    %201 = arith.select %180, %199, %200 : vector<8x16xi1>, vector<8x16xf32>
    %cst_92 = arith.constant dense<0xFF800000> : vector<8xf32>
    %202 = vector.multi_reduction <maximumf>, %201, %cst_92 [1] : vector<8x16xf32> to vector<8xf32>
    %203 = vector.shape_cast %202 : vector<8xf32> to vector<8x1xf32>
    %204 = vector.broadcast %203 : vector<8x1xf32> to vector<8x16xf32>
    %205 = arith.subf %201, %204 : vector<8x16xf32>
    %206 = math.exp %205 : vector<8x16xf32>
    %cst_93 = arith.constant dense<0.000000e+00> : vector<8xf32>
    %207 = vector.multi_reduction <add>, %206, %cst_93 [1] : vector<8x16xf32> to vector<8xf32>
    %208 = vector.shape_cast %207 : vector<8xf32> to vector<8x1xf32>
    %209 = tpu.reciprocal %208 {approx = true} : vector<8x1xf32> -> vector<8x1xf32>
    %210 = vector.broadcast %209 : vector<8x1xf32> to vector<8x16xf32>
    %211 = arith.mulf %206, %210 : vector<8x16xf32>
    %212 = arith.truncf %211 : vector<8x16xf32> to vector<8x16xbf16>
    %cst_94 = arith.constant dense<0.000000e+00> : vector<8x8xf32>
    %213 = tpu.matmul %212, %184, %cst_94 {dimension_numbers = #tpu.dot_dimension_numbers<[1], [0], [0], [1], [0, 0, 1, 1], [], []>} : vector<8x16xbf16>, vector<16x8xbf16>, vector<8x8xf32> -> vector<8x8xf32>
    %c0_95 = arith.constant 0 : index
    %c0_96 = arith.constant 0 : index
    %214 = vector.load %arg28[%c0_95, %c0_96] : memref<8x32xf32, #tpu.memory_space<vmem>>, vector<8x8xf32>
    tpu.vector_store %arg28[%c0_95, %c0_96], %213 {strides = array<i32>} : memref<8x32xf32, #tpu.memory_space<vmem>>, vector<8x8xf32>,
    %215 = vector.extract_strided_slice %173 {offsets = [0, 8], sizes = [8, 8], strides = [1, 1]} : vector<8x32xf32> to vector<8x8xf32>
    %cst_97 = arith.constant 0.353553385 : f32
    %216 = vector.broadcast %cst_97 : f32 to vector<8x8xf32>
    %217 = arith.mulf %215, %216 : vector<8x8xf32>
    %218 = arith.truncf %217 : vector<8x8xf32> to vector<8x8xbf16>
    %cst_98 = arith.constant dense<0.000000e+00> : vector<8x16xf32>
    %219 = tpu.matmul %218, %183, %cst_98 {dimension_numbers = #tpu.dot_dimension_numbers<[1], [1], [0], [0], [0, 0, 1, 0], [], []>} : vector<8x8xbf16>, vector<16x8xbf16>, vector<8x16xf32> -> vector<8x16xf32>
    %cst_99 = arith.constant -1.000000e+30 : f32
    %220 = vector.broadcast %cst_99 : f32 to vector<8x16xf32>
    %221 = arith.select %180, %219, %220 : vector<8x16xi1>, vector<8x16xf32>
    %cst_100 = arith.constant dense<0xFF800000> : vector<8xf32>
    %222 = vector.multi_reduction <maximumf>, %221, %cst_100 [1] : vector<8x16xf32> to vector<8xf32>
    %223 = vector.shape_cast %222 : vector<8xf32> to vector<8x1xf32>
    %224 = vector.broadcast %223 : vector<8x1xf32> to vector<8x16xf32>
    %225 = arith.subf %221, %224 : vector<8x16xf32>
    %226 = math.exp %225 : vector<8x16xf32>
    %cst_101 = arith.constant dense<0.000000e+00> : vector<8xf32>
    %227 = vector.multi_reduction <add>, %226, %cst_101 [1] : vector<8x16xf32> to vector<8xf32>
    %228 = vector.shape_cast %227 : vector<8xf32> to vector<8x1xf32>
    %229 = tpu.reciprocal %228 {approx = true} : vector<8x1xf32> -> vector<8x1xf32>
    %230 = vector.broadcast %229 : vector<8x1xf32> to vector<8x16xf32>
    %231 = arith.mulf %226, %230 : vector<8x16xf32>
    %232 = arith.truncf %231 : vector<8x16xf32> to vector<8x16xbf16>
    %cst_102 = arith.constant dense<0.000000e+00> : vector<8x8xf32>
    %233 = tpu.matmul %232, %184, %cst_102 {dimension_numbers = #tpu.dot_dimension_numbers<[1], [0], [0], [1], [0, 0, 1, 1], [], []>} : vector<8x16xbf16>, vector<16x8xbf16>, vector<8x8xf32> -> vector<8x8xf32>
    %c0_103 = arith.constant 0 : index
    %c8_104 = arith.constant 8 : index
    %234 = vector.load %arg28[%c0_103, %c8_104] : memref<8x32xf32, #tpu.memory_space<vmem>>, vector<8x8xf32>
    tpu.vector_store %arg28[%c0_103, %c8_104], %233 {strides = array<i32>} : memref<8x32xf32, #tpu.memory_space<vmem>>, vector<8x8xf32>,
    %235 = vector.extract_strided_slice %176 {offsets = [0, 8], sizes = [16, 8], strides = [1, 1]} : vector<16x32xf32> to vector<16x8xf32>
    %236 = vector.extract_strided_slice %176 {offsets = [0, 24], sizes = [16, 8], strides = [1, 1]} : vector<16x32xf32> to vector<16x8xf32>
    %237 = arith.truncf %235 : vector<16x8xf32> to vector<16x8xbf16>
    %238 = arith.truncf %236 : vector<16x8xf32> to vector<16x8xbf16>
    %cst_105 = arith.constant 0.000000e+00 : f32
    %239 = vector.broadcast %cst_105 : f32 to vector<16x8xf32>
    %240 = arith.cmpf ogt, %235, %239 : vector<16x8xf32>
    %cst_106 = arith.constant 1.000000e+00 : f32
    %241 = vector.broadcast %cst_106 : f32 to vector<16x8xf32>
    %242 = arith.addf %235, %241 : vector<16x8xf32>
    %243 = math.exp %235 : vector<16x8xf32>
    %244 = arith.select %240, %242, %243 : vector<16x8xi1>, vector<16x8xf32>
    %245 = arith.truncf %244 : vector<16x8xf32> to vector<16x8xbf16>
    %cst_107 = arith.constant dense<0.000000e+00> : vector<8x8xf32>
    %246 = tpu.matmul %245, %238, %cst_107 {dimension_numbers = #tpu.dot_dimension_numbers<[0], [0], [1], [1], [0, 1, 1, 1], [], []>} : vector<16x8xbf16>, vector<16x8xbf16>, vector<8x8xf32> -> vector<8x8xf32>
    %cst_108 = arith.constant dense<0.000000e+00> : vector<8xf32>
    %247 = vector.multi_reduction <add>, %244, %cst_108 [0] : vector<16x8xf32> to vector<8xf32>
    %248 = vector.shape_cast %247 : vector<8xf32> to vector<1x8xf32>
    %249 = vector.extract_strided_slice %173 {offsets = [0, 16], sizes = [8, 8], strides = [1, 1]} : vector<8x32xf32> to vector<8x8xf32>
    %cst_109 = arith.constant 0.353553385 : f32
    %250 = vector.broadcast %cst_109 : f32 to vector<8x8xf32>
    %251 = arith.mulf %249, %250 : vector<8x8xf32>
    %252 = arith.truncf %251 : vector<8x8xf32> to vector<8x8xbf16>
    %cst_110 = arith.constant dense<0.000000e+00> : vector<8x16xf32>
    %253 = tpu.matmul %252, %237, %cst_110 {dimension_numbers = #tpu.dot_dimension_numbers<[1], [1], [0], [0], [0, 0, 1, 0], [], []>} : vector<8x8xbf16>, vector<16x8xbf16>, vector<8x16xf32> -> vector<8x16xf32>
    %cst_111 = arith.constant -1.000000e+30 : f32
    %254 = vector.broadcast %cst_111 : f32 to vector<8x16xf32>
    %255 = arith.select %180, %253, %254 : vector<8x16xi1>, vector<8x16xf32>
    %cst_112 = arith.constant dense<0xFF800000> : vector<8xf32>
    %256 = vector.multi_reduction <maximumf>, %255, %cst_112 [1] : vector<8x16xf32> to vector<8xf32>
    %257 = vector.shape_cast %256 : vector<8xf32> to vector<8x1xf32>
    %258 = vector.broadcast %257 : vector<8x1xf32> to vector<8x16xf32>
    %259 = arith.subf %255, %258 : vector<8x16xf32>
    %260 = math.exp %259 : vector<8x16xf32>
    %cst_113 = arith.constant dense<0.000000e+00> : vector<8xf32>
    %261 = vector.multi_reduction <add>, %260, %cst_113 [1] : vector<8x16xf32> to vector<8xf32>
    %262 = vector.shape_cast %261 : vector<8xf32> to vector<8x1xf32>
    %263 = tpu.reciprocal %262 {approx = true} : vector<8x1xf32> -> vector<8x1xf32>
    %264 = vector.broadcast %263 : vector<8x1xf32> to vector<8x16xf32>
    %265 = arith.mulf %260, %264 : vector<8x16xf32>
    %266 = arith.truncf %265 : vector<8x16xf32> to vector<8x16xbf16>
    %cst_114 = arith.constant dense<0.000000e+00> : vector<8x8xf32>
    %267 = tpu.matmul %266, %238, %cst_114 {dimension_numbers = #tpu.dot_dimension_numbers<[1], [0], [0], [1], [0, 0, 1, 1], [], []>} : vector<8x16xbf16>, vector<16x8xbf16>, vector<8x8xf32> -> vector<8x8xf32>
    %c0_115 = arith.constant 0 : index
    %c16_116 = arith.constant 16 : index
    %268 = vector.load %arg28[%c0_115, %c16_116] : memref<8x32xf32, #tpu.memory_space<vmem>>, vector<8x8xf32>
    tpu.vector_store %arg28[%c0_115, %c16_116], %267 {strides = array<i32>} : memref<8x32xf32, #tpu.memory_space<vmem>>, vector<8x8xf32>,
    %269 = vector.extract_strided_slice %173 {offsets = [0, 24], sizes = [8, 8], strides = [1, 1]} : vector<8x32xf32> to vector<8x8xf32>
    %cst_117 = arith.constant 0.353553385 : f32
    %270 = vector.broadcast %cst_117 : f32 to vector<8x8xf32>
    %271 = arith.mulf %269, %270 : vector<8x8xf32>
    %272 = arith.truncf %271 : vector<8x8xf32> to vector<8x8xbf16>
    %cst_118 = arith.constant dense<0.000000e+00> : vector<8x16xf32>
    %273 = tpu.matmul %272, %237, %cst_118 {dimension_numbers = #tpu.dot_dimension_numbers<[1], [1], [0], [0], [0, 0, 1, 0], [], []>} : vector<8x8xbf16>, vector<16x8xbf16>, vector<8x16xf32> -> vector<8x16xf32>
    %cst_119 = arith.constant -1.000000e+30 : f32
    %274 = vector.broadcast %cst_119 : f32 to vector<8x16xf32>
    %275 = arith.select %180, %273, %274 : vector<8x16xi1>, vector<8x16xf32>
    %cst_120 = arith.constant dense<0xFF800000> : vector<8xf32>
    %276 = vector.multi_reduction <maximumf>, %275, %cst_120 [1] : vector<8x16xf32> to vector<8xf32>
    %277 = vector.shape_cast %276 : vector<8xf32> to vector<8x1xf32>
    %278 = vector.broadcast %277 : vector<8x1xf32> to vector<8x16xf32>
    %279 = arith.subf %275, %278 : vector<8x16xf32>
    %280 = math.exp %279 : vector<8x16xf32>
    %cst_121 = arith.constant dense<0.000000e+00> : vector<8xf32>
    %281 = vector.multi_reduction <add>, %280, %cst_121 [1] : vector<8x16xf32> to vector<8xf32>
    %282 = vector.shape_cast %281 : vector<8xf32> to vector<8x1xf32>
    %283 = tpu.reciprocal %282 {approx = true} : vector<8x1xf32> -> vector<8x1xf32>
    %284 = vector.broadcast %283 : vector<8x1xf32> to vector<8x16xf32>
    %285 = arith.mulf %280, %284 : vector<8x16xf32>
    %286 = arith.truncf %285 : vector<8x16xf32> to vector<8x16xbf16>
    %cst_122 = arith.constant dense<0.000000e+00> : vector<8x8xf32>
    %287 = tpu.matmul %286, %238, %cst_122 {dimension_numbers = #tpu.dot_dimension_numbers<[1], [0], [0], [1], [0, 0, 1, 1], [], []>} : vector<8x16xbf16>, vector<16x8xbf16>, vector<8x8xf32> -> vector<8x8xf32>
    %c0_123 = arith.constant 0 : index
    %c24_124 = arith.constant 24 : index
    %288 = vector.load %arg28[%c0_123, %c24_124] : memref<8x32xf32, #tpu.memory_space<vmem>>, vector<8x8xf32>
    tpu.vector_store %arg28[%c0_123, %c24_124], %287 {strides = array<i32>} : memref<8x32xf32, #tpu.memory_space<vmem>>, vector<8x8xf32>,
    %289 = tpu.concatenate %192, %246 in 1 : vector<8x8xf32>, vector<8x8xf32> -> vector<8x16xf32>
    %c0_125 = arith.constant 0 : index
    %c0_126 = arith.constant 0 : index
    %c0_127 = arith.constant 0 : index
    %290 = vector.load %arg26[%c0_125, %c0_126, %c0_127] : memref<1x8x16xf32, #tpu.memory_space<vmem>>, vector<1x8x16xf32>
    %291 = vector.shape_cast %290 : vector<1x8x16xf32> to vector<8x16xf32>
    %292 = vector.shape_cast %289 : vector<8x16xf32> to vector<1x8x16xf32>
    tpu.vector_store %arg26[%c0_125, %c0_126, %c0_127], %292 {strides = array<i32>} : memref<1x8x16xf32, #tpu.memory_space<vmem>>, vector<1x8x16xf32>,
    %293 = tpu.concatenate %194, %248 in 1 : vector<1x8xf32>, vector<1x8xf32> -> vector<1x16xf32>
    %c0_128 = arith.constant 0 : index
    %c0_129 = arith.constant 0 : index
    %c0_130 = arith.constant 0 : index
    %294 = vector.load %arg27[%c0_128, %c0_129, %c0_130] : memref<1x1x16xf32, #tpu.memory_space<vmem>>, vector<1x1x16xf32>
    %295 = vector.shape_cast %294 : vector<1x1x16xf32> to vector<1x16xf32>
    %296 = vector.shape_cast %293 : vector<1x16xf32> to vector<1x1x16xf32>
    tpu.vector_store %arg27[%c0_128, %c0_129, %c0_130], %296 {strides = array<i32>} : memref<1x1x16xf32, #tpu.memory_space<vmem>>, vector<1x1x16xf32>,
    %c0_131 = arith.constant 0 : index
    %c0_132 = arith.constant 0 : index
    %297 = vector.load %arg28[%c0_131, %c0_132] : memref<8x32xf32, #tpu.memory_space<vmem>>, vector<8x32xf32>
    %298 = vector.broadcast %170 : vector<1x32xf32> to vector<8x32xf32>
    %299 = arith.mulf %297, %298 : vector<8x32xf32>
    %300 = arith.truncf %299 : vector<8x32xf32> to vector<8x32xbf16>
    %c0_133 = arith.constant 0 : index
    %c0_134 = arith.constant 0 : index
    %301 = vector.load %arg14[%c0_133, %c0_134] : memref<32x32xbf16, #tpu.memory_space<vmem>>, vector<32x32xbf16>
    %cst_135 = arith.constant dense<0.000000e+00> : vector<8x32xf32>
    %302 = tpu.matmul %300, %301, %cst_135 {dimension_numbers = #tpu.dot_dimension_numbers<[1], [0], [0], [1], [0, 0, 1, 1], [], []>} : vector<8x32xbf16>, vector<32x32xbf16>, vector<8x32xf32> -> vector<8x32xf32>
    %303 = arith.addf %167, %302 : vector<8x32xf32>
    %c0_136 = arith.constant 0 : index
    %c0_137 = arith.constant 0 : index
    %304 = vector.load %arg15[%c0_136, %c0_137] : memref<1x32xf32, #tpu.memory_space<vmem>>, vector<1x32xf32>
    %c0_138 = arith.constant 0 : index
    %c0_139 = arith.constant 0 : index
    %305 = vector.load %arg16[%c0_138, %c0_139] : memref<1x32xf32, #tpu.memory_space<vmem>>, vector<1x32xf32>
    %cst_140 = arith.constant dense<0.000000e+00> : vector<8xf32>
    %306 = vector.multi_reduction <add>, %303, %cst_140 [1] : vector<8x32xf32> to vector<8xf32>
    %307 = vector.shape_cast %306 : vector<8xf32> to vector<8x1xf32>
    %cst_141 = arith.constant 3.200000e+01 : f32
    %308 = vector.broadcast %cst_141 : f32 to vector<8x1xf32>
    %309 = arith.divf %307, %308 : vector<8x1xf32>
    %310 = vector.broadcast %309 : vector<8x1xf32> to vector<8x32xf32>
    %311 = arith.subf %303, %310 : vector<8x32xf32>
    %312 = arith.mulf %311, %311 : vector<8x32xf32>
    %cst_142 = arith.constant dense<0.000000e+00> : vector<8xf32>
    %313 = vector.multi_reduction <add>, %312, %cst_142 [1] : vector<8x32xf32> to vector<8xf32>
    %314 = vector.shape_cast %313 : vector<8xf32> to vector<8x1xf32>
    %cst_143 = arith.constant 3.200000e+01 : f32
    %315 = vector.broadcast %cst_143 : f32 to vector<8x1xf32>
    %316 = arith.divf %314, %315 : vector<8x1xf32>
    %317 = vector.broadcast %309 : vector<8x1xf32> to vector<8x32xf32>
    %318 = arith.subf %303, %317 : vector<8x32xf32>
    %cst_144 = arith.constant 9.99999974E-6 : f32
    %319 = vector.broadcast %cst_144 : f32 to vector<8x1xf32>
    %320 = arith.addf %316, %319 : vector<8x1xf32>
    %321 = math.rsqrt %320 : vector<8x1xf32>
    %322 = vector.broadcast %321 : vector<8x1xf32> to vector<8x32xf32>
    %323 = arith.mulf %318, %322 : vector<8x32xf32>
    %324 = vector.broadcast %304 : vector<1x32xf32> to vector<8x32xf32>
    %325 = arith.mulf %323, %324 : vector<8x32xf32>
    %326 = vector.broadcast %305 : vector<1x32xf32> to vector<8x32xf32>
    %327 = arith.addf %325, %326 : vector<8x32xf32>
    %328 = arith.truncf %327 : vector<8x32xf32> to vector<8x32xbf16>
    %c0_145 = arith.constant 0 : index
    %c0_146 = arith.constant 0 : index
    %329 = vector.load %arg17[%c0_145, %c0_146] : memref<32x64xbf16, #tpu.memory_space<vmem>>, vector<32x64xbf16>
    %cst_147 = arith.constant dense<0.000000e+00> : vector<8x64xf32>
    %330 = tpu.matmul %328, %329, %cst_147 {dimension_numbers = #tpu.dot_dimension_numbers<[1], [0], [0], [1], [0, 0, 1, 1], [], []>} : vector<8x32xbf16>, vector<32x64xbf16>, vector<8x64xf32> -> vector<8x64xf32>
    %c0_148 = arith.constant 0 : index
    %c0_149 = arith.constant 0 : index
    %331 = vector.load %arg18[%c0_148, %c0_149] : memref<1x64xf32, #tpu.memory_space<vmem>>, vector<1x64xf32>
    %332 = vector.broadcast %331 : vector<1x64xf32> to vector<8x64xf32>
    %333 = arith.addf %330, %332 : vector<8x64xf32>
    %cst_150 = arith.constant 0.000000e+00 : f32
    %334 = vector.broadcast %cst_150 : f32 to vector<8x64xf32>
    %335 = arith.maximumf %333, %334 : vector<8x64xf32>
    %336 = arith.truncf %335 : vector<8x64xf32> to vector<8x64xbf16>
    %c0_151 = arith.constant 0 : index
    %c0_152 = arith.constant 0 : index
    %337 = vector.load %arg19[%c0_151, %c0_152] : memref<64x32xbf16, #tpu.memory_space<vmem>>, vector<64x32xbf16>
    %cst_153 = arith.constant dense<0.000000e+00> : vector<8x32xf32>
    %338 = tpu.matmul %336, %337, %cst_153 {dimension_numbers = #tpu.dot_dimension_numbers<[1], [0], [0], [1], [0, 0, 1, 1], [], []>} : vector<8x64xbf16>, vector<64x32xbf16>, vector<8x32xf32> -> vector<8x32xf32>
    %c0_154 = arith.constant 0 : index
    %c0_155 = arith.constant 0 : index
    %339 = vector.load %arg20[%c0_154, %c0_155] : memref<1x32xf32, #tpu.memory_space<vmem>>, vector<1x32xf32>
    %340 = vector.broadcast %339 : vector<1x32xf32> to vector<8x32xf32>
    %341 = arith.addf %338, %340 : vector<8x32xf32>
    %342 = arith.addf %327, %341 : vector<8x32xf32>
    %c0_156 = arith.constant 0 : index
    %c0_157 = arith.constant 0 : index
    %343 = vector.load %arg21[%c0_156, %c0_157] : memref<1x32xf32, #tpu.memory_space<vmem>>, vector<1x32xf32>
    %c0_158 = arith.constant 0 : index
    %c0_159 = arith.constant 0 : index
    %344 = vector.load %arg22[%c0_158, %c0_159] : memref<1x32xf32, #tpu.memory_space<vmem>>, vector<1x32xf32>
    %cst_160 = arith.constant dense<0.000000e+00> : vector<8xf32>
    %345 = vector.multi_reduction <add>, %342, %cst_160 [1] : vector<8x32xf32> to vector<8xf32>
    %346 = vector.shape_cast %345 : vector<8xf32> to vector<8x1xf32>
    %cst_161 = arith.constant 3.200000e+01 : f32
    %347 = vector.broadcast %cst_161 : f32 to vector<8x1xf32>
    %348 = arith.divf %346, %347 : vector<8x1xf32>
    %349 = vector.broadcast %348 : vector<8x1xf32> to vector<8x32xf32>
    %350 = arith.subf %342, %349 : vector<8x32xf32>
    %351 = arith.mulf %350, %350 : vector<8x32xf32>
    %cst_162 = arith.constant dense<0.000000e+00> : vector<8xf32>
    %352 = vector.multi_reduction <add>, %351, %cst_162 [1] : vector<8x32xf32> to vector<8xf32>
    %353 = vector.shape_cast %352 : vector<8xf32> to vector<8x1xf32>
    %cst_163 = arith.constant 3.200000e+01 : f32
    %354 = vector.broadcast %cst_163 : f32 to vector<8x1xf32>
    %355 = arith.divf %353, %354 : vector<8x1xf32>
    %356 = vector.broadcast %348 : vector<8x1xf32> to vector<8x32xf32>
    %357 = arith.subf %342, %356 : vector<8x32xf32>
    %cst_164 = arith.constant 9.99999974E-6 : f32
    %358 = vector.broadcast %cst_164 : f32 to vector<8x1xf32>
    %359 = arith.addf %355, %358 : vector<8x1xf32>
    %360 = math.rsqrt %359 : vector<8x1xf32>
    %361 = vector.broadcast %360 : vector<8x1xf32> to vector<8x32xf32>
    %362 = arith.mulf %357, %361 : vector<8x32xf32>
    %363 = vector.broadcast %343 : vector<1x32xf32> to vector<8x32xf32>
    %364 = arith.mulf %362, %363 : vector<8x32xf32>
    %365 = vector.broadcast %344 : vector<1x32xf32> to vector<8x32xf32>
    %366 = arith.addf %364, %365 : vector<8x32xf32>
    %c0_165 = arith.constant 0 : index
    %c0_166 = arith.constant 0 : index
    %c0_167 = arith.constant 0 : index
    %367 = vector.load %arg23[%c0_165, %c0_166, %c0_167] : memref<1x8x32xf32, #tpu.memory_space<vmem>>, vector<1x8x32xf32>
    %368 = vector.shape_cast %367 : vector<1x8x32xf32> to vector<8x32xf32>
    %369 = vector.shape_cast %366 : vector<8x32xf32> to vector<1x8x32xf32>
    tpu.vector_store %arg23[%c0_165, %c0_166, %c0_167], %369 {strides = array<i32>} : memref<1x8x32xf32, #tpu.memory_space<vmem>>, vector<1x8x32xf32>,
    return
  }
  func.func @transform_0(%arg0: i32) -> (i32, i32, i32) {
    %c0_i32 = arith.constant 0 : i32
    %c0_i32_0 = arith.constant 0 : i32
    %c0_i32_1 = arith.constant 0 : i32
    return %arg0, %c0_i32, %c0_i32_0 : i32, i32, i32
  }
  func.func @transform_1(%arg0: i32) -> (i32, i32, i32) {
    %c0_i32 = arith.constant 0 : i32
    %c0_i32_0 = arith.constant 0 : i32
    %c0_i32_1 = arith.constant 0 : i32
    return %arg0, %c0_i32, %c0_i32_0 : i32, i32, i32
  }
  func.func @transform_2(%arg0: i32) -> (i32, i32) {
    %c0_i32 = arith.constant 0 : i32
    %c0_i32_0 = arith.constant 0 : i32
    %c0_i32_1 = arith.constant 0 : i32
    return %c0_i32, %c0_i32_0 : i32, i32
  }
  func.func @transform_3(%arg0: i32) -> (i32, i32) {
    %c0_i32 = arith.constant 0 : i32
    %c0_i32_0 = arith.constant 0 : i32
    %c0_i32_1 = arith.constant 0 : i32
    return %c0_i32, %c0_i32_0 : i32, i32
  }
  func.func @transform_4(%arg0: i32) -> (i32, i32, i32) {
    %c0_i32 = arith.constant 0 : i32
    %c0_i32_0 = arith.constant 0 : i32
    %c0_i32_1 = arith.constant 0 : i32
    return %arg0, %c0_i32, %c0_i32_0 : i32, i32, i32
  }
  func.func @transform_5(%arg0: i32) -> (i32, i32, i32) {
    %c0_i32 = arith.constant 0 : i32
    %c0_i32_0 = arith.constant 0 : i32
    %c0_i32_1 = arith.constant 0 : i32
    return %arg0, %c0_i32, %c0_i32_0 : i32, i32, i32
  }
  func.func @transform_6(%arg0: i32) -> (i32, i32) {
    %c0_i32 = arith.constant 0 : i32
    %c0_i32_0 = arith.constant 0 : i32
    %c0_i32_1 = arith.constant 0 : i32
    return %c0_i32, %c0_i32_0 : i32, i32
  }
  func.func @transform_7(%arg0: i32) -> (i32, i32) {
    %c0_i32 = arith.constant 0 : i32
    %c0_i32_0 = arith.constant 0 : i32
    %c0_i32_1 = arith.constant 0 : i32
    return %c0_i32, %c0_i32_0 : i32, i32
  }
  func.func @transform_8(%arg0: i32) -> (i32, i32) {
    %c0_i32 = arith.constant 0 : i32
    %c0_i32_0 = arith.constant 0 : i32
    %c0_i32_1 = arith.constant 0 : i32
    return %c0_i32, %c0_i32_0 : i32, i32
  }
  func.func @transform_9(%arg0: i32) -> (i32, i32) {
    %c0_i32 = arith.constant 0 : i32
    %c0_i32_0 = arith.constant 0 : i32
    %c0_i32_1 = arith.constant 0 : i32
    return %c0_i32, %c0_i32_0 : i32, i32
  }
  func.func @transform_10(%arg0: i32) -> (i32, i32) {
    %c0_i32 = arith.constant 0 : i32
    %c0_i32_0 = arith.constant 0 : i32
    %c0_i32_1 = arith.constant 0 : i32
    return %c0_i32, %c0_i32_0 : i32, i32
  }
  func.func @transform_11(%arg0: i32) -> (i32, i32) {
    %c0_i32 = arith.constant 0 : i32
    %c0_i32_0 = arith.constant 0 : i32
    %c0_i32_1 = arith.constant 0 : i32
    return %c0_i32, %c0_i32_0 : i32, i32
  }
  func.func @transform_12(%arg0: i32) -> (i32, i32) {
    %c0_i32 = arith.constant 0 : i32
    %c0_i32_0 = arith.constant 0 : i32
    %c0_i32_1 = arith.constant 0 : i32
    return %c0_i32, %c0_i32_0 : i32, i32
  }
  func.func @transform_13(%arg0: i32) -> (i32, i32) {
    %c0_i32 = arith.constant 0 : i32
    %c0_i32_0 = arith.constant 0 : i32
    %c0_i32_1 = arith.constant 0 : i32
    return %c0_i32, %c0_i32_0 : i32, i32
  }
  func.func @transform_14(%arg0: i32) -> (i32, i32) {
    %c0_i32 = arith.constant 0 : i32
    %c0_i32_0 = arith.constant 0 : i32
    %c0_i32_1 = arith.constant 0 : i32
    return %c0_i32, %c0_i32_0 : i32, i32
  }
  func.func @transform_15(%arg0: i32) -> (i32, i32) {
    %c0_i32 = arith.constant 0 : i32
    %c0_i32_0 = arith.constant 0 : i32
    %c0_i32_1 = arith.constant 0 : i32
    return %c0_i32, %c0_i32_0 : i32, i32
  }
  func.func @transform_16(%arg0: i32) -> (i32, i32) {
    %c0_i32 = arith.constant 0 : i32
    %c0_i32_0 = arith.constant 0 : i32
    %c0_i32_1 = arith.constant 0 : i32
    return %c0_i32, %c0_i32_0 : i32, i32
  }
  func.func @transform_17(%arg0: i32) -> (i32, i32) {
    %c0_i32 = arith.constant 0 : i32
    %c0_i32_0 = arith.constant 0 : i32
    %c0_i32_1 = arith.constant 0 : i32
    return %c0_i32, %c0_i32_0 : i32, i32
  }
  func.func @transform_18(%arg0: i32) -> (i32, i32) {
    %c0_i32 = arith.constant 0 : i32
    %c0_i32_0 = arith.constant 0 : i32
    %c0_i32_1 = arith.constant 0 : i32
    return %c0_i32, %c0_i32_0 : i32, i32
  }
  func.func @transform_19(%arg0: i32) -> (i32, i32) {
    %c0_i32 = arith.constant 0 : i32
    %c0_i32_0 = arith.constant 0 : i32
    %c0_i32_1 = arith.constant 0 : i32
    return %c0_i32, %c0_i32_0 : i32, i32
  }
  func.func @transform_20(%arg0: i32) -> (i32, i32) {
    %c0_i32 = arith.constant 0 : i32
    %c0_i32_0 = arith.constant 0 : i32
    %c0_i32_1 = arith.constant 0 : i32
    return %c0_i32, %c0_i32_0 : i32, i32
  }
  func.func @transform_21(%arg0: i32) -> (i32, i32) {
    %c0_i32 = arith.constant 0 : i32
    %c0_i32_0 = arith.constant 0 : i32
    %c0_i32_1 = arith.constant 0 : i32
    return %c0_i32, %c0_i32_0 : i32, i32
  }
  func.func @transform_22(%arg0: i32) -> (i32, i32, i32) {
    %c0_i32 = arith.constant 0 : i32
    %c0_i32_0 = arith.constant 0 : i32
    %c0_i32_1 = arith.constant 0 : i32
    return %arg0, %c0_i32, %c0_i32_0 : i32, i32, i32
  }
  func.func @transform_23(%arg0: i32) -> (i32, i32, i32) {
    %c0_i32 = arith.constant 0 : i32
    %c0_i32_0 = arith.constant 0 : i32
    %c0_i32_1 = arith.constant 0 : i32
    return %arg0, %c0_i32, %c0_i32_0 : i32, i32, i32
  }
  func.func @transform_24(%arg0: i32) -> (i32, i32, i32) {
    %c0_i32 = arith.constant 0 : i32
    %c0_i32_0 = arith.constant 0 : i32
    %c0_i32_1 = arith.constant 0 : i32
    return %arg0, %c0_i32, %c0_i32_0 : i32, i32, i32
  }
  func.func @transform_25(%arg0: i32) -> (i32, i32, i32) {
    %c0_i32 = arith.constant 0 : i32
    %c0_i32_0 = arith.constant 0 : i32
    %c0_i32_1 = arith.constant 0 : i32
    return %arg0, %c0_i32, %c0_i32_0 : i32, i32, i32
  }
  func.func @transform_26(%arg0: i32) -> (i32, i32, i32) {
    %c0_i32 = arith.constant 0 : i32
    %c0_i32_0 = arith.constant 0 : i32
    %c0_i32_1 = arith.constant 0 : i32
    return %arg0, %c0_i32, %c0_i32_0 : i32, i32, i32
  }
}

module attributes {stable_mosaic.version = 11 : i64} {
  func.func @kernel(%arg0: i32, %arg1: memref<1x1x8xf32, #tpu.memory_space<vmem>>, %arg2: memref<1x1x16xf32, #tpu.memory_space<vmem>>, %arg3: memref<1x32xf32, #tpu.memory_space<vmem>>, %arg4: memref<1x32xf32, #tpu.memory_space<vmem>>, %arg5: memref<1x8x32xf32, #tpu.memory_space<vmem>>, %arg6: memref<1x16x32xf32, #tpu.memory_space<vmem>>, %arg7: memref<32x32xbf16, #tpu.memory_space<vmem>>, %arg8: memref<32x32xbf16, #tpu.memory_space<vmem>>, %arg9: memref<32x32xbf16, #tpu.memory_space<vmem>>, %arg10: memref<1x32xf32, #tpu.memory_space<vmem>>, %arg11: memref<1x32xf32, #tpu.memory_space<vmem>>, %arg12: memref<32x32xbf16, #tpu.memory_space<vmem>>, %arg13: memref<32x32xbf16, #tpu.memory_space<vmem>>, %arg14: memref<32x32xbf16, #tpu.memory_space<vmem>>, %arg15: memref<1x32xf32, #tpu.memory_space<vmem>>, %arg16: memref<1x32xf32, #tpu.memory_space<vmem>>, %arg17: memref<32x64xbf16, #tpu.memory_space<vmem>>, %arg18: memref<1x64xf32, #tpu.memory_space<vmem>>, %arg19: memref<64x32xbf16, #tpu.memory_space<vmem>>, %arg20: memref<1x32xf32, #tpu.memory_space<vmem>>, %arg21: memref<1x32xf32, #tpu.memory_space<vmem>>, %arg22: memref<1x32xf32, #tpu.memory_space<vmem>>, %arg23: memref<1x8x32xf32, #tpu.memory_space<vmem>>, %arg24: memref<1x8x16xf32, #tpu.memory_space<vmem>>, %arg25: memref<1x1x16xf32, #tpu.memory_space<vmem>>, %arg26: memref<1x8x16xf32, #tpu.memory_space<vmem>>, %arg27: memref<1x1x16xf32, #tpu.memory_space<vmem>>, %arg28: memref<8x32xf32, #tpu.memory_space<vmem>>) attributes {dimension_semantics = [#tpu.dimension_semantics<parallel>], iteration_bounds = array<i64: 2>, scalar_prefetch = 0 : i64, scratch_operands = 1 : i64, tpu.core_type = #tpu.core_type<tc>, window_params = [{transform_indices = @transform_0, window_bounds = array<i64: 1, 1, 8>}, {transform_indices = @transform_1, window_bounds = array<i64: 1, 1, 16>}, {pipeline_mode = #tpu.pipeline_mode<synchronous>, transform_indices = @transform_2, window_bounds = array<i64: 1, 32>}, {pipeline_mode = #tpu.pipeline_mode<synchronous>, transform_indices = @transform_3, window_bounds = array<i64: 1, 32>}, {transform_indices = @transform_4, window_bounds = array<i64: 1, 8, 32>}, {transform_indices = @transform_5, window_bounds = array<i64: 1, 16, 32>}, {pipeline_mode = #tpu.pipeline_mode<synchronous>, transform_indices = @transform_6, window_bounds = array<i64: 32, 32>}, {pipeline_mode = #tpu.pipeline_mode<synchronous>, transform_indices = @transform_7, window_bounds = array<i64: 32, 32>}, {pipeline_mode = #tpu.pipeline_mode<synchronous>, transform_indices = @transform_8, window_bounds = array<i64: 32, 32>}, {pipeline_mode = #tpu.pipeline_mode<synchronous>, transform_indices = @transform_9, window_bounds = array<i64: 1, 32>}, {pipeline_mode = #tpu.pipeline_mode<synchronous>, transform_indices = @transform_10, window_bounds = array<i64: 1, 32>}, {pipeline_mode = #tpu.pipeline_mode<synchronous>, transform_indices = @transform_11, window_bounds = array<i64: 32, 32>}, {pipeline_mode = #tpu.pipeline_mode<synchronous>, transform_indices = @transform_12, window_bounds = array<i64: 32, 32>}, {pipeline_mode = #tpu.pipeline_mode<synchronous>, transform_indices = @transform_13, window_bounds = array<i64: 32, 32>}, {pipeline_mode = #tpu.pipeline_mode<synchronous>, transform_indices = @transform_14, window_bounds = array<i64: 1, 32>}, {pipeline_mode = #tpu.pipeline_mode<synchronous>, transform_indices = @transform_15, window_bounds = array<i64: 1, 32>}, {pipeline_mode = #tpu.pipeline_mode<synchronous>, transform_indices = @transform_16, window_bounds = array<i64: 32, 64>}, {pipeline_mode = #tpu.pipeline_mode<synchronous>, transform_indices = @transform_17, window_bounds = array<i64: 1, 64>}, {pipeline_mode = #tpu.pipeline_mode<synchronous>, transform_indices = @transform_18, window_bounds = array<i64: 64, 32>}, {pipeline_mode = #tpu.pipeline_mode<synchronous>, transform_indices = @transform_19, window_bounds = array<i64: 1, 32>}, {pipeline_mode = #tpu.pipeline_mode<synchronous>, transform_indices = @transform_20, window_bounds = array<i64: 1, 32>}, {pipeline_mode = #tpu.pipeline_mode<synchronous>, transform_indices = @transform_21, window_bounds = array<i64: 1, 32>}, {transform_indices = @transform_22, window_bounds = array<i64: 1, 8, 32>}, {transform_indices = @transform_23, window_bounds = array<i64: 1, 8, 16>}, {transform_indices = @transform_24, window_bounds = array<i64: 1, 1, 16>}, {transform_indices = @transform_25, window_bounds = array<i64: 1, 8, 16>}, {transform_indices = @transform_26, window_bounds = array<i64: 1, 1, 16>}]} {
    %c0 = arith.constant 0 : index
    %c0_0 = arith.constant 0 : index
    %c0_1 = arith.constant 0 : index
    %0 = vector.load %arg5[%c0, %c0_0, %c0_1] : memref<1x8x32xf32, #tpu.memory_space<vmem>>, vector<1x8x32xf32>
    %1 = vector.shape_cast %0 : vector<1x8x32xf32> to vector<8x32xf32>
    %c0_2 = arith.constant 0 : index
    %c0_3 = arith.constant 0 : index
    %c0_4 = arith.constant 0 : index
    %2 = vector.load %arg6[%c0_2, %c0_3, %c0_4] : memref<1x16x32xf32, #tpu.memory_space<vmem>>, vector<1x16x32xf32>
    %3 = vector.shape_cast %2 : vector<1x16x32xf32> to vector<16x32xf32>
    %c0_5 = arith.constant 0 : index
    %c0_6 = arith.constant 0 : index
    %c0_7 = arith.constant 0 : index
    %4 = vector.load %arg1[%c0_5, %c0_6, %c0_7] : memref<1x1x8xf32, #tpu.memory_space<vmem>>, vector<1x1x8xf32>
    %5 = vector.shape_cast %4 : vector<1x1x8xf32> to vector<1x8xf32>
    %c0_8 = arith.constant 0 : index
    %c0_9 = arith.constant 0 : index
    %6 = vector.load %arg3[%c0_8, %c0_9] : memref<1x32xf32, #tpu.memory_space<vmem>>, vector<1x32xf32>
    %7 = arith.truncf %1 : vector<8x32xf32> to vector<8x32xbf16>
    %c0_10 = arith.constant 0 : index
    %c0_11 = arith.constant 0 : index
    %8 = vector.load %arg7[%c0_10, %c0_11] : memref<32x32xbf16, #tpu.memory_space<vmem>>, vector<32x32xbf16>
    %cst = arith.constant dense<0.000000e+00> : vector<8x32xf32>
    %9 = tpu.matmul %7, %8, %cst {dimension_numbers = #tpu.dot_dimension_numbers<[1], [0], [0], [1], [0, 0, 1, 1], [], []>} : vector<8x32xbf16>, vector<32x32xbf16>, vector<8x32xf32> -> vector<8x32xf32>
    %10 = arith.truncf %1 : vector<8x32xf32> to vector<8x32xbf16>
    %c0_12 = arith.constant 0 : index
    %c0_13 = arith.constant 0 : index
    %11 = vector.load %arg8[%c0_12, %c0_13] : memref<32x32xbf16, #tpu.memory_space<vmem>>, vector<32x32xbf16>
    %cst_14 = arith.constant dense<0.000000e+00> : vector<8x32xf32>
    %12 = tpu.matmul %10, %11, %cst_14 {dimension_numbers = #tpu.dot_dimension_numbers<[1], [0], [0], [1], [0, 0, 1, 1], [], []>} : vector<8x32xbf16>, vector<32x32xbf16>, vector<8x32xf32> -> vector<8x32xf32>
    %cst_15 = arith.constant 0.000000e+00 : f32
    %13 = vector.broadcast %cst_15 : f32 to vector<1x8xf32>
    %14 = arith.cmpf ogt, %5, %13 : vector<1x8xf32>
    %15 = vector.shape_cast %14 : vector<1x8xi1> to vector<1x8xi1>
    %16 = vector.broadcast %15 : vector<1x8xi1> to vector<8x8xi1>
    %17 = tpu.iota {dimensions = array<i32: 0>} : vector<8x8xi32>
    %18 = tpu.iota {dimensions = array<i32: 1>} : vector<8x8xi32>
    %19 = arith.cmpi sle, %18, %17 : vector<8x8xi32>
    %20 = arith.andi %16, %19 : vector<8x8xi1>
    %21 = vector.extract_strided_slice %12 {offsets = [0, 0], sizes = [8, 8], strides = [1, 1]} : vector<8x32xf32> to vector<8x8xf32>
    %22 = vector.extract_strided_slice %12 {offsets = [0, 16], sizes = [8, 8], strides = [1, 1]} : vector<8x32xf32> to vector<8x8xf32>
    %23 = arith.truncf %21 : vector<8x8xf32> to vector<8x8xbf16>
    %24 = arith.truncf %22 : vector<8x8xf32> to vector<8x8xbf16>
    %cst_16 = arith.constant 0.000000e+00 : f32
    %25 = vector.broadcast %cst_16 : f32 to vector<8x8xf32>
    %26 = arith.cmpf ogt, %21, %25 : vector<8x8xf32>
    %cst_17 = arith.constant 1.000000e+00 : f32
    %27 = vector.broadcast %cst_17 : f32 to vector<8x8xf32>
    %28 = arith.addf %21, %27 : vector<8x8xf32>
    %29 = math.exp %21 : vector<8x8xf32>
    %30 = arith.select %26, %28, %29 : vector<8x8xi1>, vector<8x8xf32>
    %31 = arith.truncf %30 : vector<8x8xf32> to vector<8x8xbf16>
    %cst_18 = arith.constant dense<0.000000e+00> : vector<8x8xf32>
    %32 = tpu.matmul %31, %24, %cst_18 {dimension_numbers = #tpu.dot_dimension_numbers<[0], [0], [1], [1], [0, 1, 1, 1], [], []>} : vector<8x8xbf16>, vector<8x8xbf16>, vector<8x8xf32> -> vector<8x8xf32>
    %cst_19 = arith.constant dense<0.000000e+00> : vector<8xf32>
    %33 = vector.multi_reduction <add>, %30, %cst_19 [0] : vector<8x8xf32> to vector<8xf32>
    %34 = vector.shape_cast %33 : vector<8xf32> to vector<1x8xf32>
    %35 = vector.extract_strided_slice %9 {offsets = [0, 0], sizes = [8, 8], strides = [1, 1]} : vector<8x32xf32> to vector<8x8xf32>
    %cst_20 = arith.constant 0.353553385 : f32
    %36 = vector.broadcast %cst_20 : f32 to vector<8x8xf32>
    %37 = arith.mulf %35, %36 : vector<8x8xf32>
    %38 = arith.truncf %37 : vector<8x8xf32> to vector<8x8xbf16>
    %cst_21 = arith.constant dense<0.000000e+00> : vector<8x8xf32>
    %39 = tpu.matmul %38, %23, %cst_21 {dimension_numbers = #tpu.dot_dimension_numbers<[1], [1], [0], [0], [0, 0, 1, 0], [], []>} : vector<8x8xbf16>, vector<8x8xbf16>, vector<8x8xf32> -> vector<8x8xf32>
    %cst_22 = arith.constant -1.000000e+30 : f32
    %40 = vector.broadcast %cst_22 : f32 to vector<8x8xf32>
    %41 = arith.select %20, %39, %40 : vector<8x8xi1>, vector<8x8xf32>
    %cst_23 = arith.constant dense<0xFF800000> : vector<8xf32>
    %42 = vector.multi_reduction <maximumf>, %41, %cst_23 [1] : vector<8x8xf32> to vector<8xf32>
    %43 = vector.shape_cast %42 : vector<8xf32> to vector<8x1xf32>
    %44 = vector.broadcast %43 : vector<8x1xf32> to vector<8x8xf32>
    %45 = arith.subf %41, %44 : vector<8x8xf32>
    %46 = math.exp %45 : vector<8x8xf32>
    %cst_24 = arith.constant dense<0.000000e+00> : vector<8xf32>
    %47 = vector.multi_reduction <add>, %46, %cst_24 [1] : vector<8x8xf32> to vector<8xf32>
    %48 = vector.shape_cast %47 : vector<8xf32> to vector<8x1xf32>
    %49 = tpu.reciprocal %48 {approx = true} : vector<8x1xf32> -> vector<8x1xf32>
    %50 = vector.broadcast %49 : vector<8x1xf32> to vector<8x8xf32>
    %51 = arith.mulf %46, %50 : vector<8x8xf32>
    %52 = arith.truncf %51 : vector<8x8xf32> to vector<8x8xbf16>
    %cst_25 = arith.constant dense<0.000000e+00> : vector<8x8xf32>
    %53 = tpu.matmul %52, %24, %cst_25 {dimension_numbers = #tpu.dot_dimension_numbers<[1], [0], [0], [1], [0, 0, 1, 1], [], []>} : vector<8x8xbf16>, vector<8x8xbf16>, vector<8x8xf32> -> vector<8x8xf32>
    %c0_26 = arith.constant 0 : index
    %c0_27 = arith.constant 0 : index
    %54 = vector.load %arg28[%c0_26, %c0_27] : memref<8x32xf32, #tpu.memory_space<vmem>>, vector<8x8xf32>
    tpu.vector_store %arg28[%c0_26, %c0_27], %53 {strides = array<i32>} : memref<8x32xf32, #tpu.memory_space<vmem>>, vector<8x8xf32>,
    %55 = vector.extract_strided_slice %9 {offsets = [0, 8], sizes = [8, 8], strides = [1, 1]} : vector<8x32xf32> to vector<8x8xf32>
    %cst_28 = arith.constant 0.353553385 : f32
    %56 = vector.broadcast %cst_28 : f32 to vector<8x8xf32>
    %57 = arith.mulf %55, %56 : vector<8x8xf32>
    %58 = arith.truncf %57 : vector<8x8xf32> to vector<8x8xbf16>
    %cst_29 = arith.constant dense<0.000000e+00> : vector<8x8xf32>
    %59 = tpu.matmul %58, %23, %cst_29 {dimension_numbers = #tpu.dot_dimension_numbers<[1], [1], [0], [0], [0, 0, 1, 0], [], []>} : vector<8x8xbf16>, vector<8x8xbf16>, vector<8x8xf32> -> vector<8x8xf32>
    %cst_30 = arith.constant -1.000000e+30 : f32
    %60 = vector.broadcast %cst_30 : f32 to vector<8x8xf32>
    %61 = arith.select %20, %59, %60 : vector<8x8xi1>, vector<8x8xf32>
    %cst_31 = arith.constant dense<0xFF800000> : vector<8xf32>
    %62 = vector.multi_reduction <maximumf>, %61, %cst_31 [1] : vector<8x8xf32> to vector<8xf32>
    %63 = vector.shape_cast %62 : vector<8xf32> to vector<8x1xf32>
    %64 = vector.broadcast %63 : vector<8x1xf32> to vector<8x8xf32>
    %65 = arith.subf %61, %64 : vector<8x8xf32>
    %66 = math.exp %65 : vector<8x8xf32>
    %cst_32 = arith.constant dense<0.000000e+00> : vector<8xf32>
    %67 = vector.multi_reduction <add>, %66, %cst_32 [1] : vector<8x8xf32> to vector<8xf32>
    %68 = vector.shape_cast %67 : vector<8xf32> to vector<8x1xf32>
    %69 = tpu.reciprocal %68 {approx = true} : vector<8x1xf32> -> vector<8x1xf32>
    %70 = vector.broadcast %69 : vector<8x1xf32> to vector<8x8xf32>
    %71 = arith.mulf %66, %70 : vector<8x8xf32>
    %72 = arith.truncf %71 : vector<8x8xf32> to vector<8x8xbf16>
    %cst_33 = arith.constant dense<0.000000e+00> : vector<8x8xf32>
    %73 = tpu.matmul %72, %24, %cst_33 {dimension_numbers = #tpu.dot_dimension_numbers<[1], [0], [0], [1], [0, 0, 1, 1], [], []>} : vector<8x8xbf16>, vector<8x8xbf16>, vector<8x8xf32> -> vector<8x8xf32>
    %c0_34 = arith.constant 0 : index
    %c8 = arith.constant 8 : index
    %74 = vector.load %arg28[%c0_34, %c8] : memref<8x32xf32, #tpu.memory_space<vmem>>, vector<8x8xf32>
    tpu.vector_store %arg28[%c0_34, %c8], %73 {strides = array<i32>} : memref<8x32xf32, #tpu.memory_space<vmem>>, vector<8x8xf32>,
    %75 = vector.extract_strided_slice %12 {offsets = [0, 8], sizes = [8, 8], strides = [1, 1]} : vector<8x32xf32> to vector<8x8xf32>
    %76 = vector.extract_strided_slice %12 {offsets = [0, 24], sizes = [8, 8], strides = [1, 1]} : vector<8x32xf32> to vector<8x8xf32>
    %77 = arith.truncf %75 : vector<8x8xf32> to vector<8x8xbf16>
    %78 = arith.truncf %76 : vector<8x8xf32> to vector<8x8xbf16>
    %cst_35 = arith.constant 0.000000e+00 : f32
    %79 = vector.broadcast %cst_35 : f32 to vector<8x8xf32>
    %80 = arith.cmpf ogt, %75, %79 : vector<8x8xf32>
    %cst_36 = arith.constant 1.000000e+00 : f32
    %81 = vector.broadcast %cst_36 : f32 to vector<8x8xf32>
    %82 = arith.addf %75, %81 : vector<8x8xf32>
    %83 = math.exp %75 : vector<8x8xf32>
    %84 = arith.select %80, %82, %83 : vector<8x8xi1>, vector<8x8xf32>
    %85 = arith.truncf %84 : vector<8x8xf32> to vector<8x8xbf16>
    %cst_37 = arith.constant dense<0.000000e+00> : vector<8x8xf32>
    %86 = tpu.matmul %85, %78, %cst_37 {dimension_numbers = #tpu.dot_dimension_numbers<[0], [0], [1], [1], [0, 1, 1, 1], [], []>} : vector<8x8xbf16>, vector<8x8xbf16>, vector<8x8xf32> -> vector<8x8xf32>
    %cst_38 = arith.constant dense<0.000000e+00> : vector<8xf32>
    %87 = vector.multi_reduction <add>, %84, %cst_38 [0] : vector<8x8xf32> to vector<8xf32>
    %88 = vector.shape_cast %87 : vector<8xf32> to vector<1x8xf32>
    %89 = vector.extract_strided_slice %9 {offsets = [0, 16], sizes = [8, 8], strides = [1, 1]} : vector<8x32xf32> to vector<8x8xf32>
    %cst_39 = arith.constant 0.353553385 : f32
    %90 = vector.broadcast %cst_39 : f32 to vector<8x8xf32>
    %91 = arith.mulf %89, %90 : vector<8x8xf32>
    %92 = arith.truncf %91 : vector<8x8xf32> to vector<8x8xbf16>
    %cst_40 = arith.constant dense<0.000000e+00> : vector<8x8xf32>
    %93 = tpu.matmul %92, %77, %cst_40 {dimension_numbers = #tpu.dot_dimension_numbers<[1], [1], [0], [0], [0, 0, 1, 0], [], []>} : vector<8x8xbf16>, vector<8x8xbf16>, vector<8x8xf32> -> vector<8x8xf32>
    %cst_41 = arith.constant -1.000000e+30 : f32
    %94 = vector.broadcast %cst_41 : f32 to vector<8x8xf32>
    %95 = arith.select %20, %93, %94 : vector<8x8xi1>, vector<8x8xf32>
    %cst_42 = arith.constant dense<0xFF800000> : vector<8xf32>
    %96 = vector.multi_reduction <maximumf>, %95, %cst_42 [1] : vector<8x8xf32> to vector<8xf32>
    %97 = vector.shape_cast %96 : vector<8xf32> to vector<8x1xf32>
    %98 = vector.broadcast %97 : vector<8x1xf32> to vector<8x8xf32>
    %99 = arith.subf %95, %98 : vector<8x8xf32>
    %100 = math.exp %99 : vector<8x8xf32>
    %cst_43 = arith.constant dense<0.000000e+00> : vector<8xf32>
    %101 = vector.multi_reduction <add>, %100, %cst_43 [1] : vector<8x8xf32> to vector<8xf32>
    %102 = vector.shape_cast %101 : vector<8xf32> to vector<8x1xf32>
    %103 = tpu.reciprocal %102 {approx = true} : vector<8x1xf32> -> vector<8x1xf32>
    %104 = vector.broadcast %103 : vector<8x1xf32> to vector<8x8xf32>
    %105 = arith.mulf %100, %104 : vector<8x8xf32>
    %106 = arith.truncf %105 : vector<8x8xf32> to vector<8x8xbf16>
    %cst_44 = arith.constant dense<0.000000e+00> : vector<8x8xf32>
    %107 = tpu.matmul %106, %78, %cst_44 {dimension_numbers = #tpu.dot_dimension_numbers<[1], [0], [0], [1], [0, 0, 1, 1], [], []>} : vector<8x8xbf16>, vector<8x8xbf16>, vector<8x8xf32> -> vector<8x8xf32>
    %c0_45 = arith.constant 0 : index
    %c16 = arith.constant 16 : index
    %108 = vector.load %arg28[%c0_45, %c16] : memref<8x32xf32, #tpu.memory_space<vmem>>, vector<8x8xf32>
    tpu.vector_store %arg28[%c0_45, %c16], %107 {strides = array<i32>} : memref<8x32xf32, #tpu.memory_space<vmem>>, vector<8x8xf32>,
    %109 = vector.extract_strided_slice %9 {offsets = [0, 24], sizes = [8, 8], strides = [1, 1]} : vector<8x32xf32> to vector<8x8xf32>
    %cst_46 = arith.constant 0.353553385 : f32
    %110 = vector.broadcast %cst_46 : f32 to vector<8x8xf32>
    %111 = arith.mulf %109, %110 : vector<8x8xf32>
    %112 = arith.truncf %111 : vector<8x8xf32> to vector<8x8xbf16>
    %cst_47 = arith.constant dense<0.000000e+00> : vector<8x8xf32>
    %113 = tpu.matmul %112, %77, %cst_47 {dimension_numbers = #tpu.dot_dimension_numbers<[1], [1], [0], [0], [0, 0, 1, 0], [], []>} : vector<8x8xbf16>, vector<8x8xbf16>, vector<8x8xf32> -> vector<8x8xf32>
    %cst_48 = arith.constant -1.000000e+30 : f32
    %114 = vector.broadcast %cst_48 : f32 to vector<8x8xf32>
    %115 = arith.select %20, %113, %114 : vector<8x8xi1>, vector<8x8xf32>
    %cst_49 = arith.constant dense<0xFF800000> : vector<8xf32>
    %116 = vector.multi_reduction <maximumf>, %115, %cst_49 [1] : vector<8x8xf32> to vector<8xf32>
    %117 = vector.shape_cast %116 : vector<8xf32> to vector<8x1xf32>
    %118 = vector.broadcast %117 : vector<8x1xf32> to vector<8x8xf32>
    %119 = arith.subf %115, %118 : vector<8x8xf32>
    %120 = math.exp %119 : vector<8x8xf32>
    %cst_50 = arith.constant dense<0.000000e+00> : vector<8xf32>
    %121 = vector.multi_reduction <add>, %120, %cst_50 [1] : vector<8x8xf32> to vector<8xf32>
    %122 = vector.shape_cast %121 : vector<8xf32> to vector<8x1xf32>
    %123 = tpu.reciprocal %122 {approx = true} : vector<8x1xf32> -> vector<8x1xf32>
    %124 = vector.broadcast %123 : vector<8x1xf32> to vector<8x8xf32>
    %125 = arith.mulf %120, %124 : vector<8x8xf32>
    %126 = arith.truncf %125 : vector<8x8xf32> to vector<8x8xbf16>
    %cst_51 = arith.constant dense<0.000000e+00> : vector<8x8xf32>
    %127 = tpu.matmul %126, %78, %cst_51 {dimension_numbers = #tpu.dot_dimension_numbers<[1], [0], [0], [1], [0, 0, 1, 1], [], []>} : vector<8x8xbf16>, vector<8x8xbf16>, vector<8x8xf32> -> vector<8x8xf32>
    %c0_52 = arith.constant 0 : index
    %c24 = arith.constant 24 : index
    %128 = vector.load %arg28[%c0_52, %c24] : memref<8x32xf32, #tpu.memory_space<vmem>>, vector<8x8xf32>
    tpu.vector_store %arg28[%c0_52, %c24], %127 {strides = array<i32>} : memref<8x32xf32, #tpu.memory_space<vmem>>, vector<8x8xf32>,
    %129 = tpu.concatenate %32, %86 in 1 : vector<8x8xf32>, vector<8x8xf32> -> vector<8x16xf32>
    %c0_53 = arith.constant 0 : index
    %c0_54 = arith.constant 0 : index
    %c0_55 = arith.constant 0 : index
    %130 = vector.load %arg24[%c0_53, %c0_54, %c0_55] : memref<1x8x16xf32, #tpu.memory_space<vmem>>, vector<1x8x16xf32>
    %131 = vector.shape_cast %130 : vector<1x8x16xf32> to vector<8x16xf32>
    %132 = vector.shape_cast %129 : vector<8x16xf32> to vector<1x8x16xf32>
    tpu.vector_store %arg24[%c0_53, %c0_54, %c0_55], %132 {strides = array<i32>} : memref<1x8x16xf32, #tpu.memory_space<vmem>>, vector<1x8x16xf32>,
    %133 = tpu.concatenate %34, %88 in 1 : vector<1x8xf32>, vector<1x8xf32> -> vector<1x16xf32>
    %c0_56 = arith.constant 0 : index
    %c0_57 = arith.constant 0 : index
    %c0_58 = arith.constant 0 : index
    %134 = vector.load %arg25[%c0_56, %c0_57, %c0_58] : memref<1x1x16xf32, #tpu.memory_space<vmem>>, vector<1x1x16xf32>
    %135 = vector.shape_cast %134 : vector<1x1x16xf32> to vector<1x16xf32>
    %136 = vector.shape_cast %133 : vector<1x16xf32> to vector<1x1x16xf32>
    tpu.vector_store %arg25[%c0_56, %c0_57, %c0_58], %136 {strides = array<i32>} : memref<1x1x16xf32, #tpu.memory_space<vmem>>, vector<1x1x16xf32>,
    %c0_59 = arith.constant 0 : index
    %c0_60 = arith.constant 0 : index
    %137 = vector.load %arg28[%c0_59, %c0_60] : memref<8x32xf32, #tpu.memory_space<vmem>>, vector<8x32xf32>
    %138 = vector.broadcast %6 : vector<1x32xf32> to vector<8x32xf32>
    %139 = arith.mulf %137, %138 : vector<8x32xf32>
    %140 = arith.truncf %139 : vector<8x32xf32> to vector<8x32xbf16>
    %c0_61 = arith.constant 0 : index
    %c0_62 = arith.constant 0 : index
    %141 = vector.load %arg9[%c0_61, %c0_62] : memref<32x32xbf16, #tpu.memory_space<vmem>>, vector<32x32xbf16>
    %cst_63 = arith.constant dense<0.000000e+00> : vector<8x32xf32>
    %142 = tpu.matmul %140, %141, %cst_63 {dimension_numbers = #tpu.dot_dimension_numbers<[1], [0], [0], [1], [0, 0, 1, 1], [], []>} : vector<8x32xbf16>, vector<32x32xbf16>, vector<8x32xf32> -> vector<8x32xf32>
    %143 = arith.addf %1, %142 : vector<8x32xf32>
    %c0_64 = arith.constant 0 : index
    %c0_65 = arith.constant 0 : index
    %144 = vector.load %arg10[%c0_64, %c0_65] : memref<1x32xf32, #tpu.memory_space<vmem>>, vector<1x32xf32>
    %c0_66 = arith.constant 0 : index
    %c0_67 = arith.constant 0 : index
    %145 = vector.load %arg11[%c0_66, %c0_67] : memref<1x32xf32, #tpu.memory_space<vmem>>, vector<1x32xf32>
    %cst_68 = arith.constant dense<0.000000e+00> : vector<8xf32>
    %146 = vector.multi_reduction <add>, %143, %cst_68 [1] : vector<8x32xf32> to vector<8xf32>
    %147 = vector.shape_cast %146 : vector<8xf32> to vector<8x1xf32>
    %cst_69 = arith.constant 3.200000e+01 : f32
    %148 = vector.broadcast %cst_69 : f32 to vector<8x1xf32>
    %149 = arith.divf %147, %148 : vector<8x1xf32>
    %150 = vector.broadcast %149 : vector<8x1xf32> to vector<8x32xf32>
    %151 = arith.subf %143, %150 : vector<8x32xf32>
    %152 = arith.mulf %151, %151 : vector<8x32xf32>
    %cst_70 = arith.constant dense<0.000000e+00> : vector<8xf32>
    %153 = vector.multi_reduction <add>, %152, %cst_70 [1] : vector<8x32xf32> to vector<8xf32>
    %154 = vector.shape_cast %153 : vector<8xf32> to vector<8x1xf32>
    %cst_71 = arith.constant 3.200000e+01 : f32
    %155 = vector.broadcast %cst_71 : f32 to vector<8x1xf32>
    %156 = arith.divf %154, %155 : vector<8x1xf32>
    %157 = vector.broadcast %149 : vector<8x1xf32> to vector<8x32xf32>
    %158 = arith.subf %143, %157 : vector<8x32xf32>
    %cst_72 = arith.constant 9.99999974E-6 : f32
    %159 = vector.broadcast %cst_72 : f32 to vector<8x1xf32>
    %160 = arith.addf %156, %159 : vector<8x1xf32>
    %161 = math.rsqrt %160 : vector<8x1xf32>
    %162 = vector.broadcast %161 : vector<8x1xf32> to vector<8x32xf32>
    %163 = arith.mulf %158, %162 : vector<8x32xf32>
    %164 = vector.broadcast %144 : vector<1x32xf32> to vector<8x32xf32>
    %165 = arith.mulf %163, %164 : vector<8x32xf32>
    %166 = vector.broadcast %145 : vector<1x32xf32> to vector<8x32xf32>
    %167 = arith.addf %165, %166 : vector<8x32xf32>
    %c0_73 = arith.constant 0 : index
    %c0_74 = arith.constant 0 : index
    %c0_75 = arith.constant 0 : index
    %168 = vector.load %arg2[%c0_73, %c0_74, %c0_75] : memref<1x1x16xf32, #tpu.memory_space<vmem>>, vector<1x1x16xf32>
    %169 = vector.shape_cast %168 : vector<1x1x16xf32> to vector<1x16xf32>
    %c0_76 = arith.constant 0 : index
    %c0_77 = arith.constant 0 : index
    %170 = vector.load %arg4[%c0_76, %c0_77] : memref<1x32xf32, #tpu.memory_space<vmem>>, vector<1x32xf32>
    %171 = arith.truncf %167 : vector<8x32xf32> to vector<8x32xbf16>
    %c0_78 = arith.constant 0 : index
    %c0_79 = arith.constant 0 : index
    %172 = vector.load %arg12[%c0_78, %c0_79] : memref<32x32xbf16, #tpu.memory_space<vmem>>, vector<32x32xbf16>
    %cst_80 = arith.constant dense<0.000000e+00> : vector<8x32xf32>
    %173 = tpu.matmul %171, %172, %cst_80 {dimension_numbers = #tpu.dot_dimension_numbers<[1], [0], [0], [1], [0, 0, 1, 1], [], []>} : vector<8x32xbf16>, vector<32x32xbf16>, vector<8x32xf32> -> vector<8x32xf32>
    %174 = arith.truncf %3 : vector<16x32xf32> to vector<16x32xbf16>
    %c0_81 = arith.constant 0 : index
    %c0_82 = arith.constant 0 : index
    %175 = vector.load %arg13[%c0_81, %c0_82] : memref<32x32xbf16, #tpu.memory_space<vmem>>, vector<32x32xbf16>
    %cst_83 = arith.constant dense<0.000000e+00> : vector<16x32xf32>
    %176 = tpu.matmul %174, %175, %cst_83 {dimension_numbers = #tpu.dot_dimension_numbers<[1], [0], [0], [1], [0, 0, 1, 1], [], []>} : vector<16x32xbf16>, vector<32x32xbf16>, vector<16x32xf32> -> vector<16x32xf32>
    %cst_84 = arith.constant 0.000000e+00 : f32
    %177 = vector.broadcast %cst_84 : f32 to vector<1x16xf32>
    %178 = arith.cmpf ogt, %169, %177 : vector<1x16xf32>
    %179 = vector.shape_cast %178 : vector<1x16xi1> to vector<1x16xi1>
    %180 = vector.broadcast %179 : vector<1x16xi1> to vector<8x16xi1>
    %181 = vector.extract_strided_slice %176 {offsets = [0, 0], sizes = [16, 8], strides = [1, 1]} : vector<16x32xf32> to vector<16x8xf32>
    %182 = vector.extract_strided_slice %176 {offsets = [0, 16], sizes = [16, 8], strides = [1, 1]} : vector<16x32xf32> to vector<16x8xf32>
    %183 = arith.truncf %181 : vector<16x8xf32> to vector<16x8xbf16>
    %184 = arith.truncf %182 : vector<16x8xf32> to vector<16x8xbf16>
    %cst_85 = arith.constant 0.000000e+00 : f32
    %185 = vector.broadcast %cst_85 : f32 to vector<16x8xf32>
    %186 = arith.cmpf ogt, %181, %185 : vector<16x8xf32>
    %cst_86 = arith.constant 1.000000e+00 : f32
    %187 = vector.broadcast %cst_86 : f32 to vector<16x8xf32>
    %188 = arith.addf %181, %187 : vector<16x8xf32>
    %189 = math.exp %181 : vector<16x8xf32>
    %190 = arith.select %186, %188, %189 : vector<16x8xi1>, vector<16x8xf32>
    %191 = arith.truncf %190 : vector<16x8xf32> to vector<16x8xbf16>
    %cst_87 = arith.constant dense<0.000000e+00> : vector<8x8xf32>
    %192 = tpu.matmul %191, %184, %cst_87 {dimension_numbers = #tpu.dot_dimension_numbers<[0], [0], [1], [1], [0, 1, 1, 1], [], []>} : vector<16x8xbf16>, vector<16x8xbf16>, vector<8x8xf32> -> vector<8x8xf32>
    %cst_88 = arith.constant dense<0.000000e+00> : vector<8xf32>
    %193 = vector.multi_reduction <add>, %190, %cst_88 [0] : vector<16x8xf32> to vector<8xf32>
    %194 = vector.shape_cast %193 : vector<8xf32> to vector<1x8xf32>
    %195 = vector.extract_strided_slice %173 {offsets = [0, 0], sizes = [8, 8], strides = [1, 1]} : vector<8x32xf32> to vector<8x8xf32>
    %cst_89 = arith.constant 0.353553385 : f32
    %196 = vector.broadcast %cst_89 : f32 to vector<8x8xf32>
    %197 = arith.mulf %195, %196 : vector<8x8xf32>
    %198 = arith.truncf %197 : vector<8x8xf32> to vector<8x8xbf16>
    %cst_90 = arith.constant dense<0.000000e+00> : vector<8x16xf32>
    %199 = tpu.matmul %198, %183, %cst_90 {dimension_numbers = #tpu.dot_dimension_numbers<[1], [1], [0], [0], [0, 0, 1, 0], [], []>} : vector<8x8xbf16>, vector<16x8xbf16>, vector<8x16xf32> -> vector<8x16xf32>
    %cst_91 = arith.constant -1.000000e+30 : f32
    %200 = vector.broadcast %cst_91 : f32 to vector<8x16xf32>
    %201 = arith.select %180, %199, %200 : vector<8x16xi1>, vector<8x16xf32>
    %cst_92 = arith.constant dense<0xFF800000> : vector<8xf32>
    %202 = vector.multi_reduction <maximumf>, %201, %cst_92 [1] : vector<8x16xf32> to vector<8xf32>
    %203 = vector.shape_cast %202 : vector<8xf32> to vector<8x1xf32>
    %204 = vector.broadcast %203 : vector<8x1xf32> to vector<8x16xf32>
    %205 = arith.subf %201, %204 : vector<8x16xf32>
    %206 = math.exp %205 : vector<8x16xf32>
    %cst_93 = arith.constant dense<0.000000e+00> : vector<8xf32>
    %207 = vector.multi_reduction <add>, %206, %cst_93 [1] : vector<8x16xf32> to vector<8xf32>
    %208 = vector.shape_cast %207 : vector<8xf32> to vector<8x1xf32>
    %209 = tpu.reciprocal %208 {approx = true} : vector<8x1xf32> -> vector<8x1xf32>
    %210 = vector.broadcast %209 : vector<8x1xf32> to vector<8x16xf32>
    %211 = arith.mulf %206, %210 : vector<8x16xf32>
    %212 = arith.truncf %211 : vector<8x16xf32> to vector<8x16xbf16>
    %cst_94 = arith.constant dense<0.000000e+00> : vector<8x8xf32>
    %213 = tpu.matmul %212, %184, %cst_94 {dimension_numbers = #tpu.dot_dimension_numbers<[1], [0], [0], [1], [0, 0, 1, 1], [], []>} : vector<8x16xbf16>, vector<16x8xbf16>, vector<8x8xf32> -> vector<8x8xf32>
    %c0_95 = arith.constant 0 : index
    %c0_96 = arith.constant 0 : index
    %214 = vector.load %arg28[%c0_95, %c0_96] : memref<8x32xf32, #tpu.memory_space<vmem>>, vector<8x8xf32>
    tpu.vector_store %arg28[%c0_95, %c0_96], %213 {strides = array<i32>} : memref<8x32xf32, #tpu.memory_space<vmem>>, vector<8x8xf32>,
    %215 = vector.extract_strided_slice %173 {offsets = [0, 8], sizes = [8, 8], strides = [1, 1]} : vector<8x32xf32> to vector<8x8xf32>
    %cst_97 = arith.constant 0.353553385 : f32
    %216 = vector.broadcast %cst_97 : f32 to vector<8x8xf32>
    %217 = arith.mulf %215, %216 : vector<8x8xf32>
    %218 = arith.truncf %217 : vector<8x8xf32> to vector<8x8xbf16>
    %cst_98 = arith.constant dense<0.000000e+00> : vector<8x16xf32>
    %219 = tpu.matmul %218, %183, %cst_98 {dimension_numbers = #tpu.dot_dimension_numbers<[1], [1], [0], [0], [0, 0, 1, 0], [], []>} : vector<8x8xbf16>, vector<16x8xbf16>, vector<8x16xf32> -> vector<8x16xf32>
    %cst_99 = arith.constant -1.000000e+30 : f32
    %220 = vector.broadcast %cst_99 : f32 to vector<8x16xf32>
    %221 = arith.select %180, %219, %220 : vector<8x16xi1>, vector<8x16xf32>
    %cst_100 = arith.constant dense<0xFF800000> : vector<8xf32>
    %222 = vector.multi_reduction <maximumf>, %221, %cst_100 [1] : vector<8x16xf32> to vector<8xf32>
    %223 = vector.shape_cast %222 : vector<8xf32> to vector<8x1xf32>
    %224 = vector.broadcast %223 : vector<8x1xf32> to vector<8x16xf32>
    %225 = arith.subf %221, %224 : vector<8x16xf32>
    %226 = math.exp %225 : vector<8x16xf32>
    %cst_101 = arith.constant dense<0.000000e+00> : vector<8xf32>
    %227 = vector.multi_reduction <add>, %226, %cst_101 [1] : vector<8x16xf32> to vector<8xf32>
    %228 = vector.shape_cast %227 : vector<8xf32> to vector<8x1xf32>
    %229 = tpu.reciprocal %228 {approx = true} : vector<8x1xf32> -> vector<8x1xf32>
    %230 = vector.broadcast %229 : vector<8x1xf32> to vector<8x16xf32>
    %231 = arith.mulf %226, %230 : vector<8x16xf32>
    %232 = arith.truncf %231 : vector<8x16xf32> to vector<8x16xbf16>
    %cst_102 = arith.constant dense<0.000000e+00> : vector<8x8xf32>
    %233 = tpu.matmul %232, %184, %cst_102 {dimension_numbers = #tpu.dot_dimension_numbers<[1], [0], [0], [1], [0, 0, 1, 1], [], []>} : vector<8x16xbf16>, vector<16x8xbf16>, vector<8x8xf32> -> vector<8x8xf32>
    %c0_103 = arith.constant 0 : index
    %c8_104 = arith.constant 8 : index
    %234 = vector.load %arg28[%c0_103, %c8_104] : memref<8x32xf32, #tpu.memory_space<vmem>>, vector<8x8xf32>
    tpu.vector_store %arg28[%c0_103, %c8_104], %233 {strides = array<i32>} : memref<8x32xf32, #tpu.memory_space<vmem>>, vector<8x8xf32>,
    %235 = vector.extract_strided_slice %176 {offsets = [0, 8], sizes = [16, 8], strides = [1, 1]} : vector<16x32xf32> to vector<16x8xf32>
    %236 = vector.extract_strided_slice %176 {offsets = [0, 24], sizes = [16, 8], strides = [1, 1]} : vector<16x32xf32> to vector<16x8xf32>
    %237 = arith.truncf %235 : vector<16x8xf32> to vector<16x8xbf16>
    %238 = arith.truncf %236 : vector<16x8xf32> to vector<16x8xbf16>
    %cst_105 = arith.constant 0.000000e+00 : f32
    %239 = vector.broadcast %cst_105 : f32 to vector<16x8xf32>
    %240 = arith.cmpf ogt, %235, %239 : vector<16x8xf32>
    %cst_106 = arith.constant 1.000000e+00 : f32
    %241 = vector.broadcast %cst_106 : f32 to vector<16x8xf32>
    %242 = arith.addf %235, %241 : vector<16x8xf32>
    %243 = math.exp %235 : vector<16x8xf32>
    %244 = arith.select %240, %242, %243 : vector<16x8xi1>, vector<16x8xf32>
    %245 = arith.truncf %244 : vector<16x8xf32> to vector<16x8xbf16>
    %cst_107 = arith.constant dense<0.000000e+00> : vector<8x8xf32>
    %246 = tpu.matmul %245, %238, %cst_107 {dimension_numbers = #tpu.dot_dimension_numbers<[0], [0], [1], [1], [0, 1, 1, 1], [], []>} : vector<16x8xbf16>, vector<16x8xbf16>, vector<8x8xf32> -> vector<8x8xf32>
    %cst_108 = arith.constant dense<0.000000e+00> : vector<8xf32>
    %247 = vector.multi_reduction <add>, %244, %cst_108 [0] : vector<16x8xf32> to vector<8xf32>
    %248 = vector.shape_cast %247 : vector<8xf32> to vector<1x8xf32>
    %249 = vector.extract_strided_slice %173 {offsets = [0, 16], sizes = [8, 8], strides = [1, 1]} : vector<8x32xf32> to vector<8x8xf32>
    %cst_109 = arith.constant 0.353553385 : f32
    %250 = vector.broadcast %cst_109 : f32 to vector<8x8xf32>
    %251 = arith.mulf %249, %250 : vector<8x8xf32>
    %252 = arith.truncf %251 : vector<8x8xf32> to vector<8x8xbf16>
    %cst_110 = arith.constant dense<0.000000e+00> : vector<8x16xf32>
    %253 = tpu.matmul %252, %237, %cst_110 {dimension_numbers = #tpu.dot_dimension_numbers<[1], [1], [0], [0], [0, 0, 1, 0], [], []>} : vector<8x8xbf16>, vector<16x8xbf16>, vector<8x16xf32> -> vector<8x16xf32>
    %cst_111 = arith.constant -1.000000e+30 : f32
    %254 = vector.broadcast %cst_111 : f32 to vector<8x16xf32>
    %255 = arith.select %180, %253, %254 : vector<8x16xi1>, vector<8x16xf32>
    %cst_112 = arith.constant dense<0xFF800000> : vector<8xf32>
    %256 = vector.multi_reduction <maximumf>, %255, %cst_112 [1] : vector<8x16xf32> to vector<8xf32>
    %257 = vector.shape_cast %256 : vector<8xf32> to vector<8x1xf32>
    %258 = vector.broadcast %257 : vector<8x1xf32> to vector<8x16xf32>
    %259 = arith.subf %255, %258 : vector<8x16xf32>
    %260 = math.exp %259 : vector<8x16xf32>
    %cst_113 = arith.constant dense<0.000000e+00> : vector<8xf32>
    %261 = vector.multi_reduction <add>, %260, %cst_113 [1] : vector<8x16xf32> to vector<8xf32>
    %262 = vector.shape_cast %261 : vector<8xf32> to vector<8x1xf32>
    %263 = tpu.reciprocal %262 {approx = true} : vector<8x1xf32> -> vector<8x1xf32>
    %264 = vector.broadcast %263 : vector<8x1xf32> to vector<8x16xf32>
    %265 = arith.mulf %260, %264 : vector<8x16xf32>
    %266 = arith.truncf %265 : vector<8x16xf32> to vector<8x16xbf16>
    %cst_114 = arith.constant dense<0.000000e+00> : vector<8x8xf32>
    %267 = tpu.matmul %266, %238, %cst_114 {dimension_numbers = #tpu.dot_dimension_numbers<[1], [0], [0], [1], [0, 0, 1, 1], [], []>} : vector<8x16xbf16>, vector<16x8xbf16>, vector<8x8xf32> -> vector<8x8xf32>
    %c0_115 = arith.constant 0 : index
    %c16_116 = arith.constant 16 : index
    %268 = vector.load %arg28[%c0_115, %c16_116] : memref<8x32xf32, #tpu.memory_space<vmem>>, vector<8x8xf32>
    tpu.vector_store %arg28[%c0_115, %c16_116], %267 {strides = array<i32>} : memref<8x32xf32, #tpu.memory_space<vmem>>, vector<8x8xf32>,
    %269 = vector.extract_strided_slice %173 {offsets = [0, 24], sizes = [8, 8], strides = [1, 1]} : vector<8x32xf32> to vector<8x8xf32>
    %cst_117 = arith.constant 0.353553385 : f32
    %270 = vector.broadcast %cst_117 : f32 to vector<8x8xf32>
    %271 = arith.mulf %269, %270 : vector<8x8xf32>
    %272 = arith.truncf %271 : vector<8x8xf32> to vector<8x8xbf16>
    %cst_118 = arith.constant dense<0.000000e+00> : vector<8x16xf32>
    %273 = tpu.matmul %272, %237, %cst_118 {dimension_numbers = #tpu.dot_dimension_numbers<[1], [1], [0], [0], [0, 0, 1, 0], [], []>} : vector<8x8xbf16>, vector<16x8xbf16>, vector<8x16xf32> -> vector<8x16xf32>
    %cst_119 = arith.constant -1.000000e+30 : f32
    %274 = vector.broadcast %cst_119 : f32 to vector<8x16xf32>
    %275 = arith.select %180, %273, %274 : vector<8x16xi1>, vector<8x16xf32>
    %cst_120 = arith.constant dense<0xFF800000> : vector<8xf32>
    %276 = vector.multi_reduction <maximumf>, %275, %cst_120 [1] : vector<8x16xf32> to vector<8xf32>
    %277 = vector.shape_cast %276 : vector<8xf32> to vector<8x1xf32>
    %278 = vector.broadcast %277 : vector<8x1xf32> to vector<8x16xf32>
    %279 = arith.subf %275, %278 : vector<8x16xf32>
    %280 = math.exp %279 : vector<8x16xf32>
    %cst_121 = arith.constant dense<0.000000e+00> : vector<8xf32>
    %281 = vector.multi_reduction <add>, %280, %cst_121 [1] : vector<8x16xf32> to vector<8xf32>
    %282 = vector.shape_cast %281 : vector<8xf32> to vector<8x1xf32>
    %283 = tpu.reciprocal %282 {approx = true} : vector<8x1xf32> -> vector<8x1xf32>
    %284 = vector.broadcast %283 : vector<8x1xf32> to vector<8x16xf32>
    %285 = arith.mulf %280, %284 : vector<8x16xf32>
    %286 = arith.truncf %285 : vector<8x16xf32> to vector<8x16xbf16>
    %cst_122 = arith.constant dense<0.000000e+00> : vector<8x8xf32>
    %287 = tpu.matmul %286, %238, %cst_122 {dimension_numbers = #tpu.dot_dimension_numbers<[1], [0], [0], [1], [0, 0, 1, 1], [], []>} : vector<8x16xbf16>, vector<16x8xbf16>, vector<8x8xf32> -> vector<8x8xf32>
    %c0_123 = arith.constant 0 : index
    %c24_124 = arith.constant 24 : index
    %288 = vector.load %arg28[%c0_123, %c24_124] : memref<8x32xf32, #tpu.memory_space<vmem>>, vector<8x8xf32>
    tpu.vector_store %arg28[%c0_123, %c24_124], %287 {strides = array<i32>} : memref<8x32xf32, #tpu.memory_space<vmem>>, vector<8x8xf32>,
    %289 = tpu.concatenate %192, %246 in 1 : vector<8x8xf32>, vector<8x8xf32> -> vector<8x16xf32>
    %c0_125 = arith.constant 0 : index
    %c0_126 = arith.constant 0 : index
    %c0_127 = arith.constant 0 : index
    %290 = vector.load %arg26[%c0_125, %c0_126, %c0_127] : memref<1x8x16xf32, #tpu.memory_space<vmem>>, vector<1x8x16xf32>
    %291 = vector.shape_cast %290 : vector<1x8x16xf32> to vector<8x16xf32>
    %292 = vector.shape_cast %289 : vector<8x16xf32> to vector<1x8x16xf32>
    tpu.vector_store %arg26[%c0_125, %c0_126, %c0_127], %292 {strides = array<i32>} : memref<1x8x16xf32, #tpu.memory_space<vmem>>, vector<1x8x16xf32>,
    %293 = tpu.concatenate %194, %248 in 1 : vector<1x8xf32>, vector<1x8xf32> -> vector<1x16xf32>
    %c0_128 = arith.constant 0 : index
    %c0_129 = arith.constant 0 : index
    %c0_130 = arith.constant 0 : index
    %294 = vector.load %arg27[%c0_128, %c0_129, %c0_130] : memref<1x1x16xf32, #tpu.memory_space<vmem>>, vector<1x1x16xf32>
    %295 = vector.shape_cast %294 : vector<1x1x16xf32> to vector<1x16xf32>
    %296 = vector.shape_cast %293 : vector<1x16xf32> to vector<1x1x16xf32>
    tpu.vector_store %arg27[%c0_128, %c0_129, %c0_130], %296 {strides = array<i32>} : memref<1x1x16xf32, #tpu.memory_space<vmem>>, vector<1x1x16xf32>,
    %c0_131 = arith.constant 0 : index
    %c0_132 = arith.constant 0 : index
    %297 = vector.load %arg28[%c0_131, %c0_132] : memref<8x32xf32, #tpu.memory_space<vmem>>, vector<8x32xf32>
    %298 = vector.broadcast %170 : vector<1x32xf32> to vector<8x32xf32>
    %299 = arith.mulf %297, %298 : vector<8x32xf32>
    %300 = arith.truncf %299 : vector<8x32xf32> to vector<8x32xbf16>
    %c0_133 = arith.constant 0 : index
    %c0_134 = arith.constant 0 : index
    %301 = vector.load %arg14[%c0_133, %c0_134] : memref<32x32xbf16, #tpu.memory_space<vmem>>, vector<32x32xbf16>
    %cst_135 = arith.constant dense<0.000000e+00> : vector<8x32xf32>
    %302 = tpu.matmul %300, %301, %cst_135 {dimension_numbers = #tpu.dot_dimension_numbers<[1], [0], [0], [1], [0, 0, 1, 1], [], []>} : vector<8x32xbf16>, vector<32x32xbf16>, vector<8x32xf32> -> vector<8x32xf32>
    %303 = arith.addf %167, %302 : vector<8x32xf32>
    %c0_136 = arith.constant 0 : index
    %c0_137 = arith.constant 0 : index
    %304 = vector.load %arg15[%c0_136, %c0_137] : memref<1x32xf32, #tpu.memory_space<vmem>>, vector<1x32xf32>
    %c0_138 = arith.constant 0 : index
    %c0_139 = arith.constant 0 : index
    %305 = vector.load %arg16[%c0_138, %c0_139] : memref<1x32xf32, #tpu.memory_space<vmem>>, vector<1x32xf32>
    %cst_140 = arith.constant dense<0.000000e+00> : vector<8xf32>
    %306 = vector.multi_reduction <add>, %303, %cst_140 [1] : vector<8x32xf32> to vector<8xf32>
    %307 = vector.shape_cast %306 : vector<8xf32> to vector<8x1xf32>
    %cst_141 = arith.constant 3.200000e+01 : f32
    %308 = vector.broadcast %cst_141 : f32 to vector<8x1xf32>
    %309 = arith.divf %307, %308 : vector<8x1xf32>
    %310 = vector.broadcast %309 : vector<8x1xf32> to vector<8x32xf32>
    %311 = arith.subf %303, %310 : vector<8x32xf32>
    %312 = arith.mulf %311, %311 : vector<8x32xf32>
    %cst_142 = arith.constant dense<0.000000e+00> : vector<8xf32>
    %313 = vector.multi_reduction <add>, %312, %cst_142 [1] : vector<8x32xf32> to vector<8xf32>
    %314 = vector.shape_cast %313 : vector<8xf32> to vector<8x1xf32>
    %cst_143 = arith.constant 3.200000e+01 : f32
    %315 = vector.broadcast %cst_143 : f32 to vector<8x1xf32>
    %316 = arith.divf %314, %315 : vector<8x1xf32>
    %317 = vector.broadcast %309 : vector<8x1xf32> to vector<8x32xf32>
    %318 = arith.subf %303, %317 : vector<8x32xf32>
    %cst_144 = arith.constant 9.99999974E-6 : f32
    %319 = vector.broadcast %cst_144 : f32 to vector<8x1xf32>
    %320 = arith.addf %316, %319 : vector<8x1xf32>
    %321 = math.rsqrt %320 : vector<8x1xf32>
    %322 = vector.broadcast %321 : vector<8x1xf32> to vector<8x32xf32>
    %323 = arith.mulf %318, %322 : vector<8x32xf32>
    %324 = vector.broadcast %304 : vector<1x32xf32> to vector<8x32xf32>
    %325 = arith.mulf %323, %324 : vector<8x32xf32>
    %326 = vector.broadcast %305 : vector<1x32xf32> to vector<8x32xf32>
    %327 = arith.addf %325, %326 : vector<8x32xf32>
    %328 = arith.truncf %327 : vector<8x32xf32> to vector<8x32xbf16>
    %c0_145 = arith.constant 0 : index
    %c0_146 = arith.constant 0 : index
    %329 = vector.load %arg17[%c0_145, %c0_146] : memref<32x64xbf16, #tpu.memory_space<vmem>>, vector<32x64xbf16>
    %cst_147 = arith.constant dense<0.000000e+00> : vector<8x64xf32>
    %330 = tpu.matmul %328, %329, %cst_147 {dimension_numbers = #tpu.dot_dimension_numbers<[1], [0], [0], [1], [0, 0, 1, 1], [], []>} : vector<8x32xbf16>, vector<32x64xbf16>, vector<8x64xf32> -> vector<8x64xf32>
    %c0_148 = arith.constant 0 : index
    %c0_149 = arith.constant 0 : index
    %331 = vector.load %arg18[%c0_148, %c0_149] : memref<1x64xf32, #tpu.memory_space<vmem>>, vector<1x64xf32>
    %332 = vector.broadcast %331 : vector<1x64xf32> to vector<8x64xf32>
    %333 = arith.addf %330, %332 : vector<8x64xf32>
    %cst_150 = arith.constant 0.000000e+00 : f32
    %334 = vector.broadcast %cst_150 : f32 to vector<8x64xf32>
    %335 = arith.maximumf %333, %334 : vector<8x64xf32>
    %336 = arith.truncf %335 : vector<8x64xf32> to vector<8x64xbf16>
    %c0_151 = arith.constant 0 : index
    %c0_152 = arith.constant 0 : index
    %337 = vector.load %arg19[%c0_151, %c0_152] : memref<64x32xbf16, #tpu.memory_space<vmem>>, vector<64x32xbf16>
    %cst_153 = arith.constant dense<0.000000e+00> : vector<8x32xf32>
    %338 = tpu.matmul %336, %337, %cst_153 {dimension_numbers = #tpu.dot_dimension_numbers<[1], [0], [0], [1], [0, 0, 1, 1], [], []>} : vector<8x64xbf16>, vector<64x32xbf16>, vector<8x32xf32> -> vector<8x32xf32>
    %c0_154 = arith.constant 0 : index
    %c0_155 = arith.constant 0 : index
    %339 = vector.load %arg20[%c0_154, %c0_155] : memref<1x32xf32, #tpu.memory_space<vmem>>, vector<1x32xf32>
    %340 = vector.broadcast %339 : vector<1x32xf32> to vector<8x32xf32>
    %341 = arith.addf %338, %340 : vector<8x32xf32>
    %342 = arith.addf %327, %341 : vector<8x32xf32>
    %c0_156 = arith.constant 0 : index
    %c0_157 = arith.constant 0 : index
    %343 = vector.load %arg21[%c0_156, %c0_157] : memref<1x32xf32, #tpu.memory_space<vmem>>, vector<1x32xf32>
    %c0_158 = arith.constant 0 : index
    %c0_159 = arith.constant 0 : index
    %344 = vector.load %arg22[%c0_158, %c0_159] : memref<1x32xf32, #tpu.memory_space<vmem>>, vector<1x32xf32>
    %cst_160 = arith.constant dense<0.000000e+00> : vector<8xf32>
    %345 = vector.multi_reduction <add>, %342, %cst_160 [1] : vector<8x32xf32> to vector<8xf32>
    %346 = vector.shape_cast %345 : vector<8xf32> to vector<8x1xf32>
    %cst_161 = arith.constant 3.200000e+01 : f32
    %347 = vector.broadcast %cst_161 : f32 to vector<8x1xf32>
    %348 = arith.divf %346, %347 : vector<8x1xf32>
    %349 = vector.broadcast %348 : vector<8x1xf32> to vector<8x32xf32>
    %350 = arith.subf %342, %349 : vector<8x32xf32>
    %351 = arith.mulf %350, %350 : vector<8x32xf32>
    %cst_162 = arith.constant dense<0.000000e+00> : vector<8xf32>
    %352 = vector.multi_reduction <add>, %351, %cst_162 [1] : vector<8x32xf32> to vector<8xf32>
    %353 = vector.shape_cast %352 : vector<8xf32> to vector<8x1xf32>
    %cst_163 = arith.constant 3.200000e+01 : f32
    %354 = vector.broadcast %cst_163 : f32 to vector<8x1xf32>
    %355 = arith.divf %353, %354 : vector<8x1xf32>
    %356 = vector.broadcast %348 : vector<8x1xf32> to vector<8x32xf32>
    %357 = arith.subf %342, %356 : vector<8x32xf32>
    %cst_164 = arith.constant 9.99999974E-6 : f32
    %358 = vector.broadcast %cst_164 : f32 to vector<8x1xf32>
    %359 = arith.addf %355, %358 : vector<8x1xf32>
    %360 = math.rsqrt %359 : vector<8x1xf32>
    %361 = vector.broadcast %360 : vector<8x1xf32> to vector<8x32xf32>
    %362 = arith.mulf %357, %361 : vector<8x32xf32>
    %363 = vector.broadcast %343 : vector<1x32xf32> to vector<8x32xf32>
    %364 = arith.mulf %362, %363 : vector<8x32xf32>
    %365 = vector.broadcast %344 : vector<1x32xf32> to vector<8x32xf32>
    %366 = arith.addf %364, %365 : vector<8x32xf32>
    %c0_165 = arith.constant 0 : index
    %c0_166 = arith.constant 0 : index
    %c0_167 = arith.constant 0 : index
    %367 = vector.load %arg23[%c0_165, %c0_166, %c0_167] : memref<1x8x32xf32, #tpu.memory_space<vmem>>, vector<1x8x32xf32>
    %368 = vector.shape_cast %367 : vector<1x8x32xf32> to vector<8x32xf32>
    %369 = vector.shape_cast %366 : vector<8x32xf32> to vector<1x8x32xf32>
    tpu.vector_store %arg23[%c0_165, %c0_166, %c0_167], %369 {strides = array<i32>} : memref<1x8x32xf32, #tpu.memory_space<vmem>>, vector<1x8x32xf32>,
    return
  }
  func.func @transform_0(%arg0: i32) -> (i32, i32, i32) {
    %c0_i32 = arith.constant 0 : i32
    %c0_i32_0 = arith.constant 0 : i32
    %c0_i32_1 = arith.constant 0 : i32
    return %arg0, %c0_i32, %c0_i32_0 : i32, i32, i32
  }
  func.func @transform_1(%arg0: i32) -> (i32, i32, i32) {
    %c0_i32 = arith.constant 0 : i32
    %c0_i32_0 = arith.constant 0 : i32
    %c0_i32_1 = arith.constant 0 : i32
    return %arg0, %c0_i32, %c0_i32_0 : i32, i32, i32
  }
  func.func @transform_2(%arg0: i32) -> (i32, i32) {
    %c0_i32 = arith.constant 0 : i32
    %c0_i32_0 = arith.constant 0 : i32
    %c0_i32_1 = arith.constant 0 : i32
    return %c0_i32, %c0_i32_0 : i32, i32
  }
  func.func @transform_3(%arg0: i32) -> (i32, i32) {
    %c0_i32 = arith.constant 0 : i32
    %c0_i32_0 = arith.constant 0 : i32
    %c0_i32_1 = arith.constant 0 : i32
    return %c0_i32, %c0_i32_0 : i32, i32
  }
  func.func @transform_4(%arg0: i32) -> (i32, i32, i32) {
    %c0_i32 = arith.constant 0 : i32
    %c0_i32_0 = arith.constant 0 : i32
    %c0_i32_1 = arith.constant 0 : i32
    return %arg0, %c0_i32, %c0_i32_0 : i32, i32, i32
  }
  func.func @transform_5(%arg0: i32) -> (i32, i32, i32) {
    %c0_i32 = arith.constant 0 : i32
    %c0_i32_0 = arith.constant 0 : i32
    %c0_i32_1 = arith.constant 0 : i32
    return %arg0, %c0_i32, %c0_i32_0 : i32, i32, i32
  }
  func.func @transform_6(%arg0: i32) -> (i32, i32) {
    %c0_i32 = arith.constant 0 : i32
    %c0_i32_0 = arith.constant 0 : i32
    %c0_i32_1 = arith.constant 0 : i32
    return %c0_i32, %c0_i32_0 : i32, i32
  }
  func.func @transform_7(%arg0: i32) -> (i32, i32) {
    %c0_i32 = arith.constant 0 : i32
    %c0_i32_0 = arith.constant 0 : i32
    %c0_i32_1 = arith.constant 0 : i32
    return %c0_i32, %c0_i32_0 : i32, i32
  }
  func.func @transform_8(%arg0: i32) -> (i32, i32) {
    %c0_i32 = arith.constant 0 : i32
    %c0_i32_0 = arith.constant 0 : i32
    %c0_i32_1 = arith.constant 0 : i32
    return %c0_i32, %c0_i32_0 : i32, i32
  }
  func.func @transform_9(%arg0: i32) -> (i32, i32) {
    %c0_i32 = arith.constant 0 : i32
    %c0_i32_0 = arith.constant 0 : i32
    %c0_i32_1 = arith.constant 0 : i32
    return %c0_i32, %c0_i32_0 : i32, i32
  }
  func.func @transform_10(%arg0: i32) -> (i32, i32) {
    %c0_i32 = arith.constant 0 : i32
    %c0_i32_0 = arith.constant 0 : i32
    %c0_i32_1 = arith.constant 0 : i32
    return %c0_i32, %c0_i32_0 : i32, i32
  }
  func.func @transform_11(%arg0: i32) -> (i32, i32) {
    %c0_i32 = arith.constant 0 : i32
    %c0_i32_0 = arith.constant 0 : i32
    %c0_i32_1 = arith.constant 0 : i32
    return %c0_i32, %c0_i32_0 : i32, i32
  }
  func.func @transform_12(%arg0: i32) -> (i32, i32) {
    %c0_i32 = arith.constant 0 : i32
    %c0_i32_0 = arith.constant 0 : i32
    %c0_i32_1 = arith.constant 0 : i32
    return %c0_i32, %c0_i32_0 : i32, i32
  }
  func.func @transform_13(%arg0: i32) -> (i32, i32) {
    %c0_i32 = arith.constant 0 : i32
    %c0_i32_0 = arith.constant 0 : i32
    %c0_i32_1 = arith.constant 0 : i32
    return %c0_i32, %c0_i32_0 : i32, i32
  }
  func.func @transform_14(%arg0: i32) -> (i32, i32) {
    %c0_i32 = arith.constant 0 : i32
    %c0_i32_0 = arith.constant 0 : i32
    %c0_i32_1 = arith.constant 0 : i32
    return %c0_i32, %c0_i32_0 : i32, i32
  }
  func.func @transform_15(%arg0: i32) -> (i32, i32) {
    %c0_i32 = arith.constant 0 : i32
    %c0_i32_0 = arith.constant 0 : i32
    %c0_i32_1 = arith.constant 0 : i32
    return %c0_i32, %c0_i32_0 : i32, i32
  }
  func.func @transform_16(%arg0: i32) -> (i32, i32) {
    %c0_i32 = arith.constant 0 : i32
    %c0_i32_0 = arith.constant 0 : i32
    %c0_i32_1 = arith.constant 0 : i32
    return %c0_i32, %c0_i32_0 : i32, i32
  }
  func.func @transform_17(%arg0: i32) -> (i32, i32) {
    %c0_i32 = arith.constant 0 : i32
    %c0_i32_0 = arith.constant 0 : i32
    %c0_i32_1 = arith.constant 0 : i32
    return %c0_i32, %c0_i32_0 : i32, i32
  }
  func.func @transform_18(%arg0: i32) -> (i32, i32) {
    %c0_i32 = arith.constant 0 : i32
    %c0_i32_0 = arith.constant 0 : i32
    %c0_i32_1 = arith.constant 0 : i32
    return %c0_i32, %c0_i32_0 : i32, i32
  }
  func.func @transform_19(%arg0: i32) -> (i32, i32) {
    %c0_i32 = arith.constant 0 : i32
    %c0_i32_0 = arith.constant 0 : i32
    %c0_i32_1 = arith.constant 0 : i32
    return %c0_i32, %c0_i32_0 : i32, i32
  }
  func.func @transform_20(%arg0: i32) -> (i32, i32) {
    %c0_i32 = arith.constant 0 : i32
    %c0_i32_0 = arith.constant 0 : i32
    %c0_i32_1 = arith.constant 0 : i32
    return %c0_i32, %c0_i32_0 : i32, i32
  }
  func.func @transform_21(%arg0: i32) -> (i32, i32) {
    %c0_i32 = arith.constant 0 : i32
    %c0_i32_0 = arith.constant 0 : i32
    %c0_i32_1 = arith.constant 0 : i32
    return %c0_i32, %c0_i32_0 : i32, i32
  }
  func.func @transform_22(%arg0: i32) -> (i32, i32, i32) {
    %c0_i32 = arith.constant 0 : i32
    %c0_i32_0 = arith.constant 0 : i32
    %c0_i32_1 = arith.constant 0 : i32
    return %arg0, %c0_i32, %c0_i32_0 : i32, i32, i32
  }
  func.func @transform_23(%arg0: i32) -> (i32, i32, i32) {
    %c0_i32 = arith.constant 0 : i32
    %c0_i32_0 = arith.constant 0 : i32
    %c0_i32_1 = arith.constant 0 : i32
    return %arg0, %c0_i32, %c0_i32_0 : i32, i32, i32
  }
  func.func @transform_24(%arg0: i32) -> (i32, i32, i32) {
    %c0_i32 = arith.constant 0 : i32
    %c0_i32_0 = arith.constant 0 : i32
    %c0_i32_1 = arith.constant 0 : i32
    return %arg0, %c0_i32, %c0_i32_0 : i32, i32, i32
  }
  func.func @transform_25(%arg0: i32) -> (i32, i32, i32) {
    %c0_i32 = arith.constant 0 : i32
    %c0_i32_0 = arith.constant 0 : i32
    %c0_i32_1 = arith.constant 0 : i32
    return %arg0, %c0_i32, %c0_i32_0 : i32, i32, i32
  }
  func.func @transform_26(%arg0: i32) -> (i32, i32, i32) {
    %c0_i32 = arith.constant 0 : i32
    %c0_i32_0 = arith.constant 0 : i32
    %c0_i32_1 = arith.constant 0 : i32
    return %arg0, %c0_i32, %c0_i32_0 : i32, i32, i32
  }
}

module attributes {stable_mosaic.version = 11 : i64} {
  func.func @kernel(%arg0: i32, %arg1: memref<1x1x16xf32, #tpu.memory_space<vmem>>, %arg2: memref<1x32xf32, #tpu.memory_space<vmem>>, %arg3: memref<1x16x32xf32, #tpu.memory_space<vmem>>, %arg4: memref<32x32xbf16, #tpu.memory_space<vmem>>, %arg5: memref<32x32xbf16, #tpu.memory_space<vmem>>, %arg6: memref<32x32xbf16, #tpu.memory_space<vmem>>, %arg7: memref<1x32xf32, #tpu.memory_space<vmem>>, %arg8: memref<1x32xf32, #tpu.memory_space<vmem>>, %arg9: memref<32x64xbf16, #tpu.memory_space<vmem>>, %arg10: memref<1x64xf32, #tpu.memory_space<vmem>>, %arg11: memref<64x32xbf16, #tpu.memory_space<vmem>>, %arg12: memref<1x32xf32, #tpu.memory_space<vmem>>, %arg13: memref<1x32xf32, #tpu.memory_space<vmem>>, %arg14: memref<1x32xf32, #tpu.memory_space<vmem>>, %arg15: memref<1x16x32xf32, #tpu.memory_space<vmem>>, %arg16: memref<1x8x16xf32, #tpu.memory_space<vmem>>, %arg17: memref<1x1x16xf32, #tpu.memory_space<vmem>>, %arg18: memref<16x32xf32, #tpu.memory_space<vmem>>) attributes {dimension_semantics = [#tpu.dimension_semantics<parallel>], iteration_bounds = array<i64: 2>, scalar_prefetch = 0 : i64, scratch_operands = 1 : i64, tpu.core_type = #tpu.core_type<tc>, window_params = [{transform_indices = @transform_0, window_bounds = array<i64: 1, 1, 16>}, {pipeline_mode = #tpu.pipeline_mode<synchronous>, transform_indices = @transform_1, window_bounds = array<i64: 1, 32>}, {transform_indices = @transform_2, window_bounds = array<i64: 1, 16, 32>}, {pipeline_mode = #tpu.pipeline_mode<synchronous>, transform_indices = @transform_3, window_bounds = array<i64: 32, 32>}, {pipeline_mode = #tpu.pipeline_mode<synchronous>, transform_indices = @transform_4, window_bounds = array<i64: 32, 32>}, {pipeline_mode = #tpu.pipeline_mode<synchronous>, transform_indices = @transform_5, window_bounds = array<i64: 32, 32>}, {pipeline_mode = #tpu.pipeline_mode<synchronous>, transform_indices = @transform_6, window_bounds = array<i64: 1, 32>}, {pipeline_mode = #tpu.pipeline_mode<synchronous>, transform_indices = @transform_7, window_bounds = array<i64: 1, 32>}, {pipeline_mode = #tpu.pipeline_mode<synchronous>, transform_indices = @transform_8, window_bounds = array<i64: 32, 64>}, {pipeline_mode = #tpu.pipeline_mode<synchronous>, transform_indices = @transform_9, window_bounds = array<i64: 1, 64>}, {pipeline_mode = #tpu.pipeline_mode<synchronous>, transform_indices = @transform_10, window_bounds = array<i64: 64, 32>}, {pipeline_mode = #tpu.pipeline_mode<synchronous>, transform_indices = @transform_11, window_bounds = array<i64: 1, 32>}, {pipeline_mode = #tpu.pipeline_mode<synchronous>, transform_indices = @transform_12, window_bounds = array<i64: 1, 32>}, {pipeline_mode = #tpu.pipeline_mode<synchronous>, transform_indices = @transform_13, window_bounds = array<i64: 1, 32>}, {transform_indices = @transform_14, window_bounds = array<i64: 1, 16, 32>}, {transform_indices = @transform_15, window_bounds = array<i64: 1, 8, 16>}, {transform_indices = @transform_16, window_bounds = array<i64: 1, 1, 16>}]} {
    %c0 = arith.constant 0 : index
    %c0_0 = arith.constant 0 : index
    %c0_1 = arith.constant 0 : index
    %0 = vector.load %arg3[%c0, %c0_0, %c0_1] : memref<1x16x32xf32, #tpu.memory_space<vmem>>, vector<1x16x32xf32>
    %1 = vector.shape_cast %0 : vector<1x16x32xf32> to vector<16x32xf32>
    %c0_2 = arith.constant 0 : index
    %c0_3 = arith.constant 0 : index
    %c0_4 = arith.constant 0 : index
    %2 = vector.load %arg1[%c0_2, %c0_3, %c0_4] : memref<1x1x16xf32, #tpu.memory_space<vmem>>, vector<1x1x16xf32>
    %3 = vector.shape_cast %2 : vector<1x1x16xf32> to vector<1x16xf32>
    %c0_5 = arith.constant 0 : index
    %c0_6 = arith.constant 0 : index
    %4 = vector.load %arg2[%c0_5, %c0_6] : memref<1x32xf32, #tpu.memory_space<vmem>>, vector<1x32xf32>
    %5 = arith.truncf %1 : vector<16x32xf32> to vector<16x32xbf16>
    %c0_7 = arith.constant 0 : index
    %c0_8 = arith.constant 0 : index
    %6 = vector.load %arg4[%c0_7, %c0_8] : memref<32x32xbf16, #tpu.memory_space<vmem>>, vector<32x32xbf16>
    %cst = arith.constant dense<0.000000e+00> : vector<16x32xf32>
    %7 = tpu.matmul %5, %6, %cst {dimension_numbers = #tpu.dot_dimension_numbers<[1], [0], [0], [1], [0, 0, 1, 1], [], []>} : vector<16x32xbf16>, vector<32x32xbf16>, vector<16x32xf32> -> vector<16x32xf32>
    %8 = arith.truncf %1 : vector<16x32xf32> to vector<16x32xbf16>
    %c0_9 = arith.constant 0 : index
    %c0_10 = arith.constant 0 : index
    %9 = vector.load %arg5[%c0_9, %c0_10] : memref<32x32xbf16, #tpu.memory_space<vmem>>, vector<32x32xbf16>
    %cst_11 = arith.constant dense<0.000000e+00> : vector<16x32xf32>
    %10 = tpu.matmul %8, %9, %cst_11 {dimension_numbers = #tpu.dot_dimension_numbers<[1], [0], [0], [1], [0, 0, 1, 1], [], []>} : vector<16x32xbf16>, vector<32x32xbf16>, vector<16x32xf32> -> vector<16x32xf32>
    %cst_12 = arith.constant 0.000000e+00 : f32
    %11 = vector.broadcast %cst_12 : f32 to vector<1x16xf32>
    %12 = arith.cmpf ogt, %3, %11 : vector<1x16xf32>
    %13 = vector.shape_cast %12 : vector<1x16xi1> to vector<1x16xi1>
    %14 = vector.broadcast %13 : vector<1x16xi1> to vector<16x16xi1>
    %15 = vector.extract_strided_slice %10 {offsets = [0, 0], sizes = [16, 8], strides = [1, 1]} : vector<16x32xf32> to vector<16x8xf32>
    %16 = vector.extract_strided_slice %10 {offsets = [0, 16], sizes = [16, 8], strides = [1, 1]} : vector<16x32xf32> to vector<16x8xf32>
    %17 = arith.truncf %15 : vector<16x8xf32> to vector<16x8xbf16>
    %18 = arith.truncf %16 : vector<16x8xf32> to vector<16x8xbf16>
    %cst_13 = arith.constant 0.000000e+00 : f32
    %19 = vector.broadcast %cst_13 : f32 to vector<16x8xf32>
    %20 = arith.cmpf ogt, %15, %19 : vector<16x8xf32>
    %cst_14 = arith.constant 1.000000e+00 : f32
    %21 = vector.broadcast %cst_14 : f32 to vector<16x8xf32>
    %22 = arith.addf %15, %21 : vector<16x8xf32>
    %23 = math.exp %15 : vector<16x8xf32>
    %24 = arith.select %20, %22, %23 : vector<16x8xi1>, vector<16x8xf32>
    %25 = arith.truncf %24 : vector<16x8xf32> to vector<16x8xbf16>
    %cst_15 = arith.constant dense<0.000000e+00> : vector<8x8xf32>
    %26 = tpu.matmul %25, %18, %cst_15 {dimension_numbers = #tpu.dot_dimension_numbers<[0], [0], [1], [1], [0, 1, 1, 1], [], []>} : vector<16x8xbf16>, vector<16x8xbf16>, vector<8x8xf32> -> vector<8x8xf32>
    %cst_16 = arith.constant dense<0.000000e+00> : vector<8xf32>
    %27 = vector.multi_reduction <add>, %24, %cst_16 [0] : vector<16x8xf32> to vector<8xf32>
    %28 = vector.shape_cast %27 : vector<8xf32> to vector<1x8xf32>
    %29 = vector.extract_strided_slice %7 {offsets = [0, 0], sizes = [16, 8], strides = [1, 1]} : vector<16x32xf32> to vector<16x8xf32>
    %cst_17 = arith.constant 0.353553385 : f32
    %30 = vector.broadcast %cst_17 : f32 to vector<16x8xf32>
    %31 = arith.mulf %29, %30 : vector<16x8xf32>
    %32 = arith.truncf %31 : vector<16x8xf32> to vector<16x8xbf16>
    %cst_18 = arith.constant dense<0.000000e+00> : vector<16x16xf32>
    %33 = tpu.matmul %32, %17, %cst_18 {dimension_numbers = #tpu.dot_dimension_numbers<[1], [1], [0], [0], [0, 0, 1, 0], [], []>} : vector<16x8xbf16>, vector<16x8xbf16>, vector<16x16xf32> -> vector<16x16xf32>
    %cst_19 = arith.constant -1.000000e+30 : f32
    %34 = vector.broadcast %cst_19 : f32 to vector<16x16xf32>
    %35 = arith.select %14, %33, %34 : vector<16x16xi1>, vector<16x16xf32>
    %cst_20 = arith.constant dense<0xFF800000> : vector<16xf32>
    %36 = vector.multi_reduction <maximumf>, %35, %cst_20 [1] : vector<16x16xf32> to vector<16xf32>
    %37 = vector.shape_cast %36 : vector<16xf32> to vector<16x1xf32>
    %38 = vector.broadcast %37 : vector<16x1xf32> to vector<16x16xf32>
    %39 = arith.subf %35, %38 : vector<16x16xf32>
    %40 = math.exp %39 : vector<16x16xf32>
    %cst_21 = arith.constant dense<0.000000e+00> : vector<16xf32>
    %41 = vector.multi_reduction <add>, %40, %cst_21 [1] : vector<16x16xf32> to vector<16xf32>
    %42 = vector.shape_cast %41 : vector<16xf32> to vector<16x1xf32>
    %43 = tpu.reciprocal %42 {approx = true} : vector<16x1xf32> -> vector<16x1xf32>
    %44 = vector.broadcast %43 : vector<16x1xf32> to vector<16x16xf32>
    %45 = arith.mulf %40, %44 : vector<16x16xf32>
    %46 = arith.truncf %45 : vector<16x16xf32> to vector<16x16xbf16>
    %cst_22 = arith.constant dense<0.000000e+00> : vector<16x8xf32>
    %47 = tpu.matmul %46, %18, %cst_22 {dimension_numbers = #tpu.dot_dimension_numbers<[1], [0], [0], [1], [0, 0, 1, 1], [], []>} : vector<16x16xbf16>, vector<16x8xbf16>, vector<16x8xf32> -> vector<16x8xf32>
    %c0_23 = arith.constant 0 : index
    %c0_24 = arith.constant 0 : index
    %48 = vector.load %arg18[%c0_23, %c0_24] : memref<16x32xf32, #tpu.memory_space<vmem>>, vector<16x8xf32>
    tpu.vector_store %arg18[%c0_23, %c0_24], %47 {strides = array<i32>} : memref<16x32xf32, #tpu.memory_space<vmem>>, vector<16x8xf32>,
    %49 = vector.extract_strided_slice %7 {offsets = [0, 8], sizes = [16, 8], strides = [1, 1]} : vector<16x32xf32> to vector<16x8xf32>
    %cst_25 = arith.constant 0.353553385 : f32
    %50 = vector.broadcast %cst_25 : f32 to vector<16x8xf32>
    %51 = arith.mulf %49, %50 : vector<16x8xf32>
    %52 = arith.truncf %51 : vector<16x8xf32> to vector<16x8xbf16>
    %cst_26 = arith.constant dense<0.000000e+00> : vector<16x16xf32>
    %53 = tpu.matmul %52, %17, %cst_26 {dimension_numbers = #tpu.dot_dimension_numbers<[1], [1], [0], [0], [0, 0, 1, 0], [], []>} : vector<16x8xbf16>, vector<16x8xbf16>, vector<16x16xf32> -> vector<16x16xf32>
    %cst_27 = arith.constant -1.000000e+30 : f32
    %54 = vector.broadcast %cst_27 : f32 to vector<16x16xf32>
    %55 = arith.select %14, %53, %54 : vector<16x16xi1>, vector<16x16xf32>
    %cst_28 = arith.constant dense<0xFF800000> : vector<16xf32>
    %56 = vector.multi_reduction <maximumf>, %55, %cst_28 [1] : vector<16x16xf32> to vector<16xf32>
    %57 = vector.shape_cast %56 : vector<16xf32> to vector<16x1xf32>
    %58 = vector.broadcast %57 : vector<16x1xf32> to vector<16x16xf32>
    %59 = arith.subf %55, %58 : vector<16x16xf32>
    %60 = math.exp %59 : vector<16x16xf32>
    %cst_29 = arith.constant dense<0.000000e+00> : vector<16xf32>
    %61 = vector.multi_reduction <add>, %60, %cst_29 [1] : vector<16x16xf32> to vector<16xf32>
    %62 = vector.shape_cast %61 : vector<16xf32> to vector<16x1xf32>
    %63 = tpu.reciprocal %62 {approx = true} : vector<16x1xf32> -> vector<16x1xf32>
    %64 = vector.broadcast %63 : vector<16x1xf32> to vector<16x16xf32>
    %65 = arith.mulf %60, %64 : vector<16x16xf32>
    %66 = arith.truncf %65 : vector<16x16xf32> to vector<16x16xbf16>
    %cst_30 = arith.constant dense<0.000000e+00> : vector<16x8xf32>
    %67 = tpu.matmul %66, %18, %cst_30 {dimension_numbers = #tpu.dot_dimension_numbers<[1], [0], [0], [1], [0, 0, 1, 1], [], []>} : vector<16x16xbf16>, vector<16x8xbf16>, vector<16x8xf32> -> vector<16x8xf32>
    %c0_31 = arith.constant 0 : index
    %c8 = arith.constant 8 : index
    %68 = vector.load %arg18[%c0_31, %c8] : memref<16x32xf32, #tpu.memory_space<vmem>>, vector<16x8xf32>
    tpu.vector_store %arg18[%c0_31, %c8], %67 {strides = array<i32>} : memref<16x32xf32, #tpu.memory_space<vmem>>, vector<16x8xf32>,
    %69 = vector.extract_strided_slice %10 {offsets = [0, 8], sizes = [16, 8], strides = [1, 1]} : vector<16x32xf32> to vector<16x8xf32>
    %70 = vector.extract_strided_slice %10 {offsets = [0, 24], sizes = [16, 8], strides = [1, 1]} : vector<16x32xf32> to vector<16x8xf32>
    %71 = arith.truncf %69 : vector<16x8xf32> to vector<16x8xbf16>
    %72 = arith.truncf %70 : vector<16x8xf32> to vector<16x8xbf16>
    %cst_32 = arith.constant 0.000000e+00 : f32
    %73 = vector.broadcast %cst_32 : f32 to vector<16x8xf32>
    %74 = arith.cmpf ogt, %69, %73 : vector<16x8xf32>
    %cst_33 = arith.constant 1.000000e+00 : f32
    %75 = vector.broadcast %cst_33 : f32 to vector<16x8xf32>
    %76 = arith.addf %69, %75 : vector<16x8xf32>
    %77 = math.exp %69 : vector<16x8xf32>
    %78 = arith.select %74, %76, %77 : vector<16x8xi1>, vector<16x8xf32>
    %79 = arith.truncf %78 : vector<16x8xf32> to vector<16x8xbf16>
    %cst_34 = arith.constant dense<0.000000e+00> : vector<8x8xf32>
    %80 = tpu.matmul %79, %72, %cst_34 {dimension_numbers = #tpu.dot_dimension_numbers<[0], [0], [1], [1], [0, 1, 1, 1], [], []>} : vector<16x8xbf16>, vector<16x8xbf16>, vector<8x8xf32> -> vector<8x8xf32>
    %cst_35 = arith.constant dense<0.000000e+00> : vector<8xf32>
    %81 = vector.multi_reduction <add>, %78, %cst_35 [0] : vector<16x8xf32> to vector<8xf32>
    %82 = vector.shape_cast %81 : vector<8xf32> to vector<1x8xf32>
    %83 = vector.extract_strided_slice %7 {offsets = [0, 16], sizes = [16, 8], strides = [1, 1]} : vector<16x32xf32> to vector<16x8xf32>
    %cst_36 = arith.constant 0.353553385 : f32
    %84 = vector.broadcast %cst_36 : f32 to vector<16x8xf32>
    %85 = arith.mulf %83, %84 : vector<16x8xf32>
    %86 = arith.truncf %85 : vector<16x8xf32> to vector<16x8xbf16>
    %cst_37 = arith.constant dense<0.000000e+00> : vector<16x16xf32>
    %87 = tpu.matmul %86, %71, %cst_37 {dimension_numbers = #tpu.dot_dimension_numbers<[1], [1], [0], [0], [0, 0, 1, 0], [], []>} : vector<16x8xbf16>, vector<16x8xbf16>, vector<16x16xf32> -> vector<16x16xf32>
    %cst_38 = arith.constant -1.000000e+30 : f32
    %88 = vector.broadcast %cst_38 : f32 to vector<16x16xf32>
    %89 = arith.select %14, %87, %88 : vector<16x16xi1>, vector<16x16xf32>
    %cst_39 = arith.constant dense<0xFF800000> : vector<16xf32>
    %90 = vector.multi_reduction <maximumf>, %89, %cst_39 [1] : vector<16x16xf32> to vector<16xf32>
    %91 = vector.shape_cast %90 : vector<16xf32> to vector<16x1xf32>
    %92 = vector.broadcast %91 : vector<16x1xf32> to vector<16x16xf32>
    %93 = arith.subf %89, %92 : vector<16x16xf32>
    %94 = math.exp %93 : vector<16x16xf32>
    %cst_40 = arith.constant dense<0.000000e+00> : vector<16xf32>
    %95 = vector.multi_reduction <add>, %94, %cst_40 [1] : vector<16x16xf32> to vector<16xf32>
    %96 = vector.shape_cast %95 : vector<16xf32> to vector<16x1xf32>
    %97 = tpu.reciprocal %96 {approx = true} : vector<16x1xf32> -> vector<16x1xf32>
    %98 = vector.broadcast %97 : vector<16x1xf32> to vector<16x16xf32>
    %99 = arith.mulf %94, %98 : vector<16x16xf32>
    %100 = arith.truncf %99 : vector<16x16xf32> to vector<16x16xbf16>
    %cst_41 = arith.constant dense<0.000000e+00> : vector<16x8xf32>
    %101 = tpu.matmul %100, %72, %cst_41 {dimension_numbers = #tpu.dot_dimension_numbers<[1], [0], [0], [1], [0, 0, 1, 1], [], []>} : vector<16x16xbf16>, vector<16x8xbf16>, vector<16x8xf32> -> vector<16x8xf32>
    %c0_42 = arith.constant 0 : index
    %c16 = arith.constant 16 : index
    %102 = vector.load %arg18[%c0_42, %c16] : memref<16x32xf32, #tpu.memory_space<vmem>>, vector<16x8xf32>
    tpu.vector_store %arg18[%c0_42, %c16], %101 {strides = array<i32>} : memref<16x32xf32, #tpu.memory_space<vmem>>, vector<16x8xf32>,
    %103 = vector.extract_strided_slice %7 {offsets = [0, 24], sizes = [16, 8], strides = [1, 1]} : vector<16x32xf32> to vector<16x8xf32>
    %cst_43 = arith.constant 0.353553385 : f32
    %104 = vector.broadcast %cst_43 : f32 to vector<16x8xf32>
    %105 = arith.mulf %103, %104 : vector<16x8xf32>
    %106 = arith.truncf %105 : vector<16x8xf32> to vector<16x8xbf16>
    %cst_44 = arith.constant dense<0.000000e+00> : vector<16x16xf32>
    %107 = tpu.matmul %106, %71, %cst_44 {dimension_numbers = #tpu.dot_dimension_numbers<[1], [1], [0], [0], [0, 0, 1, 0], [], []>} : vector<16x8xbf16>, vector<16x8xbf16>, vector<16x16xf32> -> vector<16x16xf32>
    %cst_45 = arith.constant -1.000000e+30 : f32
    %108 = vector.broadcast %cst_45 : f32 to vector<16x16xf32>
    %109 = arith.select %14, %107, %108 : vector<16x16xi1>, vector<16x16xf32>
    %cst_46 = arith.constant dense<0xFF800000> : vector<16xf32>
    %110 = vector.multi_reduction <maximumf>, %109, %cst_46 [1] : vector<16x16xf32> to vector<16xf32>
    %111 = vector.shape_cast %110 : vector<16xf32> to vector<16x1xf32>
    %112 = vector.broadcast %111 : vector<16x1xf32> to vector<16x16xf32>
    %113 = arith.subf %109, %112 : vector<16x16xf32>
    %114 = math.exp %113 : vector<16x16xf32>
    %cst_47 = arith.constant dense<0.000000e+00> : vector<16xf32>
    %115 = vector.multi_reduction <add>, %114, %cst_47 [1] : vector<16x16xf32> to vector<16xf32>
    %116 = vector.shape_cast %115 : vector<16xf32> to vector<16x1xf32>
    %117 = tpu.reciprocal %116 {approx = true} : vector<16x1xf32> -> vector<16x1xf32>
    %118 = vector.broadcast %117 : vector<16x1xf32> to vector<16x16xf32>
    %119 = arith.mulf %114, %118 : vector<16x16xf32>
    %120 = arith.truncf %119 : vector<16x16xf32> to vector<16x16xbf16>
    %cst_48 = arith.constant dense<0.000000e+00> : vector<16x8xf32>
    %121 = tpu.matmul %120, %72, %cst_48 {dimension_numbers = #tpu.dot_dimension_numbers<[1], [0], [0], [1], [0, 0, 1, 1], [], []>} : vector<16x16xbf16>, vector<16x8xbf16>, vector<16x8xf32> -> vector<16x8xf32>
    %c0_49 = arith.constant 0 : index
    %c24 = arith.constant 24 : index
    %122 = vector.load %arg18[%c0_49, %c24] : memref<16x32xf32, #tpu.memory_space<vmem>>, vector<16x8xf32>
    tpu.vector_store %arg18[%c0_49, %c24], %121 {strides = array<i32>} : memref<16x32xf32, #tpu.memory_space<vmem>>, vector<16x8xf32>,
    %123 = tpu.concatenate %26, %80 in 1 : vector<8x8xf32>, vector<8x8xf32> -> vector<8x16xf32>
    %c0_50 = arith.constant 0 : index
    %c0_51 = arith.constant 0 : index
    %c0_52 = arith.constant 0 : index
    %124 = vector.load %arg16[%c0_50, %c0_51, %c0_52] : memref<1x8x16xf32, #tpu.memory_space<vmem>>, vector<1x8x16xf32>
    %125 = vector.shape_cast %124 : vector<1x8x16xf32> to vector<8x16xf32>
    %126 = vector.shape_cast %123 : vector<8x16xf32> to vector<1x8x16xf32>
    tpu.vector_store %arg16[%c0_50, %c0_51, %c0_52], %126 {strides = array<i32>} : memref<1x8x16xf32, #tpu.memory_space<vmem>>, vector<1x8x16xf32>,
    %127 = tpu.concatenate %28, %82 in 1 : vector<1x8xf32>, vector<1x8xf32> -> vector<1x16xf32>
    %c0_53 = arith.constant 0 : index
    %c0_54 = arith.constant 0 : index
    %c0_55 = arith.constant 0 : index
    %128 = vector.load %arg17[%c0_53, %c0_54, %c0_55] : memref<1x1x16xf32, #tpu.memory_space<vmem>>, vector<1x1x16xf32>
    %129 = vector.shape_cast %128 : vector<1x1x16xf32> to vector<1x16xf32>
    %130 = vector.shape_cast %127 : vector<1x16xf32> to vector<1x1x16xf32>
    tpu.vector_store %arg17[%c0_53, %c0_54, %c0_55], %130 {strides = array<i32>} : memref<1x1x16xf32, #tpu.memory_space<vmem>>, vector<1x1x16xf32>,
    %c0_56 = arith.constant 0 : index
    %c0_57 = arith.constant 0 : index
    %131 = vector.load %arg18[%c0_56, %c0_57] : memref<16x32xf32, #tpu.memory_space<vmem>>, vector<16x32xf32>
    %132 = vector.broadcast %4 : vector<1x32xf32> to vector<16x32xf32>
    %133 = arith.mulf %131, %132 : vector<16x32xf32>
    %134 = arith.truncf %133 : vector<16x32xf32> to vector<16x32xbf16>
    %c0_58 = arith.constant 0 : index
    %c0_59 = arith.constant 0 : index
    %135 = vector.load %arg6[%c0_58, %c0_59] : memref<32x32xbf16, #tpu.memory_space<vmem>>, vector<32x32xbf16>
    %cst_60 = arith.constant dense<0.000000e+00> : vector<16x32xf32>
    %136 = tpu.matmul %134, %135, %cst_60 {dimension_numbers = #tpu.dot_dimension_numbers<[1], [0], [0], [1], [0, 0, 1, 1], [], []>} : vector<16x32xbf16>, vector<32x32xbf16>, vector<16x32xf32> -> vector<16x32xf32>
    %137 = arith.addf %1, %136 : vector<16x32xf32>
    %c0_61 = arith.constant 0 : index
    %c0_62 = arith.constant 0 : index
    %138 = vector.load %arg7[%c0_61, %c0_62] : memref<1x32xf32, #tpu.memory_space<vmem>>, vector<1x32xf32>
    %c0_63 = arith.constant 0 : index
    %c0_64 = arith.constant 0 : index
    %139 = vector.load %arg8[%c0_63, %c0_64] : memref<1x32xf32, #tpu.memory_space<vmem>>, vector<1x32xf32>
    %cst_65 = arith.constant dense<0.000000e+00> : vector<16xf32>
    %140 = vector.multi_reduction <add>, %137, %cst_65 [1] : vector<16x32xf32> to vector<16xf32>
    %141 = vector.shape_cast %140 : vector<16xf32> to vector<16x1xf32>
    %cst_66 = arith.constant 3.200000e+01 : f32
    %142 = vector.broadcast %cst_66 : f32 to vector<16x1xf32>
    %143 = arith.divf %141, %142 : vector<16x1xf32>
    %144 = vector.broadcast %143 : vector<16x1xf32> to vector<16x32xf32>
    %145 = arith.subf %137, %144 : vector<16x32xf32>
    %146 = arith.mulf %145, %145 : vector<16x32xf32>
    %cst_67 = arith.constant dense<0.000000e+00> : vector<16xf32>
    %147 = vector.multi_reduction <add>, %146, %cst_67 [1] : vector<16x32xf32> to vector<16xf32>
    %148 = vector.shape_cast %147 : vector<16xf32> to vector<16x1xf32>
    %cst_68 = arith.constant 3.200000e+01 : f32
    %149 = vector.broadcast %cst_68 : f32 to vector<16x1xf32>
    %150 = arith.divf %148, %149 : vector<16x1xf32>
    %151 = vector.broadcast %143 : vector<16x1xf32> to vector<16x32xf32>
    %152 = arith.subf %137, %151 : vector<16x32xf32>
    %cst_69 = arith.constant 9.99999974E-6 : f32
    %153 = vector.broadcast %cst_69 : f32 to vector<16x1xf32>
    %154 = arith.addf %150, %153 : vector<16x1xf32>
    %155 = math.rsqrt %154 : vector<16x1xf32>
    %156 = vector.broadcast %155 : vector<16x1xf32> to vector<16x32xf32>
    %157 = arith.mulf %152, %156 : vector<16x32xf32>
    %158 = vector.broadcast %138 : vector<1x32xf32> to vector<16x32xf32>
    %159 = arith.mulf %157, %158 : vector<16x32xf32>
    %160 = vector.broadcast %139 : vector<1x32xf32> to vector<16x32xf32>
    %161 = arith.addf %159, %160 : vector<16x32xf32>
    %162 = arith.truncf %161 : vector<16x32xf32> to vector<16x32xbf16>
    %c0_70 = arith.constant 0 : index
    %c0_71 = arith.constant 0 : index
    %163 = vector.load %arg9[%c0_70, %c0_71] : memref<32x64xbf16, #tpu.memory_space<vmem>>, vector<32x64xbf16>
    %cst_72 = arith.constant dense<0.000000e+00> : vector<16x64xf32>
    %164 = tpu.matmul %162, %163, %cst_72 {dimension_numbers = #tpu.dot_dimension_numbers<[1], [0], [0], [1], [0, 0, 1, 1], [], []>} : vector<16x32xbf16>, vector<32x64xbf16>, vector<16x64xf32> -> vector<16x64xf32>
    %c0_73 = arith.constant 0 : index
    %c0_74 = arith.constant 0 : index
    %165 = vector.load %arg10[%c0_73, %c0_74] : memref<1x64xf32, #tpu.memory_space<vmem>>, vector<1x64xf32>
    %166 = vector.broadcast %165 : vector<1x64xf32> to vector<16x64xf32>
    %167 = arith.addf %164, %166 : vector<16x64xf32>
    %cst_75 = arith.constant 0.000000e+00 : f32
    %168 = vector.broadcast %cst_75 : f32 to vector<16x64xf32>
    %169 = arith.maximumf %167, %168 : vector<16x64xf32>
    %170 = arith.truncf %169 : vector<16x64xf32> to vector<16x64xbf16>
    %c0_76 = arith.constant 0 : index
    %c0_77 = arith.constant 0 : index
    %171 = vector.load %arg11[%c0_76, %c0_77] : memref<64x32xbf16, #tpu.memory_space<vmem>>, vector<64x32xbf16>
    %cst_78 = arith.constant dense<0.000000e+00> : vector<16x32xf32>
    %172 = tpu.matmul %170, %171, %cst_78 {dimension_numbers = #tpu.dot_dimension_numbers<[1], [0], [0], [1], [0, 0, 1, 1], [], []>} : vector<16x64xbf16>, vector<64x32xbf16>, vector<16x32xf32> -> vector<16x32xf32>
    %c0_79 = arith.constant 0 : index
    %c0_80 = arith.constant 0 : index
    %173 = vector.load %arg12[%c0_79, %c0_80] : memref<1x32xf32, #tpu.memory_space<vmem>>, vector<1x32xf32>
    %174 = vector.broadcast %173 : vector<1x32xf32> to vector<16x32xf32>
    %175 = arith.addf %172, %174 : vector<16x32xf32>
    %176 = arith.addf %161, %175 : vector<16x32xf32>
    %c0_81 = arith.constant 0 : index
    %c0_82 = arith.constant 0 : index
    %177 = vector.load %arg13[%c0_81, %c0_82] : memref<1x32xf32, #tpu.memory_space<vmem>>, vector<1x32xf32>
    %c0_83 = arith.constant 0 : index
    %c0_84 = arith.constant 0 : index
    %178 = vector.load %arg14[%c0_83, %c0_84] : memref<1x32xf32, #tpu.memory_space<vmem>>, vector<1x32xf32>
    %cst_85 = arith.constant dense<0.000000e+00> : vector<16xf32>
    %179 = vector.multi_reduction <add>, %176, %cst_85 [1] : vector<16x32xf32> to vector<16xf32>
    %180 = vector.shape_cast %179 : vector<16xf32> to vector<16x1xf32>
    %cst_86 = arith.constant 3.200000e+01 : f32
    %181 = vector.broadcast %cst_86 : f32 to vector<16x1xf32>
    %182 = arith.divf %180, %181 : vector<16x1xf32>
    %183 = vector.broadcast %182 : vector<16x1xf32> to vector<16x32xf32>
    %184 = arith.subf %176, %183 : vector<16x32xf32>
    %185 = arith.mulf %184, %184 : vector<16x32xf32>
    %cst_87 = arith.constant dense<0.000000e+00> : vector<16xf32>
    %186 = vector.multi_reduction <add>, %185, %cst_87 [1] : vector<16x32xf32> to vector<16xf32>
    %187 = vector.shape_cast %186 : vector<16xf32> to vector<16x1xf32>
    %cst_88 = arith.constant 3.200000e+01 : f32
    %188 = vector.broadcast %cst_88 : f32 to vector<16x1xf32>
    %189 = arith.divf %187, %188 : vector<16x1xf32>
    %190 = vector.broadcast %182 : vector<16x1xf32> to vector<16x32xf32>
    %191 = arith.subf %176, %190 : vector<16x32xf32>
    %cst_89 = arith.constant 9.99999974E-6 : f32
    %192 = vector.broadcast %cst_89 : f32 to vector<16x1xf32>
    %193 = arith.addf %189, %192 : vector<16x1xf32>
    %194 = math.rsqrt %193 : vector<16x1xf32>
    %195 = vector.broadcast %194 : vector<16x1xf32> to vector<16x32xf32>
    %196 = arith.mulf %191, %195 : vector<16x32xf32>
    %197 = vector.broadcast %177 : vector<1x32xf32> to vector<16x32xf32>
    %198 = arith.mulf %196, %197 : vector<16x32xf32>
    %199 = vector.broadcast %178 : vector<1x32xf32> to vector<16x32xf32>
    %200 = arith.addf %198, %199 : vector<16x32xf32>
    %c0_90 = arith.constant 0 : index
    %c0_91 = arith.constant 0 : index
    %c0_92 = arith.constant 0 : index
    %201 = vector.load %arg15[%c0_90, %c0_91, %c0_92] : memref<1x16x32xf32, #tpu.memory_space<vmem>>, vector<1x16x32xf32>
    %202 = vector.shape_cast %201 : vector<1x16x32xf32> to vector<16x32xf32>
    %203 = vector.shape_cast %200 : vector<16x32xf32> to vector<1x16x32xf32>
    tpu.vector_store %arg15[%c0_90, %c0_91, %c0_92], %203 {strides = array<i32>} : memref<1x16x32xf32, #tpu.memory_space<vmem>>, vector<1x16x32xf32>,
    return
  }
  func.func @transform_0(%arg0: i32) -> (i32, i32, i32) {
    %c0_i32 = arith.constant 0 : i32
    %c0_i32_0 = arith.constant 0 : i32
    %c0_i32_1 = arith.constant 0 : i32
    return %arg0, %c0_i32, %c0_i32_0 : i32, i32, i32
  }
  func.func @transform_1(%arg0: i32) -> (i32, i32) {
    %c0_i32 = arith.constant 0 : i32
    %c0_i32_0 = arith.constant 0 : i32
    %c0_i32_1 = arith.constant 0 : i32
    return %c0_i32, %c0_i32_0 : i32, i32
  }
  func.func @transform_2(%arg0: i32) -> (i32, i32, i32) {
    %c0_i32 = arith.constant 0 : i32
    %c0_i32_0 = arith.constant 0 : i32
    %c0_i32_1 = arith.constant 0 : i32
    return %arg0, %c0_i32, %c0_i32_0 : i32, i32, i32
  }
  func.func @transform_3(%arg0: i32) -> (i32, i32) {
    %c0_i32 = arith.constant 0 : i32
    %c0_i32_0 = arith.constant 0 : i32
    %c0_i32_1 = arith.constant 0 : i32
    return %c0_i32, %c0_i32_0 : i32, i32
  }
  func.func @transform_4(%arg0: i32) -> (i32, i32) {
    %c0_i32 = arith.constant 0 : i32
    %c0_i32_0 = arith.constant 0 : i32
    %c0_i32_1 = arith.constant 0 : i32
    return %c0_i32, %c0_i32_0 : i32, i32
  }
  func.func @transform_5(%arg0: i32) -> (i32, i32) {
    %c0_i32 = arith.constant 0 : i32
    %c0_i32_0 = arith.constant 0 : i32
    %c0_i32_1 = arith.constant 0 : i32
    return %c0_i32, %c0_i32_0 : i32, i32
  }
  func.func @transform_6(%arg0: i32) -> (i32, i32) {
    %c0_i32 = arith.constant 0 : i32
    %c0_i32_0 = arith.constant 0 : i32
    %c0_i32_1 = arith.constant 0 : i32
    return %c0_i32, %c0_i32_0 : i32, i32
  }
  func.func @transform_7(%arg0: i32) -> (i32, i32) {
    %c0_i32 = arith.constant 0 : i32
    %c0_i32_0 = arith.constant 0 : i32
    %c0_i32_1 = arith.constant 0 : i32
    return %c0_i32, %c0_i32_0 : i32, i32
  }
  func.func @transform_8(%arg0: i32) -> (i32, i32) {
    %c0_i32 = arith.constant 0 : i32
    %c0_i32_0 = arith.constant 0 : i32
    %c0_i32_1 = arith.constant 0 : i32
    return %c0_i32, %c0_i32_0 : i32, i32
  }
  func.func @transform_9(%arg0: i32) -> (i32, i32) {
    %c0_i32 = arith.constant 0 : i32
    %c0_i32_0 = arith.constant 0 : i32
    %c0_i32_1 = arith.constant 0 : i32
    return %c0_i32, %c0_i32_0 : i32, i32
  }
  func.func @transform_10(%arg0: i32) -> (i32, i32) {
    %c0_i32 = arith.constant 0 : i32
    %c0_i32_0 = arith.constant 0 : i32
    %c0_i32_1 = arith.constant 0 : i32
    return %c0_i32, %c0_i32_0 : i32, i32
  }
  func.func @transform_11(%arg0: i32) -> (i32, i32) {
    %c0_i32 = arith.constant 0 : i32
    %c0_i32_0 = arith.constant 0 : i32
    %c0_i32_1 = arith.constant 0 : i32
    return %c0_i32, %c0_i32_0 : i32, i32
  }
  func.func @transform_12(%arg0: i32) -> (i32, i32) {
    %c0_i32 = arith.constant 0 : i32
    %c0_i32_0 = arith.constant 0 : i32
    %c0_i32_1 = arith.constant 0 : i32
    return %c0_i32, %c0_i32_0 : i32, i32
  }
  func.func @transform_13(%arg0: i32) -> (i32, i32) {
    %c0_i32 = arith.constant 0 : i32
    %c0_i32_0 = arith.constant 0 : i32
    %c0_i32_1 = arith.constant 0 : i32
    return %c0_i32, %c0_i32_0 : i32, i32
  }
  func.func @transform_14(%arg0: i32) -> (i32, i32, i32) {
    %c0_i32 = arith.constant 0 : i32
    %c0_i32_0 = arith.constant 0 : i32
    %c0_i32_1 = arith.constant 0 : i32
    return %arg0, %c0_i32, %c0_i32_0 : i32, i32, i32
  }
  func.func @transform_15(%arg0: i32) -> (i32, i32, i32) {
    %c0_i32 = arith.constant 0 : i32
    %c0_i32_0 = arith.constant 0 : i32
    %c0_i32_1 = arith.constant 0 : i32
    return %arg0, %c0_i32, %c0_i32_0 : i32, i32, i32
  }
  func.func @transform_16(%arg0: i32) -> (i32, i32, i32) {
    %c0_i32 = arith.constant 0 : i32
    %c0_i32_0 = arith.constant 0 : i32
    %c0_i32_1 = arith.constant 0 : i32
    return %arg0, %c0_i32, %c0_i32_0 : i32, i32, i32
  }
}

</mosaic_0001>

<llo_original>
// kernel: transformer_forward.4
$region0: #{transformer_forward.4}
  #allocation0 [shape = 'u32[]', space=smem, size = 0x4, offset = 0x4, fixed_abs, tag = 'smem constant byte address 0x4 - core index']
  #allocation1 [shape = 'u32[144,128]{1,0:T(1,128)}', space=vmem, size = 0x12000, scoped, tag = 'internal scratch']
  #allocation2 [shape = 'f32[16,32]{1,0:T(8,128)}', space=vmem, size = 0x2000, scoped, tag = 'scratch operand']
  %s0 = inlined_call_operand.vmem [shape: f32[2,1,16], index: 0, kind: input, shape index: {}]
  %s1 = inlined_call_operand.vmem [shape: f32[1,32], index: 1, kind: input, shape index: {}]
  %s2 = inlined_call_operand.vmem [shape: f32[2,16,32], index: 2, kind: input, shape index: {}]
  %s3 = inlined_call_operand.vmem [shape: bf16[32,32], index: 3, kind: input, shape index: {}]
  %s4 = inlined_call_operand.vmem [shape: bf16[32,32], index: 4, kind: input, shape index: {}]
  %s5 = inlined_call_operand.vmem [shape: bf16[32,32], index: 5, kind: input, shape index: {}]
  %s6 = inlined_call_operand.vmem [shape: f32[1,32], index: 6, kind: input, shape index: {}]
  %s7 = inlined_call_operand.vmem [shape: f32[1,32], index: 7, kind: input, shape index: {}]
  %s8 = inlined_call_operand.vmem [shape: bf16[32,64], index: 8, kind: input, shape index: {}]
  %s9 = inlined_call_operand.vmem [shape: f32[1,64], index: 9, kind: input, shape index: {}]
  %s10 = inlined_call_operand.vmem [shape: bf16[64,32], index: 10, kind: input, shape index: {}]
  %s11 = inlined_call_operand.vmem [shape: f32[1,32], index: 11, kind: input, shape index: {}]
  %s12 = inlined_call_operand.vmem [shape: f32[1,32], index: 12, kind: input, shape index: {}]
  %s13 = inlined_call_operand.vmem [shape: f32[1,32], index: 13, kind: input, shape index: {}]
  %s14 = inlined_call_operand.vmem [shape: f32[2,16,32], index: 14, kind: output, shape index: {0}]
  %s15 = inlined_call_operand.vmem [shape: f32[2,8,16], index: 15, kind: output, shape index: {1}]
  %s16 = inlined_call_operand.vmem [shape: f32[2,1,16], index: 16, kind: output, shape index: {2}]
  %17 = xla_tuple %s14, %s15, %s16
  %s18 = sld [smem:[#allocation0]]
  $region105: #{transformer_forward.4} parent=0
    _
  %s20 = ssub.s32 1, %s18
  %s21 = scalar_select 0, %s20, %s18
  loop: start=0, step=1, limit=4
  $region2: #{transformer_forward.4} parent=0 // loop_pre_header
    _
  $region3: #{transformer_forward.4} parent=0 // loop_header
    %s23 = sphi 0, %s27
    %p24 = scmp.ge.s32.totalorder %s23, 4
    %s33 = sphi 0, %s35
    %s36 = sphi 0, %s33
    %s37 = sphi 0, %s36
    %s53 = sphi 0, %s37
    %s57 = sphi 0, %s57
    %s59 = sphi 0, %s57
    %s60 = sphi 0, %s59
    %s74 = sphi 0, %s60
    %s80 = sphi 0, %s82
    %s83 = sphi 0, %s80
    %s84 = sphi 0, %s83
    %s100 = sphi 0, %s84
    %s104 = sphi 0, %s104
    %s106 = sphi 0, %s104
    %s107 = sphi 0, %s106
    %s121 = sphi 0, %s107
    %s125 = sphi 0, %s125
    %s127 = sphi 0, %s125
    %s128 = sphi 0, %s127
    %s142 = sphi 0, %s128
    %s146 = sphi 0, %s146
    %s148 = sphi 0, %s146
    %s149 = sphi 0, %s148
    %s163 = sphi 0, %s149
    %s167 = sphi 0, %s167
    %s169 = sphi 0, %s167
    %s170 = sphi 0, %s169
    %s184 = sphi 0, %s170
    %s188 = sphi 0, %s188
    %s190 = sphi 0, %s188
    %s191 = sphi 0, %s190
    %s205 = sphi 0, %s191
    %s209 = sphi 0, %s209
    %s211 = sphi 0, %s209
    %s212 = sphi 0, %s211
    %s226 = sphi 0, %s212
    %s230 = sphi 0, %s230
    %s232 = sphi 0, %s230
    %s233 = sphi 0, %s232
    %s247 = sphi 0, %s233
    %s251 = sphi 0, %s251
    %s253 = sphi 0, %s251
    %s254 = sphi 0, %s253
    %s268 = sphi 0, %s254
    %s272 = sphi 0, %s272
    %s274 = sphi 0, %s272
    %s275 = sphi 0, %s274
    %s289 = sphi 0, %s275
    %s293 = sphi 0, %s293
    %s295 = sphi 0, %s293
    %s296 = sphi 0, %s295
    %s310 = sphi 0, %s296
    %s314 = sphi 0, %s314
    %s316 = sphi 0, %s314
    %s317 = sphi 0, %s316
    %s331 = sphi 0, %s317
    %s337 = sphi 0, %s339
    %s340 = sphi 0, %s337
    %s341 = sphi 0, %s340
    %s357 = sphi 0, %s341
    %s363 = sphi 0, %s365
    %s366 = sphi 0, %s363
    %s367 = sphi 0, %s366
    %s383 = sphi 0, %s367
    %s389 = sphi 0, %s391
    %s392 = sphi 0, %s389
    %s393 = sphi 0, %s392
    %s409 = sphi 0, %s393
  $region4: #{transformer_forward.4} parent=0 // loop_header_branch
    %26 = sbr.rel (%p24) target = $region8
  $region5: #{transformer_forward.4} parent=0 // loop_body
    %s28 = ssub.s32 %s23, 1
    %s29 = ssub.s32 %s23, 2
    %s30 = sadd.s32 %s23, 1
    %s31 = ssub.s32 %s23, %s30
    %p32 = scmp.eq.s32.totalorder %s31, 0
    %s34 = sadd.s32 %s33, 1
    %s35 = scalar_select %p32, %s33, %s34
    %p38 = pneg %p32
    %p39 = scmp.eq.s32.totalorder %s23, 1
    %p40 = por %p38, %p39
    %p41 = scmp.ne.s32.totalorder %s33, %s36
    %p42 = scmp.eq.s32.totalorder %s23, 0
    %p43 = por %p41, %p42
    %p44 = scmp.ne.s32.totalorder %s33, %s36
    %p45 = scmp.eq.s32.totalorder %s28, 1
    %p46 = por %p44, %p45
    %p47 = scmp.ne.s32.totalorder %s36, %s37
    %p48 = scmp.eq.s32.totalorder %s28, 0
    %p49 = por %p47, %p48
    %p50 = scmp.ne.s32.totalorder %s36, %s37
    %p51 = scmp.eq.s32.totalorder %s29, 1
    %p52 = por %p50, %p51
    %p54 = scmp.ne.s32.totalorder %s37, %s53
    %p55 = scmp.eq.s32.totalorder %s29, 0
    %p56 = por %p54, %p55
    %s58 = sadd.s32 %s57, 1
    %p61 = scmp.eq.s32.totalorder %s23, 1
    %p62 = scmp.ne.s32.totalorder %s57, %s59
    %p63 = scmp.eq.s32.totalorder %s23, 0
    %p64 = por %p62, %p63
    %p65 = scmp.ne.s32.totalorder %s57, %s59
    %p66 = scmp.eq.s32.totalorder %s28, 1
    %p67 = por %p65, %p66
    %p68 = scmp.ne.s32.totalorder %s59, %s60
    %p69 = scmp.eq.s32.totalorder %s28, 0
    %p70 = por %p68, %p69
    %p71 = scmp.ne.s32.totalorder %s59, %s60
    %p72 = scmp.eq.s32.totalorder %s29, 1
    %p73 = por %p71, %p72
    %p75 = scmp.ne.s32.totalorder %s60, %s74
    %p76 = scmp.eq.s32.totalorder %s29, 0
    %p77 = por %p75, %p76
    %s78 = ssub.s32 %s23, %s30
    %p79 = scmp.eq.s32.totalorder %s78, 0
    %s81 = sadd.s32 %s80, 1
    %s82 = scalar_select %p79, %s80, %s81
    %p85 = pneg %p79
    %p86 = scmp.eq.s32.totalorder %s23, 1
    %p87 = por %p85, %p86
    %p88 = scmp.ne.s32.totalorder %s80, %s83
    %p89 = scmp.eq.s32.totalorder %s23, 0
    %p90 = por %p88, %p89
    %p91 = scmp.ne.s32.totalorder %s80, %s83
    %p92 = scmp.eq.s32.totalorder %s28, 1
    %p93 = por %p91, %p92
    %p94 = scmp.ne.s32.totalorder %s83, %s84
    %p95 = scmp.eq.s32.totalorder %s28, 0
    %p96 = por %p94, %p95
    %p97 = scmp.ne.s32.totalorder %s83, %s84
    %p98 = scmp.eq.s32.totalorder %s29, 1
    %p99 = por %p97, %p98
    %p101 = scmp.ne.s32.totalorder %s84, %s100
    %p102 = scmp.eq.s32.totalorder %s29, 0
    %p103 = por %p101, %p102
    %s105 = sadd.s32 %s104, 1
    %p108 = scmp.eq.s32.totalorder %s23, 1
    %p109 = scmp.ne.s32.totalorder %s104, %s106
    %p110 = scmp.eq.s32.totalorder %s23, 0
    %p111 = por %p109, %p110
    %p112 = scmp.ne.s32.totalorder %s104, %s106
    %p113 = scmp.eq.s32.totalorder %s28, 1
    %p114 = por %p112, %p113
    %p115 = scmp.ne.s32.totalorder %s106, %s107
    %p116 = scmp.eq.s32.totalorder %s28, 0
    %p117 = por %p115, %p116
    %p118 = scmp.ne.s32.totalorder %s106, %s107
    %p119 = scmp.eq.s32.totalorder %s29, 1
    %p120 = por %p118, %p119
    %p122 = scmp.ne.s32.totalorder %s107, %s121
    %p123 = scmp.eq.s32.totalorder %s29, 0
    %p124 = por %p122, %p123
    %s126 = sadd.s32 %s125, 1
    %p129 = scmp.eq.s32.totalorder %s23, 1
    %p130 = scmp.ne.s32.totalorder %s125, %s127
    %p131 = scmp.eq.s32.totalorder %s23, 0
    %p132 = por %p130, %p131
    %p133 = scmp.ne.s32.totalorder %s125, %s127
    %p134 = scmp.eq.s32.totalorder %s28, 1
    %p135 = por %p133, %p134
    %p136 = scmp.ne.s32.totalorder %s127, %s128
    %p137 = scmp.eq.s32.totalorder %s28, 0
    %p138 = por %p136, %p137
    %p139 = scmp.ne.s32.totalorder %s127, %s128
    %p140 = scmp.eq.s32.totalorder %s29, 1
    %p141 = por %p139, %p140
    %p143 = scmp.ne.s32.totalorder %s128, %s142
    %p144 = scmp.eq.s32.totalorder %s29, 0
    %p145 = por %p143, %p144
    %s147 = sadd.s32 %s146, 1
    %p150 = scmp.eq.s32.totalorder %s23, 1
    %p151 = scmp.ne.s32.totalorder %s146, %s148
    %p152 = scmp.eq.s32.totalorder %s23, 0
    %p153 = por %p151, %p152
    %p154 = scmp.ne.s32.totalorder %s146, %s148
    %p155 = scmp.eq.s32.totalorder %s28, 1
    %p156 = por %p154, %p155
    %p157 = scmp.ne.s32.totalorder %s148, %s149
    %p158 = scmp.eq.s32.totalorder %s28, 0
    %p159 = por %p157, %p158
    %p160 = scmp.ne.s32.totalorder %s148, %s149
    %p161 = scmp.eq.s32.totalorder %s29, 1
    %p162 = por %p160, %p161
    %p164 = scmp.ne.s32.totalorder %s149, %s163
    %p165 = scmp.eq.s32.totalorder %s29, 0
    %p166 = por %p164, %p165
    %s168 = sadd.s32 %s167, 1
    %p171 = scmp.eq.s32.totalorder %s23, 1
    %p172 = scmp.ne.s32.totalorder %s167, %s169
    %p173 = scmp.eq.s32.totalorder %s23, 0
    %p174 = por %p172, %p173
    %p175 = scmp.ne.s32.totalorder %s167, %s169
    %p176 = scmp.eq.s32.totalorder %s28, 1
    %p177 = por %p175, %p176
    %p178 = scmp.ne.s32.totalorder %s169, %s170
    %p179 = scmp.eq.s32.totalorder %s28, 0
    %p180 = por %p178, %p179
    %p181 = scmp.ne.s32.totalorder %s169, %s170
    %p182 = scmp.eq.s32.totalorder %s29, 1
    %p183 = por %p181, %p182
    %p185 = scmp.ne.s32.totalorder %s170, %s184
    %p186 = scmp.eq.s32.totalorder %s29, 0
    %p187 = por %p185, %p186
    %s189 = sadd.s32 %s188, 1
    %p192 = scmp.eq.s32.totalorder %s23, 1
    %p193 = scmp.ne.s32.totalorder %s188, %s190
    %p194 = scmp.eq.s32.totalorder %s23, 0
    %p195 = por %p193, %p194
    %p196 = scmp.ne.s32.totalorder %s188, %s190
    %p197 = scmp.eq.s32.totalorder %s28, 1
    %p198 = por %p196, %p197
    %p199 = scmp.ne.s32.totalorder %s190, %s191
    %p200 = scmp.eq.s32.totalorder %s28, 0
    %p201 = por %p199, %p200
    %p202 = scmp.ne.s32.totalorder %s190, %s191
    %p203 = scmp.eq.s32.totalorder %s29, 1
    %p204 = por %p202, %p203
    %p206 = scmp.ne.s32.totalorder %s191, %s205
    %p207 = scmp.eq.s32.totalorder %s29, 0
    %p208 = por %p206, %p207
    %s210 = sadd.s32 %s209, 1
    %p213 = scmp.eq.s32.totalorder %s23, 1
    %p214 = scmp.ne.s32.totalorder %s209, %s211
    %p215 = scmp.eq.s32.totalorder %s23, 0
    %p216 = por %p214, %p215
    %p217 = scmp.ne.s32.totalorder %s209, %s211
    %p218 = scmp.eq.s32.totalorder %s28, 1
    %p219 = por %p217, %p218
    %p220 = scmp.ne.s32.totalorder %s211, %s212
    %p221 = scmp.eq.s32.totalorder %s28, 0
    %p222 = por %p220, %p221
    %p223 = scmp.ne.s32.totalorder %s211, %s212
    %p224 = scmp.eq.s32.totalorder %s29, 1
    %p225 = por %p223, %p224
    %p227 = scmp.ne.s32.totalorder %s212, %s226
    %p228 = scmp.eq.s32.totalorder %s29, 0
    %p229 = por %p227, %p228
    %s231 = sadd.s32 %s230, 1
    %p234 = scmp.eq.s32.totalorder %s23, 1
    %p235 = scmp.ne.s32.totalorder %s230, %s232
    %p236 = scmp.eq.s32.totalorder %s23, 0
    %p237 = por %p235, %p236
    %p238 = scmp.ne.s32.totalorder %s230, %s232
    %p239 = scmp.eq.s32.totalorder %s28, 1
    %p240 = por %p238, %p239
    %p241 = scmp.ne.s32.totalorder %s232, %s233
    %p242 = scmp.eq.s32.totalorder %s28, 0
    %p243 = por %p241, %p242
    %p244 = scmp.ne.s32.totalorder %s232, %s233
    %p245 = scmp.eq.s32.totalorder %s29, 1
    %p246 = por %p244, %p245
    %p248 = scmp.ne.s32.totalorder %s233, %s247
    %p249 = scmp.eq.s32.totalorder %s29, 0
    %p250 = por %p248, %p249
    %s252 = sadd.s32 %s251, 1
    %p255 = scmp.eq.s32.totalorder %s23, 1
    %p256 = scmp.ne.s32.totalorder %s251, %s253
    %p257 = scmp.eq.s32.totalorder %s23, 0
    %p258 = por %p256, %p257
    %p259 = scmp.ne.s32.totalorder %s251, %s253
    %p260 = scmp.eq.s32.totalorder %s28, 1
    %p261 = por %p259, %p260
    %p262 = scmp.ne.s32.totalorder %s253, %s254
    %p263 = scmp.eq.s32.totalorder %s28, 0
    %p264 = por %p262, %p263
    %p265 = scmp.ne.s32.totalorder %s253, %s254
    %p266 = scmp.eq.s32.totalorder %s29, 1
    %p267 = por %p265, %p266
    %p269 = scmp.ne.s32.totalorder %s254, %s268
    %p270 = scmp.eq.s32.totalorder %s29, 0
    %p271 = por %p269, %p270
    %s273 = sadd.s32 %s272, 1
    %p276 = scmp.eq.s32.totalorder %s23, 1
    %p277 = scmp.ne.s32.totalorder %s272, %s274
    %p278 = scmp.eq.s32.totalorder %s23, 0
    %p279 = por %p277, %p278
    %p280 = scmp.ne.s32.totalorder %s272, %s274
    %p281 = scmp.eq.s32.totalorder %s28, 1
    %p282 = por %p280, %p281
    %p283 = scmp.ne.s32.totalorder %s274, %s275
    %p284 = scmp.eq.s32.totalorder %s28, 0
    %p285 = por %p283, %p284
    %p286 = scmp.ne.s32.totalorder %s274, %s275
    %p287 = scmp.eq.s32.totalorder %s29, 1
    %p288 = por %p286, %p287
    %p290 = scmp.ne.s32.totalorder %s275, %s289
    %p291 = scmp.eq.s32.totalorder %s29, 0
    %p292 = por %p290, %p291
    %s294 = sadd.s32 %s293, 1
    %p297 = scmp.eq.s32.totalorder %s23, 1
    %p298 = scmp.ne.s32.totalorder %s293, %s295
    %p299 = scmp.eq.s32.totalorder %s23, 0
    %p300 = por %p298, %p299
    %p301 = scmp.ne.s32.totalorder %s293, %s295
    %p302 = scmp.eq.s32.totalorder %s28, 1
    %p303 = por %p301, %p302
    %p304 = scmp.ne.s32.totalorder %s295, %s296
    %p305 = scmp.eq.s32.totalorder %s28, 0
    %p306 = por %p304, %p305
    %p307 = scmp.ne.s32.totalorder %s295, %s296
    %p308 = scmp.eq.s32.totalorder %s29, 1
    %p309 = por %p307, %p308
    %p311 = scmp.ne.s32.totalorder %s296, %s310
    %p312 = scmp.eq.s32.totalorder %s29, 0
    %p313 = por %p311, %p312
    %s315 = sadd.s32 %s314, 1
    %p318 = scmp.eq.s32.totalorder %s23, 1
    %p319 = scmp.ne.s32.totalorder %s314, %s316
    %p320 = scmp.eq.s32.totalorder %s23, 0
    %p321 = por %p319, %p320
    %p322 = scmp.ne.s32.totalorder %s314, %s316
    %p323 = scmp.eq.s32.totalorder %s28, 1
    %p324 = por %p322, %p323
    %p325 = scmp.ne.s32.totalorder %s316, %s317
    %p326 = scmp.eq.s32.totalorder %s28, 0
    %p327 = por %p325, %p326
    %p328 = scmp.ne.s32.totalorder %s316, %s317
    %p329 = scmp.eq.s32.totalorder %s29, 1
    %p330 = por %p328, %p329
    %p332 = scmp.ne.s32.totalorder %s317, %s331
    %p333 = scmp.eq.s32.totalorder %s29, 0
    %p334 = por %p332, %p333
    %s335 = ssub.s32 %s23, %s30
    %p336 = scmp.eq.s32.totalorder %s335, 0
    %s338 = sadd.s32 %s337, 1
    %s339 = scalar_select %p336, %s337, %s338
    %p342 = pneg %p336
    %p343 = scmp.eq.s32.totalorder %s23, 1
    %p344 = por %p342, %p343
    %p345 = scmp.ne.s32.totalorder %s337, %s340
    %p346 = scmp.eq.s32.totalorder %s23, 0
    %p347 = por %p345, %p346
    %p348 = scmp.ne.s32.totalorder %s337, %s340
    %p349 = scmp.eq.s32.totalorder %s28, 1
    %p350 = por %p348, %p349
    %p351 = scmp.ne.s32.totalorder %s340, %s341
    %p352 = scmp.eq.s32.totalorder %s28, 0
    %p353 = por %p351, %p352
    %p354 = scmp.ne.s32.totalorder %s340, %s341
    %p355 = scmp.eq.s32.totalorder %s29, 1
    %p356 = por %p354, %p355
    %p358 = scmp.ne.s32.totalorder %s341, %s357
    %p359 = scmp.eq.s32.totalorder %s29, 0
    %p360 = por %p358, %p359
    %s361 = ssub.s32 %s23, %s30
    %p362 = scmp.eq.s32.totalorder %s361, 0
    %s364 = sadd.s32 %s363, 1
    %s365 = scalar_select %p362, %s363, %s364
    %p368 = pneg %p362
    %p369 = scmp.eq.s32.totalorder %s23, 1
    %p370 = por %p368, %p369
    %p371 = scmp.ne.s32.totalorder %s363, %s366
    %p372 = scmp.eq.s32.totalorder %s23, 0
    %p373 = por %p371, %p372
    %p374 = scmp.ne.s32.totalorder %s363, %s366
    %p375 = scmp.eq.s32.totalorder %s28, 1
    %p376 = por %p374, %p375
    %p377 = scmp.ne.s32.totalorder %s366, %s367
    %p378 = scmp.eq.s32.totalorder %s28, 0
    %p379 = por %p377, %p378
    %p380 = scmp.ne.s32.totalorder %s366, %s367
    %p381 = scmp.eq.s32.totalorder %s29, 1
    %p382 = por %p380, %p381
    %p384 = scmp.ne.s32.totalorder %s367, %s383
    %p385 = scmp.eq.s32.totalorder %s29, 0
    %p386 = por %p384, %p385
    %s387 = ssub.s32 %s23, %s30
    %p388 = scmp.eq.s32.totalorder %s387, 0
    %s390 = sadd.s32 %s389, 1
    %s391 = scalar_select %p388, %s389, %s390
    %p394 = pneg %p388
    %p395 = scmp.eq.s32.totalorder %s23, 1
    %p396 = por %p394, %p395
    %p397 = scmp.ne.s32.totalorder %s389, %s392
    %p398 = scmp.eq.s32.totalorder %s23, 0
    %p399 = por %p397, %p398
    %p400 = scmp.ne.s32.totalorder %s389, %s392
    %p401 = scmp.eq.s32.totalorder %s28, 1
    %p402 = por %p400, %p401
    %p403 = scmp.ne.s32.totalorder %s392, %s393
    %p404 = scmp.eq.s32.totalorder %s28, 0
    %p405 = por %p403, %p404
    %p406 = scmp.ne.s32.totalorder %s392, %s393
    %p407 = scmp.eq.s32.totalorder %s29, 1
    %p408 = por %p406, %p407
    %p410 = scmp.ne.s32.totalorder %s393, %s409
    %p411 = scmp.eq.s32.totalorder %s29, 0
    %p412 = por %p410, %p411
    %p413 = scmp.le.s32.totalorder 1, %s23
    %p414 = scmp.lt.s32.totalorder %s23, 3
    %p415 = pnand %p413, %p414
    %p416 = pneg %p415
    // Predicated region
    $region9: #{transformer_forward.4} parent=5 // pred_check
      _
    $region10: #{transformer_forward.4} parent=5 // pred_check_branch
      %418 = sbr.rel (%p415) target = $region12
    $region11: #{transformer_forward.4} parent=5 // pred_region
      %s419 = ssub.s32 %s23, 1
      // Predicated region
      $region13: #{transformer_forward.4} parent=11 // pred_check
        %p420 = pneg %p70
      $region14: #{transformer_forward.4} parent=11 // pred_check_branch
        %422 = sbr.rel (%p420) target = $region16
      $region15: #{transformer_forward.4} parent=11 // pred_region
        _
      $region16: #{transformer_forward.4} parent=11 // pred_fallthru
        _
      // Predicated region
      $region17: #{transformer_forward.4} parent=11 // pred_check
        %p423 = pneg %p117
      $region18: #{transformer_forward.4} parent=11 // pred_check_branch
        %425 = sbr.rel (%p423) target = $region20
      $region19: #{transformer_forward.4} parent=11 // pred_region
        _
      $region20: #{transformer_forward.4} parent=11 // pred_fallthru
        _
      // Predicated region
      $region21: #{transformer_forward.4} parent=11 // pred_check
        %p426 = pneg %p138
      $region22: #{transformer_forward.4} parent=11 // pred_check_branch
        %428 = sbr.rel (%p426) target = $region24
      $region23: #{transformer_forward.4} parent=11 // pred_region
        _
      $region24: #{transformer_forward.4} parent=11 // pred_fallthru
        _
      // Predicated region
      $region25: #{transformer_forward.4} parent=11 // pred_check
        %p429 = pneg %p159
      $region26: #{transformer_forward.4} parent=11 // pred_check_branch
        %431 = sbr.rel (%p429) target = $region28
      $region27: #{transformer_forward.4} parent=11 // pred_region
        _
      $region28: #{transformer_forward.4} parent=11 // pred_fallthru
        _
      // Predicated region
      $region29: #{transformer_forward.4} parent=11 // pred_check
        %p432 = pneg %p180
      $region30: #{transformer_forward.4} parent=11 // pred_check_branch
        %434 = sbr.rel (%p432) target = $region32
      $region31: #{transformer_forward.4} parent=11 // pred_region
        _
      $region32: #{transformer_forward.4} parent=11 // pred_fallthru
        _
      // Predicated region
      $region33: #{transformer_forward.4} parent=11 // pred_check
        %p435 = pneg %p201
      $region34: #{transformer_forward.4} parent=11 // pred_check_branch
        %437 = sbr.rel (%p435) target = $region36
      $region35: #{transformer_forward.4} parent=11 // pred_region
        _
      $region36: #{transformer_forward.4} parent=11 // pred_fallthru
        _
      // Predicated region
      $region37: #{transformer_forward.4} parent=11 // pred_check
        %p438 = pneg %p222
      $region38: #{transformer_forward.4} parent=11 // pred_check_branch
        %440 = sbr.rel (%p438) target = $region40
      $region39: #{transformer_forward.4} parent=11 // pred_region
        _
      $region40: #{transformer_forward.4} parent=11 // pred_fallthru
        _
      // Predicated region
      $region41: #{transformer_forward.4} parent=11 // pred_check
        %p441 = pneg %p243
      $region42: #{transformer_forward.4} parent=11 // pred_check_branch
        %443 = sbr.rel (%p441) target = $region44
      $region43: #{transformer_forward.4} parent=11 // pred_region
        _
      $region44: #{transformer_forward.4} parent=11 // pred_fallthru
        _
      // Predicated region
      $region45: #{transformer_forward.4} parent=11 // pred_check
        %p444 = pneg %p264
      $region46: #{transformer_forward.4} parent=11 // pred_check_branch
        %446 = sbr.rel (%p444) target = $region48
      $region47: #{transformer_forward.4} parent=11 // pred_region
        _
      $region48: #{transformer_forward.4} parent=11 // pred_fallthru
        _
      // Predicated region
      $region49: #{transformer_forward.4} parent=11 // pred_check
        %p447 = pneg %p285
      $region50: #{transformer_forward.4} parent=11 // pred_check_branch
        %449 = sbr.rel (%p447) target = $region52
      $region51: #{transformer_forward.4} parent=11 // pred_region
        _
      $region52: #{transformer_forward.4} parent=11 // pred_fallthru
        _
      // Predicated region
      $region53: #{transformer_forward.4} parent=11 // pred_check
        %p450 = pneg %p306
      $region54: #{transformer_forward.4} parent=11 // pred_check_branch
        %452 = sbr.rel (%p450) target = $region56
      $region55: #{transformer_forward.4} parent=11 // pred_region
        _
      $region56: #{transformer_forward.4} parent=11 // pred_fallthru
        _
      // Predicated region
      $region57: #{transformer_forward.4} parent=11 // pred_check
        %p453 = pneg %p327
      $region58: #{transformer_forward.4} parent=11 // pred_check_branch
        %455 = sbr.rel (%p453) target = $region60
      $region59: #{transformer_forward.4} parent=11 // pred_region
        _
      $region60: #{transformer_forward.4} parent=11 // pred_fallthru
        _
    $region12: #{transformer_forward.4} parent=5 // pred_fallthru
      _
    %p456 = scmp.lt.s32.totalorder %s23, 2
    // Predicated region
    $region61: #{transformer_forward.4} parent=5 // pred_check
      %p457 = pneg %p456
    $region62: #{transformer_forward.4} parent=5 // pred_check_branch
      %459 = sbr.rel (%p457) target = $region64
    $region63: #{transformer_forward.4} parent=5 // pred_region
      // Predicated region
      $region65: #{transformer_forward.4} parent=63 // pred_check
        %p460 = pneg %p43
      $region66: #{transformer_forward.4} parent=63 // pred_check_branch
        %462 = sbr.rel (%p460) target = $region68
      $region67: #{transformer_forward.4} parent=63 // pred_region
        %p463 = scmp.lt.s32.totalorder %s23, 1
        %s464 = scalar_select %p463, %s23, 1
        %s465 = scalar_lea.vmem %s0, %s464
      $region68: #{transformer_forward.4} parent=63 // pred_fallthru
        _
      // Predicated region
      $region69: #{transformer_forward.4} parent=63 // pred_check
        %p466 = pneg %p90
      $region70: #{transformer_forward.4} parent=63 // pred_check_branch
        %468 = sbr.rel (%p466) target = $region72
      $region71: #{transformer_forward.4} parent=63 // pred_region
        %p469 = scmp.lt.s32.totalorder %s23, 1
        %s470 = scalar_select %p469, %s23, 1
        %s471 = smul.addr %s470, 2
        %s472 = smul.addr %s471, 8
        %s473 = scalar_lea.vmem %s2, %s472
      $region72: #{transformer_forward.4} parent=63 // pred_fallthru
        _
    $region64: #{transformer_forward.4} parent=5 // pred_fallthru
      _
    %p474 = scmp.le.s32.totalorder 1, %s23
    %p475 = scmp.lt.s32.totalorder %s23, 3
    %p476 = pnand %p474, %p475
    %p477 = pneg %p476
    // Predicated region
    $region73: #{transformer_forward.4} parent=5 // pred_check
      _
    $region74: #{transformer_forward.4} parent=5 // pred_check_branch
      %479 = sbr.rel (%p476) target = $region76
    $region75: #{transformer_forward.4} parent=5 // pred_region
      %s480 = ssub.s32 %s23, 1
      %p481 = scmp.lt.s32.totalorder %s28, 1
      %s482 = scalar_select %p481, %s28, 1
      %s483 = scalar_lea.vmem %s0, %s482
      %p484 = pneg %p49
      %p485 = pneg %p46
      %p486 = pneg %p70
      %p487 = pneg %p67
      %p488 = scmp.lt.s32.totalorder %s28, 1
      %s489 = scalar_select %p488, %s28, 1
      %s490 = smul.addr %s489, 2
      %s491 = smul.addr %s490, 8
      %s492 = scalar_lea.vmem %s2, %s491
      %p493 = pneg %p96
      %p494 = pneg %p93
      %p495 = pneg %p117
      %p496 = pneg %p114
      %p497 = pneg %p138
      %p498 = pneg %p135
      %p499 = pneg %p159
      %p500 = pneg %p156
      %p501 = pneg %p180
      %p502 = pneg %p177
      %p503 = pneg %p201
      %p504 = pneg %p198
      %p505 = pneg %p222
      %p506 = pneg %p219
      %p507 = pneg %p243
      %p508 = pneg %p240
      %p509 = pneg %p264
      %p510 = pneg %p261
      %p511 = pneg %p285
      %p512 = pneg %p282
      %p513 = pneg %p306
      %p514 = pneg %p303
      %p515 = pneg %p327
      %p516 = pneg %p324
      %p517 = pneg %p353
      %p518 = pneg %p350
      %p519 = scmp.lt.s32.totalorder %s28, 1
      %s520 = scalar_select %p519, %s28, 1
      %s521 = smul.addr %s520, 2
      %s522 = smul.addr %s521, 8
      %s523 = scalar_lea.vmem %s14, %s522
      %p524 = pneg %p379
      %p525 = pneg %p376
      %p526 = scmp.lt.s32.totalorder %s28, 1
      %s527 = scalar_select %p526, %s28, 1
      %s528 = smul.addr %s527, 8
      %s529 = scalar_lea.vmem %s15, %s528
      %p530 = pneg %p405
      %p531 = pneg %p402
      %p532 = scmp.lt.s32.totalorder %s28, 1
      %s533 = scalar_select %p532, %s28, 1
      %s534 = scalar_lea.vmem %s16, %s533
      %p535 = scmp.lt.s32.totalorder %s28, 1
      %s536 = scalar_select %p535, %s28, 1
      %s537 = scalar_lea.vmem %s0, %s536
      %p538 = scmp.lt.s32.totalorder %s28, 1
      %s539 = scalar_select %p538, %s28, 1
      %s540 = smul.addr %s539, 2
      %s541 = smul.addr %s540, 8
      %s542 = scalar_lea.vmem %s2, %s541
      %p543 = scmp.lt.s32.totalorder %s28, 1
      %s544 = scalar_select %p543, %s28, 1
      %s545 = smul.addr %s544, 2
      %s546 = smul.addr %s545, 8
      %s547 = scalar_lea.vmem %s14, %s546
      %p548 = scmp.lt.s32.totalorder %s28, 1
      %s549 = scalar_select %p548, %s28, 1
      %s550 = smul.addr %s549, 8
      %s551 = scalar_lea.vmem %s15, %s550
      %p552 = scmp.lt.s32.totalorder %s28, 1
      %s553 = scalar_select %p552, %s28, 1
      %s554 = scalar_lea.vmem %s16, %s553
      %v556 = vld [vmem:[%s542] sm:$0xff]
      %v557 = vld [vmem:[%s542 + $0x8] sm:$0xff]
      %v558 = vld [vmem:[%s537] sm:$0x1]
      %v559 = vld [vmem:[%s1] sm:$0x1]
      %v560 = vpack.c.bf16 %v557, %v556
      %v561 = vld [vmem:[%s3] sm:$0xf]
      %v562 = vld [vmem:[%s3 + $0x4] sm:$0xf]
      %v563 = vld [vmem:[%s3 + $0x8] sm:$0xf]
      %v564 = vld [vmem:[%s3 + $0xc] sm:$0xf]
      %v569 = vunpack.c.l.b16 %v561
      %v570 = vunpack.c.l.b16 %v562
      %v571 = vunpack.c.l.b16 %v563
      %v572 = vunpack.c.l.b16 %v564
      %v573 = vpack.c.b16 %v570, %v569
      %v574 = vpack.c.b16 %v572, %v571
      %vm577 = vcmask 261120
      %v579 = vsel %vm577, %v560, 0
      %581 = vmatprep.subr.bf16.mxu0 0
      %582 = vmatpush1.bf16.msra.mxu0 0
      %583 = vmatprep.subr.bf16.mxu0 0
      %584 = vmatpush1.bf16.msra.mxu0 0
      %585 = vmatprep.subr.bf16.mxu0 0
      %586 = vmatpush1.bf16.msra.mxu0 0
      %587 = vmatprep.subr.bf16.mxu0 0
      %588 = vmatpush1.bf16.msra.mxu0 0
      %589 = vmatprep.subr.bf16.mxu0 0
      %590 = vmatpush1.bf16.msra.mxu0 0
      %591 = vmatprep.subr.bf16.mxu0 0
      %592 = vmatpush1.bf16.msra.mxu0 0
      %593 = vmatprep.subr.bf16.mxu0 0
      %594 = vmatpush1.bf16.msra.mxu0 %v574
      %595 = vmatprep.subr.bf16.mxu0 0
      %596 = vmatpush1.bf16.msra.mxu0 %v573
      %597 = vmatprep.subr.bf16.mxu0 0
      %598 = vmatpush2.bf16.msra.mxu0 0
      %599 = vmatprep.subr.bf16.mxu0 0
      %600 = vmatpush2.bf16.msra.mxu0 0
      %601 = vmatprep.subr.bf16.mxu0 0
      %602 = vmatpush2.bf16.msra.mxu0 0
      %603 = vmatprep.subr.bf16.mxu0 0
      %604 = vmatpush2.bf16.msra.mxu0 0
      %605 = vmatprep.subr.bf16.mxu0 0
      %606 = vmatpush2.bf16.msra.mxu0 0
      %607 = vmatprep.subr.bf16.mxu0 0
      %608 = vmatpush2.bf16.msra.mxu0 0
      %609 = vmatprep.subr.bf16.mxu0 0
      %610 = vmatpush2.bf16.msra.mxu0 0
      %611 = vmatprep.subr.bf16.mxu0 0
      %612 = vmatpush2.bf16.msra.mxu0 0
      %613 = vmatprep.mubr.bf16.mxu0 0
      %614 = vmatmul.mubr.bf16.gmra.mxu0 %v579
      %v615 = vpop.f32.mrf.mxu0
      %v616 = vadd.f32 0.0, %v615
      %v617 = vpop.f32.mrf.mxu0
      %v618 = vpop.f32.mrf.mxu0
      %v619 = vadd.f32 0.0, %v618
      %v620 = vpop.f32.mrf.mxu0
      %621 = vdwg.mxu0
      %v622 = vld [vmem:[%s4] sm:$0xf]
      %v623 = vld [vmem:[%s4 + $0x4] sm:$0xf]
      %v624 = vld [vmem:[%s4 + $0x8] sm:$0xf]
      %v625 = vld [vmem:[%s4 + $0xc] sm:$0xf]
      %v630 = vunpack.c.l.b16 %v622
      %v631 = vunpack.c.l.b16 %v623
      %v632 = vunpack.c.l.b16 %v624
      %v633 = vunpack.c.l.b16 %v625
      %v634 = vpack.c.b16 %v631, %v630
      %v635 = vpack.c.b16 %v633, %v632
      %638 = vmatprep.subr.bf16.mxu0 0
      %639 = vmatpush1.bf16.msra.mxu0 0
      %640 = vmatprep.subr.bf16.mxu0 0
      %641 = vmatpush1.bf16.msra.mxu0 0
      %642 = vmatprep.subr.bf16.mxu0 0
      %643 = vmatpush1.bf16.msra.mxu0 0
      %644 = vmatprep.subr.bf16.mxu0 0
      %645 = vmatpush1.bf16.msra.mxu0 0
      %646 = vmatprep.subr.bf16.mxu0 0
      %647 = vmatpush1.bf16.msra.mxu0 0
      %648 = vmatprep.subr.bf16.mxu0 0
      %649 = vmatpush1.bf16.msra.mxu0 0
      %650 = vmatprep.subr.bf16.mxu0 0
      %651 = vmatpush1.bf16.msra.mxu0 %v635
      %652 = vmatprep.subr.bf16.mxu0 0
      %653 = vmatpush1.bf16.msra.mxu0 %v634
      %654 = vmatprep.subr.bf16.mxu0 0
      %655 = vmatpush2.bf16.msra.mxu0 0
      %656 = vmatprep.subr.bf16.mxu0 0
      %657 = vmatpush2.bf16.msra.mxu0 0
      %658 = vmatprep.subr.bf16.mxu0 0
      %659 = vmatpush2.bf16.msra.mxu0 0
      %660 = vmatprep.subr.bf16.mxu0 0
      %661 = vmatpush2.bf16.msra.mxu0 0
      %662 = vmatprep.subr.bf16.mxu0 0
      %663 = vmatpush2.bf16.msra.mxu0 0
      %664 = vmatprep.subr.bf16.mxu0 0
      %665 = vmatpush2.bf16.msra.mxu0 0
      %666 = vmatprep.subr.bf16.mxu0 0
      %667 = vmatpush2.bf16.msra.mxu0 0
      %668 = vmatprep.subr.bf16.mxu0 0
      %669 = vmatpush2.bf16.msra.mxu0 0
      %670 = vmatprep.mubr.bf16.mxu0 0
      %671 = vmatmul.mubr.bf16.gmra.mxu0 %v579
      %v672 = vpop.f32.mrf.mxu0
      %v673 = vadd.f32 0.0, %v672
      %v674 = vpop.f32.mrf.mxu0
      %v675 = vpop.f32.mrf.mxu0
      %v676 = vadd.f32 0.0, %v675
      %v677 = vpop.f32.mrf.mxu0
      %678 = vdwg.mxu0
      %vm679 = vcmp.gt.f32.partialorder %v558, 0.0
      %v680 = vsel %vm679, 1, 0
      %v681 = vlaneseq
      %v682 = vshrl.u32 %v681, 7
      %v683 = vsub.s32 0, %v682
      %v684 = vrot.slane %v680, %v683
      %vm685 = vcmp.eq.s32.totalorder %v684, 1
      %v686 = vpack.c.bf16 %v676, %v673
      %vm687 = vcmp.gt.f32.partialorder %v673, 0.0
      %vm688 = vcmp.gt.f32.partialorder %v676, 0.0
      %v689 = vadd.f32 %v673, 1.0
      %v690 = vadd.f32 %v676, 1.0
      %v691 = vmul.f32 %v673, 1.442695
      %v692 = vpow.pop %v691
      %v693 = vmul.f32 %v676, 1.442695
      %v694 = vpow.pop %v693
      %v695 = vsel %vm687, %v689, %v692
      %v696 = vsel %vm688, %v690, %v694
      %v697 = vpack.c.bf16 %v696, %v695
      %698 = vxpose.xlu0.c.b16.start [1/8] %v697, 128
      %699 = vxpose.xlu0.c.b16.cont [2/8] 0, 128
      %700 = vxpose.xlu0.c.b16.cont [3/8] 0, 128
      %701 = vxpose.xlu0.c.b16.cont [4/8] 0, 128
      %702 = vxpose.xlu0.c.b16.cont [5/8] 0, 128
      %703 = vxpose.xlu0.c.b16.cont [6/8] 0, 128
      %704 = vxpose.xlu0.c.b16.cont [7/8] 0, 128
      %705 = vxpose.xlu0.c.b16.end [8/8] 0, 128
      %v706 = vpop.trf.xlu0
      %v707 = vpop.trf.xlu0
      %v708 = vpop.trf.xlu0
      %v709 = vpop.trf.xlu0
      %v710 = vpop.trf.xlu0
      %v711 = vpop.trf.xlu0
      %v712 = vpop.trf.xlu0
      %v713 = vpop.trf.xlu0
      %715 = vrot.lane.b32.xlu0 %v686, 112
      %v716 = vpop.permute.xlu0 %715
      %vm718 = vcmask 130048
      %v720 = vsel %vm718, %v706, 0
      %722 = vmatprep.subr.bf16.mxu0 0
      %723 = vmatpush1.bf16.msra.mxu0 0
      %724 = vmatprep.subr.bf16.mxu0 0
      %725 = vmatpush1.bf16.msra.mxu0 0
      %726 = vmatprep.subr.bf16.mxu0 0
      %727 = vmatpush1.bf16.msra.mxu0 0
      %728 = vmatprep.subr.bf16.mxu0 0
      %729 = vmatpush1.bf16.msra.mxu0 0
      %730 = vmatprep.subr.bf16.mxu0 0
      %731 = vmatpush1.bf16.msra.mxu0 0
      %732 = vmatprep.subr.bf16.mxu0 0
      %733 = vmatpush1.bf16.msra.mxu0 0
      %734 = vmatprep.subr.bf16.mxu0 0
      %735 = vmatpush1.bf16.msra.mxu0 0
      %736 = vmatprep.subr.bf16.mxu0 0
      %737 = vmatpush1.bf16.msra.mxu0 %v716
      %738 = vmatprep.subr.bf16.mxu0 0
      %739 = vmatpush2.bf16.msra.mxu0 0
      %740 = vmatprep.subr.bf16.mxu0 0
      %741 = vmatpush2.bf16.msra.mxu0 0
      %742 = vmatprep.subr.bf16.mxu0 0
      %743 = vmatpush2.bf16.msra.mxu0 0
      %744 = vmatprep.subr.bf16.mxu0 0
      %745 = vmatpush2.bf16.msra.mxu0 0
      %746 = vmatprep.subr.bf16.mxu0 0
      %747 = vmatpush2.bf16.msra.mxu0 0
      %748 = vmatprep.subr.bf16.mxu0 0
      %749 = vmatpush2.bf16.msra.mxu0 0
      %750 = vmatprep.subr.bf16.mxu0 0
      %751 = vmatpush2.bf16.msra.mxu0 0
      %752 = vmatprep.subr.bf16.mxu0 0
      %753 = vmatpush2.bf16.msra.mxu0 0
      %754 = vmatprep.mubr.bf16.mxu0 0
      %755 = vmatmul.mubr.bf16.gmra.mxu0 %v720
      %v756 = vpop.f32.mrf.mxu0
      %v757 = vadd.f32 0.0, %v756
      %v758 = vpop.f32.mrf.mxu0
      %v759 = vpop.f32.mrf.mxu0
      %v760 = vpop.f32.mrf.mxu0
      %761 = vdwg.mxu0
      %vm762 = vcmask 64512
      %v763 = vsel %vm762, %v695, 0.0
      %v764 = vsel %vm762, %v696, 0.0
      %v765 = vadd.f32 %v763, %v764
      %v766 = vrot.slane %v765, 4
      %v767 = vadd.f32 %v765, %v766
      %v768 = vrot.slane %v767, 2
      %v769 = vadd.f32 %v767, %v768
      %v770 = vrot.slane %v769, 1
      %v771 = vadd.f32 %v769, %v770
      %v772 = vmul.f32 %v616, 0.35355338
      %v773 = vmul.f32 %v619, 0.35355338
      %v774 = vpack.c.bf16 %v773, %v772
      %v776 = vsel %vm762, %v774, 0
      %v779 = vsel %vm762, %v686, 0
      %781 = vmatprep.subr.bf16.mxu0 0
      %782 = vmatpush1.bf16.xpose.msra.mxu0 0
      %783 = vmatprep.subr.bf16.mxu0 0
      %784 = vmatpush1.bf16.xpose.msra.mxu0 0
      %785 = vmatprep.subr.bf16.mxu0 0
      %786 = vmatpush1.bf16.xpose.msra.mxu0 0
      %787 = vmatprep.subr.bf16.mxu0 0
      %788 = vmatpush1.bf16.xpose.msra.mxu0 0
      %789 = vmatprep.subr.bf16.mxu0 0
      %790 = vmatpush1.bf16.xpose.msra.mxu0 0
      %791 = vmatprep.subr.bf16.mxu0 0
      %792 = vmatpush1.bf16.xpose.msra.mxu0 0
      %793 = vmatprep.subr.bf16.mxu0 0
      %794 = vmatpush1.bf16.xpose.msra.mxu0 0
      %795 = vmatprep.subr.bf16.mxu0 0
      %796 = vmatpush1.bf16.xpose.msra.mxu0 %v779
      %797 = vmatprep.subr.bf16.mxu0 0
      %798 = vmatpush2.bf16.xpose.msra.mxu0 0
      %799 = vmatprep.subr.bf16.mxu0 0
      %800 = vmatpush2.bf16.xpose.msra.mxu0 0
      %801 = vmatprep.subr.bf16.mxu0 0
      %802 = vmatpush2.bf16.xpose.msra.mxu0 0
      %803 = vmatprep.subr.bf16.mxu0 0
      %804 = vmatpush2.bf16.xpose.msra.mxu0 0
      %805 = vmatprep.subr.bf16.mxu0 0
      %806 = vmatpush2.bf16.xpose.msra.mxu0 0
      %807 = vmatprep.subr.bf16.mxu0 0
      %808 = vmatpush2.bf16.xpose.msra.mxu0 0
      %809 = vmatprep.subr.bf16.mxu0 0
      %810 = vmatpush2.bf16.xpose.msra.mxu0 0
      %811 = vmatprep.subr.bf16.mxu0 0
      %812 = vmatpush2.bf16.xpose.msra.mxu0 0
      %813 = vmatprep.mubr.bf16.mxu0 0
      %814 = vmatmul.mubr.bf16.gmra.mxu0 %v776
      %v815 = vpop.f32.mrf.mxu0
      %v816 = vadd.f32 0.0, %v815
      %v817 = vpop.f32.mrf.mxu0
      %v818 = vpop.f32.mrf.mxu0
      %v819 = vadd.f32 0.0, %v818
      %v820 = vpop.f32.mrf.mxu0
      %821 = vdwg.mxu0
      %v822 = vsel %vm685, %v816, -1e+30
      %v823 = vsel %vm685, %v819, -1e+30
      %v824 = vsel %vm718, %v822, -inf
      %825 = vmax.xlane.f32.xlu0 %v824
      %v826 = vpop.xlane.xlu0 %825
      %v827 = vsel %vm718, %v823, -inf
      %828 = vmax.xlane.f32.xlu0 %v827
      %v829 = vpop.xlane.xlu0 %828
      %v830 = vsub.f32 %v822, %v826
      %v831 = vsub.f32 %v823, %v829
      %v832 = vmul.f32 %v830, 1.442695
      %v833 = vpow.pop %v832
      %v834 = vmul.f32 %v831, 1.442695
      %v835 = vpow.pop %v834
      %v836 = vsel %vm718, %v833, 0.0
      %837 = vadd.xlane.f32.xlu0 %v836
      %v838 = vpop.xlane.xlu0 %837
      %v839 = vsel %vm718, %v835, 0.0
      %840 = vadd.xlane.f32.xlu0 %v839
      %v841 = vpop.xlane.xlu0 %840
      %v842 = vrcp.pop %v838
      %v843 = vrcp.pop %v841
      %v844 = vmul.f32 %v833, %v842
      %v845 = vmul.f32 %v835, %v843
      %v846 = vpack.c.bf16 %v845, %v844
      %v848 = vsel %vm718, %v846, 0
      %850 = vmatprep.subr.bf16.mxu0 0
      %851 = vmatpush1.bf16.msra.mxu0 0
      %852 = vmatprep.subr.bf16.mxu0 0
      %853 = vmatpush1.bf16.msra.mxu0 0
      %854 = vmatprep.subr.bf16.mxu0 0
      %855 = vmatpush1.bf16.msra.mxu0 0
      %856 = vmatprep.subr.bf16.mxu0 0
      %857 = vmatpush1.bf16.msra.mxu0 0
      %858 = vmatprep.subr.bf16.mxu0 0
      %859 = vmatpush1.bf16.msra.mxu0 0
      %860 = vmatprep.subr.bf16.mxu0 0
      %861 = vmatpush1.bf16.msra.mxu0 0
      %862 = vmatprep.subr.bf16.mxu0 0
      %863 = vmatpush1.bf16.msra.mxu0 0
      %864 = vmatprep.subr.bf16.mxu0 0
      %865 = vmatpush1.bf16.msra.mxu0 %v716
      %866 = vmatprep.subr.bf16.mxu0 0
      %867 = vmatpush2.bf16.msra.mxu0 0
      %868 = vmatprep.subr.bf16.mxu0 0
      %869 = vmatpush2.bf16.msra.mxu0 0
      %870 = vmatprep.subr.bf16.mxu0 0
      %871 = vmatpush2.bf16.msra.mxu0 0
      %872 = vmatprep.subr.bf16.mxu0 0
      %873 = vmatpush2.bf16.msra.mxu0 0
      %874 = vmatprep.subr.bf16.mxu0 0
      %875 = vmatpush2.bf16.msra.mxu0 0
      %876 = vmatprep.subr.bf16.mxu0 0
      %877 = vmatpush2.bf16.msra.mxu0 0
      %878 = vmatprep.subr.bf16.mxu0 0
      %879 = vmatpush2.bf16.msra.mxu0 0
      %880 = vmatprep.subr.bf16.mxu0 0
      %881 = vmatpush2.bf16.msra.mxu0 0
      %882 = vmatprep.mubr.bf16.mxu0 0
      %883 = vmatmul.mubr.bf16.gmra.mxu0 %v848
      %v884 = vpop.f32.mrf.mxu0
      %v885 = vadd.f32 0.0, %v884
      %v886 = vpop.f32.mrf.mxu0
      %v887 = vpop.f32.mrf.mxu0
      %v888 = vadd.f32 0.0, %v887
      %v889 = vpop.f32.mrf.mxu0
      %890 = vdwg.mxu0
      %891 = vst.msk [vmem:[#allocation2] sm:$0xff] %vm762, %v885
      %892 = vst.msk [vmem:[#allocation2 + $0x8] sm:$0xff] %vm762, %v888
      %894 = vrot.lane.b32.xlu0 %v774, 120
      %v895 = vpop.permute.xlu0 %894
      %v897 = vsel %vm762, %v895, 0
      %899 = vmatprep.subr.bf16.mxu0 0
      %900 = vmatpush1.bf16.xpose.msra.mxu0 0
      %901 = vmatprep.subr.bf16.mxu0 0
      %902 = vmatpush1.bf16.xpose.msra.mxu0 0
      %903 = vmatprep.subr.bf16.mxu0 0
      %904 = vmatpush1.bf16.xpose.msra.mxu0 0
      %905 = vmatprep.subr.bf16.mxu0 0
      %906 = vmatpush1.bf16.xpose.msra.mxu0 0
      %907 = vmatprep.subr.bf16.mxu0 0
      %908 = vmatpush1.bf16.xpose.msra.mxu0 0
      %909 = vmatprep.subr.bf16.mxu0 0
      %910 = vmatpush1.bf16.xpose.msra.mxu0 0
      %911 = vmatprep.subr.bf16.mxu0 0
      %912 = vmatpush1.bf16.xpose.msra.mxu0 0
      %913 = vmatprep.subr.bf16.mxu0 0
      %914 = vmatpush1.bf16.xpose.msra.mxu0 %v779
      %915 = vmatprep.subr.bf16.mxu0 0
      %916 = vmatpush2.bf16.xpose.msra.mxu0 0
      %917 = vmatprep.subr.bf16.mxu0 0
      %918 = vmatpush2.bf16.xpose.msra.mxu0 0
      %919 = vmatprep.subr.bf16.mxu0 0
      %920 = vmatpush2.bf16.xpose.msra.mxu0 0
      %921 = vmatprep.subr.bf16.mxu0 0
      %922 = vmatpush2.bf16.xpose.msra.mxu0 0
      %923 = vmatprep.subr.bf16.mxu0 0
      %924 = vmatpush2.bf16.xpose.msra.mxu0 0
      %925 = vmatprep.subr.bf16.mxu0 0
      %926 = vmatpush2.bf16.xpose.msra.mxu0 0
      %927 = vmatprep.subr.bf16.mxu0 0
      %928 = vmatpush2.bf16.xpose.msra.mxu0 0
      %929 = vmatprep.subr.bf16.mxu0 0
      %930 = vmatpush2.bf16.xpose.msra.mxu0 0
      %931 = vmatprep.mubr.bf16.mxu0 0
      %932 = vmatmul.mubr.bf16.gmra.mxu0 %v897
      %v933 = vpop.f32.mrf.mxu0
      %v934 = vadd.f32 0.0, %v933
      %v935 = vpop.f32.mrf.mxu0
      %v936 = vpop.f32.mrf.mxu0
      %v937 = vadd.f32 0.0, %v936
      %v938 = vpop.f32.mrf.mxu0
      %939 = vdwg.mxu0
      %v940 = vsel %vm685, %v934, -1e+30
      %v941 = vsel %vm685, %v937, -1e+30
      %v942 = vsel %vm718, %v940, -inf
      %943 = vmax.xlane.f32.xlu0 %v942
      %v944 = vpop.xlane.xlu0 %943
      %v945 = vsel %vm718, %v941, -inf
      %946 = vmax.xlane.f32.xlu0 %v945
      %v947 = vpop.xlane.xlu0 %946
      %v948 = vsub.f32 %v940, %v944
      %v949 = vsub.f32 %v941, %v947
      %v950 = vmul.f32 %v948, 1.442695
      %v951 = vpow.pop %v950
      %v952 = vmul.f32 %v949, 1.442695
      %v953 = vpow.pop %v952
      %v954 = vsel %vm718, %v951, 0.0
      %955 = vadd.xlane.f32.xlu0 %v954
      %v956 = vpop.xlane.xlu0 %955
      %v957 = vsel %vm718, %v953, 0.0
      %958 = vadd.xlane.f32.xlu0 %v957
      %v959 = vpop.xlane.xlu0 %958
      %v960 = vrcp.pop %v956
      %v961 = vrcp.pop %v959
      %v962 = vmul.f32 %v951, %v960
      %v963 = vmul.f32 %v953, %v961
      %v964 = vpack.c.bf16 %v963, %v962
      %v966 = vsel %vm718, %v964, 0
      %968 = vmatprep.subr.bf16.mxu0 0
      %969 = vmatpush1.bf16.msra.mxu0 0
      %970 = vmatprep.subr.bf16.mxu0 0
      %971 = vmatpush1.bf16.msra.mxu0 0
      %972 = vmatprep.subr.bf16.mxu0 0
      %973 = vmatpush1.bf16.msra.mxu0 0
      %974 = vmatprep.subr.bf16.mxu0 0
      %975 = vmatpush1.bf16.msra.mxu0 0
      %976 = vmatprep.subr.bf16.mxu0 0
      %977 = vmatpush1.bf16.msra.mxu0 0
      %978 = vmatprep.subr.bf16.mxu0 0
      %979 = vmatpush1.bf16.msra.mxu0 0
      %980 = vmatprep.subr.bf16.mxu0 0
      %981 = vmatpush1.bf16.msra.mxu0 0
      %982 = vmatprep.subr.bf16.mxu0 0
      %983 = vmatpush1.bf16.msra.mxu0 %v716
      %984 = vmatprep.subr.bf16.mxu0 0
      %985 = vmatpush2.bf16.msra.mxu0 0
      %986 = vmatprep.subr.bf16.mxu0 0
      %987 = vmatpush2.bf16.msra.mxu0 0
      %988 = vmatprep.subr.bf16.mxu0 0
      %989 = vmatpush2.bf16.msra.mxu0 0
      %990 = vmatprep.subr.bf16.mxu0 0
      %991 = vmatpush2.bf16.msra.mxu0 0
      %992 = vmatprep.subr.bf16.mxu0 0
      %993 = vmatpush2.bf16.msra.mxu0 0
      %994 = vmatprep.subr.bf16.mxu0 0
      %995 = vmatpush2.bf16.msra.mxu0 0
      %996 = vmatprep.subr.bf16.mxu0 0
      %997 = vmatpush2.bf16.msra.mxu0 0
      %998 = vmatprep.subr.bf16.mxu0 0
      %999 = vmatpush2.bf16.msra.mxu0 0
      %1000 = vmatprep.mubr.bf16.mxu0 0
      %1001 = vmatmul.mubr.bf16.gmra.mxu0 %v966
      %v1002 = vpop.f32.mrf.mxu0
      %v1003 = vadd.f32 0.0, %v1002
      %v1004 = vpop.f32.mrf.mxu0
      %v1005 = vpop.f32.mrf.mxu0
      %v1006 = vadd.f32 0.0, %v1005
      %v1007 = vpop.f32.mrf.mxu0
      %1008 = vdwg.mxu0
      %1011 = vrot.lane.b32.xlu0 %v1003, 8
      %v1012 = vpop.permute.xlu0 %1011
      %1013 = vrot.lane.b32.xlu0 %v1006, 8
      %v1014 = vpop.permute.xlu0 %1013
      %vm1017 = vcmask 130112
      %1018 = vst.msk [vmem:[#allocation2] sm:$0xff] %vm1017, %v1012
      %1019 = vst.msk [vmem:[#allocation2 + $0x8] sm:$0xff] %vm1017, %v1014
      %1021 = vrot.lane.b32.xlu0 %v697, 120
      %v1022 = vpop.permute.xlu0 %1021
      %1024 = vxpose.xlu0.c.b16.start [1/8] %v1022, 128
      %1025 = vxpose.xlu0.c.b16.cont [2/8] 0, 128
      %1026 = vxpose.xlu0.c.b16.cont [3/8] 0, 128
      %1027 = vxpose.xlu0.c.b16.cont [4/8] 0, 128
      %1028 = vxpose.xlu0.c.b16.cont [5/8] 0, 128
      %1029 = vxpose.xlu0.c.b16.cont [6/8] 0, 128
      %1030 = vxpose.xlu0.c.b16.cont [7/8] 0, 128
      %1031 = vxpose.xlu0.c.b16.end [8/8] 0, 128
      %v1032 = vpop.trf.xlu0
      %v1033 = vpop.trf.xlu0
      %v1034 = vpop.trf.xlu0
      %v1035 = vpop.trf.xlu0
      %v1036 = vpop.trf.xlu0
      %v1037 = vpop.trf.xlu0
      %v1038 = vpop.trf.xlu0
      %v1039 = vpop.trf.xlu0
      %1040 = vrot.lane.b32.xlu0 %v686, 104
      %v1041 = vpop.permute.xlu0 %1040
      %v1044 = vsel %vm718, %v1032, 0
      %1046 = vmatprep.subr.bf16.mxu0 0
      %1047 = vmatpush1.bf16.msra.mxu0 0
      %1048 = vmatprep.subr.bf16.mxu0 0
      %1049 = vmatpush1.bf16.msra.mxu0 0
      %1050 = vmatprep.subr.bf16.mxu0 0
      %1051 = vmatpush1.bf16.msra.mxu0 0
      %1052 = vmatprep.subr.bf16.mxu0 0
      %1053 = vmatpush1.bf16.msra.mxu0 0
      %1054 = vmatprep.subr.bf16.mxu0 0
      %1055 = vmatpush1.bf16.msra.mxu0 0
      %1056 = vmatprep.subr.bf16.mxu0 0
      %1057 = vmatpush1.bf16.msra.mxu0 0
      %1058 = vmatprep.subr.bf16.mxu0 0
      %1059 = vmatpush1.bf16.msra.mxu0 0
      %1060 = vmatprep.subr.bf16.mxu0 0
      %1061 = vmatpush1.bf16.msra.mxu0 %v1041
      %1062 = vmatprep.subr.bf16.mxu0 0
      %1063 = vmatpush2.bf16.msra.mxu0 0
      %1064 = vmatprep.subr.bf16.mxu0 0
      %1065 = vmatpush2.bf16.msra.mxu0 0
      %1066 = vmatprep.subr.bf16.mxu0 0
      %1067 = vmatpush2.bf16.msra.mxu0 0
      %1068 = vmatprep.subr.bf16.mxu0 0
      %1069 = vmatpush2.bf16.msra.mxu0 0
      %1070 = vmatprep.subr.bf16.mxu0 0
      %1071 = vmatpush2.bf16.msra.mxu0 0
      %1072 = vmatprep.subr.bf16.mxu0 0
      %1073 = vmatpush2.bf16.msra.mxu0 0
      %1074 = vmatprep.subr.bf16.mxu0 0
      %1075 = vmatpush2.bf16.msra.mxu0 0
      %1076 = vmatprep.subr.bf16.mxu0 0
      %1077 = vmatpush2.bf16.msra.mxu0 0
      %1078 = vmatprep.mubr.bf16.mxu0 0
      %1079 = vmatmul.mubr.bf16.gmra.mxu0 %v1044
      %v1080 = vpop.f32.mrf.mxu0
      %v1081 = vadd.f32 0.0, %v1080
      %v1082 = vpop.f32.mrf.mxu0
      %v1083 = vpop.f32.mrf.mxu0
      %v1084 = vpop.f32.mrf.mxu0
      %1085 = vdwg.mxu0
      %v1086 = vsel %vm1017, %v695, 0.0
      %v1087 = vsel %vm1017, %v696, 0.0
      %v1088 = vadd.f32 %v1086, %v1087
      %v1089 = vrot.slane %v1088, 4
      %v1090 = vadd.f32 %v1088, %v1089
      %v1091 = vrot.slane %v1090, 2
      %v1092 = vadd.f32 %v1090, %v1091
      %v1093 = vrot.slane %v1092, 1
      %v1094 = vadd.f32 %v1092, %v1093
      %1095 = vrot.lane.b32.xlu0 %v774, 112
      %v1096 = vpop.permute.xlu0 %1095
      %1097 = vrot.lane.b32.xlu0 %v686, 120
      %v1098 = vpop.permute.xlu0 %1097
      %v1100 = vsel %vm762, %v1096, 0
      %v1103 = vsel %vm762, %v1098, 0
      %1105 = vmatprep.subr.bf16.mxu0 0
      %1106 = vmatpush1.bf16.xpose.msra.mxu0 0
      %1107 = vmatprep.subr.bf16.mxu0 0
      %1108 = vmatpush1.bf16.xpose.msra.mxu0 0
      %1109 = vmatprep.subr.bf16.mxu0 0
      %1110 = vmatpush1.bf16.xpose.msra.mxu0 0
      %1111 = vmatprep.subr.bf16.mxu0 0
      %1112 = vmatpush1.bf16.xpose.msra.mxu0 0
      %1113 = vmatprep.subr.bf16.mxu0 0
      %1114 = vmatpush1.bf16.xpose.msra.mxu0 0
      %1115 = vmatprep.subr.bf16.mxu0 0
      %1116 = vmatpush1.bf16.xpose.msra.mxu0 0
      %1117 = vmatprep.subr.bf16.mxu0 0
      %1118 = vmatpush1.bf16.xpose.msra.mxu0 0
      %1119 = vmatprep.subr.bf16.mxu0 0
      %1120 = vmatpush1.bf16.xpose.msra.mxu0 %v1103
      %1121 = vmatprep.subr.bf16.mxu0 0
      %1122 = vmatpush2.bf16.xpose.msra.mxu0 0
      %1123 = vmatprep.subr.bf16.mxu0 0
      %1124 = vmatpush2.bf16.xpose.msra.mxu0 0
      %1125 = vmatprep.subr.bf16.mxu0 0
      %1126 = vmatpush2.bf16.xpose.msra.mxu0 0
      %1127 = vmatprep.subr.bf16.mxu0 0
      %1128 = vmatpush2.bf16.xpose.msra.mxu0 0
      %1129 = vmatprep.subr.bf16.mxu0 0
      %1130 = vmatpush2.bf16.xpose.msra.mxu0 0
      %1131 = vmatprep.subr.bf16.mxu0 0
      %1132 = vmatpush2.bf16.xpose.msra.mxu0 0
      %1133 = vmatprep.subr.bf16.mxu0 0
      %1134 = vmatpush2.bf16.xpose.msra.mxu0 0
      %1135 = vmatprep.subr.bf16.mxu0 0
      %1136 = vmatpush2.bf16.xpose.msra.mxu0 0
      %1137 = vmatprep.mubr.bf16.mxu0 0
      %1138 = vmatmul.mubr.bf16.gmra.mxu0 %v1100
      %v1139 = vpop.f32.mrf.mxu0
      %v1140 = vadd.f32 0.0, %v1139
      %v1141 = vpop.f32.mrf.mxu0
      %v1142 = vpop.f32.mrf.mxu0
      %v1143 = vadd.f32 0.0, %v1142
      %v1144 = vpop.f32.mrf.mxu0
      %1145 = vdwg.mxu0
      %v1146 = vsel %vm685, %v1140, -1e+30
      %v1147 = vsel %vm685, %v1143, -1e+30
      %v1148 = vsel %vm718, %v1146, -inf
      %1149 = vmax.xlane.f32.xlu0 %v1148
      %v1150 = vpop.xlane.xlu0 %1149
      %v1151 = vsel %vm718, %v1147, -inf
      %1152 = vmax.xlane.f32.xlu0 %v1151
      %v1153 = vpop.xlane.xlu0 %1152
      %v1154 = vsub.f32 %v1146, %v1150
      %v1155 = vsub.f32 %v1147, %v1153
      %v1156 = vmul.f32 %v1154, 1.442695
      %v1157 = vpow.pop %v1156
      %v1158 = vmul.f32 %v1155, 1.442695
      %v1159 = vpow.pop %v1158
      %v1160 = vsel %vm718, %v1157, 0.0
      %1161 = vadd.xlane.f32.xlu0 %v1160
      %v1162 = vpop.xlane.xlu0 %1161
      %v1163 = vsel %vm718, %v1159, 0.0
      %1164 = vadd.xlane.f32.xlu0 %v1163
      %v1165 = vpop.xlane.xlu0 %1164
      %v1166 = vrcp.pop %v1162
      %v1167 = vrcp.pop %v1165
      %v1168 = vmul.f32 %v1157, %v1166
      %v1169 = vmul.f32 %v1159, %v1167
      %v1170 = vpack.c.bf16 %v1169, %v1168
      %v1172 = vsel %vm718, %v1170, 0
      %1174 = vmatprep.subr.bf16.mxu0 0
      %1175 = vmatpush1.bf16.msra.mxu0 0
      %1176 = vmatprep.subr.bf16.mxu0 0
      %1177 = vmatpush1.bf16.msra.mxu0 0
      %1178 = vmatprep.subr.bf16.mxu0 0
      %1179 = vmatpush1.bf16.msra.mxu0 0
      %1180 = vmatprep.subr.bf16.mxu0 0
      %1181 = vmatpush1.bf16.msra.mxu0 0
      %1182 = vmatprep.subr.bf16.mxu0 0
      %1183 = vmatpush1.bf16.msra.mxu0 0
      %1184 = vmatprep.subr.bf16.mxu0 0
      %1185 = vmatpush1.bf16.msra.mxu0 0
      %1186 = vmatprep.subr.bf16.mxu0 0
      %1187 = vmatpush1.bf16.msra.mxu0 0
      %1188 = vmatprep.subr.bf16.mxu0 0
      %1189 = vmatpush1.bf16.msra.mxu0 %v1041
      %1190 = vmatprep.subr.bf16.mxu0 0
      %1191 = vmatpush2.bf16.msra.mxu0 0
      %1192 = vmatprep.subr.bf16.mxu0 0
      %1193 = vmatpush2.bf16.msra.mxu0 0
      %1194 = vmatprep.subr.bf16.mxu0 0
      %1195 = vmatpush2.bf16.msra.mxu0 0
      %1196 = vmatprep.subr.bf16.mxu0 0
      %1197 = vmatpush2.bf16.msra.mxu0 0
      %1198 = vmatprep.subr.bf16.mxu0 0
      %1199 = vmatpush2.bf16.msra.mxu0 0
      %1200 = vmatprep.subr.bf16.mxu0 0
      %1201 = vmatpush2.bf16.msra.mxu0 0
      %1202 = vmatprep.subr.bf16.mxu0 0
      %1203 = vmatpush2.bf16.msra.mxu0 0
      %1204 = vmatprep.subr.bf16.mxu0 0
      %1205 = vmatpush2.bf16.msra.mxu0 0
      %1206 = vmatprep.mubr.bf16.mxu0 0
      %1207 = vmatmul.mubr.bf16.gmra.mxu0 %v1172
      %v1208 = vpop.f32.mrf.mxu0
      %v1209 = vadd.f32 0.0, %v1208
      %v1210 = vpop.f32.mrf.mxu0
      %v1211 = vpop.f32.mrf.mxu0
      %v1212 = vadd.f32 0.0, %v1211
      %v1213 = vpop.f32.mrf.mxu0
      %1214 = vdwg.mxu0
      %1217 = vrot.lane.b32.xlu0 %v1209, 16
      %v1218 = vpop.permute.xlu0 %1217
      %1219 = vrot.lane.b32.xlu0 %v1212, 16
      %v1220 = vpop.permute.xlu0 %1219
      %vm1223 = vcmask 195712
      %1224 = vst.msk [vmem:[#allocation2] sm:$0xff] %vm1223, %v1218
      %1225 = vst.msk [vmem:[#allocation2 + $0x8] sm:$0xff] %vm1223, %v1220
      %1226 = vrot.lane.b32.xlu0 %v774, 104
      %v1227 = vpop.permute.xlu0 %1226
      %v1229 = vsel %vm762, %v1227, 0
      %1231 = vmatprep.subr.bf16.mxu0 0
      %1232 = vmatpush1.bf16.xpose.msra.mxu0 0
      %1233 = vmatprep.subr.bf16.mxu0 0
      %1234 = vmatpush1.bf16.xpose.msra.mxu0 0
      %1235 = vmatprep.subr.bf16.mxu0 0
      %1236 = vmatpush1.bf16.xpose.msra.mxu0 0
      %1237 = vmatprep.subr.bf16.mxu0 0
      %1238 = vmatpush1.bf16.xpose.msra.mxu0 0
      %1239 = vmatprep.subr.bf16.mxu0 0
      %1240 = vmatpush1.bf16.xpose.msra.mxu0 0
      %1241 = vmatprep.subr.bf16.mxu0 0
      %1242 = vmatpush1.bf16.xpose.msra.mxu0 0
      %1243 = vmatprep.subr.bf16.mxu0 0
      %1244 = vmatpush1.bf16.xpose.msra.mxu0 0
      %1245 = vmatprep.subr.bf16.mxu0 0
      %1246 = vmatpush1.bf16.xpose.msra.mxu0 %v1103
      %1247 = vmatprep.subr.bf16.mxu0 0
      %1248 = vmatpush2.bf16.xpose.msra.mxu0 0
      %1249 = vmatprep.subr.bf16.mxu0 0
      %1250 = vmatpush2.bf16.xpose.msra.mxu0 0
      %1251 = vmatprep.subr.bf16.mxu0 0
      %1252 = vmatpush2.bf16.xpose.msra.mxu0 0
      %1253 = vmatprep.subr.bf16.mxu0 0
      %1254 = vmatpush2.bf16.xpose.msra.mxu0 0
      %1255 = vmatprep.subr.bf16.mxu0 0
      %1256 = vmatpush2.bf16.xpose.msra.mxu0 0
      %1257 = vmatprep.subr.bf16.mxu0 0
      %1258 = vmatpush2.bf16.xpose.msra.mxu0 0
      %1259 = vmatprep.subr.bf16.mxu0 0
      %1260 = vmatpush2.bf16.xpose.msra.mxu0 0
      %1261 = vmatprep.subr.bf16.mxu0 0
      %1262 = vmatpush2.bf16.xpose.msra.mxu0 0
      %1263 = vmatprep.mubr.bf16.mxu0 0
      %1264 = vmatmul.mubr.bf16.gmra.mxu0 %v1229
      %v1265 = vpop.f32.mrf.mxu0
      %v1266 = vadd.f32 0.0, %v1265
      %v1267 = vpop.f32.mrf.mxu0
      %v1268 = vpop.f32.mrf.mxu0
      %v1269 = vadd.f32 0.0, %v1268
      %v1270 = vpop.f32.mrf.mxu0
      %1271 = vdwg.mxu0
      %v1272 = vsel %vm685, %v1266, -1e+30
      %v1273 = vsel %vm685, %v1269, -1e+30
      %v1274 = vsel %vm718, %v1272, -inf
      %1275 = vmax.xlane.f32.xlu0 %v1274
      %v1276 = vpop.xlane.xlu0 %1275
      %v1277 = vsel %vm718, %v1273, -inf
      %1278 = vmax.xlane.f32.xlu0 %v1277
      %v1279 = vpop.xlane.xlu0 %1278
      %v1280 = vsub.f32 %v1272, %v1276
      %v1281 = vsub.f32 %v1273, %v1279
      %v1282 = vmul.f32 %v1280, 1.442695
      %v1283 = vpow.pop %v1282
      %v1284 = vmul.f32 %v1281, 1.442695
      %v1285 = vpow.pop %v1284
      %v1286 = vsel %vm718, %v1283, 0.0
      %1287 = vadd.xlane.f32.xlu0 %v1286
      %v1288 = vpop.xlane.xlu0 %1287
      %v1289 = vsel %vm718, %v1285, 0.0
      %1290 = vadd.xlane.f32.xlu0 %v1289
      %v1291 = vpop.xlane.xlu0 %1290
      %v1292 = vrcp.pop %v1288
      %v1293 = vrcp.pop %v1291
      %v1294 = vmul.f32 %v1283, %v1292
      %v1295 = vmul.f32 %v1285, %v1293
      %v1296 = vpack.c.bf16 %v1295, %v1294
      %v1298 = vsel %vm718, %v1296, 0
      %1300 = vmatprep.subr.bf16.mxu0 0
      %1301 = vmatpush1.bf16.msra.mxu0 0
      %1302 = vmatprep.subr.bf16.mxu0 0
      %1303 = vmatpush1.bf16.msra.mxu0 0
      %1304 = vmatprep.subr.bf16.mxu0 0
      %1305 = vmatpush1.bf16.msra.mxu0 0
      %1306 = vmatprep.subr.bf16.mxu0 0
      %1307 = vmatpush1.bf16.msra.mxu0 0
      %1308 = vmatprep.subr.bf16.mxu0 0
      %1309 = vmatpush1.bf16.msra.mxu0 0
      %1310 = vmatprep.subr.bf16.mxu0 0
      %1311 = vmatpush1.bf16.msra.mxu0 0
      %1312 = vmatprep.subr.bf16.mxu0 0
      %1313 = vmatpush1.bf16.msra.mxu0 0
      %1314 = vmatprep.subr.bf16.mxu0 0
      %1315 = vmatpush1.bf16.msra.mxu0 %v1041
      %1316 = vmatprep.subr.bf16.mxu0 0
      %1317 = vmatpush2.bf16.msra.mxu0 0
      %1318 = vmatprep.subr.bf16.mxu0 0
      %1319 = vmatpush2.bf16.msra.mxu0 0
      %1320 = vmatprep.subr.bf16.mxu0 0
      %1321 = vmatpush2.bf16.msra.mxu0 0
      %1322 = vmatprep.subr.bf16.mxu0 0
      %1323 = vmatpush2.bf16.msra.mxu0 0
      %1324 = vmatprep.subr.bf16.mxu0 0
      %1325 = vmatpush2.bf16.msra.mxu0 0
      %1326 = vmatprep.subr.bf16.mxu0 0
      %1327 = vmatpush2.bf16.msra.mxu0 0
      %1328 = vmatprep.subr.bf16.mxu0 0
      %1329 = vmatpush2.bf16.msra.mxu0 0
      %1330 = vmatprep.subr.bf16.mxu0 0
      %1331 = vmatpush2.bf16.msra.mxu0 0
      %1332 = vmatprep.mubr.bf16.mxu0 0
      %1333 = vmatmul.mubr.bf16.gmra.mxu0 %v1298
      %v1334 = vpop.f32.mrf.mxu0
      %v1335 = vadd.f32 0.0, %v1334
      %v1336 = vpop.f32.mrf.mxu0
      %v1337 = vpop.f32.mrf.mxu0
      %v1338 = vadd.f32 0.0, %v1337
      %v1339 = vpop.f32.mrf.mxu0
      %1340 = vdwg.mxu0
      %1343 = vrot.lane.b32.xlu0 %v1335, 24
      %v1344 = vpop.permute.xlu0 %1343
      %1345 = vrot.lane.b32.xlu0 %v1338, 24
      %v1346 = vpop.permute.xlu0 %1345
      %vm1349 = vcmask 261312
      %1350 = vst.msk [vmem:[#allocation2] sm:$0xff] %vm1349, %v1344
      %1351 = vst.msk [vmem:[#allocation2 + $0x8] sm:$0xff] %vm1349, %v1346
      %1353 = vrot.lane.b32.xlu0 %v1081, 8
      %v1354 = vpop.permute.xlu0 %1353
      %v1356 = vsel %vm762, %v757, %v1354
      %1357 = vst.msk [vmem:[%s551] sm:$0xff] %vm718, %v1356
      %v1358 = vsel %vm762, %v771, %v1094
      %vm1359 = vcmask 122880
      %1360 = vst.msk [vmem:[%s554] sm:$0x1] %vm1359, %v1358
      %v1361 = vld [vmem:[#allocation2] sm:$0xff]
      %v1362 = vld [vmem:[#allocation2 + $0x8] sm:$0xff]
      %v1364 = vlaneseq
      %v1365 = vshrl.u32 %v1364, 7
      %v1366 = vsub.s32 0, %v1365
      %v1367 = vrot.slane %v559, %v1366
      %v1369 = vmul.f32 %v1361, %v1367
      %v1370 = vmul.f32 %v1362, %v1367
      %v1371 = vpack.c.bf16 %v1370, %v1369
      %v1372 = vld [vmem:[%s5] sm:$0xf]
      %v1373 = vld [vmem:[%s5 + $0x4] sm:$0xf]
      %v1374 = vld [vmem:[%s5 + $0x8] sm:$0xf]
      %v1375 = vld [vmem:[%s5 + $0xc] sm:$0xf]
      %v1380 = vunpack.c.l.b16 %v1372
      %v1381 = vunpack.c.l.b16 %v1373
      %v1382 = vunpack.c.l.b16 %v1374
      %v1383 = vunpack.c.l.b16 %v1375
      %v1384 = vpack.c.b16 %v1381, %v1380
      %v1385 = vpack.c.b16 %v1383, %v1382
      %v1389 = vsel %vm577, %v1371, 0
      %1391 = vmatprep.subr.bf16.mxu0 0
      %1392 = vmatpush1.bf16.msra.mxu0 0
      %1393 = vmatprep.subr.bf16.mxu0 0
      %1394 = vmatpush1.bf16.msra.mxu0 0
      %1395 = vmatprep.subr.bf16.mxu0 0
      %1396 = vmatpush1.bf16.msra.mxu0 0
      %1397 = vmatprep.subr.bf16.mxu0 0
      %1398 = vmatpush1.bf16.msra.mxu0 0
      %1399 = vmatprep.subr.bf16.mxu0 0
      %1400 = vmatpush1.bf16.msra.mxu0 0
      %1401 = vmatprep.subr.bf16.mxu0 0
      %1402 = vmatpush1.bf16.msra.mxu0 0
      %1403 = vmatprep.subr.bf16.mxu0 0
      %1404 = vmatpush1.bf16.msra.mxu0 %v1385
      %1405 = vmatprep.subr.bf16.mxu0 0
      %1406 = vmatpush1.bf16.msra.mxu0 %v1384
      %1407 = vmatprep.subr.bf16.mxu0 0
      %1408 = vmatpush2.bf16.msra.mxu0 0
      %1409 = vmatprep.subr.bf16.mxu0 0
      %1410 = vmatpush2.bf16.msra.mxu0 0
      %1411 = vmatprep.subr.bf16.mxu0 0
      %1412 = vmatpush2.bf16.msra.mxu0 0
      %1413 = vmatprep.subr.bf16.mxu0 0
      %1414 = vmatpush2.bf16.msra.mxu0 0
      %1415 = vmatprep.subr.bf16.mxu0 0
      %1416 = vmatpush2.bf16.msra.mxu0 0
      %1417 = vmatprep.subr.bf16.mxu0 0
      %1418 = vmatpush2.bf16.msra.mxu0 0
      %1419 = vmatprep.subr.bf16.mxu0 0
      %1420 = vmatpush2.bf16.msra.mxu0 0
      %1421 = vmatprep.subr.bf16.mxu0 0
      %1422 = vmatpush2.bf16.msra.mxu0 0
      %1423 = vmatprep.mubr.bf16.mxu0 0
      %1424 = vmatmul.mubr.bf16.gmra.mxu0 %v1389
      %v1425 = vpop.f32.mrf.mxu0
      %v1426 = vadd.f32 0.0, %v1425
      %v1427 = vpop.f32.mrf.mxu0
      %v1428 = vpop.f32.mrf.mxu0
      %v1429 = vadd.f32 0.0, %v1428
      %v1430 = vpop.f32.mrf.mxu0
      %1431 = vdwg.mxu0
      %v1432 = vadd.f32 %v556, %v1426
      %v1433 = vadd.f32 %v557, %v1429
      %v1434 = vld [vmem:[%s6] sm:$0x1]
      %v1435 = vld [vmem:[%s7] sm:$0x1]
      %v1436 = vsel %vm577, %v1432, 0.0
      %1437 = vadd.xlane.f32.xlu0 %v1436
      %v1438 = vpop.xlane.xlu0 %1437
      %v1439 = vsel %vm577, %v1433, 0.0
      %1440 = vadd.xlane.f32.xlu0 %v1439
      %v1441 = vpop.xlane.xlu0 %1440
      %v1442 = vrcp.pop 32.0
      %v1443 = vmul.f32 %v1438, %v1442
      %v1444 = vmul.f32 %v1441, %v1442
      %v1445 = vsub.f32 %v1432, %v1443
      %v1446 = vsub.f32 %v1433, %v1444
      %v1447 = vmul.f32 %v1445, %v1445
      %v1448 = vmul.f32 %v1446, %v1446
      %v1449 = vsel %vm577, %v1447, 0.0
      %1450 = vadd.xlane.f32.xlu0 %v1449
      %v1451 = vpop.xlane.xlu0 %1450
      %v1452 = vsel %vm577, %v1448, 0.0
      %1453 = vadd.xlane.f32.xlu0 %v1452
      %v1454 = vpop.xlane.xlu0 %1453
      %v1455 = vmul.f32 %v1451, %v1442
      %v1456 = vmul.f32 %v1454, %v1442
      %v1457 = vadd.f32 %v1455, 1e-05
      %v1458 = vadd.f32 %v1456, 1e-05
      %v1459 = vrsqrt.pop %v1457
      %v1460 = vrsqrt.pop %v1458
      %v1461 = vmul.f32 %v1445, %v1459
      %v1462 = vmul.f32 %v1446, %v1460
      %v1464 = vlaneseq
      %v1465 = vshrl.u32 %v1464, 7
      %v1466 = vsub.s32 0, %v1465
      %v1467 = vrot.slane %v1434, %v1466
      %v1469 = vmul.f32 %v1461, %v1467
      %v1470 = vmul.f32 %v1462, %v1467
      %v1472 = vlaneseq
      %v1473 = vshrl.u32 %v1472, 7
      %v1474 = vsub.s32 0, %v1473
      %v1475 = vrot.slane %v1435, %v1474
      %v1477 = vadd.f32 %v1469, %v1475
      %v1478 = vadd.f32 %v1470, %v1475
      %v1479 = vpack.c.bf16 %v1478, %v1477
      %v1480 = vld [vmem:[%s8] sm:$0xf]
      %v1481 = vld [vmem:[%s8 + $0x4] sm:$0xf]
      %v1482 = vld [vmem:[%s8 + $0x8] sm:$0xf]
      %v1483 = vld [vmem:[%s8 + $0xc] sm:$0xf]
      %v1484 = vld [vmem:[%s9] sm:$0x1]
      %v1486 = vlaneseq
      %v1487 = vshrl.u32 %v1486, 7
      %v1488 = vsub.s32 0, %v1487
      %v1489 = vrot.slane %v1484, %v1488
      %v1495 = vunpack.c.l.b16 %v1480
      %v1496 = vunpack.c.l.b16 %v1481
      %v1497 = vunpack.c.l.b16 %v1482
      %v1498 = vunpack.c.l.b16 %v1483
      %v1499 = vpack.c.b16 %v1496, %v1495
      %v1500 = vpack.c.b16 %v1498, %v1497
      %v1504 = vsel %vm577, %v1479, 0
      %1506 = vmatprep.subr.bf16.mxu0 0
      %1507 = vmatpush1.bf16.msra.mxu0 0
      %1508 = vmatprep.subr.bf16.mxu0 0
      %1509 = vmatpush1.bf16.msra.mxu0 0
      %1510 = vmatprep.subr.bf16.mxu0 0
      %1511 = vmatpush1.bf16.msra.mxu0 0
      %1512 = vmatprep.subr.bf16.mxu0 0
      %1513 = vmatpush1.bf16.msra.mxu0 0
      %1514 = vmatprep.subr.bf16.mxu0 0
      %1515 = vmatpush1.bf16.msra.mxu0 0
      %1516 = vmatprep.subr.bf16.mxu0 0
      %1517 = vmatpush1.bf16.msra.mxu0 0
      %1518 = vmatprep.subr.bf16.mxu0 0
      %1519 = vmatpush1.bf16.msra.mxu0 %v1500
      %1520 = vmatprep.subr.bf16.mxu0 0
      %1521 = vmatpush1.bf16.msra.mxu0 %v1499
      %1522 = vmatprep.subr.bf16.mxu0 0
      %1523 = vmatpush2.bf16.msra.mxu0 0
      %1524 = vmatprep.subr.bf16.mxu0 0
      %1525 = vmatpush2.bf16.msra.mxu0 0
      %1526 = vmatprep.subr.bf16.mxu0 0
      %1527 = vmatpush2.bf16.msra.mxu0 0
      %1528 = vmatprep.subr.bf16.mxu0 0
      %1529 = vmatpush2.bf16.msra.mxu0 0
      %1530 = vmatprep.subr.bf16.mxu0 0
      %1531 = vmatpush2.bf16.msra.mxu0 0
      %1532 = vmatprep.subr.bf16.mxu0 0
      %1533 = vmatpush2.bf16.msra.mxu0 0
      %1534 = vmatprep.subr.bf16.mxu0 0
      %1535 = vmatpush2.bf16.msra.mxu0 0
      %1536 = vmatprep.subr.bf16.mxu0 0
      %1537 = vmatpush2.bf16.msra.mxu0 0
      %1538 = vmatprep.mubr.bf16.mxu0 0
      %1539 = vmatmul.mubr.bf16.gmra.mxu0 %v1504
      %v1540 = vpop.f32.mrf.mxu0
      %v1541 = vadd.f32 %v1489, %v1540
      %v1542 = vpop.f32.mrf.mxu0
      %v1543 = vpop.f32.mrf.mxu0
      %v1544 = vadd.f32 %v1489, %v1543
      %v1545 = vpop.f32.mrf.mxu0
      %1546 = vdwg.mxu0
      %v1547 = vmax.f32 %v1541, 0.0
      %v1548 = vmax.f32 %v1544, 0.0
      %v1549 = vpack.c.bf16 %v1548, %v1547
      %v1550 = vld [vmem:[%s10] sm:$0xf]
      %v1551 = vld [vmem:[%s10 + $0x4] sm:$0xf]
      %v1552 = vld [vmem:[%s10 + $0x8] sm:$0xf]
      %v1553 = vld [vmem:[%s10 + $0xc] sm:$0xf]
      %v1554 = vld [vmem:[%s10 + $0x10] sm:$0xf]
      %v1555 = vld [vmem:[%s10 + $0x14] sm:$0xf]
      %v1556 = vld [vmem:[%s10 + $0x18] sm:$0xf]
      %v1557 = vld [vmem:[%s10 + $0x1c] sm:$0xf]
      %v1558 = vld [vmem:[%s11] sm:$0x1]
      %v1560 = vlaneseq
      %v1561 = vshrl.u32 %v1560, 7
      %v1562 = vsub.s32 0, %v1561
      %v1563 = vrot.slane %v1558, %v1562
      %v1573 = vunpack.c.l.b16 %v1550
      %v1574 = vunpack.c.l.b16 %v1551
      %v1575 = vunpack.c.l.b16 %v1552
      %v1576 = vunpack.c.l.b16 %v1553
      %v1577 = vunpack.c.l.b16 %v1554
      %v1578 = vunpack.c.l.b16 %v1555
      %v1579 = vunpack.c.l.b16 %v1556
      %v1580 = vunpack.c.l.b16 %v1557
      %v1581 = vpack.c.b16 %v1574, %v1573
      %v1582 = vpack.c.b16 %v1576, %v1575
      %v1583 = vpack.c.b16 %v1578, %v1577
      %v1584 = vpack.c.b16 %v1580, %v1579
      %vm1589 = vcmask 523264
      %v1591 = vsel %vm1589, %v1549, 0
      %1593 = vmatprep.subr.bf16.mxu0 0
      %1594 = vmatpush1.bf16.msra.mxu0 0
      %1595 = vmatprep.subr.bf16.mxu0 0
      %1596 = vmatpush1.bf16.msra.mxu0 0
      %1597 = vmatprep.subr.bf16.mxu0 0
      %1598 = vmatpush1.bf16.msra.mxu0 0
      %1599 = vmatprep.subr.bf16.mxu0 0
      %1600 = vmatpush1.bf16.msra.mxu0 0
      %1601 = vmatprep.subr.bf16.mxu0 0
      %1602 = vmatpush1.bf16.msra.mxu0 %v1584
      %1603 = vmatprep.subr.bf16.mxu0 0
      %1604 = vmatpush1.bf16.msra.mxu0 %v1583
      %1605 = vmatprep.subr.bf16.mxu0 0
      %1606 = vmatpush1.bf16.msra.mxu0 %v1582
      %1607 = vmatprep.subr.bf16.mxu0 0
      %1608 = vmatpush1.bf16.msra.mxu0 %v1581
      %1609 = vmatprep.subr.bf16.mxu0 0
      %1610 = vmatpush2.bf16.msra.mxu0 0
      %1611 = vmatprep.subr.bf16.mxu0 0
      %1612 = vmatpush2.bf16.msra.mxu0 0
      %1613 = vmatprep.subr.bf16.mxu0 0
      %1614 = vmatpush2.bf16.msra.mxu0 0
      %1615 = vmatprep.subr.bf16.mxu0 0
      %1616 = vmatpush2.bf16.msra.mxu0 0
      %1617 = vmatprep.subr.bf16.mxu0 0
      %1618 = vmatpush2.bf16.msra.mxu0 0
      %1619 = vmatprep.subr.bf16.mxu0 0
      %1620 = vmatpush2.bf16.msra.mxu0 0
      %1621 = vmatprep.subr.bf16.mxu0 0
      %1622 = vmatpush2.bf16.msra.mxu0 0
      %1623 = vmatprep.subr.bf16.mxu0 0
      %1624 = vmatpush2.bf16.msra.mxu0 0
      %1625 = vmatprep.mubr.bf16.mxu0 0
      %1626 = vmatmul.mubr.bf16.gmra.mxu0 %v1591
      %v1627 = vpop.f32.mrf.mxu0
      %v1628 = vadd.f32 %v1563, %v1627
      %v1629 = vpop.f32.mrf.mxu0
      %v1630 = vpop.f32.mrf.mxu0
      %v1631 = vadd.f32 %v1563, %v1630
      %v1632 = vpop.f32.mrf.mxu0
      %1633 = vdwg.mxu0
      %v1634 = vadd.f32 %v1477, %v1628
      %v1635 = vadd.f32 %v1478, %v1631
      %v1636 = vld [vmem:[%s12] sm:$0x1]
      %v1637 = vld [vmem:[%s13] sm:$0x1]
      %v1638 = vsel %vm577, %v1634, 0.0
      %1639 = vadd.xlane.f32.xlu0 %v1638
      %v1640 = vpop.xlane.xlu0 %1639
      %v1641 = vsel %vm577, %v1635, 0.0
      %1642 = vadd.xlane.f32.xlu0 %v1641
      %v1643 = vpop.xlane.xlu0 %1642
      %v1644 = vmul.f32 %v1640, %v1442
      %v1645 = vmul.f32 %v1643, %v1442
      %v1646 = vsub.f32 %v1634, %v1644
      %v1647 = vsub.f32 %v1635, %v1645
      %v1648 = vmul.f32 %v1646, %v1646
      %v1649 = vmul.f32 %v1647, %v1647
      %v1650 = vsel %vm577, %v1648, 0.0
      %1651 = vadd.xlane.f32.xlu0 %v1650
      %v1652 = vpop.xlane.xlu0 %1651
      %v1653 = vsel %vm577, %v1649, 0.0
      %1654 = vadd.xlane.f32.xlu0 %v1653
      %v1655 = vpop.xlane.xlu0 %1654
      %v1656 = vmul.f32 %v1652, %v1442
      %v1657 = vmul.f32 %v1655, %v1442
      %v1658 = vadd.f32 %v1656, 1e-05
      %v1659 = vadd.f32 %v1657, 1e-05
      %v1660 = vrsqrt.pop %v1658
      %v1661 = vrsqrt.pop %v1659
      %v1662 = vmul.f32 %v1646, %v1660
      %v1663 = vmul.f32 %v1647, %v1661
      %v1665 = vlaneseq
      %v1666 = vshrl.u32 %v1665, 7
      %v1667 = vsub.s32 0, %v1666
      %v1668 = vrot.slane %v1636, %v1667
      %v1670 = vmul.f32 %v1662, %v1668
      %v1671 = vmul.f32 %v1663, %v1668
      %v1673 = vlaneseq
      %v1674 = vshrl.u32 %v1673, 7
      %v1675 = vsub.s32 0, %v1674
      %v1676 = vrot.slane %v1637, %v1675
      %v1678 = vadd.f32 %v1670, %v1676
      %v1679 = vadd.f32 %v1671, %v1676
      %1680 = vst.msk [vmem:[%s547] sm:$0xff] %vm577, %v1678
      %1681 = vst.msk [vmem:[%s547 + $0x8] sm:$0xff] %vm577, %v1679
      %p1682 = scmp.lt.s32.totalorder %s28, 1
      %s1683 = scalar_select %p1682, %s28, 1
      %s1684 = smul.addr %s1683, 2
      %s1685 = smul.addr %s1684, 8
      %s1686 = scalar_lea.vmem %s14, %s1685
      %p1687 = scmp.lt.s32.totalorder %s28, 1
      %s1688 = scalar_select %p1687, %s28, 1
      %s1689 = smul.addr %s1688, 8
      %s1690 = scalar_lea.vmem %s15, %s1689
      %p1691 = scmp.lt.s32.totalorder %s28, 1
      %s1692 = scalar_select %p1691, %s28, 1
      %s1693 = scalar_lea.vmem %s16, %s1692
      // Predicated region
      $region77: #{transformer_forward.4} parent=75 // pred_check
        %p1694 = pneg %p350
      $region78: #{transformer_forward.4} parent=75 // pred_check_branch
        %1696 = sbr.rel (%p1694) target = $region80
      $region79: #{transformer_forward.4} parent=75 // pred_region
        _
      $region80: #{transformer_forward.4} parent=75 // pred_fallthru
        _
      // Predicated region
      $region81: #{transformer_forward.4} parent=75 // pred_check
        %p1697 = pneg %p376
      $region82: #{transformer_forward.4} parent=75 // pred_check_branch
        %1699 = sbr.rel (%p1697) target = $region84
      $region83: #{transformer_forward.4} parent=75 // pred_region
        _
      $region84: #{transformer_forward.4} parent=75 // pred_fallthru
        _
      // Predicated region
      $region85: #{transformer_forward.4} parent=75 // pred_check
        %p1700 = pneg %p402
      $region86: #{transformer_forward.4} parent=75 // pred_check_branch
        %1702 = sbr.rel (%p1700) target = $region88
      $region87: #{transformer_forward.4} parent=75 // pred_region
        _
      $region88: #{transformer_forward.4} parent=75 // pred_fallthru
        _
    $region76: #{transformer_forward.4} parent=5 // pred_fallthru
      _
    %p1703 = scmp.le.s32.totalorder 2, %s23
    // Predicated region
    $region89: #{transformer_forward.4} parent=5 // pred_check
      %p1704 = pneg %p1703
    $region90: #{transformer_forward.4} parent=5 // pred_check_branch
      %1706 = sbr.rel (%p1704) target = $region92
    $region91: #{transformer_forward.4} parent=5 // pred_region
      %s1707 = ssub.s32 %s23, 2
      // Predicated region
      $region93: #{transformer_forward.4} parent=91 // pred_check
        %p1708 = pneg %p356
      $region94: #{transformer_forward.4} parent=91 // pred_check_branch
        %1710 = sbr.rel (%p1708) target = $region96
      $region95: #{transformer_forward.4} parent=91 // pred_region
        %p1711 = scmp.lt.s32.totalorder %s29, 1
        %s1712 = scalar_select %p1711, %s29, 1
        %s1713 = smul.addr %s1712, 2
        %s1714 = smul.addr %s1713, 8
        %s1715 = scalar_lea.vmem %s14, %s1714
      $region96: #{transformer_forward.4} parent=91 // pred_fallthru
        _
      // Predicated region
      $region97: #{transformer_forward.4} parent=91 // pred_check
        %p1716 = pneg %p382
      $region98: #{transformer_forward.4} parent=91 // pred_check_branch
        %1718 = sbr.rel (%p1716) target = $region100
      $region99: #{transformer_forward.4} parent=91 // pred_region
        %p1719 = scmp.lt.s32.totalorder %s29, 1
        %s1720 = scalar_select %p1719, %s29, 1
        %s1721 = smul.addr %s1720, 8
        %s1722 = scalar_lea.vmem %s15, %s1721
      $region100: #{transformer_forward.4} parent=91 // pred_fallthru
        _
      // Predicated region
      $region101: #{transformer_forward.4} parent=91 // pred_check
        %p1723 = pneg %p408
      $region102: #{transformer_forward.4} parent=91 // pred_check_branch
        %1725 = sbr.rel (%p1723) target = $region104
      $region103: #{transformer_forward.4} parent=91 // pred_region
        %p1726 = scmp.lt.s32.totalorder %s29, 1
        %s1727 = scalar_select %p1726, %s29, 1
        %s1728 = scalar_lea.vmem %s16, %s1727
      $region104: #{transformer_forward.4} parent=91 // pred_fallthru
        _
    $region92: #{transformer_forward.4} parent=5 // pred_fallthru
      _
  $region6: #{transformer_forward.4} parent=0 // loop_footer
    %s27 = sadd.s32 1, %s23
  $region7: #{transformer_forward.4} parent=0 // loop_footer_branch
    %22 = sbr.rel target = $region3
  $region8: #{transformer_forward.4} parent=0 // loop_exit
    _

// kernel: transformer_forward.7
$region0: #{transformer_forward.7}
  #allocation0 [shape = 'u32[]', space=smem, size = 0x4, offset = 0x4, fixed_abs, tag = 'smem constant byte address 0x4 - core index']
  #allocation1 [shape = 'u32[144,128]{1,0:T(1,128)}', space=vmem, size = 0x12000, scoped, tag = 'internal scratch']
  #allocation2 [shape = 'f32[8,32]{1,0:T(8,128)}', space=vmem, size = 0x1000, scoped, tag = 'scratch operand']
  %s0 = inlined_call_operand.vmem [shape: f32[2,1,8], index: 0, kind: input, shape index: {}]
  %s1 = inlined_call_operand.vmem [shape: f32[2,1,16], index: 1, kind: input, shape index: {}]
  %s2 = inlined_call_operand.vmem [shape: f32[1,32], index: 2, kind: input, shape index: {}]
  %s3 = inlined_call_operand.vmem [shape: f32[1,32], index: 3, kind: input, shape index: {}]
  %s4 = inlined_call_operand.vmem [shape: f32[2,8,32], index: 4, kind: input, shape index: {}]
  %s5 = inlined_call_operand.vmem [shape: f32[2,16,32], index: 5, kind: input, shape index: {}]
  %s6 = inlined_call_operand.vmem [shape: bf16[32,32], index: 6, kind: input, shape index: {}]
  %s7 = inlined_call_operand.vmem [shape: bf16[32,32], index: 7, kind: input, shape index: {}]
  %s8 = inlined_call_operand.vmem [shape: bf16[32,32], index: 8, kind: input, shape index: {}]
  %s9 = inlined_call_operand.vmem [shape: f32[1,32], index: 9, kind: input, shape index: {}]
  %s10 = inlined_call_operand.vmem [shape: f32[1,32], index: 10, kind: input, shape index: {}]
  %s11 = inlined_call_operand.vmem [shape: bf16[32,32], index: 11, kind: input, shape index: {}]
  %s12 = inlined_call_operand.vmem [shape: bf16[32,32], index: 12, kind: input, shape index: {}]
  %s13 = inlined_call_operand.vmem [shape: bf16[32,32], index: 13, kind: input, shape index: {}]
  %s14 = inlined_call_operand.vmem [shape: f32[1,32], index: 14, kind: input, shape index: {}]
  %s15 = inlined_call_operand.vmem [shape: f32[1,32], index: 15, kind: input, shape index: {}]
  %s16 = inlined_call_operand.vmem [shape: bf16[32,64], index: 16, kind: input, shape index: {}]
  %s17 = inlined_call_operand.vmem [shape: f32[1,64], index: 17, kind: input, shape index: {}]
  %s18 = inlined_call_operand.vmem [shape: bf16[64,32], index: 18, kind: input, shape index: {}]
  %s19 = inlined_call_operand.vmem [shape: f32[1,32], index: 19, kind: input, shape index: {}]
  %s20 = inlined_call_operand.vmem [shape: f32[1,32], index: 20, kind: input, shape index: {}]
  %s21 = inlined_call_operand.vmem [shape: f32[1,32], index: 21, kind: input, shape index: {}]
  %s22 = inlined_call_operand.hbm [shape: f32[2,8,32], index: 22, kind: output, shape index: {0}]
  %s23 = inlined_call_operand.vmem [shape: f32[2,8,16], index: 23, kind: output, shape index: {1}]
  %s24 = inlined_call_operand.vmem [shape: f32[2,1,16], index: 24, kind: output, shape index: {2}]
  %s25 = inlined_call_operand.vmem [shape: f32[2,8,16], index: 25, kind: output, shape index: {3}]
  %s26 = inlined_call_operand.vmem [shape: f32[2,1,16], index: 26, kind: output, shape index: {4}]
  %27 = xla_tuple %s22, %s23, %s24, %s25, %s26
  %s28 = sld [smem:[#allocation0]]
  $region153: #{transformer_forward.7} parent=0
    _
  %s30 = ssub.s32 1, %s28
  %s31 = scalar_select 0, %s30, %s28
  $region1: #{transformer_forward.7} parent=0
    #allocation3 [shape = 'u8[8192]{0}', space=vmem, size = 0x2000, scoped, tag = 'output window, operand 0']
    #allocation4 [shape = 's32[2]{0}', space=sflag, size = 0x8, scoped, tag = 'scoped memory for transformer_forward.7']
    %32 = vsyncpa [#allocation4], 0
    %s33 = scalar_lea.sflag [#allocation4], 1
    %34 = vsyncpa %s33, 0
    loop: start=0, step=1, limit=4
    $region2: #{transformer_forward.7} parent=1 // loop_pre_header
      _
    $region3: #{transformer_forward.7} parent=1 // loop_header
      %s36 = sphi 0, %s40
      %p37 = scmp.ge.s32.totalorder %s36, 4
      %s46 = sphi 0, %s48
      %s49 = sphi 0, %s46
      %s50 = sphi 0, %s49
      %s66 = sphi 0, %s50
      %s72 = sphi 0, %s74
      %s75 = sphi 0, %s72
      %s76 = sphi 0, %s75
      %s92 = sphi 0, %s76
      %s96 = sphi 0, %s96
      %s98 = sphi 0, %s96
      %s99 = sphi 0, %s98
      %s113 = sphi 0, %s99
      %s117 = sphi 0, %s117
      %s119 = sphi 0, %s117
      %s120 = sphi 0, %s119
      %s134 = sphi 0, %s120
      %s140 = sphi 0, %s142
      %s143 = sphi 0, %s140
      %s144 = sphi 0, %s143
      %s160 = sphi 0, %s144
      %s166 = sphi 0, %s168
      %s169 = sphi 0, %s166
      %s170 = sphi 0, %s169
      %s186 = sphi 0, %s170
      %s190 = sphi 0, %s190
      %s192 = sphi 0, %s190
      %s193 = sphi 0, %s192
      %s207 = sphi 0, %s193
      %s211 = sphi 0, %s211
      %s213 = sphi 0, %s211
      %s214 = sphi 0, %s213
      %s228 = sphi 0, %s214
      %s232 = sphi 0, %s232
      %s234 = sphi 0, %s232
      %s235 = sphi 0, %s234
      %s249 = sphi 0, %s235
      %s253 = sphi 0, %s253
      %s255 = sphi 0, %s253
      %s256 = sphi 0, %s255
      %s270 = sphi 0, %s256
      %s274 = sphi 0, %s274
      %s276 = sphi 0, %s274
      %s277 = sphi 0, %s276
      %s291 = sphi 0, %s277
      %s295 = sphi 0, %s295
      %s297 = sphi 0, %s295
      %s298 = sphi 0, %s297
      %s312 = sphi 0, %s298
      %s316 = sphi 0, %s316
      %s318 = sphi 0, %s316
      %s319 = sphi 0, %s318
      %s333 = sphi 0, %s319
      %s337 = sphi 0, %s337
      %s339 = sphi 0, %s337
      %s340 = sphi 0, %s339
      %s354 = sphi 0, %s340
      %s358 = sphi 0, %s358
      %s360 = sphi 0, %s358
      %s361 = sphi 0, %s360
      %s375 = sphi 0, %s361
      %s379 = sphi 0, %s379
      %s381 = sphi 0, %s379
      %s382 = sphi 0, %s381
      %s396 = sphi 0, %s382
      %s400 = sphi 0, %s400
      %s402 = sphi 0, %s400
      %s403 = sphi 0, %s402
      %s417 = sphi 0, %s403
      %s421 = sphi 0, %s421
      %s423 = sphi 0, %s421
      %s424 = sphi 0, %s423
      %s438 = sphi 0, %s424
      %s442 = sphi 0, %s442
      %s444 = sphi 0, %s442
      %s445 = sphi 0, %s444
      %s459 = sphi 0, %s445
      %s463 = sphi 0, %s463
      %s465 = sphi 0, %s463
      %s466 = sphi 0, %s465
      %s480 = sphi 0, %s466
      %s484 = sphi 0, %s484
      %s486 = sphi 0, %s484
      %s487 = sphi 0, %s486
      %s501 = sphi 0, %s487
      %s505 = sphi 0, %s505
      %s507 = sphi 0, %s505
      %s508 = sphi 0, %s507
      %s522 = sphi 0, %s508
      %s528 = sphi 0, %s530
      %s531 = sphi 0, %s528
      %s532 = sphi 0, %s531
      %s548 = sphi 0, %s532
      %s554 = sphi 0, %s556
      %s557 = sphi 0, %s554
      %s558 = sphi 0, %s557
      %s574 = sphi 0, %s558
      %s580 = sphi 0, %s582
      %s583 = sphi 0, %s580
      %s584 = sphi 0, %s583
      %s600 = sphi 0, %s584
      %s606 = sphi 0, %s608
      %s609 = sphi 0, %s606
      %s610 = sphi 0, %s609
      %s626 = sphi 0, %s610
      %s632 = sphi 0, %s634
      %s635 = sphi 0, %s632
      %s636 = sphi 0, %s635
      %s652 = sphi 0, %s636
    $region4: #{transformer_forward.7} parent=1 // loop_header_branch
      %39 = sbr.rel (%p37) target = $region8
    $region5: #{transformer_forward.7} parent=1 // loop_body
      %s41 = ssub.s32 %s36, 1
      %s42 = ssub.s32 %s36, 2
      %s43 = sadd.s32 %s36, 1
      %s44 = ssub.s32 %s36, %s43
      %p45 = scmp.eq.s32.totalorder %s44, 0
      %s47 = sadd.s32 %s46, 1
      %s48 = scalar_select %p45, %s46, %s47
      %p51 = pneg %p45
      %p52 = scmp.eq.s32.totalorder %s36, 1
      %p53 = por %p51, %p52
      %p54 = scmp.ne.s32.totalorder %s46, %s49
      %p55 = scmp.eq.s32.totalorder %s36, 0
      %p56 = por %p54, %p55
      %p57 = scmp.ne.s32.totalorder %s46, %s49
      %p58 = scmp.eq.s32.totalorder %s41, 1
      %p59 = por %p57, %p58
      %p60 = scmp.ne.s32.totalorder %s49, %s50
      %p61 = scmp.eq.s32.totalorder %s41, 0
      %p62 = por %p60, %p61
      %p63 = scmp.ne.s32.totalorder %s49, %s50
      %p64 = scmp.eq.s32.totalorder %s42, 1
      %p65 = por %p63, %p64
      %p67 = scmp.ne.s32.totalorder %s50, %s66
      %p68 = scmp.eq.s32.totalorder %s42, 0
      %p69 = por %p67, %p68
      %s70 = ssub.s32 %s36, %s43
      %p71 = scmp.eq.s32.totalorder %s70, 0
      %s73 = sadd.s32 %s72, 1
      %s74 = scalar_select %p71, %s72, %s73
      %p77 = pneg %p71
      %p78 = scmp.eq.s32.totalorder %s36, 1
      %p79 = por %p77, %p78
      %p80 = scmp.ne.s32.totalorder %s72, %s75
      %p81 = scmp.eq.s32.totalorder %s36, 0
      %p82 = por %p80, %p81
      %p83 = scmp.ne.s32.totalorder %s72, %s75
      %p84 = scmp.eq.s32.totalorder %s41, 1
      %p85 = por %p83, %p84
      %p86 = scmp.ne.s32.totalorder %s75, %s76
      %p87 = scmp.eq.s32.totalorder %s41, 0
      %p88 = por %p86, %p87
      %p89 = scmp.ne.s32.totalorder %s75, %s76
      %p90 = scmp.eq.s32.totalorder %s42, 1
      %p91 = por %p89, %p90
      %p93 = scmp.ne.s32.totalorder %s76, %s92
      %p94 = scmp.eq.s32.totalorder %s42, 0
      %p95 = por %p93, %p94
      %s97 = sadd.s32 %s96, 1
      %p100 = scmp.eq.s32.totalorder %s36, 1
      %p101 = scmp.ne.s32.totalorder %s96, %s98
      %p102 = scmp.eq.s32.totalorder %s36, 0
      %p103 = por %p101, %p102
      %p104 = scmp.ne.s32.totalorder %s96, %s98
      %p105 = scmp.eq.s32.totalorder %s41, 1
      %p106 = por %p104, %p105
      %p107 = scmp.ne.s32.totalorder %s98, %s99
      %p108 = scmp.eq.s32.totalorder %s41, 0
      %p109 = por %p107, %p108
      %p110 = scmp.ne.s32.totalorder %s98, %s99
      %p111 = scmp.eq.s32.totalorder %s42, 1
      %p112 = por %p110, %p111
      %p114 = scmp.ne.s32.totalorder %s99, %s113
      %p115 = scmp.eq.s32.totalorder %s42, 0
      %p116 = por %p114, %p115
      %s118 = sadd.s32 %s117, 1
      %p121 = scmp.eq.s32.totalorder %s36, 1
      %p122 = scmp.ne.s32.totalorder %s117, %s119
      %p123 = scmp.eq.s32.totalorder %s36, 0
      %p124 = por %p122, %p123
      %p125 = scmp.ne.s32.totalorder %s117, %s119
      %p126 = scmp.eq.s32.totalorder %s41, 1
      %p127 = por %p125, %p126
      %p128 = scmp.ne.s32.totalorder %s119, %s120
      %p129 = scmp.eq.s32.totalorder %s41, 0
      %p130 = por %p128, %p129
      %p131 = scmp.ne.s32.totalorder %s119, %s120
      %p132 = scmp.eq.s32.totalorder %s42, 1
      %p133 = por %p131, %p132
      %p135 = scmp.ne.s32.totalorder %s120, %s134
      %p136 = scmp.eq.s32.totalorder %s42, 0
      %p137 = por %p135, %p136
      %s138 = ssub.s32 %s36, %s43
      %p139 = scmp.eq.s32.totalorder %s138, 0
      %s141 = sadd.s32 %s140, 1
      %s142 = scalar_select %p139, %s140, %s141
      %p145 = pneg %p139
      %p146 = scmp.eq.s32.totalorder %s36, 1
      %p147 = por %p145, %p146
      %p148 = scmp.ne.s32.totalorder %s140, %s143
      %p149 = scmp.eq.s32.totalorder %s36, 0
      %p150 = por %p148, %p149
      %p151 = scmp.ne.s32.totalorder %s140, %s143
      %p152 = scmp.eq.s32.totalorder %s41, 1
      %p153 = por %p151, %p152
      %p154 = scmp.ne.s32.totalorder %s143, %s144
      %p155 = scmp.eq.s32.totalorder %s41, 0
      %p156 = por %p154, %p155
      %p157 = scmp.ne.s32.totalorder %s143, %s144
      %p158 = scmp.eq.s32.totalorder %s42, 1
      %p159 = por %p157, %p158
      %p161 = scmp.ne.s32.totalorder %s144, %s160
      %p162 = scmp.eq.s32.totalorder %s42, 0
      %p163 = por %p161, %p162
      %s164 = ssub.s32 %s36, %s43
      %p165 = scmp.eq.s32.totalorder %s164, 0
      %s167 = sadd.s32 %s166, 1
      %s168 = scalar_select %p165, %s166, %s167
      %p171 = pneg %p165
      %p172 = scmp.eq.s32.totalorder %s36, 1
      %p173 = por %p171, %p172
      %p174 = scmp.ne.s32.totalorder %s166, %s169
      %p175 = scmp.eq.s32.totalorder %s36, 0
      %p176 = por %p174, %p175
      %p177 = scmp.ne.s32.totalorder %s166, %s169
      %p178 = scmp.eq.s32.totalorder %s41, 1
      %p179 = por %p177, %p178
      %p180 = scmp.ne.s32.totalorder %s169, %s170
      %p181 = scmp.eq.s32.totalorder %s41, 0
      %p182 = por %p180, %p181
      %p183 = scmp.ne.s32.totalorder %s169, %s170
      %p184 = scmp.eq.s32.totalorder %s42, 1
      %p185 = por %p183, %p184
      %p187 = scmp.ne.s32.totalorder %s170, %s186
      %p188 = scmp.eq.s32.totalorder %s42, 0
      %p189 = por %p187, %p188
      %s191 = sadd.s32 %s190, 1
      %p194 = scmp.eq.s32.totalorder %s36, 1
      %p195 = scmp.ne.s32.totalorder %s190, %s192
      %p196 = scmp.eq.s32.totalorder %s36, 0
      %p197 = por %p195, %p196
      %p198 = scmp.ne.s32.totalorder %s190, %s192
      %p199 = scmp.eq.s32.totalorder %s41, 1
      %p200 = por %p198, %p199
      %p201 = scmp.ne.s32.totalorder %s192, %s193
      %p202 = scmp.eq.s32.totalorder %s41, 0
      %p203 = por %p201, %p202
      %p204 = scmp.ne.s32.totalorder %s192, %s193
      %p205 = scmp.eq.s32.totalorder %s42, 1
      %p206 = por %p204, %p205
      %p208 = scmp.ne.s32.totalorder %s193, %s207
      %p209 = scmp.eq.s32.totalorder %s42, 0
      %p210 = por %p208, %p209
      %s212 = sadd.s32 %s211, 1
      %p215 = scmp.eq.s32.totalorder %s36, 1
      %p216 = scmp.ne.s32.totalorder %s211, %s213
      %p217 = scmp.eq.s32.totalorder %s36, 0
      %p218 = por %p216, %p217
      %p219 = scmp.ne.s32.totalorder %s211, %s213
      %p220 = scmp.eq.s32.totalorder %s41, 1
      %p221 = por %p219, %p220
      %p222 = scmp.ne.s32.totalorder %s213, %s214
      %p223 = scmp.eq.s32.totalorder %s41, 0
      %p224 = por %p222, %p223
      %p225 = scmp.ne.s32.totalorder %s213, %s214
      %p226 = scmp.eq.s32.totalorder %s42, 1
      %p227 = por %p225, %p226
      %p229 = scmp.ne.s32.totalorder %s214, %s228
      %p230 = scmp.eq.s32.totalorder %s42, 0
      %p231 = por %p229, %p230
      %s233 = sadd.s32 %s232, 1
      %p236 = scmp.eq.s32.totalorder %s36, 1
      %p237 = scmp.ne.s32.totalorder %s232, %s234
      %p238 = scmp.eq.s32.totalorder %s36, 0
      %p239 = por %p237, %p238
      %p240 = scmp.ne.s32.totalorder %s232, %s234
      %p241 = scmp.eq.s32.totalorder %s41, 1
      %p242 = por %p240, %p241
      %p243 = scmp.ne.s32.totalorder %s234, %s235
      %p244 = scmp.eq.s32.totalorder %s41, 0
      %p245 = por %p243, %p244
      %p246 = scmp.ne.s32.totalorder %s234, %s235
      %p247 = scmp.eq.s32.totalorder %s42, 1
      %p248 = por %p246, %p247
      %p250 = scmp.ne.s32.totalorder %s235, %s249
      %p251 = scmp.eq.s32.totalorder %s42, 0
      %p252 = por %p250, %p251
      %s254 = sadd.s32 %s253, 1
      %p257 = scmp.eq.s32.totalorder %s36, 1
      %p258 = scmp.ne.s32.totalorder %s253, %s255
      %p259 = scmp.eq.s32.totalorder %s36, 0
      %p260 = por %p258, %p259
      %p261 = scmp.ne.s32.totalorder %s253, %s255
      %p262 = scmp.eq.s32.totalorder %s41, 1
      %p263 = por %p261, %p262
      %p264 = scmp.ne.s32.totalorder %s255, %s256
      %p265 = scmp.eq.s32.totalorder %s41, 0
      %p266 = por %p264, %p265
      %p267 = scmp.ne.s32.totalorder %s255, %s256
      %p268 = scmp.eq.s32.totalorder %s42, 1
      %p269 = por %p267, %p268
      %p271 = scmp.ne.s32.totalorder %s256, %s270
      %p272 = scmp.eq.s32.totalorder %s42, 0
      %p273 = por %p271, %p272
      %s275 = sadd.s32 %s274, 1
      %p278 = scmp.eq.s32.totalorder %s36, 1
      %p279 = scmp.ne.s32.totalorder %s274, %s276
      %p280 = scmp.eq.s32.totalorder %s36, 0
      %p281 = por %p279, %p280
      %p282 = scmp.ne.s32.totalorder %s274, %s276
      %p283 = scmp.eq.s32.totalorder %s41, 1
      %p284 = por %p282, %p283
      %p285 = scmp.ne.s32.totalorder %s276, %s277
      %p286 = scmp.eq.s32.totalorder %s41, 0
      %p287 = por %p285, %p286
      %p288 = scmp.ne.s32.totalorder %s276, %s277
      %p289 = scmp.eq.s32.totalorder %s42, 1
      %p290 = por %p288, %p289
      %p292 = scmp.ne.s32.totalorder %s277, %s291
      %p293 = scmp.eq.s32.totalorder %s42, 0
      %p294 = por %p292, %p293
      %s296 = sadd.s32 %s295, 1
      %p299 = scmp.eq.s32.totalorder %s36, 1
      %p300 = scmp.ne.s32.totalorder %s295, %s297
      %p301 = scmp.eq.s32.totalorder %s36, 0
      %p302 = por %p300, %p301
      %p303 = scmp.ne.s32.totalorder %s295, %s297
      %p304 = scmp.eq.s32.totalorder %s41, 1
      %p305 = por %p303, %p304
      %p306 = scmp.ne.s32.totalorder %s297, %s298
      %p307 = scmp.eq.s32.totalorder %s41, 0
      %p308 = por %p306, %p307
      %p309 = scmp.ne.s32.totalorder %s297, %s298
      %p310 = scmp.eq.s32.totalorder %s42, 1
      %p311 = por %p309, %p310
      %p313 = scmp.ne.s32.totalorder %s298, %s312
      %p314 = scmp.eq.s32.totalorder %s42, 0
      %p315 = por %p313, %p314
      %s317 = sadd.s32 %s316, 1
      %p320 = scmp.eq.s32.totalorder %s36, 1
      %p321 = scmp.ne.s32.totalorder %s316, %s318
      %p322 = scmp.eq.s32.totalorder %s36, 0
      %p323 = por %p321, %p322
      %p324 = scmp.ne.s32.totalorder %s316, %s318
      %p325 = scmp.eq.s32.totalorder %s41, 1
      %p326 = por %p324, %p325
      %p327 = scmp.ne.s32.totalorder %s318, %s319
      %p328 = scmp.eq.s32.totalorder %s41, 0
      %p329 = por %p327, %p328
      %p330 = scmp.ne.s32.totalorder %s318, %s319
      %p331 = scmp.eq.s32.totalorder %s42, 1
      %p332 = por %p330, %p331
      %p334 = scmp.ne.s32.totalorder %s319, %s333
      %p335 = scmp.eq.s32.totalorder %s42, 0
      %p336 = por %p334, %p335
      %s338 = sadd.s32 %s337, 1
      %p341 = scmp.eq.s32.totalorder %s36, 1
      %p342 = scmp.ne.s32.totalorder %s337, %s339
      %p343 = scmp.eq.s32.totalorder %s36, 0
      %p344 = por %p342, %p343
      %p345 = scmp.ne.s32.totalorder %s337, %s339
      %p346 = scmp.eq.s32.totalorder %s41, 1
      %p347 = por %p345, %p346
      %p348 = scmp.ne.s32.totalorder %s339, %s340
      %p349 = scmp.eq.s32.totalorder %s41, 0
      %p350 = por %p348, %p349
      %p351 = scmp.ne.s32.totalorder %s339, %s340
      %p352 = scmp.eq.s32.totalorder %s42, 1
      %p353 = por %p351, %p352
      %p355 = scmp.ne.s32.totalorder %s340, %s354
      %p356 = scmp.eq.s32.totalorder %s42, 0
      %p357 = por %p355, %p356
      %s359 = sadd.s32 %s358, 1
      %p362 = scmp.eq.s32.totalorder %s36, 1
      %p363 = scmp.ne.s32.totalorder %s358, %s360
      %p364 = scmp.eq.s32.totalorder %s36, 0
      %p365 = por %p363, %p364
      %p366 = scmp.ne.s32.totalorder %s358, %s360
      %p367 = scmp.eq.s32.totalorder %s41, 1
      %p368 = por %p366, %p367
      %p369 = scmp.ne.s32.totalorder %s360, %s361
      %p370 = scmp.eq.s32.totalorder %s41, 0
      %p371 = por %p369, %p370
      %p372 = scmp.ne.s32.totalorder %s360, %s361
      %p373 = scmp.eq.s32.totalorder %s42, 1
      %p374 = por %p372, %p373
      %p376 = scmp.ne.s32.totalorder %s361, %s375
      %p377 = scmp.eq.s32.totalorder %s42, 0
      %p378 = por %p376, %p377
      %s380 = sadd.s32 %s379, 1
      %p383 = scmp.eq.s32.totalorder %s36, 1
      %p384 = scmp.ne.s32.totalorder %s379, %s381
      %p385 = scmp.eq.s32.totalorder %s36, 0
      %p386 = por %p384, %p385
      %p387 = scmp.ne.s32.totalorder %s379, %s381
      %p388 = scmp.eq.s32.totalorder %s41, 1
      %p389 = por %p387, %p388
      %p390 = scmp.ne.s32.totalorder %s381, %s382
      %p391 = scmp.eq.s32.totalorder %s41, 0
      %p392 = por %p390, %p391
      %p393 = scmp.ne.s32.totalorder %s381, %s382
      %p394 = scmp.eq.s32.totalorder %s42, 1
      %p395 = por %p393, %p394
      %p397 = scmp.ne.s32.totalorder %s382, %s396
      %p398 = scmp.eq.s32.totalorder %s42, 0
      %p399 = por %p397, %p398
      %s401 = sadd.s32 %s400, 1
      %p404 = scmp.eq.s32.totalorder %s36, 1
      %p405 = scmp.ne.s32.totalorder %s400, %s402
      %p406 = scmp.eq.s32.totalorder %s36, 0
      %p407 = por %p405, %p406
      %p408 = scmp.ne.s32.totalorder %s400, %s402
      %p409 = scmp.eq.s32.totalorder %s41, 1
      %p410 = por %p408, %p409
      %p411 = scmp.ne.s32.totalorder %s402, %s403
      %p412 = scmp.eq.s32.totalorder %s41, 0
      %p413 = por %p411, %p412
      %p414 = scmp.ne.s32.totalorder %s402, %s403
      %p415 = scmp.eq.s32.totalorder %s42, 1
      %p416 = por %p414, %p415
      %p418 = scmp.ne.s32.totalorder %s403, %s417
      %p419 = scmp.eq.s32.totalorder %s42, 0
      %p420 = por %p418, %p419
      %s422 = sadd.s32 %s421, 1
      %p425 = scmp.eq.s32.totalorder %s36, 1
      %p426 = scmp.ne.s32.totalorder %s421, %s423
      %p427 = scmp.eq.s32.totalorder %s36, 0
      %p428 = por %p426, %p427
      %p429 = scmp.ne.s32.totalorder %s421, %s423
      %p430 = scmp.eq.s32.totalorder %s41, 1
      %p431 = por %p429, %p430
      %p432 = scmp.ne.s32.totalorder %s423, %s424
      %p433 = scmp.eq.s32.totalorder %s41, 0
      %p434 = por %p432, %p433
      %p435 = scmp.ne.s32.totalorder %s423, %s424
      %p436 = scmp.eq.s32.totalorder %s42, 1
      %p437 = por %p435, %p436
      %p439 = scmp.ne.s32.totalorder %s424, %s438
      %p440 = scmp.eq.s32.totalorder %s42, 0
      %p441 = por %p439, %p440
      %s443 = sadd.s32 %s442, 1
      %p446 = scmp.eq.s32.totalorder %s36, 1
      %p447 = scmp.ne.s32.totalorder %s442, %s444
      %p448 = scmp.eq.s32.totalorder %s36, 0
      %p449 = por %p447, %p448
      %p450 = scmp.ne.s32.totalorder %s442, %s444
      %p451 = scmp.eq.s32.totalorder %s41, 1
      %p452 = por %p450, %p451
      %p453 = scmp.ne.s32.totalorder %s444, %s445
      %p454 = scmp.eq.s32.totalorder %s41, 0
      %p455 = por %p453, %p454
      %p456 = scmp.ne.s32.totalorder %s444, %s445
      %p457 = scmp.eq.s32.totalorder %s42, 1
      %p458 = por %p456, %p457
      %p460 = scmp.ne.s32.totalorder %s445, %s459
      %p461 = scmp.eq.s32.totalorder %s42, 0
      %p462 = por %p460, %p461
      %s464 = sadd.s32 %s463, 1
      %p467 = scmp.eq.s32.totalorder %s36, 1
      %p468 = scmp.ne.s32.totalorder %s463, %s465
      %p469 = scmp.eq.s32.totalorder %s36, 0
      %p470 = por %p468, %p469
      %p471 = scmp.ne.s32.totalorder %s463, %s465
      %p472 = scmp.eq.s32.totalorder %s41, 1
      %p473 = por %p471, %p472
      %p474 = scmp.ne.s32.totalorder %s465, %s466
      %p475 = scmp.eq.s32.totalorder %s41, 0
      %p476 = por %p474, %p475
      %p477 = scmp.ne.s32.totalorder %s465, %s466
      %p478 = scmp.eq.s32.totalorder %s42, 1
      %p479 = por %p477, %p478
      %p481 = scmp.ne.s32.totalorder %s466, %s480
      %p482 = scmp.eq.s32.totalorder %s42, 0
      %p483 = por %p481, %p482
      %s485 = sadd.s32 %s484, 1
      %p488 = scmp.eq.s32.totalorder %s36, 1
      %p489 = scmp.ne.s32.totalorder %s484, %s486
      %p490 = scmp.eq.s32.totalorder %s36, 0
      %p491 = por %p489, %p490
      %p492 = scmp.ne.s32.totalorder %s484, %s486
      %p493 = scmp.eq.s32.totalorder %s41, 1
      %p494 = por %p492, %p493
      %p495 = scmp.ne.s32.totalorder %s486, %s487
      %p496 = scmp.eq.s32.totalorder %s41, 0
      %p497 = por %p495, %p496
      %p498 = scmp.ne.s32.totalorder %s486, %s487
      %p499 = scmp.eq.s32.totalorder %s42, 1
      %p500 = por %p498, %p499
      %p502 = scmp.ne.s32.totalorder %s487, %s501
      %p503 = scmp.eq.s32.totalorder %s42, 0
      %p504 = por %p502, %p503
      %s506 = sadd.s32 %s505, 1
      %p509 = scmp.eq.s32.totalorder %s36, 1
      %p510 = scmp.ne.s32.totalorder %s505, %s507
      %p511 = scmp.eq.s32.totalorder %s36, 0
      %p512 = por %p510, %p511
      %p513 = scmp.ne.s32.totalorder %s505, %s507
      %p514 = scmp.eq.s32.totalorder %s41, 1
      %p515 = por %p513, %p514
      %p516 = scmp.ne.s32.totalorder %s507, %s508
      %p517 = scmp.eq.s32.totalorder %s41, 0
      %p518 = por %p516, %p517
      %p519 = scmp.ne.s32.totalorder %s507, %s508
      %p520 = scmp.eq.s32.totalorder %s42, 1
      %p521 = por %p519, %p520
      %p523 = scmp.ne.s32.totalorder %s508, %s522
      %p524 = scmp.eq.s32.totalorder %s42, 0
      %p525 = por %p523, %p524
      %s526 = ssub.s32 %s36, %s43
      %p527 = scmp.eq.s32.totalorder %s526, 0
      %s529 = sadd.s32 %s528, 1
      %s530 = scalar_select %p527, %s528, %s529
      %p533 = pneg %p527
      %p534 = scmp.eq.s32.totalorder %s36, 1
      %p535 = por %p533, %p534
      %p536 = scmp.ne.s32.totalorder %s528, %s531
      %p537 = scmp.eq.s32.totalorder %s36, 0
      %p538 = por %p536, %p537
      %p539 = scmp.ne.s32.totalorder %s528, %s531
      %p540 = scmp.eq.s32.totalorder %s41, 1
      %p541 = por %p539, %p540
      %p542 = scmp.ne.s32.totalorder %s531, %s532
      %p543 = scmp.eq.s32.totalorder %s41, 0
      %p544 = por %p542, %p543
      %p545 = scmp.ne.s32.totalorder %s531, %s532
      %p546 = scmp.eq.s32.totalorder %s42, 1
      %p547 = por %p545, %p546
      %p549 = scmp.ne.s32.totalorder %s532, %s548
      %p550 = scmp.eq.s32.totalorder %s42, 0
      %p551 = por %p549, %p550
      %s552 = ssub.s32 %s36, %s43
      %p553 = scmp.eq.s32.totalorder %s552, 0
      %s555 = sadd.s32 %s554, 1
      %s556 = scalar_select %p553, %s554, %s555
      %p559 = pneg %p553
      %p560 = scmp.eq.s32.totalorder %s36, 1
      %p561 = por %p559, %p560
      %p562 = scmp.ne.s32.totalorder %s554, %s557
      %p563 = scmp.eq.s32.totalorder %s36, 0
      %p564 = por %p562, %p563
      %p565 = scmp.ne.s32.totalorder %s554, %s557
      %p566 = scmp.eq.s32.totalorder %s41, 1
      %p567 = por %p565, %p566
      %p568 = scmp.ne.s32.totalorder %s557, %s558
      %p569 = scmp.eq.s32.totalorder %s41, 0
      %p570 = por %p568, %p569
      %p571 = scmp.ne.s32.totalorder %s557, %s558
      %p572 = scmp.eq.s32.totalorder %s42, 1
      %p573 = por %p571, %p572
      %p575 = scmp.ne.s32.totalorder %s558, %s574
      %p576 = scmp.eq.s32.totalorder %s42, 0
      %p577 = por %p575, %p576
      %s578 = ssub.s32 %s36, %s43
      %p579 = scmp.eq.s32.totalorder %s578, 0
      %s581 = sadd.s32 %s580, 1
      %s582 = scalar_select %p579, %s580, %s581
      %p585 = pneg %p579
      %p586 = scmp.eq.s32.totalorder %s36, 1
      %p587 = por %p585, %p586
      %p588 = scmp.ne.s32.totalorder %s580, %s583
      %p589 = scmp.eq.s32.totalorder %s36, 0
      %p590 = por %p588, %p589
      %p591 = scmp.ne.s32.totalorder %s580, %s583
      %p592 = scmp.eq.s32.totalorder %s41, 1
      %p593 = por %p591, %p592
      %p594 = scmp.ne.s32.totalorder %s583, %s584
      %p595 = scmp.eq.s32.totalorder %s41, 0
      %p596 = por %p594, %p595
      %p597 = scmp.ne.s32.totalorder %s583, %s584
      %p598 = scmp.eq.s32.totalorder %s42, 1
      %p599 = por %p597, %p598
      %p601 = scmp.ne.s32.totalorder %s584, %s600
      %p602 = scmp.eq.s32.totalorder %s42, 0
      %p603 = por %p601, %p602
      %s604 = ssub.s32 %s36, %s43
      %p605 = scmp.eq.s32.totalorder %s604, 0
      %s607 = sadd.s32 %s606, 1
      %s608 = scalar_select %p605, %s606, %s607
      %p611 = pneg %p605
      %p612 = scmp.eq.s32.totalorder %s36, 1
      %p613 = por %p611, %p612
      %p614 = scmp.ne.s32.totalorder %s606, %s609
      %p615 = scmp.eq.s32.totalorder %s36, 0
      %p616 = por %p614, %p615
      %p617 = scmp.ne.s32.totalorder %s606, %s609
      %p618 = scmp.eq.s32.totalorder %s41, 1
      %p619 = por %p617, %p618
      %p620 = scmp.ne.s32.totalorder %s609, %s610
      %p621 = scmp.eq.s32.totalorder %s41, 0
      %p622 = por %p620, %p621
      %p623 = scmp.ne.s32.totalorder %s609, %s610
      %p624 = scmp.eq.s32.totalorder %s42, 1
      %p625 = por %p623, %p624
      %p627 = scmp.ne.s32.totalorder %s610, %s626
      %p628 = scmp.eq.s32.totalorder %s42, 0
      %p629 = por %p627, %p628
      %s630 = ssub.s32 %s36, %s43
      %p631 = scmp.eq.s32.totalorder %s630, 0
      %s633 = sadd.s32 %s632, 1
      %s634 = scalar_select %p631, %s632, %s633
      %p637 = pneg %p631
      %p638 = scmp.eq.s32.totalorder %s36, 1
      %p639 = por %p637, %p638
      %p640 = scmp.ne.s32.totalorder %s632, %s635
      %p641 = scmp.eq.s32.totalorder %s36, 0
      %p642 = por %p640, %p641
      %p643 = scmp.ne.s32.totalorder %s632, %s635
      %p644 = scmp.eq.s32.totalorder %s41, 1
      %p645 = por %p643, %p644
      %p646 = scmp.ne.s32.totalorder %s635, %s636
      %p647 = scmp.eq.s32.totalorder %s41, 0
      %p648 = por %p646, %p647
      %p649 = scmp.ne.s32.totalorder %s635, %s636
      %p650 = scmp.eq.s32.totalorder %s42, 1
      %p651 = por %p649, %p650
      %p653 = scmp.ne.s32.totalorder %s636, %s652
      %p654 = scmp.eq.s32.totalorder %s42, 0
      %p655 = por %p653, %p654
      %p656 = scmp.le.s32.totalorder 1, %s36
      %p657 = scmp.lt.s32.totalorder %s36, 3
      %p658 = pnand %p656, %p657
      %p659 = pneg %p658
      // Predicated region
      $region9: #{transformer_forward.7} parent=5 // pred_check
        _
      $region10: #{transformer_forward.7} parent=5 // pred_check_branch
        %661 = sbr.rel (%p658) target = $region12
      $region11: #{transformer_forward.7} parent=5 // pred_region
        %s662 = ssub.s32 %s36, 1
        // Predicated region
        $region13: #{transformer_forward.7} parent=11 // pred_check
          %p663 = pneg %p109
        $region14: #{transformer_forward.7} parent=11 // pred_check_branch
          %665 = sbr.rel (%p663) target = $region16
        $region15: #{transformer_forward.7} parent=11 // pred_region
          _
        $region16: #{transformer_forward.7} parent=11 // pred_fallthru
          _
        // Predicated region
        $region17: #{transformer_forward.7} parent=11 // pred_check
          %p666 = pneg %p130
        $region18: #{transformer_forward.7} parent=11 // pred_check_branch
          %668 = sbr.rel (%p666) target = $region20
        $region19: #{transformer_forward.7} parent=11 // pred_region
          _
        $region20: #{transformer_forward.7} parent=11 // pred_fallthru
          _
        // Predicated region
        $region21: #{transformer_forward.7} parent=11 // pred_check
          %p669 = pneg %p203
        $region22: #{transformer_forward.7} parent=11 // pred_check_branch
          %671 = sbr.rel (%p669) target = $region24
        $region23: #{transformer_forward.7} parent=11 // pred_region
          _
        $region24: #{transformer_forward.7} parent=11 // pred_fallthru
          _
        // Predicated region
        $region25: #{transformer_forward.7} parent=11 // pred_check
          %p672 = pneg %p224
        $region26: #{transformer_forward.7} parent=11 // pred_check_branch
          %674 = sbr.rel (%p672) target = $region28
        $region27: #{transformer_forward.7} parent=11 // pred_region
          _
        $region28: #{transformer_forward.7} parent=11 // pred_fallthru
          _
        // Predicated region
        $region29: #{transformer_forward.7} parent=11 // pred_check
          %p675 = pneg %p245
        $region30: #{transformer_forward.7} parent=11 // pred_check_branch
          %677 = sbr.rel (%p675) target = $region32
        $region31: #{transformer_forward.7} parent=11 // pred_region
          _
        $region32: #{transformer_forward.7} parent=11 // pred_fallthru
          _
        // Predicated region
        $region33: #{transformer_forward.7} parent=11 // pred_check
          %p678 = pneg %p266
        $region34: #{transformer_forward.7} parent=11 // pred_check_branch
          %680 = sbr.rel (%p678) target = $region36
        $region35: #{transformer_forward.7} parent=11 // pred_region
          _
        $region36: #{transformer_forward.7} parent=11 // pred_fallthru
          _
        // Predicated region
        $region37: #{transformer_forward.7} parent=11 // pred_check
          %p681 = pneg %p287
        $region38: #{transformer_forward.7} parent=11 // pred_check_branch
          %683 = sbr.rel (%p681) target = $region40
        $region39: #{transformer_forward.7} parent=11 // pred_region
          _
        $region40: #{transformer_forward.7} parent=11 // pred_fallthru
          _
        // Predicated region
        $region41: #{transformer_forward.7} parent=11 // pred_check
          %p684 = pneg %p308
        $region42: #{transformer_forward.7} parent=11 // pred_check_branch
          %686 = sbr.rel (%p684) target = $region44
        $region43: #{transformer_forward.7} parent=11 // pred_region
          _
        $region44: #{transformer_forward.7} parent=11 // pred_fallthru
          _
        // Predicated region
        $region45: #{transformer_forward.7} parent=11 // pred_check
          %p687 = pneg %p329
        $region46: #{transformer_forward.7} parent=11 // pred_check_branch
          %689 = sbr.rel (%p687) target = $region48
        $region47: #{transformer_forward.7} parent=11 // pred_region
          _
        $region48: #{transformer_forward.7} parent=11 // pred_fallthru
          _
        // Predicated region
        $region49: #{transformer_forward.7} parent=11 // pred_check
          %p690 = pneg %p350
        $region50: #{transformer_forward.7} parent=11 // pred_check_branch
          %692 = sbr.rel (%p690) target = $region52
        $region51: #{transformer_forward.7} parent=11 // pred_region
          _
        $region52: #{transformer_forward.7} parent=11 // pred_fallthru
          _
        // Predicated region
        $region53: #{transformer_forward.7} parent=11 // pred_check
          %p693 = pneg %p371
        $region54: #{transformer_forward.7} parent=11 // pred_check_branch
          %695 = sbr.rel (%p693) target = $region56
        $region55: #{transformer_forward.7} parent=11 // pred_region
          _
        $region56: #{transformer_forward.7} parent=11 // pred_fallthru
          _
        // Predicated region
        $region57: #{transformer_forward.7} parent=11 // pred_check
          %p696 = pneg %p392
        $region58: #{transformer_forward.7} parent=11 // pred_check_branch
          %698 = sbr.rel (%p696) target = $region60
        $region59: #{transformer_forward.7} parent=11 // pred_region
          _
        $region60: #{transformer_forward.7} parent=11 // pred_fallthru
          _
        // Predicated region
        $region61: #{transformer_forward.7} parent=11 // pred_check
          %p699 = pneg %p413
        $region62: #{transformer_forward.7} parent=11 // pred_check_branch
          %701 = sbr.rel (%p699) target = $region64
        $region63: #{transformer_forward.7} parent=11 // pred_region
          _
        $region64: #{transformer_forward.7} parent=11 // pred_fallthru
          _
        // Predicated region
        $region65: #{transformer_forward.7} parent=11 // pred_check
          %p702 = pneg %p434
        $region66: #{transformer_forward.7} parent=11 // pred_check_branch
          %704 = sbr.rel (%p702) target = $region68
        $region67: #{transformer_forward.7} parent=11 // pred_region
          _
        $region68: #{transformer_forward.7} parent=11 // pred_fallthru
          _
        // Predicated region
        $region69: #{transformer_forward.7} parent=11 // pred_check
          %p705 = pneg %p455
        $region70: #{transformer_forward.7} parent=11 // pred_check_branch
          %707 = sbr.rel (%p705) target = $region72
        $region71: #{transformer_forward.7} parent=11 // pred_region
          _
        $region72: #{transformer_forward.7} parent=11 // pred_fallthru
          _
        // Predicated region
        $region73: #{transformer_forward.7} parent=11 // pred_check
          %p708 = pneg %p476
        $region74: #{transformer_forward.7} parent=11 // pred_check_branch
          %710 = sbr.rel (%p708) target = $region76
        $region75: #{transformer_forward.7} parent=11 // pred_region
          _
        $region76: #{transformer_forward.7} parent=11 // pred_fallthru
          _
        // Predicated region
        $region77: #{transformer_forward.7} parent=11 // pred_check
          %p711 = pneg %p497
        $region78: #{transformer_forward.7} parent=11 // pred_check_branch
          %713 = sbr.rel (%p711) target = $region80
        $region79: #{transformer_forward.7} parent=11 // pred_region
          _
        $region80: #{transformer_forward.7} parent=11 // pred_fallthru
          _
        // Predicated region
        $region81: #{transformer_forward.7} parent=11 // pred_check
          %p714 = pneg %p518
        $region82: #{transformer_forward.7} parent=11 // pred_check_branch
          %716 = sbr.rel (%p714) target = $region84
        $region83: #{transformer_forward.7} parent=11 // pred_region
          _
        $region84: #{transformer_forward.7} parent=11 // pred_fallthru
          _
      $region12: #{transformer_forward.7} parent=5 // pred_fallthru
        _
      %p717 = scmp.lt.s32.totalorder %s36, 2
      // Predicated region
      $region85: #{transformer_forward.7} parent=5 // pred_check
        %p718 = pneg %p717
      $region86: #{transformer_forward.7} parent=5 // pred_check_branch
        %720 = sbr.rel (%p718) target = $region88
      $region87: #{transformer_forward.7} parent=5 // pred_region
        // Predicated region
        $region89: #{transformer_forward.7} parent=87 // pred_check
          %p721 = pneg %p56
        $region90: #{transformer_forward.7} parent=87 // pred_check_branch
          %723 = sbr.rel (%p721) target = $region92
        $region91: #{transformer_forward.7} parent=87 // pred_region
          %p724 = scmp.lt.s32.totalorder %s36, 1
          %s725 = scalar_select %p724, %s36, 1
          %s726 = scalar_lea.vmem %s0, %s725
        $region92: #{transformer_forward.7} parent=87 // pred_fallthru
          _
        // Predicated region
        $region93: #{transformer_forward.7} parent=87 // pred_check
          %p727 = pneg %p82
        $region94: #{transformer_forward.7} parent=87 // pred_check_branch
          %729 = sbr.rel (%p727) target = $region96
        $region95: #{transformer_forward.7} parent=87 // pred_region
          %p730 = scmp.lt.s32.totalorder %s36, 1
          %s731 = scalar_select %p730, %s36, 1
          %s732 = scalar_lea.vmem %s1, %s731
        $region96: #{transformer_forward.7} parent=87 // pred_fallthru
          _
        // Predicated region
        $region97: #{transformer_forward.7} parent=87 // pred_check
          %p733 = pneg %p150
        $region98: #{transformer_forward.7} parent=87 // pred_check_branch
          %735 = sbr.rel (%p733) target = $region100
        $region99: #{transformer_forward.7} parent=87 // pred_region
          %p736 = scmp.lt.s32.totalorder %s36, 1
          %s737 = scalar_select %p736, %s36, 1
          %s738 = smul.addr %s737, 8
          %s739 = scalar_lea.vmem %s4, %s738
        $region100: #{transformer_forward.7} parent=87 // pred_fallthru
          _
        // Predicated region
        $region101: #{transformer_forward.7} parent=87 // pred_check
          %p740 = pneg %p176
        $region102: #{transformer_forward.7} parent=87 // pred_check_branch
          %742 = sbr.rel (%p740) target = $region104
        $region103: #{transformer_forward.7} parent=87 // pred_region
          %p743 = scmp.lt.s32.totalorder %s36, 1
          %s744 = scalar_select %p743, %s36, 1
          %s745 = smul.addr %s744, 2
          %s746 = smul.addr %s745, 8
          %s747 = scalar_lea.vmem %s5, %s746
        $region104: #{transformer_forward.7} parent=87 // pred_fallthru
          _
      $region88: #{transformer_forward.7} parent=5 // pred_fallthru
        _
      %p748 = scmp.le.s32.totalorder 1, %s36
      %p749 = scmp.lt.s32.totalorder %s36, 3
      %p750 = pnand %p748, %p749
      %p751 = pneg %p750
      // Predicated region
      $region105: #{transformer_forward.7} parent=5 // pred_check
        _
      $region106: #{transformer_forward.7} parent=5 // pred_check_branch
        %753 = sbr.rel (%p750) target = $region108
      $region107: #{transformer_forward.7} parent=5 // pred_region
        %s754 = ssub.s32 %s36, 1
        %p755 = scmp.lt.s32.totalorder %s41, 1
        %s756 = scalar_select %p755, %s41, 1
        %s757 = scalar_lea.vmem %s0, %s756
        %p758 = pneg %p62
        %p759 = pneg %p59
        %p760 = scmp.lt.s32.totalorder %s41, 1
        %s761 = scalar_select %p760, %s41, 1
        %s762 = scalar_lea.vmem %s1, %s761
        %p763 = pneg %p88
        %p764 = pneg %p85
        %p765 = pneg %p109
        %p766 = pneg %p106
        %p767 = pneg %p130
        %p768 = pneg %p127
        %p769 = scmp.lt.s32.totalorder %s41, 1
        %s770 = scalar_select %p769, %s41, 1
        %s771 = smul.addr %s770, 8
        %s772 = scalar_lea.vmem %s4, %s771
        %p773 = pneg %p156
        %p774 = pneg %p153
        %p775 = scmp.lt.s32.totalorder %s41, 1
        %s776 = scalar_select %p775, %s41, 1
        %s777 = smul.addr %s776, 2
        %s778 = smul.addr %s777, 8
        %s779 = scalar_lea.vmem %s5, %s778
        %p780 = pneg %p182
        %p781 = pneg %p179
        %p782 = pneg %p203
        %p783 = pneg %p200
        %p784 = pneg %p224
        %p785 = pneg %p221
        %p786 = pneg %p245
        %p787 = pneg %p242
        %p788 = pneg %p266
        %p789 = pneg %p263
        %p790 = pneg %p287
        %p791 = pneg %p284
        %p792 = pneg %p308
        %p793 = pneg %p305
        %p794 = pneg %p329
        %p795 = pneg %p326
        %p796 = pneg %p350
        %p797 = pneg %p347
        %p798 = pneg %p371
        %p799 = pneg %p368
        %p800 = pneg %p392
        %p801 = pneg %p389
        %p802 = pneg %p413
        %p803 = pneg %p410
        %p804 = pneg %p434
        %p805 = pneg %p431
        %p806 = pneg %p455
        %p807 = pneg %p452
        %p808 = pneg %p476
        %p809 = pneg %p473
        %p810 = pneg %p497
        %p811 = pneg %p494
        %p812 = pneg %p518
        %p813 = pneg %p515
        %p814 = pneg %p544
        %p815 = pneg %p541
        %s816 = sand.u32 %s531, 1
        %s817 = scalar_lea.sflag [#allocation4], %s816
        %s818 = sand.u32 %s531, 1
        %s819 = smul.addr %s818, 8
        %s820 = scalar_lea.vmem [#allocation3], %s819
        %p821 = pneg %p570
        %p822 = pneg %p567
        %p823 = scmp.lt.s32.totalorder %s41, 1
        %s824 = scalar_select %p823, %s41, 1
        %s825 = smul.addr %s824, 8
        %s826 = scalar_lea.vmem %s23, %s825
        %p827 = pneg %p596
        %p828 = pneg %p593
        %p829 = scmp.lt.s32.totalorder %s41, 1
        %s830 = scalar_select %p829, %s41, 1
        %s831 = scalar_lea.vmem %s24, %s830
        %p832 = pneg %p622
        %p833 = pneg %p619
        %p834 = scmp.lt.s32.totalorder %s41, 1
        %s835 = scalar_select %p834, %s41, 1
        %s836 = smul.addr %s835, 8
        %s837 = scalar_lea.vmem %s25, %s836
        %p838 = pneg %p648
        %p839 = pneg %p645
        %p840 = scmp.lt.s32.totalorder %s41, 1
        %s841 = scalar_select %p840, %s41, 1
        %s842 = scalar_lea.vmem %s26, %s841
        %p843 = scmp.lt.s32.totalorder %s41, 1
        %s844 = scalar_select %p843, %s41, 1
        %s845 = scalar_lea.vmem %s0, %s844
        %p846 = scmp.lt.s32.totalorder %s41, 1
        %s847 = scalar_select %p846, %s41, 1
        %s848 = scalar_lea.vmem %s1, %s847
        %p849 = scmp.lt.s32.totalorder %s41, 1
        %s850 = scalar_select %p849, %s41, 1
        %s851 = smul.addr %s850, 8
        %s852 = scalar_lea.vmem %s4, %s851
        %p853 = scmp.lt.s32.totalorder %s41, 1
        %s854 = scalar_select %p853, %s41, 1
        %s855 = smul.addr %s854, 2
        %s856 = smul.addr %s855, 8
        %s857 = scalar_lea.vmem %s5, %s856
        %p858 = scmp.lt.s32.totalorder %s41, 1
        %s859 = scalar_select %p858, %s41, 1
        %s860 = smul.addr %s859, 8
        %s861 = scalar_lea.vmem %s23, %s860
        %p862 = scmp.lt.s32.totalorder %s41, 1
        %s863 = scalar_select %p862, %s41, 1
        %s864 = scalar_lea.vmem %s24, %s863
        %p865 = scmp.lt.s32.totalorder %s41, 1
        %s866 = scalar_select %p865, %s41, 1
        %s867 = smul.addr %s866, 8
        %s868 = scalar_lea.vmem %s25, %s867
        %p869 = scmp.lt.s32.totalorder %s41, 1
        %s870 = scalar_select %p869, %s41, 1
        %s871 = scalar_lea.vmem %s26, %s870
        %v873 = vld [vmem:[%s852] sm:$0xff]
        %v874 = vld [vmem:[%s857] sm:$0xff]
        %v875 = vld [vmem:[%s857 + $0x8] sm:$0xff]
        %v876 = vld [vmem:[%s845] sm:$0x1]
        %v877 = vld [vmem:[%s2] sm:$0x1]
        %v878 = vpack.c.bf16 %v873, %v873
        %v879 = vld [vmem:[%s6] sm:$0xf]
        %v880 = vld [vmem:[%s6 + $0x4] sm:$0xf]
        %v881 = vld [vmem:[%s6 + $0x8] sm:$0xf]
        %v882 = vld [vmem:[%s6 + $0xc] sm:$0xf]
        %v887 = vunpack.c.l.b16 %v879
        %v888 = vunpack.c.l.b16 %v880
        %v889 = vunpack.c.l.b16 %v881
        %v890 = vunpack.c.l.b16 %v882
        %v891 = vpack.c.b16 %v888, %v887
        %v892 = vpack.c.b16 %v890, %v889
        %vm895 = vcmask 261120
        %v897 = vsel %vm895, %v878, 0
        %899 = vmatprep.subr.bf16.mxu0 0
        %900 = vmatpush1.bf16.msra.mxu0 0
        %901 = vmatprep.subr.bf16.mxu0 0
        %902 = vmatpush1.bf16.msra.mxu0 0
        %903 = vmatprep.subr.bf16.mxu0 0
        %904 = vmatpush1.bf16.msra.mxu0 0
        %905 = vmatprep.subr.bf16.mxu0 0
        %906 = vmatpush1.bf16.msra.mxu0 0
        %907 = vmatprep.subr.bf16.mxu0 0
        %908 = vmatpush1.bf16.msra.mxu0 0
        %909 = vmatprep.subr.bf16.mxu0 0
        %910 = vmatpush1.bf16.msra.mxu0 0
        %911 = vmatprep.subr.bf16.mxu0 0
        %912 = vmatpush1.bf16.msra.mxu0 %v892
        %913 = vmatprep.subr.bf16.mxu0 0
        %914 = vmatpush1.bf16.msra.mxu0 %v891
        %915 = vmatprep.subr.bf16.mxu0 0
        %916 = vmatpush2.bf16.msra.mxu0 0
        %917 = vmatprep.subr.bf16.mxu0 0
        %918 = vmatpush2.bf16.msra.mxu0 0
        %919 = vmatprep.subr.bf16.mxu0 0
        %920 = vmatpush2.bf16.msra.mxu0 0
        %921 = vmatprep.subr.bf16.mxu0 0
        %922 = vmatpush2.bf16.msra.mxu0 0
        %923 = vmatprep.subr.bf16.mxu0 0
        %924 = vmatpush2.bf16.msra.mxu0 0
        %925 = vmatprep.subr.bf16.mxu0 0
        %926 = vmatpush2.bf16.msra.mxu0 0
        %927 = vmatprep.subr.bf16.mxu0 0
        %928 = vmatpush2.bf16.msra.mxu0 0
        %929 = vmatprep.subr.bf16.mxu0 0
        %930 = vmatpush2.bf16.msra.mxu0 0
        %931 = vmatprep.mubr.bf16.mxu0 0
        %932 = vmatmul.mubr.bf16.gmra.mxu0 %v897
        %v933 = vpop.f32.mrf.mxu0
        %v934 = vadd.f32 0.0, %v933
        %v935 = vpop.f32.mrf.mxu0
        %v936 = vpop.f32.mrf.mxu0
        %v937 = vpop.f32.mrf.mxu0
        %938 = vdwg.mxu0
        %v939 = vld [vmem:[%s7] sm:$0xf]
        %v940 = vld [vmem:[%s7 + $0x4] sm:$0xf]
        %v941 = vld [vmem:[%s7 + $0x8] sm:$0xf]
        %v942 = vld [vmem:[%s7 + $0xc] sm:$0xf]
        %v947 = vunpack.c.l.b16 %v939
        %v948 = vunpack.c.l.b16 %v940
        %v949 = vunpack.c.l.b16 %v941
        %v950 = vunpack.c.l.b16 %v942
        %v951 = vpack.c.b16 %v948, %v947
        %v952 = vpack.c.b16 %v950, %v949
        %955 = vmatprep.subr.bf16.mxu0 0
        %956 = vmatpush1.bf16.msra.mxu0 0
        %957 = vmatprep.subr.bf16.mxu0 0
        %958 = vmatpush1.bf16.msra.mxu0 0
        %959 = vmatprep.subr.bf16.mxu0 0
        %960 = vmatpush1.bf16.msra.mxu0 0
        %961 = vmatprep.subr.bf16.mxu0 0
        %962 = vmatpush1.bf16.msra.mxu0 0
        %963 = vmatprep.subr.bf16.mxu0 0
        %964 = vmatpush1.bf16.msra.mxu0 0
        %965 = vmatprep.subr.bf16.mxu0 0
        %966 = vmatpush1.bf16.msra.mxu0 0
        %967 = vmatprep.subr.bf16.mxu0 0
        %968 = vmatpush1.bf16.msra.mxu0 %v952
        %969 = vmatprep.subr.bf16.mxu0 0
        %970 = vmatpush1.bf16.msra.mxu0 %v951
        %971 = vmatprep.subr.bf16.mxu0 0
        %972 = vmatpush2.bf16.msra.mxu0 0
        %973 = vmatprep.subr.bf16.mxu0 0
        %974 = vmatpush2.bf16.msra.mxu0 0
        %975 = vmatprep.subr.bf16.mxu0 0
        %976 = vmatpush2.bf16.msra.mxu0 0
        %977 = vmatprep.subr.bf16.mxu0 0
        %978 = vmatpush2.bf16.msra.mxu0 0
        %979 = vmatprep.subr.bf16.mxu0 0
        %980 = vmatpush2.bf16.msra.mxu0 0
        %981 = vmatprep.subr.bf16.mxu0 0
        %982 = vmatpush2.bf16.msra.mxu0 0
        %983 = vmatprep.subr.bf16.mxu0 0
        %984 = vmatpush2.bf16.msra.mxu0 0
        %985 = vmatprep.subr.bf16.mxu0 0
        %986 = vmatpush2.bf16.msra.mxu0 0
        %987 = vmatprep.mubr.bf16.mxu0 0
        %988 = vmatmul.mubr.bf16.gmra.mxu0 %v897
        %v989 = vpop.f32.mrf.mxu0
        %v990 = vadd.f32 0.0, %v989
        %v991 = vpop.f32.mrf.mxu0
        %v992 = vpop.f32.mrf.mxu0
        %v993 = vpop.f32.mrf.mxu0
        %994 = vdwg.mxu0
        %vm995 = vcmp.gt.f32.partialorder %v876, 0.0
        %v996 = vsel %vm995, 1, 0
        %v997 = vlaneseq
        %v998 = vshrl.u32 %v997, 7
        %v999 = vsub.s32 0, %v998
        %v1000 = vrot.slane %v996, %v999
        %vm1001 = vcmp.eq.s32.totalorder %v1000, 1
        %v1002 = vlaneseq
        %v1003 = vshrl.u32 %v1002, 7
        %v1004 = vlaneseq
        %v1005 = vand.u32 %v1004, 127
        %vm1006 = vcmp.le.s32.totalorder %v1005, %v1003
        %vm1007 = vmand %vm1001, %vm1006
        %v1008 = vpack.c.bf16 %v990, %v990
        %vm1009 = vcmp.gt.f32.partialorder %v990, 0.0
        %v1010 = vadd.f32 %v990, 1.0
        %v1011 = vmul.f32 %v990, 1.442695
        %v1012 = vpow.pop %v1011
        %v1013 = vsel %vm1009, %v1010, %v1012
        %v1014 = vpack.c.bf16 %v1013, %v1013
        %1015 = vxpose.xlu0.c.b16.start [1/8] %v1014, 128
        %1016 = vxpose.xlu0.c.b16.cont [2/8] 0, 128
        %1017 = vxpose.xlu0.c.b16.cont [3/8] 0, 128
        %1018 = vxpose.xlu0.c.b16.cont [4/8] 0, 128
        %1019 = vxpose.xlu0.c.b16.cont [5/8] 0, 128
        %1020 = vxpose.xlu0.c.b16.cont [6/8] 0, 128
        %1021 = vxpose.xlu0.c.b16.cont [7/8] 0, 128
        %1022 = vxpose.xlu0.c.b16.end [8/8] 0, 128
        %v1023 = vpop.trf.xlu0
        %v1024 = vpop.trf.xlu0
        %v1025 = vpop.trf.xlu0
        %v1026 = vpop.trf.xlu0
        %v1027 = vpop.trf.xlu0
        %v1028 = vpop.trf.xlu0
        %v1029 = vpop.trf.xlu0
        %v1030 = vpop.trf.xlu0
        %1032 = vrot.lane.b32.xlu0 %v1008, 112
        %v1033 = vpop.permute.xlu0 %1032
        %vm1034 = vcmask 64512
        %v1036 = vsel %vm1034, %v1023, 0
        %vm1038 = vcmask 1043456
        %v1040 = vsel %vm1038, %v1033, 0
        %1042 = vmatprep.subr.bf16.mxu0 0
        %1043 = vmatpush1.bf16.msra.mxu0 0
        %1044 = vmatprep.subr.bf16.mxu0 0
        %1045 = vmatpush1.bf16.msra.mxu0 0
        %1046 = vmatprep.subr.bf16.mxu0 0
        %1047 = vmatpush1.bf16.msra.mxu0 0
        %1048 = vmatprep.subr.bf16.mxu0 0
        %1049 = vmatpush1.bf16.msra.mxu0 0
        %1050 = vmatprep.subr.bf16.mxu0 0
        %1051 = vmatpush1.bf16.msra.mxu0 0
        %1052 = vmatprep.subr.bf16.mxu0 0
        %1053 = vmatpush1.bf16.msra.mxu0 0
        %1054 = vmatprep.subr.bf16.mxu0 0
        %1055 = vmatpush1.bf16.msra.mxu0 0
        %1056 = vmatprep.subr.bf16.mxu0 0
        %1057 = vmatpush1.bf16.msra.mxu0 %v1040
        %1058 = vmatprep.subr.bf16.mxu0 0
        %1059 = vmatpush2.bf16.msra.mxu0 0
        %1060 = vmatprep.subr.bf16.mxu0 0
        %1061 = vmatpush2.bf16.msra.mxu0 0
        %1062 = vmatprep.subr.bf16.mxu0 0
        %1063 = vmatpush2.bf16.msra.mxu0 0
        %1064 = vmatprep.subr.bf16.mxu0 0
        %1065 = vmatpush2.bf16.msra.mxu0 0
        %1066 = vmatprep.subr.bf16.mxu0 0
        %1067 = vmatpush2.bf16.msra.mxu0 0
        %1068 = vmatprep.subr.bf16.mxu0 0
        %1069 = vmatpush2.bf16.msra.mxu0 0
        %1070 = vmatprep.subr.bf16.mxu0 0
        %1071 = vmatpush2.bf16.msra.mxu0 0
        %1072 = vmatprep.subr.bf16.mxu0 0
        %1073 = vmatpush2.bf16.msra.mxu0 0
        %1074 = vmatprep.mubr.bf16.mxu0 0
        %1075 = vmatmul.mubr.bf16.gmra.mxu0 %v1036
        %v1076 = vpop.f32.mrf.mxu0
        %v1077 = vadd.f32 0.0, %v1076
        %v1078 = vpop.f32.mrf.mxu0
        %v1079 = vpop.f32.mrf.mxu0
        %v1080 = vpop.f32.mrf.mxu0
        %1081 = vdwg.mxu0
        %v1082 = vsel %vm1034, %v1013, 0.0
        %v1083 = vrot.slane %v1082, 4
        %v1084 = vadd.f32 %v1082, %v1083
        %v1085 = vrot.slane %v1084, 2
        %v1086 = vadd.f32 %v1084, %v1085
        %v1087 = vrot.slane %v1086, 1
        %v1088 = vadd.f32 %v1086, %v1087
        %v1089 = vmul.f32 %v934, 0.35355338
        %v1090 = vpack.c.bf16 %v1089, %v1089
        %v1092 = vsel %vm1034, %v1090, 0
        %v1095 = vsel %vm1034, %v1008, 0
        %1097 = vmatprep.subr.bf16.mxu0 0
        %1098 = vmatpush1.bf16.xpose.msra.mxu0 0
        %1099 = vmatprep.subr.bf16.mxu0 0
        %1100 = vmatpush1.bf16.xpose.msra.mxu0 0
        %1101 = vmatprep.subr.bf16.mxu0 0
        %1102 = vmatpush1.bf16.xpose.msra.mxu0 0
        %1103 = vmatprep.subr.bf16.mxu0 0
        %1104 = vmatpush1.bf16.xpose.msra.mxu0 0
        %1105 = vmatprep.subr.bf16.mxu0 0
        %1106 = vmatpush1.bf16.xpose.msra.mxu0 0
        %1107 = vmatprep.subr.bf16.mxu0 0
        %1108 = vmatpush1.bf16.xpose.msra.mxu0 0
        %1109 = vmatprep.subr.bf16.mxu0 0
        %1110 = vmatpush1.bf16.xpose.msra.mxu0 0
        %1111 = vmatprep.subr.bf16.mxu0 0
        %1112 = vmatpush1.bf16.xpose.msra.mxu0 %v1095
        %1113 = vmatprep.subr.bf16.mxu0 0
        %1114 = vmatpush2.bf16.xpose.msra.mxu0 0
        %1115 = vmatprep.subr.bf16.mxu0 0
        %1116 = vmatpush2.bf16.xpose.msra.mxu0 0
        %1117 = vmatprep.subr.bf16.mxu0 0
        %1118 = vmatpush2.bf16.xpose.msra.mxu0 0
        %1119 = vmatprep.subr.bf16.mxu0 0
        %1120 = vmatpush2.bf16.xpose.msra.mxu0 0
        %1121 = vmatprep.subr.bf16.mxu0 0
        %1122 = vmatpush2.bf16.xpose.msra.mxu0 0
        %1123 = vmatprep.subr.bf16.mxu0 0
        %1124 = vmatpush2.bf16.xpose.msra.mxu0 0
        %1125 = vmatprep.subr.bf16.mxu0 0
        %1126 = vmatpush2.bf16.xpose.msra.mxu0 0
        %1127 = vmatprep.subr.bf16.mxu0 0
        %1128 = vmatpush2.bf16.xpose.msra.mxu0 0
        %1129 = vmatprep.mubr.bf16.mxu0 0
        %1130 = vmatmul.mubr.bf16.gmra.mxu0 %v1092
        %v1131 = vpop.f32.mrf.mxu0
        %v1132 = vadd.f32 0.0, %v1131
        %v1133 = vpop.f32.mrf.mxu0
        %v1134 = vpop.f32.mrf.mxu0
        %v1135 = vpop.f32.mrf.mxu0
        %1136 = vdwg.mxu0
        %v1137 = vsel %vm1007, %v1132, -1e+30
        %v1138 = vsel %vm1034, %v1137, -inf
        %1139 = vmax.xlane.f32.xlu0 %v1138
        %v1140 = vpop.xlane.xlu0 %1139
        %v1141 = vsub.f32 %v1137, %v1140
        %v1142 = vmul.f32 %v1141, 1.442695
        %v1143 = vpow.pop %v1142
        %v1144 = vsel %vm1034, %v1143, 0.0
        %1145 = vadd.xlane.f32.xlu0 %v1144
        %v1146 = vpop.xlane.xlu0 %1145
        %v1147 = vrcp.pop %v1146
        %v1148 = vmul.f32 %v1143, %v1147
        %v1149 = vpack.c.bf16 %v1148, %v1148
        %v1151 = vsel %vm1034, %v1149, 0
        %1153 = vmatprep.subr.bf16.mxu0 0
        %1154 = vmatpush1.bf16.msra.mxu0 0
        %1155 = vmatprep.subr.bf16.mxu0 0
        %1156 = vmatpush1.bf16.msra.mxu0 0
        %1157 = vmatprep.subr.bf16.mxu0 0
        %1158 = vmatpush1.bf16.msra.mxu0 0
        %1159 = vmatprep.subr.bf16.mxu0 0
        %1160 = vmatpush1.bf16.msra.mxu0 0
        %1161 = vmatprep.subr.bf16.mxu0 0
        %1162 = vmatpush1.bf16.msra.mxu0 0
        %1163 = vmatprep.subr.bf16.mxu0 0
        %1164 = vmatpush1.bf16.msra.mxu0 0
        %1165 = vmatprep.subr.bf16.mxu0 0
        %1166 = vmatpush1.bf16.msra.mxu0 0
        %1167 = vmatprep.subr.bf16.mxu0 0
        %1168 = vmatpush1.bf16.msra.mxu0 %v1040
        %1169 = vmatprep.subr.bf16.mxu0 0
        %1170 = vmatpush2.bf16.msra.mxu0 0
        %1171 = vmatprep.subr.bf16.mxu0 0
        %1172 = vmatpush2.bf16.msra.mxu0 0
        %1173 = vmatprep.subr.bf16.mxu0 0
        %1174 = vmatpush2.bf16.msra.mxu0 0
        %1175 = vmatprep.subr.bf16.mxu0 0
        %1176 = vmatpush2.bf16.msra.mxu0 0
        %1177 = vmatprep.subr.bf16.mxu0 0
        %1178 = vmatpush2.bf16.msra.mxu0 0
        %1179 = vmatprep.subr.bf16.mxu0 0
        %1180 = vmatpush2.bf16.msra.mxu0 0
        %1181 = vmatprep.subr.bf16.mxu0 0
        %1182 = vmatpush2.bf16.msra.mxu0 0
        %1183 = vmatprep.subr.bf16.mxu0 0
        %1184 = vmatpush2.bf16.msra.mxu0 0
        %1185 = vmatprep.mubr.bf16.mxu0 0
        %1186 = vmatmul.mubr.bf16.gmra.mxu0 %v1151
        %v1187 = vpop.f32.mrf.mxu0
        %v1188 = vadd.f32 0.0, %v1187
        %v1189 = vpop.f32.mrf.mxu0
        %v1190 = vpop.f32.mrf.mxu0
        %v1191 = vpop.f32.mrf.mxu0
        %1192 = vdwg.mxu0
        %1193 = vst.msk [vmem:[#allocation2] sm:$0xff] %vm1034, %v1188
        %1195 = vrot.lane.b32.xlu0 %v1090, 120
        %v1196 = vpop.permute.xlu0 %1195
        %v1198 = vsel %vm1034, %v1196, 0
        %1200 = vmatprep.subr.bf16.mxu0 0
        %1201 = vmatpush1.bf16.xpose.msra.mxu0 0
        %1202 = vmatprep.subr.bf16.mxu0 0
        %1203 = vmatpush1.bf16.xpose.msra.mxu0 0
        %1204 = vmatprep.subr.bf16.mxu0 0
        %1205 = vmatpush1.bf16.xpose.msra.mxu0 0
        %1206 = vmatprep.subr.bf16.mxu0 0
        %1207 = vmatpush1.bf16.xpose.msra.mxu0 0
        %1208 = vmatprep.subr.bf16.mxu0 0
        %1209 = vmatpush1.bf16.xpose.msra.mxu0 0
        %1210 = vmatprep.subr.bf16.mxu0 0
        %1211 = vmatpush1.bf16.xpose.msra.mxu0 0
        %1212 = vmatprep.subr.bf16.mxu0 0
        %1213 = vmatpush1.bf16.xpose.msra.mxu0 0
        %1214 = vmatprep.subr.bf16.mxu0 0
        %1215 = vmatpush1.bf16.xpose.msra.mxu0 %v1095
        %1216 = vmatprep.subr.bf16.mxu0 0
        %1217 = vmatpush2.bf16.xpose.msra.mxu0 0
        %1218 = vmatprep.subr.bf16.mxu0 0
        %1219 = vmatpush2.bf16.xpose.msra.mxu0 0
        %1220 = vmatprep.subr.bf16.mxu0 0
        %1221 = vmatpush2.bf16.xpose.msra.mxu0 0
        %1222 = vmatprep.subr.bf16.mxu0 0
        %1223 = vmatpush2.bf16.xpose.msra.mxu0 0
        %1224 = vmatprep.subr.bf16.mxu0 0
        %1225 = vmatpush2.bf16.xpose.msra.mxu0 0
        %1226 = vmatprep.subr.bf16.mxu0 0
        %1227 = vmatpush2.bf16.xpose.msra.mxu0 0
        %1228 = vmatprep.subr.bf16.mxu0 0
        %1229 = vmatpush2.bf16.xpose.msra.mxu0 0
        %1230 = vmatprep.subr.bf16.mxu0 0
        %1231 = vmatpush2.bf16.xpose.msra.mxu0 0
        %1232 = vmatprep.mubr.bf16.mxu0 0
        %1233 = vmatmul.mubr.bf16.gmra.mxu0 %v1198
        %v1234 = vpop.f32.mrf.mxu0
        %v1235 = vadd.f32 0.0, %v1234
        %v1236 = vpop.f32.mrf.mxu0
        %v1237 = vpop.f32.mrf.mxu0
        %v1238 = vpop.f32.mrf.mxu0
        %1239 = vdwg.mxu0
        %v1240 = vsel %vm1007, %v1235, -1e+30
        %v1241 = vsel %vm1034, %v1240, -inf
        %1242 = vmax.xlane.f32.xlu0 %v1241
        %v1243 = vpop.xlane.xlu0 %1242
        %v1244 = vsub.f32 %v1240, %v1243
        %v1245 = vmul.f32 %v1244, 1.442695
        %v1246 = vpow.pop %v1245
        %v1247 = vsel %vm1034, %v1246, 0.0
        %1248 = vadd.xlane.f32.xlu0 %v1247
        %v1249 = vpop.xlane.xlu0 %1248
        %v1250 = vrcp.pop %v1249
        %v1251 = vmul.f32 %v1246, %v1250
        %v1252 = vpack.c.bf16 %v1251, %v1251
        %v1254 = vsel %vm1034, %v1252, 0
        %1256 = vmatprep.subr.bf16.mxu0 0
        %1257 = vmatpush1.bf16.msra.mxu0 0
        %1258 = vmatprep.subr.bf16.mxu0 0
        %1259 = vmatpush1.bf16.msra.mxu0 0
        %1260 = vmatprep.subr.bf16.mxu0 0
        %1261 = vmatpush1.bf16.msra.mxu0 0
        %1262 = vmatprep.subr.bf16.mxu0 0
        %1263 = vmatpush1.bf16.msra.mxu0 0
        %1264 = vmatprep.subr.bf16.mxu0 0
        %1265 = vmatpush1.bf16.msra.mxu0 0
        %1266 = vmatprep.subr.bf16.mxu0 0
        %1267 = vmatpush1.bf16.msra.mxu0 0
        %1268 = vmatprep.subr.bf16.mxu0 0
        %1269 = vmatpush1.bf16.msra.mxu0 0
        %1270 = vmatprep.subr.bf16.mxu0 0
        %1271 = vmatpush1.bf16.msra.mxu0 %v1040
        %1272 = vmatprep.subr.bf16.mxu0 0
        %1273 = vmatpush2.bf16.msra.mxu0 0
        %1274 = vmatprep.subr.bf16.mxu0 0
        %1275 = vmatpush2.bf16.msra.mxu0 0
        %1276 = vmatprep.subr.bf16.mxu0 0
        %1277 = vmatpush2.bf16.msra.mxu0 0
        %1278 = vmatprep.subr.bf16.mxu0 0
        %1279 = vmatpush2.bf16.msra.mxu0 0
        %1280 = vmatprep.subr.bf16.mxu0 0
        %1281 = vmatpush2.bf16.msra.mxu0 0
        %1282 = vmatprep.subr.bf16.mxu0 0
        %1283 = vmatpush2.bf16.msra.mxu0 0
        %1284 = vmatprep.subr.bf16.mxu0 0
        %1285 = vmatpush2.bf16.msra.mxu0 0
        %1286 = vmatprep.subr.bf16.mxu0 0
        %1287 = vmatpush2.bf16.msra.mxu0 0
        %1288 = vmatprep.mubr.bf16.mxu0 0
        %1289 = vmatmul.mubr.bf16.gmra.mxu0 %v1254
        %v1290 = vpop.f32.mrf.mxu0
        %v1291 = vadd.f32 0.0, %v1290
        %v1292 = vpop.f32.mrf.mxu0
        %v1293 = vpop.f32.mrf.mxu0
        %v1294 = vpop.f32.mrf.mxu0
        %1295 = vdwg.mxu0
        %1297 = vrot.lane.b32.xlu0 %v1291, 8
        %v1298 = vpop.permute.xlu0 %1297
        %vm1300 = vcmask 130112
        %1301 = vst.msk [vmem:[#allocation2] sm:$0xff] %vm1300, %v1298
        %1303 = vrot.lane.b32.xlu0 %v1014, 120
        %v1304 = vpop.permute.xlu0 %1303
        %1306 = vxpose.xlu0.c.b16.start [1/8] %v1304, 128
        %1307 = vxpose.xlu0.c.b16.cont [2/8] 0, 128
        %1308 = vxpose.xlu0.c.b16.cont [3/8] 0, 128
        %1309 = vxpose.xlu0.c.b16.cont [4/8] 0, 128
        %1310 = vxpose.xlu0.c.b16.cont [5/8] 0, 128
        %1311 = vxpose.xlu0.c.b16.cont [6/8] 0, 128
        %1312 = vxpose.xlu0.c.b16.cont [7/8] 0, 128
        %1313 = vxpose.xlu0.c.b16.end [8/8] 0, 128
        %v1314 = vpop.trf.xlu0
        %v1315 = vpop.trf.xlu0
        %v1316 = vpop.trf.xlu0
        %v1317 = vpop.trf.xlu0
        %v1318 = vpop.trf.xlu0
        %v1319 = vpop.trf.xlu0
        %v1320 = vpop.trf.xlu0
        %v1321 = vpop.trf.xlu0
        %1322 = vrot.lane.b32.xlu0 %v1008, 104
        %v1323 = vpop.permute.xlu0 %1322
        %v1325 = vsel %vm1034, %v1314, 0
        %v1328 = vsel %vm1038, %v1323, 0
        %1330 = vmatprep.subr.bf16.mxu0 0
        %1331 = vmatpush1.bf16.msra.mxu0 0
        %1332 = vmatprep.subr.bf16.mxu0 0
        %1333 = vmatpush1.bf16.msra.mxu0 0
        %1334 = vmatprep.subr.bf16.mxu0 0
        %1335 = vmatpush1.bf16.msra.mxu0 0
        %1336 = vmatprep.subr.bf16.mxu0 0
        %1337 = vmatpush1.bf16.msra.mxu0 0
        %1338 = vmatprep.subr.bf16.mxu0 0
        %1339 = vmatpush1.bf16.msra.mxu0 0
        %1340 = vmatprep.subr.bf16.mxu0 0
        %1341 = vmatpush1.bf16.msra.mxu0 0
        %1342 = vmatprep.subr.bf16.mxu0 0
        %1343 = vmatpush1.bf16.msra.mxu0 0
        %1344 = vmatprep.subr.bf16.mxu0 0
        %1345 = vmatpush1.bf16.msra.mxu0 %v1328
        %1346 = vmatprep.subr.bf16.mxu0 0
        %1347 = vmatpush2.bf16.msra.mxu0 0
        %1348 = vmatprep.subr.bf16.mxu0 0
        %1349 = vmatpush2.bf16.msra.mxu0 0
        %1350 = vmatprep.subr.bf16.mxu0 0
        %1351 = vmatpush2.bf16.msra.mxu0 0
        %1352 = vmatprep.subr.bf16.mxu0 0
        %1353 = vmatpush2.bf16.msra.mxu0 0
        %1354 = vmatprep.subr.bf16.mxu0 0
        %1355 = vmatpush2.bf16.msra.mxu0 0
        %1356 = vmatprep.subr.bf16.mxu0 0
        %1357 = vmatpush2.bf16.msra.mxu0 0
        %1358 = vmatprep.subr.bf16.mxu0 0
        %1359 = vmatpush2.bf16.msra.mxu0 0
        %1360 = vmatprep.subr.bf16.mxu0 0
        %1361 = vmatpush2.bf16.msra.mxu0 0
        %1362 = vmatprep.mubr.bf16.mxu0 0
        %1363 = vmatmul.mubr.bf16.gmra.mxu0 %v1325
        %v1364 = vpop.f32.mrf.mxu0
        %v1365 = vadd.f32 0.0, %v1364
        %v1366 = vpop.f32.mrf.mxu0
        %v1367 = vpop.f32.mrf.mxu0
        %v1368 = vpop.f32.mrf.mxu0
        %1369 = vdwg.mxu0
        %v1370 = vsel %vm1300, %v1013, 0.0
        %v1371 = vrot.slane %v1370, 4
        %v1372 = vadd.f32 %v1370, %v1371
        %v1373 = vrot.slane %v1372, 2
        %v1374 = vadd.f32 %v1372, %v1373
        %v1375 = vrot.slane %v1374, 1
        %v1376 = vadd.f32 %v1374, %v1375
        %1377 = vrot.lane.b32.xlu0 %v1090, 112
        %v1378 = vpop.permute.xlu0 %1377
        %1379 = vrot.lane.b32.xlu0 %v1008, 120
        %v1380 = vpop.permute.xlu0 %1379
        %v1382 = vsel %vm1034, %v1378, 0
        %v1385 = vsel %vm1034, %v1380, 0
        %1387 = vmatprep.subr.bf16.mxu0 0
        %1388 = vmatpush1.bf16.xpose.msra.mxu0 0
        %1389 = vmatprep.subr.bf16.mxu0 0
        %1390 = vmatpush1.bf16.xpose.msra.mxu0 0
        %1391 = vmatprep.subr.bf16.mxu0 0
        %1392 = vmatpush1.bf16.xpose.msra.mxu0 0
        %1393 = vmatprep.subr.bf16.mxu0 0
        %1394 = vmatpush1.bf16.xpose.msra.mxu0 0
        %1395 = vmatprep.subr.bf16.mxu0 0
        %1396 = vmatpush1.bf16.xpose.msra.mxu0 0
        %1397 = vmatprep.subr.bf16.mxu0 0
        %1398 = vmatpush1.bf16.xpose.msra.mxu0 0
        %1399 = vmatprep.subr.bf16.mxu0 0
        %1400 = vmatpush1.bf16.xpose.msra.mxu0 0
        %1401 = vmatprep.subr.bf16.mxu0 0
        %1402 = vmatpush1.bf16.xpose.msra.mxu0 %v1385
        %1403 = vmatprep.subr.bf16.mxu0 0
        %1404 = vmatpush2.bf16.xpose.msra.mxu0 0
        %1405 = vmatprep.subr.bf16.mxu0 0
        %1406 = vmatpush2.bf16.xpose.msra.mxu0 0
        %1407 = vmatprep.subr.bf16.mxu0 0
        %1408 = vmatpush2.bf16.xpose.msra.mxu0 0
        %1409 = vmatprep.subr.bf16.mxu0 0
        %1410 = vmatpush2.bf16.xpose.msra.mxu0 0
        %1411 = vmatprep.subr.bf16.mxu0 0
        %1412 = vmatpush2.bf16.xpose.msra.mxu0 0
        %1413 = vmatprep.subr.bf16.mxu0 0
        %1414 = vmatpush2.bf16.xpose.msra.mxu0 0
        %1415 = vmatprep.subr.bf16.mxu0 0
        %1416 = vmatpush2.bf16.xpose.msra.mxu0 0
        %1417 = vmatprep.subr.bf16.mxu0 0
        %1418 = vmatpush2.bf16.xpose.msra.mxu0 0
        %1419 = vmatprep.mubr.bf16.mxu0 0
        %1420 = vmatmul.mubr.bf16.gmra.mxu0 %v1382
        %v1421 = vpop.f32.mrf.mxu0
        %v1422 = vadd.f32 0.0, %v1421
        %v1423 = vpop.f32.mrf.mxu0
        %v1424 = vpop.f32.mrf.mxu0
        %v1425 = vpop.f32.mrf.mxu0
        %1426 = vdwg.mxu0
        %v1427 = vsel %vm1007, %v1422, -1e+30
        %v1428 = vsel %vm1034, %v1427, -inf
        %1429 = vmax.xlane.f32.xlu0 %v1428
        %v1430 = vpop.xlane.xlu0 %1429
        %v1431 = vsub.f32 %v1427, %v1430
        %v1432 = vmul.f32 %v1431, 1.442695
        %v1433 = vpow.pop %v1432
        %v1434 = vsel %vm1034, %v1433, 0.0
        %1435 = vadd.xlane.f32.xlu0 %v1434
        %v1436 = vpop.xlane.xlu0 %1435
        %v1437 = vrcp.pop %v1436
        %v1438 = vmul.f32 %v1433, %v1437
        %v1439 = vpack.c.bf16 %v1438, %v1438
        %v1441 = vsel %vm1034, %v1439, 0
        %1443 = vmatprep.subr.bf16.mxu0 0
        %1444 = vmatpush1.bf16.msra.mxu0 0
        %1445 = vmatprep.subr.bf16.mxu0 0
        %1446 = vmatpush1.bf16.msra.mxu0 0
        %1447 = vmatprep.subr.bf16.mxu0 0
        %1448 = vmatpush1.bf16.msra.mxu0 0
        %1449 = vmatprep.subr.bf16.mxu0 0
        %1450 = vmatpush1.bf16.msra.mxu0 0
        %1451 = vmatprep.subr.bf16.mxu0 0
        %1452 = vmatpush1.bf16.msra.mxu0 0
        %1453 = vmatprep.subr.bf16.mxu0 0
        %1454 = vmatpush1.bf16.msra.mxu0 0
        %1455 = vmatprep.subr.bf16.mxu0 0
        %1456 = vmatpush1.bf16.msra.mxu0 0
        %1457 = vmatprep.subr.bf16.mxu0 0
        %1458 = vmatpush1.bf16.msra.mxu0 %v1328
        %1459 = vmatprep.subr.bf16.mxu0 0
        %1460 = vmatpush2.bf16.msra.mxu0 0
        %1461 = vmatprep.subr.bf16.mxu0 0
        %1462 = vmatpush2.bf16.msra.mxu0 0
        %1463 = vmatprep.subr.bf16.mxu0 0
        %1464 = vmatpush2.bf16.msra.mxu0 0
        %1465 = vmatprep.subr.bf16.mxu0 0
        %1466 = vmatpush2.bf16.msra.mxu0 0
        %1467 = vmatprep.subr.bf16.mxu0 0
        %1468 = vmatpush2.bf16.msra.mxu0 0
        %1469 = vmatprep.subr.bf16.mxu0 0
        %1470 = vmatpush2.bf16.msra.mxu0 0
        %1471 = vmatprep.subr.bf16.mxu0 0
        %1472 = vmatpush2.bf16.msra.mxu0 0
        %1473 = vmatprep.subr.bf16.mxu0 0
        %1474 = vmatpush2.bf16.msra.mxu0 0
        %1475 = vmatprep.mubr.bf16.mxu0 0
        %1476 = vmatmul.mubr.bf16.gmra.mxu0 %v1441
        %v1477 = vpop.f32.mrf.mxu0
        %v1478 = vadd.f32 0.0, %v1477
        %v1479 = vpop.f32.mrf.mxu0
        %v1480 = vpop.f32.mrf.mxu0
        %v1481 = vpop.f32.mrf.mxu0
        %1482 = vdwg.mxu0
        %1484 = vrot.lane.b32.xlu0 %v1478, 16
        %v1485 = vpop.permute.xlu0 %1484
        %vm1487 = vcmask 195712
        %1488 = vst.msk [vmem:[#allocation2] sm:$0xff] %vm1487, %v1485
        %1489 = vrot.lane.b32.xlu0 %v1090, 104
        %v1490 = vpop.permute.xlu0 %1489
        %v1492 = vsel %vm1034, %v1490, 0
        %1494 = vmatprep.subr.bf16.mxu0 0
        %1495 = vmatpush1.bf16.xpose.msra.mxu0 0
        %1496 = vmatprep.subr.bf16.mxu0 0
        %1497 = vmatpush1.bf16.xpose.msra.mxu0 0
        %1498 = vmatprep.subr.bf16.mxu0 0
        %1499 = vmatpush1.bf16.xpose.msra.mxu0 0
        %1500 = vmatprep.subr.bf16.mxu0 0
        %1501 = vmatpush1.bf16.xpose.msra.mxu0 0
        %1502 = vmatprep.subr.bf16.mxu0 0
        %1503 = vmatpush1.bf16.xpose.msra.mxu0 0
        %1504 = vmatprep.subr.bf16.mxu0 0
        %1505 = vmatpush1.bf16.xpose.msra.mxu0 0
        %1506 = vmatprep.subr.bf16.mxu0 0
        %1507 = vmatpush1.bf16.xpose.msra.mxu0 0
        %1508 = vmatprep.subr.bf16.mxu0 0
        %1509 = vmatpush1.bf16.xpose.msra.mxu0 %v1385
        %1510 = vmatprep.subr.bf16.mxu0 0
        %1511 = vmatpush2.bf16.xpose.msra.mxu0 0
        %1512 = vmatprep.subr.bf16.mxu0 0
        %1513 = vmatpush2.bf16.xpose.msra.mxu0 0
        %1514 = vmatprep.subr.bf16.mxu0 0
        %1515 = vmatpush2.bf16.xpose.msra.mxu0 0
        %1516 = vmatprep.subr.bf16.mxu0 0
        %1517 = vmatpush2.bf16.xpose.msra.mxu0 0
        %1518 = vmatprep.subr.bf16.mxu0 0
        %1519 = vmatpush2.bf16.xpose.msra.mxu0 0
        %1520 = vmatprep.subr.bf16.mxu0 0
        %1521 = vmatpush2.bf16.xpose.msra.mxu0 0
        %1522 = vmatprep.subr.bf16.mxu0 0
        %1523 = vmatpush2.bf16.xpose.msra.mxu0 0
        %1524 = vmatprep.subr.bf16.mxu0 0
        %1525 = vmatpush2.bf16.xpose.msra.mxu0 0
        %1526 = vmatprep.mubr.bf16.mxu0 0
        %1527 = vmatmul.mubr.bf16.gmra.mxu0 %v1492
        %v1528 = vpop.f32.mrf.mxu0
        %v1529 = vadd.f32 0.0, %v1528
        %v1530 = vpop.f32.mrf.mxu0
        %v1531 = vpop.f32.mrf.mxu0
        %v1532 = vpop.f32.mrf.mxu0
        %1533 = vdwg.mxu0
        %v1534 = vsel %vm1007, %v1529, -1e+30
        %v1535 = vsel %vm1034, %v1534, -inf
        %1536 = vmax.xlane.f32.xlu0 %v1535
        %v1537 = vpop.xlane.xlu0 %1536
        %v1538 = vsub.f32 %v1534, %v1537
        %v1539 = vmul.f32 %v1538, 1.442695
        %v1540 = vpow.pop %v1539
        %v1541 = vsel %vm1034, %v1540, 0.0
        %1542 = vadd.xlane.f32.xlu0 %v1541
        %v1543 = vpop.xlane.xlu0 %1542
        %v1544 = vrcp.pop %v1543
        %v1545 = vmul.f32 %v1540, %v1544
        %v1546 = vpack.c.bf16 %v1545, %v1545
        %v1548 = vsel %vm1034, %v1546, 0
        %1550 = vmatprep.subr.bf16.mxu0 0
        %1551 = vmatpush1.bf16.msra.mxu0 0
        %1552 = vmatprep.subr.bf16.mxu0 0
        %1553 = vmatpush1.bf16.msra.mxu0 0
        %1554 = vmatprep.subr.bf16.mxu0 0
        %1555 = vmatpush1.bf16.msra.mxu0 0
        %1556 = vmatprep.subr.bf16.mxu0 0
        %1557 = vmatpush1.bf16.msra.mxu0 0
        %1558 = vmatprep.subr.bf16.mxu0 0
        %1559 = vmatpush1.bf16.msra.mxu0 0
        %1560 = vmatprep.subr.bf16.mxu0 0
        %1561 = vmatpush1.bf16.msra.mxu0 0
        %1562 = vmatprep.subr.bf16.mxu0 0
        %1563 = vmatpush1.bf16.msra.mxu0 0
        %1564 = vmatprep.subr.bf16.mxu0 0
        %1565 = vmatpush1.bf16.msra.mxu0 %v1328
        %1566 = vmatprep.subr.bf16.mxu0 0
        %1567 = vmatpush2.bf16.msra.mxu0 0
        %1568 = vmatprep.subr.bf16.mxu0 0
        %1569 = vmatpush2.bf16.msra.mxu0 0
        %1570 = vmatprep.subr.bf16.mxu0 0
        %1571 = vmatpush2.bf16.msra.mxu0 0
        %1572 = vmatprep.subr.bf16.mxu0 0
        %1573 = vmatpush2.bf16.msra.mxu0 0
        %1574 = vmatprep.subr.bf16.mxu0 0
        %1575 = vmatpush2.bf16.msra.mxu0 0
        %1576 = vmatprep.subr.bf16.mxu0 0
        %1577 = vmatpush2.bf16.msra.mxu0 0
        %1578 = vmatprep.subr.bf16.mxu0 0
        %1579 = vmatpush2.bf16.msra.mxu0 0
        %1580 = vmatprep.subr.bf16.mxu0 0
        %1581 = vmatpush2.bf16.msra.mxu0 0
        %1582 = vmatprep.mubr.bf16.mxu0 0
        %1583 = vmatmul.mubr.bf16.gmra.mxu0 %v1548
        %v1584 = vpop.f32.mrf.mxu0
        %v1585 = vadd.f32 0.0, %v1584
        %v1586 = vpop.f32.mrf.mxu0
        %v1587 = vpop.f32.mrf.mxu0
        %v1588 = vpop.f32.mrf.mxu0
        %1589 = vdwg.mxu0
        %1591 = vrot.lane.b32.xlu0 %v1585, 24
        %v1592 = vpop.permute.xlu0 %1591
        %vm1594 = vcmask 261312
        %1595 = vst.msk [vmem:[#allocation2] sm:$0xff] %vm1594, %v1592
        %1597 = vrot.lane.b32.xlu0 %v1365, 8
        %v1598 = vpop.permute.xlu0 %1597
        %v1600 = vsel %vm1034, %v1077, %v1598
        %vm1601 = vcmask 130048
        %1602 = vst.msk [vmem:[%s861] sm:$0xff] %vm1601, %v1600
        %v1603 = vsel %vm1034, %v1088, %v1376
        %vm1604 = vcmask 122880
        %1605 = vst.msk [vmem:[%s864] sm:$0x1] %vm1604, %v1603
        %v1606 = vld [vmem:[#allocation2] sm:$0xff]
        %v1608 = vlaneseq
        %v1609 = vshrl.u32 %v1608, 7
        %v1610 = vsub.s32 0, %v1609
        %v1611 = vrot.slane %v877, %v1610
        %v1613 = vmul.f32 %v1606, %v1611
        %v1614 = vpack.c.bf16 %v1613, %v1613
        %v1615 = vld [vmem:[%s8] sm:$0xf]
        %v1616 = vld [vmem:[%s8 + $0x4] sm:$0xf]
        %v1617 = vld [vmem:[%s8 + $0x8] sm:$0xf]
        %v1618 = vld [vmem:[%s8 + $0xc] sm:$0xf]
        %v1623 = vunpack.c.l.b16 %v1615
        %v1624 = vunpack.c.l.b16 %v1616
        %v1625 = vunpack.c.l.b16 %v1617
        %v1626 = vunpack.c.l.b16 %v1618
        %v1627 = vpack.c.b16 %v1624, %v1623
        %v1628 = vpack.c.b16 %v1626, %v1625
        %v1632 = vsel %vm895, %v1614, 0
        %1634 = vmatprep.subr.bf16.mxu0 0
        %1635 = vmatpush1.bf16.msra.mxu0 0
        %1636 = vmatprep.subr.bf16.mxu0 0
        %1637 = vmatpush1.bf16.msra.mxu0 0
        %1638 = vmatprep.subr.bf16.mxu0 0
        %1639 = vmatpush1.bf16.msra.mxu0 0
        %1640 = vmatprep.subr.bf16.mxu0 0
        %1641 = vmatpush1.bf16.msra.mxu0 0
        %1642 = vmatprep.subr.bf16.mxu0 0
        %1643 = vmatpush1.bf16.msra.mxu0 0
        %1644 = vmatprep.subr.bf16.mxu0 0
        %1645 = vmatpush1.bf16.msra.mxu0 0
        %1646 = vmatprep.subr.bf16.mxu0 0
        %1647 = vmatpush1.bf16.msra.mxu0 %v1628
        %1648 = vmatprep.subr.bf16.mxu0 0
        %1649 = vmatpush1.bf16.msra.mxu0 %v1627
        %1650 = vmatprep.subr.bf16.mxu0 0
        %1651 = vmatpush2.bf16.msra.mxu0 0
        %1652 = vmatprep.subr.bf16.mxu0 0
        %1653 = vmatpush2.bf16.msra.mxu0 0
        %1654 = vmatprep.subr.bf16.mxu0 0
        %1655 = vmatpush2.bf16.msra.mxu0 0
        %1656 = vmatprep.subr.bf16.mxu0 0
        %1657 = vmatpush2.bf16.msra.mxu0 0
        %1658 = vmatprep.subr.bf16.mxu0 0
        %1659 = vmatpush2.bf16.msra.mxu0 0
        %1660 = vmatprep.subr.bf16.mxu0 0
        %1661 = vmatpush2.bf16.msra.mxu0 0
        %1662 = vmatprep.subr.bf16.mxu0 0
        %1663 = vmatpush2.bf16.msra.mxu0 0
        %1664 = vmatprep.subr.bf16.mxu0 0
        %1665 = vmatpush2.bf16.msra.mxu0 0
        %1666 = vmatprep.mubr.bf16.mxu0 0
        %1667 = vmatmul.mubr.bf16.gmra.mxu0 %v1632
        %v1668 = vpop.f32.mrf.mxu0
        %v1669 = vadd.f32 0.0, %v1668
        %v1670 = vpop.f32.mrf.mxu0
        %v1671 = vpop.f32.mrf.mxu0
        %v1672 = vpop.f32.mrf.mxu0
        %1673 = vdwg.mxu0
        %v1674 = vadd.f32 %v873, %v1669
        %v1675 = vld [vmem:[%s9] sm:$0x1]
        %v1676 = vld [vmem:[%s10] sm:$0x1]
        %v1677 = vsel %vm895, %v1674, 0.0
        %1678 = vadd.xlane.f32.xlu0 %v1677
        %v1679 = vpop.xlane.xlu0 %1678
        %v1680 = vrcp.pop 32.0
        %v1681 = vmul.f32 %v1679, %v1680
        %v1682 = vsub.f32 %v1674, %v1681
        %v1683 = vmul.f32 %v1682, %v1682
        %v1684 = vsel %vm895, %v1683, 0.0
        %1685 = vadd.xlane.f32.xlu0 %v1684
        %v1686 = vpop.xlane.xlu0 %1685
        %v1687 = vmul.f32 %v1686, %v1680
        %v1688 = vadd.f32 %v1687, 1e-05
        %v1689 = vrsqrt.pop %v1688
        %v1690 = vmul.f32 %v1682, %v1689
        %v1692 = vlaneseq
        %v1693 = vshrl.u32 %v1692, 7
        %v1694 = vsub.s32 0, %v1693
        %v1695 = vrot.slane %v1675, %v1694
        %v1697 = vmul.f32 %v1690, %v1695
        %v1699 = vlaneseq
        %v1700 = vshrl.u32 %v1699, 7
        %v1701 = vsub.s32 0, %v1700
        %v1702 = vrot.slane %v1676, %v1701
        %v1704 = vadd.f32 %v1697, %v1702
        %v1705 = vld [vmem:[%s848] sm:$0x1]
        %v1706 = vld [vmem:[%s3] sm:$0x1]
        %v1707 = vpack.c.bf16 %v1704, %v1704
        %v1708 = vld [vmem:[%s11] sm:$0xf]
        %v1709 = vld [vmem:[%s11 + $0x4] sm:$0xf]
        %v1710 = vld [vmem:[%s11 + $0x8] sm:$0xf]
        %v1711 = vld [vmem:[%s11 + $0xc] sm:$0xf]
        %v1716 = vunpack.c.l.b16 %v1708
        %v1717 = vunpack.c.l.b16 %v1709
        %v1718 = vunpack.c.l.b16 %v1710
        %v1719 = vunpack.c.l.b16 %v1711
        %v1720 = vpack.c.b16 %v1717, %v1716
        %v1721 = vpack.c.b16 %v1719, %v1718
        %v1725 = vsel %vm895, %v1707, 0
        %1727 = vmatprep.subr.bf16.mxu0 0
        %1728 = vmatpush1.bf16.msra.mxu0 0
        %1729 = vmatprep.subr.bf16.mxu0 0
        %1730 = vmatpush1.bf16.msra.mxu0 0
        %1731 = vmatprep.subr.bf16.mxu0 0
        %1732 = vmatpush1.bf16.msra.mxu0 0
        %1733 = vmatprep.subr.bf16.mxu0 0
        %1734 = vmatpush1.bf16.msra.mxu0 0
        %1735 = vmatprep.subr.bf16.mxu0 0
        %1736 = vmatpush1.bf16.msra.mxu0 0
        %1737 = vmatprep.subr.bf16.mxu0 0
        %1738 = vmatpush1.bf16.msra.mxu0 0
        %1739 = vmatprep.subr.bf16.mxu0 0
        %1740 = vmatpush1.bf16.msra.mxu0 %v1721
        %1741 = vmatprep.subr.bf16.mxu0 0
        %1742 = vmatpush1.bf16.msra.mxu0 %v1720
        %1743 = vmatprep.subr.bf16.mxu0 0
        %1744 = vmatpush2.bf16.msra.mxu0 0
        %1745 = vmatprep.subr.bf16.mxu0 0
        %1746 = vmatpush2.bf16.msra.mxu0 0
        %1747 = vmatprep.subr.bf16.mxu0 0
        %1748 = vmatpush2.bf16.msra.mxu0 0
        %1749 = vmatprep.subr.bf16.mxu0 0
        %1750 = vmatpush2.bf16.msra.mxu0 0
        %1751 = vmatprep.subr.bf16.mxu0 0
        %1752 = vmatpush2.bf16.msra.mxu0 0
        %1753 = vmatprep.subr.bf16.mxu0 0
        %1754 = vmatpush2.bf16.msra.mxu0 0
        %1755 = vmatprep.subr.bf16.mxu0 0
        %1756 = vmatpush2.bf16.msra.mxu0 0
        %1757 = vmatprep.subr.bf16.mxu0 0
        %1758 = vmatpush2.bf16.msra.mxu0 0
        %1759 = vmatprep.mubr.bf16.mxu0 0
        %1760 = vmatmul.mubr.bf16.gmra.mxu0 %v1725
        %v1761 = vpop.f32.mrf.mxu0
        %v1762 = vadd.f32 0.0, %v1761
        %v1763 = vpop.f32.mrf.mxu0
        %v1764 = vpop.f32.mrf.mxu0
        %v1765 = vpop.f32.mrf.mxu0
        %1766 = vdwg.mxu0
        %v1767 = vpack.c.bf16 %v875, %v874
        %v1768 = vld [vmem:[%s12] sm:$0xf]
        %v1769 = vld [vmem:[%s12 + $0x4] sm:$0xf]
        %v1770 = vld [vmem:[%s12 + $0x8] sm:$0xf]
        %v1771 = vld [vmem:[%s12 + $0xc] sm:$0xf]
        %v1776 = vunpack.c.l.b16 %v1768
        %v1777 = vunpack.c.l.b16 %v1769
        %v1778 = vunpack.c.l.b16 %v1770
        %v1779 = vunpack.c.l.b16 %v1771
        %v1780 = vpack.c.b16 %v1777, %v1776
        %v1781 = vpack.c.b16 %v1779, %v1778
        %v1785 = vsel %vm895, %v1767, 0
        %1787 = vmatprep.subr.bf16.mxu0 0
        %1788 = vmatpush1.bf16.msra.mxu0 0
        %1789 = vmatprep.subr.bf16.mxu0 0
        %1790 = vmatpush1.bf16.msra.mxu0 0
        %1791 = vmatprep.subr.bf16.mxu0 0
        %1792 = vmatpush1.bf16.msra.mxu0 0
        %1793 = vmatprep.subr.bf16.mxu0 0
        %1794 = vmatpush1.bf16.msra.mxu0 0
        %1795 = vmatprep.subr.bf16.mxu0 0
        %1796 = vmatpush1.bf16.msra.mxu0 0
        %1797 = vmatprep.subr.bf16.mxu0 0
        %1798 = vmatpush1.bf16.msra.mxu0 0
        %1799 = vmatprep.subr.bf16.mxu0 0
        %1800 = vmatpush1.bf16.msra.mxu0 %v1781
        %1801 = vmatprep.subr.bf16.mxu0 0
        %1802 = vmatpush1.bf16.msra.mxu0 %v1780
        %1803 = vmatprep.subr.bf16.mxu0 0
        %1804 = vmatpush2.bf16.msra.mxu0 0
        %1805 = vmatprep.subr.bf16.mxu0 0
        %1806 = vmatpush2.bf16.msra.mxu0 0
        %1807 = vmatprep.subr.bf16.mxu0 0
        %1808 = vmatpush2.bf16.msra.mxu0 0
        %1809 = vmatprep.subr.bf16.mxu0 0
        %1810 = vmatpush2.bf16.msra.mxu0 0
        %1811 = vmatprep.subr.bf16.mxu0 0
        %1812 = vmatpush2.bf16.msra.mxu0 0
        %1813 = vmatprep.subr.bf16.mxu0 0
        %1814 = vmatpush2.bf16.msra.mxu0 0
        %1815 = vmatprep.subr.bf16.mxu0 0
        %1816 = vmatpush2.bf16.msra.mxu0 0
        %1817 = vmatprep.subr.bf16.mxu0 0
        %1818 = vmatpush2.bf16.msra.mxu0 0
        %1819 = vmatprep.mubr.bf16.mxu0 0
        %1820 = vmatmul.mubr.bf16.gmra.mxu0 %v1785
        %v1821 = vpop.f32.mrf.mxu0
        %v1822 = vadd.f32 0.0, %v1821
        %v1823 = vpop.f32.mrf.mxu0
        %v1824 = vpop.f32.mrf.mxu0
        %v1825 = vadd.f32 0.0, %v1824
        %v1826 = vpop.f32.mrf.mxu0
        %1827 = vdwg.mxu0
        %vm1828 = vcmp.gt.f32.partialorder %v1705, 0.0
        %v1829 = vsel %vm1828, 1, 0
        %v1830 = vlaneseq
        %v1831 = vshrl.u32 %v1830, 7
        %v1832 = vsub.s32 0, %v1831
        %v1833 = vrot.slane %v1829, %v1832
        %vm1834 = vcmp.eq.s32.totalorder %v1833, 1
        %v1835 = vpack.c.bf16 %v1825, %v1822
        %vm1836 = vcmp.gt.f32.partialorder %v1822, 0.0
        %vm1837 = vcmp.gt.f32.partialorder %v1825, 0.0
        %v1838 = vadd.f32 %v1822, 1.0
        %v1839 = vadd.f32 %v1825, 1.0
        %v1840 = vmul.f32 %v1822, 1.442695
        %v1841 = vpow.pop %v1840
        %v1842 = vmul.f32 %v1825, 1.442695
        %v1843 = vpow.pop %v1842
        %v1844 = vsel %vm1836, %v1838, %v1841
        %v1845 = vsel %vm1837, %v1839, %v1843
        %v1846 = vpack.c.bf16 %v1845, %v1844
        %1847 = vxpose.xlu0.c.b16.start [1/8] %v1846, 128
        %1848 = vxpose.xlu0.c.b16.cont [2/8] 0, 128
        %1849 = vxpose.xlu0.c.b16.cont [3/8] 0, 128
        %1850 = vxpose.xlu0.c.b16.cont [4/8] 0, 128
        %1851 = vxpose.xlu0.c.b16.cont [5/8] 0, 128
        %1852 = vxpose.xlu0.c.b16.cont [6/8] 0, 128
        %1853 = vxpose.xlu0.c.b16.cont [7/8] 0, 128
        %1854 = vxpose.xlu0.c.b16.end [8/8] 0, 128
        %v1855 = vpop.trf.xlu0
        %v1856 = vpop.trf.xlu0
        %v1857 = vpop.trf.xlu0
        %v1858 = vpop.trf.xlu0
        %v1859 = vpop.trf.xlu0
        %v1860 = vpop.trf.xlu0
        %v1861 = vpop.trf.xlu0
        %v1862 = vpop.trf.xlu0
        %1864 = vrot.lane.b32.xlu0 %v1835, 112
        %v1865 = vpop.permute.xlu0 %1864
        %v1868 = vsel %vm1601, %v1855, 0
        %1870 = vmatprep.subr.bf16.mxu0 0
        %1871 = vmatpush1.bf16.msra.mxu0 0
        %1872 = vmatprep.subr.bf16.mxu0 0
        %1873 = vmatpush1.bf16.msra.mxu0 0
        %1874 = vmatprep.subr.bf16.mxu0 0
        %1875 = vmatpush1.bf16.msra.mxu0 0
        %1876 = vmatprep.subr.bf16.mxu0 0
        %1877 = vmatpush1.bf16.msra.mxu0 0
        %1878 = vmatprep.subr.bf16.mxu0 0
        %1879 = vmatpush1.bf16.msra.mxu0 0
        %1880 = vmatprep.subr.bf16.mxu0 0
        %1881 = vmatpush1.bf16.msra.mxu0 0
        %1882 = vmatprep.subr.bf16.mxu0 0
        %1883 = vmatpush1.bf16.msra.mxu0 0
        %1884 = vmatprep.subr.bf16.mxu0 0
        %1885 = vmatpush1.bf16.msra.mxu0 %v1865
        %1886 = vmatprep.subr.bf16.mxu0 0
        %1887 = vmatpush2.bf16.msra.mxu0 0
        %1888 = vmatprep.subr.bf16.mxu0 0
        %1889 = vmatpush2.bf16.msra.mxu0 0
        %1890 = vmatprep.subr.bf16.mxu0 0
        %1891 = vmatpush2.bf16.msra.mxu0 0
        %1892 = vmatprep.subr.bf16.mxu0 0
        %1893 = vmatpush2.bf16.msra.mxu0 0
        %1894 = vmatprep.subr.bf16.mxu0 0
        %1895 = vmatpush2.bf16.msra.mxu0 0
        %1896 = vmatprep.subr.bf16.mxu0 0
        %1897 = vmatpush2.bf16.msra.mxu0 0
        %1898 = vmatprep.subr.bf16.mxu0 0
        %1899 = vmatpush2.bf16.msra.mxu0 0
        %1900 = vmatprep.subr.bf16.mxu0 0
        %1901 = vmatpush2.bf16.msra.mxu0 0
        %1902 = vmatprep.mubr.bf16.mxu0 0
        %1903 = vmatmul.mubr.bf16.gmra.mxu0 %v1868
        %v1904 = vpop.f32.mrf.mxu0
        %v1905 = vadd.f32 0.0, %v1904
        %v1906 = vpop.f32.mrf.mxu0
        %v1907 = vpop.f32.mrf.mxu0
        %v1908 = vpop.f32.mrf.mxu0
        %1909 = vdwg.mxu0
        %v1910 = vsel %vm1034, %v1844, 0.0
        %v1911 = vsel %vm1034, %v1845, 0.0
        %v1912 = vadd.f32 %v1910, %v1911
        %v1913 = vrot.slane %v1912, 4
        %v1914 = vadd.f32 %v1912, %v1913
        %v1915 = vrot.slane %v1914, 2
        %v1916 = vadd.f32 %v1914, %v1915
        %v1917 = vrot.slane %v1916, 1
        %v1918 = vadd.f32 %v1916, %v1917
        %v1919 = vmul.f32 %v1762, 0.35355338
        %v1920 = vpack.c.bf16 %v1919, %v1919
        %v1922 = vsel %vm1034, %v1920, 0
        %v1925 = vsel %vm1034, %v1835, 0
        %1927 = vmatprep.subr.bf16.mxu0 0
        %1928 = vmatpush1.bf16.xpose.msra.mxu0 0
        %1929 = vmatprep.subr.bf16.mxu0 0
        %1930 = vmatpush1.bf16.xpose.msra.mxu0 0
        %1931 = vmatprep.subr.bf16.mxu0 0
        %1932 = vmatpush1.bf16.xpose.msra.mxu0 0
        %1933 = vmatprep.subr.bf16.mxu0 0
        %1934 = vmatpush1.bf16.xpose.msra.mxu0 0
        %1935 = vmatprep.subr.bf16.mxu0 0
        %1936 = vmatpush1.bf16.xpose.msra.mxu0 0
        %1937 = vmatprep.subr.bf16.mxu0 0
        %1938 = vmatpush1.bf16.xpose.msra.mxu0 0
        %1939 = vmatprep.subr.bf16.mxu0 0
        %1940 = vmatpush1.bf16.xpose.msra.mxu0 0
        %1941 = vmatprep.subr.bf16.mxu0 0
        %1942 = vmatpush1.bf16.xpose.msra.mxu0 %v1925
        %1943 = vmatprep.subr.bf16.mxu0 0
        %1944 = vmatpush2.bf16.xpose.msra.mxu0 0
        %1945 = vmatprep.subr.bf16.mxu0 0
        %1946 = vmatpush2.bf16.xpose.msra.mxu0 0
        %1947 = vmatprep.subr.bf16.mxu0 0
        %1948 = vmatpush2.bf16.xpose.msra.mxu0 0
        %1949 = vmatprep.subr.bf16.mxu0 0
        %1950 = vmatpush2.bf16.xpose.msra.mxu0 0
        %1951 = vmatprep.subr.bf16.mxu0 0
        %1952 = vmatpush2.bf16.xpose.msra.mxu0 0
        %1953 = vmatprep.subr.bf16.mxu0 0
        %1954 = vmatpush2.bf16.xpose.msra.mxu0 0
        %1955 = vmatprep.subr.bf16.mxu0 0
        %1956 = vmatpush2.bf16.xpose.msra.mxu0 0
        %1957 = vmatprep.subr.bf16.mxu0 0
        %1958 = vmatpush2.bf16.xpose.msra.mxu0 0
        %1959 = vmatprep.mubr.bf16.mxu0 0
        %1960 = vmatmul.mubr.bf16.gmra.mxu0 %v1922
        %v1961 = vpop.f32.mrf.mxu0
        %v1962 = vadd.f32 0.0, %v1961
        %v1963 = vpop.f32.mrf.mxu0
        %v1964 = vpop.f32.mrf.mxu0
        %v1965 = vpop.f32.mrf.mxu0
        %1966 = vdwg.mxu0
        %v1967 = vsel %vm1834, %v1962, -1e+30
        %v1968 = vsel %vm1601, %v1967, -inf
        %1969 = vmax.xlane.f32.xlu0 %v1968
        %v1970 = vpop.xlane.xlu0 %1969
        %v1971 = vsub.f32 %v1967, %v1970
        %v1972 = vmul.f32 %v1971, 1.442695
        %v1973 = vpow.pop %v1972
        %v1974 = vsel %vm1601, %v1973, 0.0
        %1975 = vadd.xlane.f32.xlu0 %v1974
        %v1976 = vpop.xlane.xlu0 %1975
        %v1977 = vrcp.pop %v1976
        %v1978 = vmul.f32 %v1973, %v1977
        %v1979 = vpack.c.bf16 %v1978, %v1978
        %v1981 = vsel %vm1601, %v1979, 0
        %1983 = vmatprep.subr.bf16.mxu0 0
        %1984 = vmatpush1.bf16.msra.mxu0 0
        %1985 = vmatprep.subr.bf16.mxu0 0
        %1986 = vmatpush1.bf16.msra.mxu0 0
        %1987 = vmatprep.subr.bf16.mxu0 0
        %1988 = vmatpush1.bf16.msra.mxu0 0
        %1989 = vmatprep.subr.bf16.mxu0 0
        %1990 = vmatpush1.bf16.msra.mxu0 0
        %1991 = vmatprep.subr.bf16.mxu0 0
        %1992 = vmatpush1.bf16.msra.mxu0 0
        %1993 = vmatprep.subr.bf16.mxu0 0
        %1994 = vmatpush1.bf16.msra.mxu0 0
        %1995 = vmatprep.subr.bf16.mxu0 0
        %1996 = vmatpush1.bf16.msra.mxu0 0
        %1997 = vmatprep.subr.bf16.mxu0 0
        %1998 = vmatpush1.bf16.msra.mxu0 %v1865
        %1999 = vmatprep.subr.bf16.mxu0 0
        %2000 = vmatpush2.bf16.msra.mxu0 0
        %2001 = vmatprep.subr.bf16.mxu0 0
        %2002 = vmatpush2.bf16.msra.mxu0 0
        %2003 = vmatprep.subr.bf16.mxu0 0
        %2004 = vmatpush2.bf16.msra.mxu0 0
        %2005 = vmatprep.subr.bf16.mxu0 0
        %2006 = vmatpush2.bf16.msra.mxu0 0
        %2007 = vmatprep.subr.bf16.mxu0 0
        %2008 = vmatpush2.bf16.msra.mxu0 0
        %2009 = vmatprep.subr.bf16.mxu0 0
        %2010 = vmatpush2.bf16.msra.mxu0 0
        %2011 = vmatprep.subr.bf16.mxu0 0
        %2012 = vmatpush2.bf16.msra.mxu0 0
        %2013 = vmatprep.subr.bf16.mxu0 0
        %2014 = vmatpush2.bf16.msra.mxu0 0
        %2015 = vmatprep.mubr.bf16.mxu0 0
        %2016 = vmatmul.mubr.bf16.gmra.mxu0 %v1981
        %v2017 = vpop.f32.mrf.mxu0
        %v2018 = vadd.f32 0.0, %v2017
        %v2019 = vpop.f32.mrf.mxu0
        %v2020 = vpop.f32.mrf.mxu0
        %v2021 = vpop.f32.mrf.mxu0
        %2022 = vdwg.mxu0
        %2023 = vst.msk [vmem:[#allocation2] sm:$0xff] %vm1034, %v2018
        %2025 = vrot.lane.b32.xlu0 %v1920, 120
        %v2026 = vpop.permute.xlu0 %2025
        %v2028 = vsel %vm1034, %v2026, 0
        %2030 = vmatprep.subr.bf16.mxu0 0
        %2031 = vmatpush1.bf16.xpose.msra.mxu0 0
        %2032 = vmatprep.subr.bf16.mxu0 0
        %2033 = vmatpush1.bf16.xpose.msra.mxu0 0
        %2034 = vmatprep.subr.bf16.mxu0 0
        %2035 = vmatpush1.bf16.xpose.msra.mxu0 0
        %2036 = vmatprep.subr.bf16.mxu0 0
        %2037 = vmatpush1.bf16.xpose.msra.mxu0 0
        %2038 = vmatprep.subr.bf16.mxu0 0
        %2039 = vmatpush1.bf16.xpose.msra.mxu0 0
        %2040 = vmatprep.subr.bf16.mxu0 0
        %2041 = vmatpush1.bf16.xpose.msra.mxu0 0
        %2042 = vmatprep.subr.bf16.mxu0 0
        %2043 = vmatpush1.bf16.xpose.msra.mxu0 0
        %2044 = vmatprep.subr.bf16.mxu0 0
        %2045 = vmatpush1.bf16.xpose.msra.mxu0 %v1925
        %2046 = vmatprep.subr.bf16.mxu0 0
        %2047 = vmatpush2.bf16.xpose.msra.mxu0 0
        %2048 = vmatprep.subr.bf16.mxu0 0
        %2049 = vmatpush2.bf16.xpose.msra.mxu0 0
        %2050 = vmatprep.subr.bf16.mxu0 0
        %2051 = vmatpush2.bf16.xpose.msra.mxu0 0
        %2052 = vmatprep.subr.bf16.mxu0 0
        %2053 = vmatpush2.bf16.xpose.msra.mxu0 0
        %2054 = vmatprep.subr.bf16.mxu0 0
        %2055 = vmatpush2.bf16.xpose.msra.mxu0 0
        %2056 = vmatprep.subr.bf16.mxu0 0
        %2057 = vmatpush2.bf16.xpose.msra.mxu0 0
        %2058 = vmatprep.subr.bf16.mxu0 0
        %2059 = vmatpush2.bf16.xpose.msra.mxu0 0
        %2060 = vmatprep.subr.bf16.mxu0 0
        %2061 = vmatpush2.bf16.xpose.msra.mxu0 0
        %2062 = vmatprep.mubr.bf16.mxu0 0
        %2063 = vmatmul.mubr.bf16.gmra.mxu0 %v2028
        %v2064 = vpop.f32.mrf.mxu0
        %v2065 = vadd.f32 0.0, %v2064
        %v2066 = vpop.f32.mrf.mxu0
        %v2067 = vpop.f32.mrf.mxu0
        %v2068 = vpop.f32.mrf.mxu0
        %2069 = vdwg.mxu0
        %v2070 = vsel %vm1834, %v2065, -1e+30
        %v2071 = vsel %vm1601, %v2070, -inf
        %2072 = vmax.xlane.f32.xlu0 %v2071
        %v2073 = vpop.xlane.xlu0 %2072
        %v2074 = vsub.f32 %v2070, %v2073
        %v2075 = vmul.f32 %v2074, 1.442695
        %v2076 = vpow.pop %v2075
        %v2077 = vsel %vm1601, %v2076, 0.0
        %2078 = vadd.xlane.f32.xlu0 %v2077
        %v2079 = vpop.xlane.xlu0 %2078
        %v2080 = vrcp.pop %v2079
        %v2081 = vmul.f32 %v2076, %v2080
        %v2082 = vpack.c.bf16 %v2081, %v2081
        %v2084 = vsel %vm1601, %v2082, 0
        %2086 = vmatprep.subr.bf16.mxu0 0
        %2087 = vmatpush1.bf16.msra.mxu0 0
        %2088 = vmatprep.subr.bf16.mxu0 0
        %2089 = vmatpush1.bf16.msra.mxu0 0
        %2090 = vmatprep.subr.bf16.mxu0 0
        %2091 = vmatpush1.bf16.msra.mxu0 0
        %2092 = vmatprep.subr.bf16.mxu0 0
        %2093 = vmatpush1.bf16.msra.mxu0 0
        %2094 = vmatprep.subr.bf16.mxu0 0
        %2095 = vmatpush1.bf16.msra.mxu0 0
        %2096 = vmatprep.subr.bf16.mxu0 0
        %2097 = vmatpush1.bf16.msra.mxu0 0
        %2098 = vmatprep.subr.bf16.mxu0 0
        %2099 = vmatpush1.bf16.msra.mxu0 0
        %2100 = vmatprep.subr.bf16.mxu0 0
        %2101 = vmatpush1.bf16.msra.mxu0 %v1865
        %2102 = vmatprep.subr.bf16.mxu0 0
        %2103 = vmatpush2.bf16.msra.mxu0 0
        %2104 = vmatprep.subr.bf16.mxu0 0
        %2105 = vmatpush2.bf16.msra.mxu0 0
        %2106 = vmatprep.subr.bf16.mxu0 0
        %2107 = vmatpush2.bf16.msra.mxu0 0
        %2108 = vmatprep.subr.bf16.mxu0 0
        %2109 = vmatpush2.bf16.msra.mxu0 0
        %2110 = vmatprep.subr.bf16.mxu0 0
        %2111 = vmatpush2.bf16.msra.mxu0 0
        %2112 = vmatprep.subr.bf16.mxu0 0
        %2113 = vmatpush2.bf16.msra.mxu0 0
        %2114 = vmatprep.subr.bf16.mxu0 0
        %2115 = vmatpush2.bf16.msra.mxu0 0
        %2116 = vmatprep.subr.bf16.mxu0 0
        %2117 = vmatpush2.bf16.msra.mxu0 0
        %2118 = vmatprep.mubr.bf16.mxu0 0
        %2119 = vmatmul.mubr.bf16.gmra.mxu0 %v2084
        %v2120 = vpop.f32.mrf.mxu0
        %v2121 = vadd.f32 0.0, %v2120
        %v2122 = vpop.f32.mrf.mxu0
        %v2123 = vpop.f32.mrf.mxu0
        %v2124 = vpop.f32.mrf.mxu0
        %2125 = vdwg.mxu0
        %2127 = vrot.lane.b32.xlu0 %v2121, 8
        %v2128 = vpop.permute.xlu0 %2127
        %2130 = vst.msk [vmem:[#allocation2] sm:$0xff] %vm1300, %v2128
        %2132 = vrot.lane.b32.xlu0 %v1846, 120
        %v2133 = vpop.permute.xlu0 %2132
        %2135 = vxpose.xlu0.c.b16.start [1/8] %v2133, 128
        %2136 = vxpose.xlu0.c.b16.cont [2/8] 0, 128
        %2137 = vxpose.xlu0.c.b16.cont [3/8] 0, 128
        %2138 = vxpose.xlu0.c.b16.cont [4/8] 0, 128
        %2139 = vxpose.xlu0.c.b16.cont [5/8] 0, 128
        %2140 = vxpose.xlu0.c.b16.cont [6/8] 0, 128
        %2141 = vxpose.xlu0.c.b16.cont [7/8] 0, 128
        %2142 = vxpose.xlu0.c.b16.end [8/8] 0, 128
        %v2143 = vpop.trf.xlu0
        %v2144 = vpop.trf.xlu0
        %v2145 = vpop.trf.xlu0
        %v2146 = vpop.trf.xlu0
        %v2147 = vpop.trf.xlu0
        %v2148 = vpop.trf.xlu0
        %v2149 = vpop.trf.xlu0
        %v2150 = vpop.trf.xlu0
        %2151 = vrot.lane.b32.xlu0 %v1835, 104
        %v2152 = vpop.permute.xlu0 %2151
        %v2155 = vsel %vm1601, %v2143, 0
        %2157 = vmatprep.subr.bf16.mxu0 0
        %2158 = vmatpush1.bf16.msra.mxu0 0
        %2159 = vmatprep.subr.bf16.mxu0 0
        %2160 = vmatpush1.bf16.msra.mxu0 0
        %2161 = vmatprep.subr.bf16.mxu0 0
        %2162 = vmatpush1.bf16.msra.mxu0 0
        %2163 = vmatprep.subr.bf16.mxu0 0
        %2164 = vmatpush1.bf16.msra.mxu0 0
        %2165 = vmatprep.subr.bf16.mxu0 0
        %2166 = vmatpush1.bf16.msra.mxu0 0
        %2167 = vmatprep.subr.bf16.mxu0 0
        %2168 = vmatpush1.bf16.msra.mxu0 0
        %2169 = vmatprep.subr.bf16.mxu0 0
        %2170 = vmatpush1.bf16.msra.mxu0 0
        %2171 = vmatprep.subr.bf16.mxu0 0
        %2172 = vmatpush1.bf16.msra.mxu0 %v2152
        %2173 = vmatprep.subr.bf16.mxu0 0
        %2174 = vmatpush2.bf16.msra.mxu0 0
        %2175 = vmatprep.subr.bf16.mxu0 0
        %2176 = vmatpush2.bf16.msra.mxu0 0
        %2177 = vmatprep.subr.bf16.mxu0 0
        %2178 = vmatpush2.bf16.msra.mxu0 0
        %2179 = vmatprep.subr.bf16.mxu0 0
        %2180 = vmatpush2.bf16.msra.mxu0 0
        %2181 = vmatprep.subr.bf16.mxu0 0
        %2182 = vmatpush2.bf16.msra.mxu0 0
        %2183 = vmatprep.subr.bf16.mxu0 0
        %2184 = vmatpush2.bf16.msra.mxu0 0
        %2185 = vmatprep.subr.bf16.mxu0 0
        %2186 = vmatpush2.bf16.msra.mxu0 0
        %2187 = vmatprep.subr.bf16.mxu0 0
        %2188 = vmatpush2.bf16.msra.mxu0 0
        %2189 = vmatprep.mubr.bf16.mxu0 0
        %2190 = vmatmul.mubr.bf16.gmra.mxu0 %v2155
        %v2191 = vpop.f32.mrf.mxu0
        %v2192 = vadd.f32 0.0, %v2191
        %v2193 = vpop.f32.mrf.mxu0
        %v2194 = vpop.f32.mrf.mxu0
        %v2195 = vpop.f32.mrf.mxu0
        %2196 = vdwg.mxu0
        %v2197 = vsel %vm1300, %v1844, 0.0
        %v2198 = vsel %vm1300, %v1845, 0.0
        %v2199 = vadd.f32 %v2197, %v2198
        %v2200 = vrot.slane %v2199, 4
        %v2201 = vadd.f32 %v2199, %v2200
        %v2202 = vrot.slane %v2201, 2
        %v2203 = vadd.f32 %v2201, %v2202
        %v2204 = vrot.slane %v2203, 1
        %v2205 = vadd.f32 %v2203, %v2204
        %2206 = vrot.lane.b32.xlu0 %v1920, 112
        %v2207 = vpop.permute.xlu0 %2206
        %2208 = vrot.lane.b32.xlu0 %v1835, 120
        %v2209 = vpop.permute.xlu0 %2208
        %v2211 = vsel %vm1034, %v2207, 0
        %v2214 = vsel %vm1034, %v2209, 0
        %2216 = vmatprep.subr.bf16.mxu0 0
        %2217 = vmatpush1.bf16.xpose.msra.mxu0 0
        %2218 = vmatprep.subr.bf16.mxu0 0
        %2219 = vmatpush1.bf16.xpose.msra.mxu0 0
        %2220 = vmatprep.subr.bf16.mxu0 0
        %2221 = vmatpush1.bf16.xpose.msra.mxu0 0
        %2222 = vmatprep.subr.bf16.mxu0 0
        %2223 = vmatpush1.bf16.xpose.msra.mxu0 0
        %2224 = vmatprep.subr.bf16.mxu0 0
        %2225 = vmatpush1.bf16.xpose.msra.mxu0 0
        %2226 = vmatprep.subr.bf16.mxu0 0
        %2227 = vmatpush1.bf16.xpose.msra.mxu0 0
        %2228 = vmatprep.subr.bf16.mxu0 0
        %2229 = vmatpush1.bf16.xpose.msra.mxu0 0
        %2230 = vmatprep.subr.bf16.mxu0 0
        %2231 = vmatpush1.bf16.xpose.msra.mxu0 %v2214
        %2232 = vmatprep.subr.bf16.mxu0 0
        %2233 = vmatpush2.bf16.xpose.msra.mxu0 0
        %2234 = vmatprep.subr.bf16.mxu0 0
        %2235 = vmatpush2.bf16.xpose.msra.mxu0 0
        %2236 = vmatprep.subr.bf16.mxu0 0
        %2237 = vmatpush2.bf16.xpose.msra.mxu0 0
        %2238 = vmatprep.subr.bf16.mxu0 0
        %2239 = vmatpush2.bf16.xpose.msra.mxu0 0
        %2240 = vmatprep.subr.bf16.mxu0 0
        %2241 = vmatpush2.bf16.xpose.msra.mxu0 0
        %2242 = vmatprep.subr.bf16.mxu0 0
        %2243 = vmatpush2.bf16.xpose.msra.mxu0 0
        %2244 = vmatprep.subr.bf16.mxu0 0
        %2245 = vmatpush2.bf16.xpose.msra.mxu0 0
        %2246 = vmatprep.subr.bf16.mxu0 0
        %2247 = vmatpush2.bf16.xpose.msra.mxu0 0
        %2248 = vmatprep.mubr.bf16.mxu0 0
        %2249 = vmatmul.mubr.bf16.gmra.mxu0 %v2211
        %v2250 = vpop.f32.mrf.mxu0
        %v2251 = vadd.f32 0.0, %v2250
        %v2252 = vpop.f32.mrf.mxu0
        %v2253 = vpop.f32.mrf.mxu0
        %v2254 = vpop.f32.mrf.mxu0
        %2255 = vdwg.mxu0
        %v2256 = vsel %vm1834, %v2251, -1e+30
        %v2257 = vsel %vm1601, %v2256, -inf
        %2258 = vmax.xlane.f32.xlu0 %v2257
        %v2259 = vpop.xlane.xlu0 %2258
        %v2260 = vsub.f32 %v2256, %v2259
        %v2261 = vmul.f32 %v2260, 1.442695
        %v2262 = vpow.pop %v2261
        %v2263 = vsel %vm1601, %v2262, 0.0
        %2264 = vadd.xlane.f32.xlu0 %v2263
        %v2265 = vpop.xlane.xlu0 %2264
        %v2266 = vrcp.pop %v2265
        %v2267 = vmul.f32 %v2262, %v2266
        %v2268 = vpack.c.bf16 %v2267, %v2267
        %v2270 = vsel %vm1601, %v2268, 0
        %2272 = vmatprep.subr.bf16.mxu0 0
        %2273 = vmatpush1.bf16.msra.mxu0 0
        %2274 = vmatprep.subr.bf16.mxu0 0
        %2275 = vmatpush1.bf16.msra.mxu0 0
        %2276 = vmatprep.subr.bf16.mxu0 0
        %2277 = vmatpush1.bf16.msra.mxu0 0
        %2278 = vmatprep.subr.bf16.mxu0 0
        %2279 = vmatpush1.bf16.msra.mxu0 0
        %2280 = vmatprep.subr.bf16.mxu0 0
        %2281 = vmatpush1.bf16.msra.mxu0 0
        %2282 = vmatprep.subr.bf16.mxu0 0
        %2283 = vmatpush1.bf16.msra.mxu0 0
        %2284 = vmatprep.subr.bf16.mxu0 0
        %2285 = vmatpush1.bf16.msra.mxu0 0
        %2286 = vmatprep.subr.bf16.mxu0 0
        %2287 = vmatpush1.bf16.msra.mxu0 %v2152
        %2288 = vmatprep.subr.bf16.mxu0 0
        %2289 = vmatpush2.bf16.msra.mxu0 0
        %2290 = vmatprep.subr.bf16.mxu0 0
        %2291 = vmatpush2.bf16.msra.mxu0 0
        %2292 = vmatprep.subr.bf16.mxu0 0
        %2293 = vmatpush2.bf16.msra.mxu0 0
        %2294 = vmatprep.subr.bf16.mxu0 0
        %2295 = vmatpush2.bf16.msra.mxu0 0
        %2296 = vmatprep.subr.bf16.mxu0 0
        %2297 = vmatpush2.bf16.msra.mxu0 0
        %2298 = vmatprep.subr.bf16.mxu0 0
        %2299 = vmatpush2.bf16.msra.mxu0 0
        %2300 = vmatprep.subr.bf16.mxu0 0
        %2301 = vmatpush2.bf16.msra.mxu0 0
        %2302 = vmatprep.subr.bf16.mxu0 0
        %2303 = vmatpush2.bf16.msra.mxu0 0
        %2304 = vmatprep.mubr.bf16.mxu0 0
        %2305 = vmatmul.mubr.bf16.gmra.mxu0 %v2270
        %v2306 = vpop.f32.mrf.mxu0
        %v2307 = vadd.f32 0.0, %v2306
        %v2308 = vpop.f32.mrf.mxu0
        %v2309 = vpop.f32.mrf.mxu0
        %v2310 = vpop.f32.mrf.mxu0
        %2311 = vdwg.mxu0
        %2313 = vrot.lane.b32.xlu0 %v2307, 16
        %v2314 = vpop.permute.xlu0 %2313
        %2316 = vst.msk [vmem:[#allocation2] sm:$0xff] %vm1487, %v2314
        %2317 = vrot.lane.b32.xlu0 %v1920, 104
        %v2318 = vpop.permute.xlu0 %2317
        %v2320 = vsel %vm1034, %v2318, 0
        %2322 = vmatprep.subr.bf16.mxu0 0
        %2323 = vmatpush1.bf16.xpose.msra.mxu0 0
        %2324 = vmatprep.subr.bf16.mxu0 0
        %2325 = vmatpush1.bf16.xpose.msra.mxu0 0
        %2326 = vmatprep.subr.bf16.mxu0 0
        %2327 = vmatpush1.bf16.xpose.msra.mxu0 0
        %2328 = vmatprep.subr.bf16.mxu0 0
        %2329 = vmatpush1.bf16.xpose.msra.mxu0 0
        %2330 = vmatprep.subr.bf16.mxu0 0
        %2331 = vmatpush1.bf16.xpose.msra.mxu0 0
        %2332 = vmatprep.subr.bf16.mxu0 0
        %2333 = vmatpush1.bf16.xpose.msra.mxu0 0
        %2334 = vmatprep.subr.bf16.mxu0 0
        %2335 = vmatpush1.bf16.xpose.msra.mxu0 0
        %2336 = vmatprep.subr.bf16.mxu0 0
        %2337 = vmatpush1.bf16.xpose.msra.mxu0 %v2214
        %2338 = vmatprep.subr.bf16.mxu0 0
        %2339 = vmatpush2.bf16.xpose.msra.mxu0 0
        %2340 = vmatprep.subr.bf16.mxu0 0
        %2341 = vmatpush2.bf16.xpose.msra.mxu0 0
        %2342 = vmatprep.subr.bf16.mxu0 0
        %2343 = vmatpush2.bf16.xpose.msra.mxu0 0
        %2344 = vmatprep.subr.bf16.mxu0 0
        %2345 = vmatpush2.bf16.xpose.msra.mxu0 0
        %2346 = vmatprep.subr.bf16.mxu0 0
        %2347 = vmatpush2.bf16.xpose.msra.mxu0 0
        %2348 = vmatprep.subr.bf16.mxu0 0
        %2349 = vmatpush2.bf16.xpose.msra.mxu0 0
        %2350 = vmatprep.subr.bf16.mxu0 0
        %2351 = vmatpush2.bf16.xpose.msra.mxu0 0
        %2352 = vmatprep.subr.bf16.mxu0 0
        %2353 = vmatpush2.bf16.xpose.msra.mxu0 0
        %2354 = vmatprep.mubr.bf16.mxu0 0
        %2355 = vmatmul.mubr.bf16.gmra.mxu0 %v2320
        %v2356 = vpop.f32.mrf.mxu0
        %v2357 = vadd.f32 0.0, %v2356
        %v2358 = vpop.f32.mrf.mxu0
        %v2359 = vpop.f32.mrf.mxu0
        %v2360 = vpop.f32.mrf.mxu0
        %2361 = vdwg.mxu0
        %v2362 = vsel %vm1834, %v2357, -1e+30
        %v2363 = vsel %vm1601, %v2362, -inf
        %2364 = vmax.xlane.f32.xlu0 %v2363
        %v2365 = vpop.xlane.xlu0 %2364
        %v2366 = vsub.f32 %v2362, %v2365
        %v2367 = vmul.f32 %v2366, 1.442695
        %v2368 = vpow.pop %v2367
        %v2369 = vsel %vm1601, %v2368, 0.0
        %2370 = vadd.xlane.f32.xlu0 %v2369
        %v2371 = vpop.xlane.xlu0 %2370
        %v2372 = vrcp.pop %v2371
        %v2373 = vmul.f32 %v2368, %v2372
        %v2374 = vpack.c.bf16 %v2373, %v2373
        %v2376 = vsel %vm1601, %v2374, 0
        %2378 = vmatprep.subr.bf16.mxu0 0
        %2379 = vmatpush1.bf16.msra.mxu0 0
        %2380 = vmatprep.subr.bf16.mxu0 0
        %2381 = vmatpush1.bf16.msra.mxu0 0
        %2382 = vmatprep.subr.bf16.mxu0 0
        %2383 = vmatpush1.bf16.msra.mxu0 0
        %2384 = vmatprep.subr.bf16.mxu0 0
        %2385 = vmatpush1.bf16.msra.mxu0 0
        %2386 = vmatprep.subr.bf16.mxu0 0
        %2387 = vmatpush1.bf16.msra.mxu0 0
        %2388 = vmatprep.subr.bf16.mxu0 0
        %2389 = vmatpush1.bf16.msra.mxu0 0
        %2390 = vmatprep.subr.bf16.mxu0 0
        %2391 = vmatpush1.bf16.msra.mxu0 0
        %2392 = vmatprep.subr.bf16.mxu0 0
        %2393 = vmatpush1.bf16.msra.mxu0 %v2152
        %2394 = vmatprep.subr.bf16.mxu0 0
        %2395 = vmatpush2.bf16.msra.mxu0 0
        %2396 = vmatprep.subr.bf16.mxu0 0
        %2397 = vmatpush2.bf16.msra.mxu0 0
        %2398 = vmatprep.subr.bf16.mxu0 0
        %2399 = vmatpush2.bf16.msra.mxu0 0
        %2400 = vmatprep.subr.bf16.mxu0 0
        %2401 = vmatpush2.bf16.msra.mxu0 0
        %2402 = vmatprep.subr.bf16.mxu0 0
        %2403 = vmatpush2.bf16.msra.mxu0 0
        %2404 = vmatprep.subr.bf16.mxu0 0
        %2405 = vmatpush2.bf16.msra.mxu0 0
        %2406 = vmatprep.subr.bf16.mxu0 0
        %2407 = vmatpush2.bf16.msra.mxu0 0
        %2408 = vmatprep.subr.bf16.mxu0 0
        %2409 = vmatpush2.bf16.msra.mxu0 0
        %2410 = vmatprep.mubr.bf16.mxu0 0
        %2411 = vmatmul.mubr.bf16.gmra.mxu0 %v2376
        %v2412 = vpop.f32.mrf.mxu0
        %v2413 = vadd.f32 0.0, %v2412
        %v2414 = vpop.f32.mrf.mxu0
        %v2415 = vpop.f32.mrf.mxu0
        %v2416 = vpop.f32.mrf.mxu0
        %2417 = vdwg.mxu0
        %2419 = vrot.lane.b32.xlu0 %v2413, 24
        %v2420 = vpop.permute.xlu0 %2419
        %2422 = vst.msk [vmem:[#allocation2] sm:$0xff] %vm1594, %v2420
        %2424 = vrot.lane.b32.xlu0 %v2192, 8
        %v2425 = vpop.permute.xlu0 %2424
        %v2427 = vsel %vm1034, %v1905, %v2425
        %2428 = vst.msk [vmem:[%s868] sm:$0xff] %vm1601, %v2427
        %v2429 = vsel %vm1034, %v1918, %v2205
        %2430 = vst.msk [vmem:[%s871] sm:$0x1] %vm1604, %v2429
        %v2431 = vld [vmem:[#allocation2] sm:$0xff]
        %v2433 = vlaneseq
        %v2434 = vshrl.u32 %v2433, 7
        %v2435 = vsub.s32 0, %v2434
        %v2436 = vrot.slane %v1706, %v2435
        %v2438 = vmul.f32 %v2431, %v2436
        %v2439 = vpack.c.bf16 %v2438, %v2438
        %v2440 = vld [vmem:[%s13] sm:$0xf]
        %v2441 = vld [vmem:[%s13 + $0x4] sm:$0xf]
        %v2442 = vld [vmem:[%s13 + $0x8] sm:$0xf]
        %v2443 = vld [vmem:[%s13 + $0xc] sm:$0xf]
        %v2448 = vunpack.c.l.b16 %v2440
        %v2449 = vunpack.c.l.b16 %v2441
        %v2450 = vunpack.c.l.b16 %v2442
        %v2451 = vunpack.c.l.b16 %v2443
        %v2452 = vpack.c.b16 %v2449, %v2448
        %v2453 = vpack.c.b16 %v2451, %v2450
        %v2457 = vsel %vm895, %v2439, 0
        %2459 = vmatprep.subr.bf16.mxu0 0
        %2460 = vmatpush1.bf16.msra.mxu0 0
        %2461 = vmatprep.subr.bf16.mxu0 0
        %2462 = vmatpush1.bf16.msra.mxu0 0
        %2463 = vmatprep.subr.bf16.mxu0 0
        %2464 = vmatpush1.bf16.msra.mxu0 0
        %2465 = vmatprep.subr.bf16.mxu0 0
        %2466 = vmatpush1.bf16.msra.mxu0 0
        %2467 = vmatprep.subr.bf16.mxu0 0
        %2468 = vmatpush1.bf16.msra.mxu0 0
        %2469 = vmatprep.subr.bf16.mxu0 0
        %2470 = vmatpush1.bf16.msra.mxu0 0
        %2471 = vmatprep.subr.bf16.mxu0 0
        %2472 = vmatpush1.bf16.msra.mxu0 %v2453
        %2473 = vmatprep.subr.bf16.mxu0 0
        %2474 = vmatpush1.bf16.msra.mxu0 %v2452
        %2475 = vmatprep.subr.bf16.mxu0 0
        %2476 = vmatpush2.bf16.msra.mxu0 0
        %2477 = vmatprep.subr.bf16.mxu0 0
        %2478 = vmatpush2.bf16.msra.mxu0 0
        %2479 = vmatprep.subr.bf16.mxu0 0
        %2480 = vmatpush2.bf16.msra.mxu0 0
        %2481 = vmatprep.subr.bf16.mxu0 0
        %2482 = vmatpush2.bf16.msra.mxu0 0
        %2483 = vmatprep.subr.bf16.mxu0 0
        %2484 = vmatpush2.bf16.msra.mxu0 0
        %2485 = vmatprep.subr.bf16.mxu0 0
        %2486 = vmatpush2.bf16.msra.mxu0 0
        %2487 = vmatprep.subr.bf16.mxu0 0
        %2488 = vmatpush2.bf16.msra.mxu0 0
        %2489 = vmatprep.subr.bf16.mxu0 0
        %2490 = vmatpush2.bf16.msra.mxu0 0
        %2491 = vmatprep.mubr.bf16.mxu0 0
        %2492 = vmatmul.mubr.bf16.gmra.mxu0 %v2457
        %v2493 = vpop.f32.mrf.mxu0
        %v2494 = vadd.f32 0.0, %v2493
        %v2495 = vpop.f32.mrf.mxu0
        %v2496 = vpop.f32.mrf.mxu0
        %v2497 = vpop.f32.mrf.mxu0
        %2498 = vdwg.mxu0
        %v2499 = vadd.f32 %v1704, %v2494
        %v2500 = vld [vmem:[%s14] sm:$0x1]
        %v2501 = vld [vmem:[%s15] sm:$0x1]
        %v2502 = vsel %vm895, %v2499, 0.0
        %2503 = vadd.xlane.f32.xlu0 %v2502
        %v2504 = vpop.xlane.xlu0 %2503
        %v2505 = vmul.f32 %v2504, %v1680
        %v2506 = vsub.f32 %v2499, %v2505
        %v2507 = vmul.f32 %v2506, %v2506
        %v2508 = vsel %vm895, %v2507, 0.0
        %2509 = vadd.xlane.f32.xlu0 %v2508
        %v2510 = vpop.xlane.xlu0 %2509
        %v2511 = vmul.f32 %v2510, %v1680
        %v2512 = vadd.f32 %v2511, 1e-05
        %v2513 = vrsqrt.pop %v2512
        %v2514 = vmul.f32 %v2506, %v2513
        %v2516 = vlaneseq
        %v2517 = vshrl.u32 %v2516, 7
        %v2518 = vsub.s32 0, %v2517
        %v2519 = vrot.slane %v2500, %v2518
        %v2521 = vmul.f32 %v2514, %v2519
        %v2523 = vlaneseq
        %v2524 = vshrl.u32 %v2523, 7
        %v2525 = vsub.s32 0, %v2524
        %v2526 = vrot.slane %v2501, %v2525
        %v2528 = vadd.f32 %v2521, %v2526
        %v2529 = vpack.c.bf16 %v2528, %v2528
        %v2530 = vld [vmem:[%s16] sm:$0xf]
        %v2531 = vld [vmem:[%s16 + $0x4] sm:$0xf]
        %v2532 = vld [vmem:[%s16 + $0x8] sm:$0xf]
        %v2533 = vld [vmem:[%s16 + $0xc] sm:$0xf]
        %v2534 = vld [vmem:[%s17] sm:$0x1]
        %v2536 = vlaneseq
        %v2537 = vshrl.u32 %v2536, 7
        %v2538 = vsub.s32 0, %v2537
        %v2539 = vrot.slane %v2534, %v2538
        %v2545 = vunpack.c.l.b16 %v2530
        %v2546 = vunpack.c.l.b16 %v2531
        %v2547 = vunpack.c.l.b16 %v2532
        %v2548 = vunpack.c.l.b16 %v2533
        %v2549 = vpack.c.b16 %v2546, %v2545
        %v2550 = vpack.c.b16 %v2548, %v2547
        %v2554 = vsel %vm895, %v2529, 0
        %2556 = vmatprep.subr.bf16.mxu0 0
        %2557 = vmatpush1.bf16.msra.mxu0 0
        %2558 = vmatprep.subr.bf16.mxu0 0
        %2559 = vmatpush1.bf16.msra.mxu0 0
        %2560 = vmatprep.subr.bf16.mxu0 0
        %2561 = vmatpush1.bf16.msra.mxu0 0
        %2562 = vmatprep.subr.bf16.mxu0 0
        %2563 = vmatpush1.bf16.msra.mxu0 0
        %2564 = vmatprep.subr.bf16.mxu0 0
        %2565 = vmatpush1.bf16.msra.mxu0 0
        %2566 = vmatprep.subr.bf16.mxu0 0
        %2567 = vmatpush1.bf16.msra.mxu0 0
        %2568 = vmatprep.subr.bf16.mxu0 0
        %2569 = vmatpush1.bf16.msra.mxu0 %v2550
        %2570 = vmatprep.subr.bf16.mxu0 0
        %2571 = vmatpush1.bf16.msra.mxu0 %v2549
        %2572 = vmatprep.subr.bf16.mxu0 0
        %2573 = vmatpush2.bf16.msra.mxu0 0
        %2574 = vmatprep.subr.bf16.mxu0 0
        %2575 = vmatpush2.bf16.msra.mxu0 0
        %2576 = vmatprep.subr.bf16.mxu0 0
        %2577 = vmatpush2.bf16.msra.mxu0 0
        %2578 = vmatprep.subr.bf16.mxu0 0
        %2579 = vmatpush2.bf16.msra.mxu0 0
        %2580 = vmatprep.subr.bf16.mxu0 0
        %2581 = vmatpush2.bf16.msra.mxu0 0
        %2582 = vmatprep.subr.bf16.mxu0 0
        %2583 = vmatpush2.bf16.msra.mxu0 0
        %2584 = vmatprep.subr.bf16.mxu0 0
        %2585 = vmatpush2.bf16.msra.mxu0 0
        %2586 = vmatprep.subr.bf16.mxu0 0
        %2587 = vmatpush2.bf16.msra.mxu0 0
        %2588 = vmatprep.mubr.bf16.mxu0 0
        %2589 = vmatmul.mubr.bf16.gmra.mxu0 %v2554
        %v2590 = vpop.f32.mrf.mxu0
        %v2591 = vadd.f32 %v2539, %v2590
        %v2592 = vpop.f32.mrf.mxu0
        %v2593 = vpop.f32.mrf.mxu0
        %v2594 = vpop.f32.mrf.mxu0
        %2595 = vdwg.mxu0
        %v2596 = vmax.f32 %v2591, 0.0
        %v2597 = vpack.c.bf16 %v2596, %v2596
        %v2598 = vld [vmem:[%s18] sm:$0xf]
        %v2599 = vld [vmem:[%s18 + $0x4] sm:$0xf]
        %v2600 = vld [vmem:[%s18 + $0x8] sm:$0xf]
        %v2601 = vld [vmem:[%s18 + $0xc] sm:$0xf]
        %v2602 = vld [vmem:[%s18 + $0x10] sm:$0xf]
        %v2603 = vld [vmem:[%s18 + $0x14] sm:$0xf]
        %v2604 = vld [vmem:[%s18 + $0x18] sm:$0xf]
        %v2605 = vld [vmem:[%s18 + $0x1c] sm:$0xf]
        %v2606 = vld [vmem:[%s19] sm:$0x1]
        %v2608 = vlaneseq
        %v2609 = vshrl.u32 %v2608, 7
        %v2610 = vsub.s32 0, %v2609
        %v2611 = vrot.slane %v2606, %v2610
        %v2621 = vunpack.c.l.b16 %v2598
        %v2622 = vunpack.c.l.b16 %v2599
        %v2623 = vunpack.c.l.b16 %v2600
        %v2624 = vunpack.c.l.b16 %v2601
        %v2625 = vunpack.c.l.b16 %v2602
        %v2626 = vunpack.c.l.b16 %v2603
        %v2627 = vunpack.c.l.b16 %v2604
        %v2628 = vunpack.c.l.b16 %v2605
        %v2629 = vpack.c.b16 %v2622, %v2621
        %v2630 = vpack.c.b16 %v2624, %v2623
        %v2631 = vpack.c.b16 %v2626, %v2625
        %v2632 = vpack.c.b16 %v2628, %v2627
        %vm2637 = vcmask 523264
        %v2639 = vsel %vm2637, %v2597, 0
        %2641 = vmatprep.subr.bf16.mxu0 0
        %2642 = vmatpush1.bf16.msra.mxu0 0
        %2643 = vmatprep.subr.bf16.mxu0 0
        %2644 = vmatpush1.bf16.msra.mxu0 0
        %2645 = vmatprep.subr.bf16.mxu0 0
        %2646 = vmatpush1.bf16.msra.mxu0 0
        %2647 = vmatprep.subr.bf16.mxu0 0
        %2648 = vmatpush1.bf16.msra.mxu0 0
        %2649 = vmatprep.subr.bf16.mxu0 0
        %2650 = vmatpush1.bf16.msra.mxu0 %v2632
        %2651 = vmatprep.subr.bf16.mxu0 0
        %2652 = vmatpush1.bf16.msra.mxu0 %v2631
        %2653 = vmatprep.subr.bf16.mxu0 0
        %2654 = vmatpush1.bf16.msra.mxu0 %v2630
        %2655 = vmatprep.subr.bf16.mxu0 0
        %2656 = vmatpush1.bf16.msra.mxu0 %v2629
        %2657 = vmatprep.subr.bf16.mxu0 0
        %2658 = vmatpush2.bf16.msra.mxu0 0
        %2659 = vmatprep.subr.bf16.mxu0 0
        %2660 = vmatpush2.bf16.msra.mxu0 0
        %2661 = vmatprep.subr.bf16.mxu0 0
        %2662 = vmatpush2.bf16.msra.mxu0 0
        %2663 = vmatprep.subr.bf16.mxu0 0
        %2664 = vmatpush2.bf16.msra.mxu0 0
        %2665 = vmatprep.subr.bf16.mxu0 0
        %2666 = vmatpush2.bf16.msra.mxu0 0
        %2667 = vmatprep.subr.bf16.mxu0 0
        %2668 = vmatpush2.bf16.msra.mxu0 0
        %2669 = vmatprep.subr.bf16.mxu0 0
        %2670 = vmatpush2.bf16.msra.mxu0 0
        %2671 = vmatprep.subr.bf16.mxu0 0
        %2672 = vmatpush2.bf16.msra.mxu0 0
        %2673 = vmatprep.mubr.bf16.mxu0 0
        %2674 = vmatmul.mubr.bf16.gmra.mxu0 %v2639
        %v2675 = vpop.f32.mrf.mxu0
        %v2676 = vadd.f32 %v2611, %v2675
        %v2677 = vpop.f32.mrf.mxu0
        %v2678 = vpop.f32.mrf.mxu0
        %v2679 = vpop.f32.mrf.mxu0
        %2680 = vdwg.mxu0
        %v2681 = vadd.f32 %v2528, %v2676
        %v2682 = vld [vmem:[%s20] sm:$0x1]
        %v2683 = vld [vmem:[%s21] sm:$0x1]
        %v2684 = vsel %vm895, %v2681, 0.0
        %2685 = vadd.xlane.f32.xlu0 %v2684
        %v2686 = vpop.xlane.xlu0 %2685
        %v2687 = vmul.f32 %v2686, %v1680
        %v2688 = vsub.f32 %v2681, %v2687
        %v2689 = vmul.f32 %v2688, %v2688
        %v2690 = vsel %vm895, %v2689, 0.0
        %2691 = vadd.xlane.f32.xlu0 %v2690
        %v2692 = vpop.xlane.xlu0 %2691
        %v2693 = vmul.f32 %v2692, %v1680
        %v2694 = vadd.f32 %v2693, 1e-05
        %v2695 = vrsqrt.pop %v2694
        %v2696 = vmul.f32 %v2688, %v2695
        %v2698 = vlaneseq
        %v2699 = vshrl.u32 %v2698, 7
        %v2700 = vsub.s32 0, %v2699
        %v2701 = vrot.slane %v2682, %v2700
        %v2703 = vmul.f32 %v2696, %v2701
        %v2705 = vlaneseq
        %v2706 = vshrl.u32 %v2705, 7
        %v2707 = vsub.s32 0, %v2706
        %v2708 = vrot.slane %v2683, %v2707
        %v2710 = vadd.f32 %v2703, %v2708
        %2711 = vst.msk [vmem:[%s820] sm:$0xff] %vm895, %v2710
        %s2712 = sand.u32 %s531, 1
        %s2713 = scalar_lea.sflag [#allocation4], %s2712
        %s2714 = sand.u32 %s531, 1
        %s2715 = smul.addr %s2714, 8
        %s2716 = scalar_lea.vmem [#allocation3], %s2715
        %p2717 = scmp.lt.s32.totalorder %s41, 1
        %s2718 = scalar_select %p2717, %s41, 1
        %s2719 = smul.addr %s2718, 8
        %s2720 = scalar_lea.vmem %s23, %s2719
        %p2721 = scmp.lt.s32.totalorder %s41, 1
        %s2722 = scalar_select %p2721, %s41, 1
        %s2723 = scalar_lea.vmem %s24, %s2722
        %p2724 = scmp.lt.s32.totalorder %s41, 1
        %s2725 = scalar_select %p2724, %s41, 1
        %s2726 = smul.addr %s2725, 8
        %s2727 = scalar_lea.vmem %s25, %s2726
        %p2728 = scmp.lt.s32.totalorder %s41, 1
        %s2729 = scalar_select %p2728, %s41, 1
        %s2730 = scalar_lea.vmem %s26, %s2729
        // Predicated region
        $region109: #{transformer_forward.7} parent=107 // pred_check
          %p2731 = pneg %p541
        $region110: #{transformer_forward.7} parent=107 // pred_check_branch
          %2733 = sbr.rel (%p2731) target = $region112
        $region111: #{transformer_forward.7} parent=107 // pred_region
          %s2735 = ssub.s32 128, 128
          %2736 = vsyncadd %s2713, %s2735
          %s2737 = smul.addr %s41, 128
          %s2738 = scalar_lea.hbm %s22, %s2737
          %s2740 = sshll.u32 %s2716, 4
          %s2741 = int_to_ptr.vmem [resolvable:$true] %s2740
          %2743 = dma.vmem_to_hbm [thread:$0]  %s2741, 128, %s2738, %s2713
        $region112: #{transformer_forward.7} parent=107 // pred_fallthru
          _
        // Predicated region
        $region113: #{transformer_forward.7} parent=107 // pred_check
          %p2744 = pneg %p567
        $region114: #{transformer_forward.7} parent=107 // pred_check_branch
          %2746 = sbr.rel (%p2744) target = $region116
        $region115: #{transformer_forward.7} parent=107 // pred_region
          _
        $region116: #{transformer_forward.7} parent=107 // pred_fallthru
          _
        // Predicated region
        $region117: #{transformer_forward.7} parent=107 // pred_check
          %p2747 = pneg %p593
        $region118: #{transformer_forward.7} parent=107 // pred_check_branch
          %2749 = sbr.rel (%p2747) target = $region120
        $region119: #{transformer_forward.7} parent=107 // pred_region
          _
        $region120: #{transformer_forward.7} parent=107 // pred_fallthru
          _
        // Predicated region
        $region121: #{transformer_forward.7} parent=107 // pred_check
          %p2750 = pneg %p619
        $region122: #{transformer_forward.7} parent=107 // pred_check_branch
          %2752 = sbr.rel (%p2750) target = $region124
        $region123: #{transformer_forward.7} parent=107 // pred_region
          _
        $region124: #{transformer_forward.7} parent=107 // pred_fallthru
          _
        // Predicated region
        $region125: #{transformer_forward.7} parent=107 // pred_check
          %p2753 = pneg %p645
        $region126: #{transformer_forward.7} parent=107 // pred_check_branch
          %2755 = sbr.rel (%p2753) target = $region128
        $region127: #{transformer_forward.7} parent=107 // pred_region
          _
        $region128: #{transformer_forward.7} parent=107 // pred_fallthru
          _
      $region108: #{transformer_forward.7} parent=5 // pred_fallthru
        _
      %p2756 = scmp.le.s32.totalorder 2, %s36
      // Predicated region
      $region129: #{transformer_forward.7} parent=5 // pred_check
        %p2757 = pneg %p2756
      $region130: #{transformer_forward.7} parent=5 // pred_check_branch
        %2759 = sbr.rel (%p2757) target = $region132
      $region131: #{transformer_forward.7} parent=5 // pred_region
        %s2760 = ssub.s32 %s36, 2
        // Predicated region
        $region133: #{transformer_forward.7} parent=131 // pred_check
          %p2761 = pneg %p547
        $region134: #{transformer_forward.7} parent=131 // pred_check_branch
          %2763 = sbr.rel (%p2761) target = $region136
        $region135: #{transformer_forward.7} parent=131 // pred_region
          %s2764 = sand.u32 %s532, 1
          %s2765 = scalar_lea.sflag [#allocation4], %s2764
          %s2766 = sand.u32 %s532, 1
          %s2767 = smul.addr %s2766, 8
          %s2768 = scalar_lea.vmem [#allocation3], %s2767
          %2769 = dma.done %s2765, 128
        $region136: #{transformer_forward.7} parent=131 // pred_fallthru
          _
        // Predicated region
        $region137: #{transformer_forward.7} parent=131 // pred_check
          %p2770 = pneg %p573
        $region138: #{transformer_forward.7} parent=131 // pred_check_branch
          %2772 = sbr.rel (%p2770) target = $region140
        $region139: #{transformer_forward.7} parent=131 // pred_region
          %p2773 = scmp.lt.s32.totalorder %s42, 1
          %s2774 = scalar_select %p2773, %s42, 1
          %s2775 = smul.addr %s2774, 8
          %s2776 = scalar_lea.vmem %s23, %s2775
        $region140: #{transformer_forward.7} parent=131 // pred_fallthru
          _
        // Predicated region
        $region141: #{transformer_forward.7} parent=131 // pred_check
          %p2777 = pneg %p599
        $region142: #{transformer_forward.7} parent=131 // pred_check_branch
          %2779 = sbr.rel (%p2777) target = $region144
        $region143: #{transformer_forward.7} parent=131 // pred_region
          %p2780 = scmp.lt.s32.totalorder %s42, 1
          %s2781 = scalar_select %p2780, %s42, 1
          %s2782 = scalar_lea.vmem %s24, %s2781
        $region144: #{transformer_forward.7} parent=131 // pred_fallthru
          _
        // Predicated region
        $region145: #{transformer_forward.7} parent=131 // pred_check
          %p2783 = pneg %p625
        $region146: #{transformer_forward.7} parent=131 // pred_check_branch
          %2785 = sbr.rel (%p2783) target = $region148
        $region147: #{transformer_forward.7} parent=131 // pred_region
          %p2786 = scmp.lt.s32.totalorder %s42, 1
          %s2787 = scalar_select %p2786, %s42, 1
          %s2788 = smul.addr %s2787, 8
          %s2789 = scalar_lea.vmem %s25, %s2788
        $region148: #{transformer_forward.7} parent=131 // pred_fallthru
          _
        // Predicated region
        $region149: #{transformer_forward.7} parent=131 // pred_check
          %p2790 = pneg %p651
        $region150: #{transformer_forward.7} parent=131 // pred_check_branch
          %2792 = sbr.rel (%p2790) target = $region152
        $region151: #{transformer_forward.7} parent=131 // pred_region
          %p2793 = scmp.lt.s32.totalorder %s42, 1
          %s2794 = scalar_select %p2793, %s42, 1
          %s2795 = scalar_lea.vmem %s26, %s2794
        $region152: #{transformer_forward.7} parent=131 // pred_fallthru
          _
      $region132: #{transformer_forward.7} parent=5 // pred_fallthru
        _
    $region6: #{transformer_forward.7} parent=1 // loop_footer
      %s40 = sadd.s32 1, %s36
    $region7: #{transformer_forward.7} parent=1 // loop_footer_branch
      %35 = sbr.rel target = $region3
    $region8: #{transformer_forward.7} parent=1 // loop_exit
      _
    %2796 = vsyncpa [#allocation4], 1
    %s2797 = scalar_lea.sflag [#allocation4], 1
    %2798 = vsyncpa %s2797, 1

// kernel: transformer_forward.6
$region0: #{transformer_forward.6}
  #allocation0 [shape = 'u32[]', space=smem, size = 0x4, offset = 0x4, fixed_abs, tag = 'smem constant byte address 0x4 - core index']
  #allocation1 [shape = 'u32[144,128]{1,0:T(1,128)}', space=vmem, size = 0x12000, scoped, tag = 'internal scratch']
  #allocation2 [shape = 'f32[8,32]{1,0:T(8,128)}', space=vmem, size = 0x1000, scoped, tag = 'scratch operand']
  %s0 = inlined_call_operand.vmem [shape: f32[2,1,8], index: 0, kind: input, shape index: {}]
  %s1 = inlined_call_operand.vmem [shape: f32[2,1,16], index: 1, kind: input, shape index: {}]
  %s2 = inlined_call_operand.vmem [shape: f32[1,32], index: 2, kind: input, shape index: {}]
  %s3 = inlined_call_operand.vmem [shape: f32[1,32], index: 3, kind: input, shape index: {}]
  %s4 = inlined_call_operand.vmem [shape: f32[2,8,32], index: 4, kind: input, shape index: {}]
  %s5 = inlined_call_operand.vmem [shape: f32[2,16,32], index: 5, kind: input, shape index: {}]
  %s6 = inlined_call_operand.vmem [shape: bf16[32,32], index: 6, kind: input, shape index: {}]
  %s7 = inlined_call_operand.vmem [shape: bf16[32,32], index: 7, kind: input, shape index: {}]
  %s8 = inlined_call_operand.vmem [shape: bf16[32,32], index: 8, kind: input, shape index: {}]
  %s9 = inlined_call_operand.vmem [shape: f32[1,32], index: 9, kind: input, shape index: {}]
  %s10 = inlined_call_operand.vmem [shape: f32[1,32], index: 10, kind: input, shape index: {}]
  %s11 = inlined_call_operand.vmem [shape: bf16[32,32], index: 11, kind: input, shape index: {}]
  %s12 = inlined_call_operand.vmem [shape: bf16[32,32], index: 12, kind: input, shape index: {}]
  %s13 = inlined_call_operand.vmem [shape: bf16[32,32], index: 13, kind: input, shape index: {}]
  %s14 = inlined_call_operand.vmem [shape: f32[1,32], index: 14, kind: input, shape index: {}]
  %s15 = inlined_call_operand.vmem [shape: f32[1,32], index: 15, kind: input, shape index: {}]
  %s16 = inlined_call_operand.vmem [shape: bf16[32,64], index: 16, kind: input, shape index: {}]
  %s17 = inlined_call_operand.vmem [shape: f32[1,64], index: 17, kind: input, shape index: {}]
  %s18 = inlined_call_operand.vmem [shape: bf16[64,32], index: 18, kind: input, shape index: {}]
  %s19 = inlined_call_operand.vmem [shape: f32[1,32], index: 19, kind: input, shape index: {}]
  %s20 = inlined_call_operand.vmem [shape: f32[1,32], index: 20, kind: input, shape index: {}]
  %s21 = inlined_call_operand.vmem [shape: f32[1,32], index: 21, kind: input, shape index: {}]
  %s22 = inlined_call_operand.vmem [shape: f32[2,8,32], index: 22, kind: output, shape index: {0}]
  %s23 = inlined_call_operand.vmem [shape: f32[2,8,16], index: 23, kind: output, shape index: {1}]
  %s24 = inlined_call_operand.vmem [shape: f32[2,1,16], index: 24, kind: output, shape index: {2}]
  %s25 = inlined_call_operand.vmem [shape: f32[2,8,16], index: 25, kind: output, shape index: {3}]
  %s26 = inlined_call_operand.vmem [shape: f32[2,1,16], index: 26, kind: output, shape index: {4}]
  %27 = xla_tuple %s22, %s23, %s24, %s25, %s26
  %s28 = sld [smem:[#allocation0]]
  $region153: #{transformer_forward.6} parent=0
    _
  %s30 = ssub.s32 1, %s28
  %s31 = scalar_select 0, %s30, %s28
  loop: start=0, step=1, limit=4
  $region2: #{transformer_forward.6} parent=0 // loop_pre_header
    _
  $region3: #{transformer_forward.6} parent=0 // loop_header
    %s33 = sphi 0, %s37
    %p34 = scmp.ge.s32.totalorder %s33, 4
    %s43 = sphi 0, %s45
    %s46 = sphi 0, %s43
    %s47 = sphi 0, %s46
    %s63 = sphi 0, %s47
    %s69 = sphi 0, %s71
    %s72 = sphi 0, %s69
    %s73 = sphi 0, %s72
    %s89 = sphi 0, %s73
    %s93 = sphi 0, %s93
    %s95 = sphi 0, %s93
    %s96 = sphi 0, %s95
    %s110 = sphi 0, %s96
    %s114 = sphi 0, %s114
    %s116 = sphi 0, %s114
    %s117 = sphi 0, %s116
    %s131 = sphi 0, %s117
    %s137 = sphi 0, %s139
    %s140 = sphi 0, %s137
    %s141 = sphi 0, %s140
    %s157 = sphi 0, %s141
    %s163 = sphi 0, %s165
    %s166 = sphi 0, %s163
    %s167 = sphi 0, %s166
    %s183 = sphi 0, %s167
    %s187 = sphi 0, %s187
    %s189 = sphi 0, %s187
    %s190 = sphi 0, %s189
    %s204 = sphi 0, %s190
    %s208 = sphi 0, %s208
    %s210 = sphi 0, %s208
    %s211 = sphi 0, %s210
    %s225 = sphi 0, %s211
    %s229 = sphi 0, %s229
    %s231 = sphi 0, %s229
    %s232 = sphi 0, %s231
    %s246 = sphi 0, %s232
    %s250 = sphi 0, %s250
    %s252 = sphi 0, %s250
    %s253 = sphi 0, %s252
    %s267 = sphi 0, %s253
    %s271 = sphi 0, %s271
    %s273 = sphi 0, %s271
    %s274 = sphi 0, %s273
    %s288 = sphi 0, %s274
    %s292 = sphi 0, %s292
    %s294 = sphi 0, %s292
    %s295 = sphi 0, %s294
    %s309 = sphi 0, %s295
    %s313 = sphi 0, %s313
    %s315 = sphi 0, %s313
    %s316 = sphi 0, %s315
    %s330 = sphi 0, %s316
    %s334 = sphi 0, %s334
    %s336 = sphi 0, %s334
    %s337 = sphi 0, %s336
    %s351 = sphi 0, %s337
    %s355 = sphi 0, %s355
    %s357 = sphi 0, %s355
    %s358 = sphi 0, %s357
    %s372 = sphi 0, %s358
    %s376 = sphi 0, %s376
    %s378 = sphi 0, %s376
    %s379 = sphi 0, %s378
    %s393 = sphi 0, %s379
    %s397 = sphi 0, %s397
    %s399 = sphi 0, %s397
    %s400 = sphi 0, %s399
    %s414 = sphi 0, %s400
    %s418 = sphi 0, %s418
    %s420 = sphi 0, %s418
    %s421 = sphi 0, %s420
    %s435 = sphi 0, %s421
    %s439 = sphi 0, %s439
    %s441 = sphi 0, %s439
    %s442 = sphi 0, %s441
    %s456 = sphi 0, %s442
    %s460 = sphi 0, %s460
    %s462 = sphi 0, %s460
    %s463 = sphi 0, %s462
    %s477 = sphi 0, %s463
    %s481 = sphi 0, %s481
    %s483 = sphi 0, %s481
    %s484 = sphi 0, %s483
    %s498 = sphi 0, %s484
    %s502 = sphi 0, %s502
    %s504 = sphi 0, %s502
    %s505 = sphi 0, %s504
    %s519 = sphi 0, %s505
    %s525 = sphi 0, %s527
    %s528 = sphi 0, %s525
    %s529 = sphi 0, %s528
    %s545 = sphi 0, %s529
    %s551 = sphi 0, %s553
    %s554 = sphi 0, %s551
    %s555 = sphi 0, %s554
    %s571 = sphi 0, %s555
    %s577 = sphi 0, %s579
    %s580 = sphi 0, %s577
    %s581 = sphi 0, %s580
    %s597 = sphi 0, %s581
    %s603 = sphi 0, %s605
    %s606 = sphi 0, %s603
    %s607 = sphi 0, %s606
    %s623 = sphi 0, %s607
    %s629 = sphi 0, %s631
    %s632 = sphi 0, %s629
    %s633 = sphi 0, %s632
    %s649 = sphi 0, %s633
  $region4: #{transformer_forward.6} parent=0 // loop_header_branch
    %36 = sbr.rel (%p34) target = $region8
  $region5: #{transformer_forward.6} parent=0 // loop_body
    %s38 = ssub.s32 %s33, 1
    %s39 = ssub.s32 %s33, 2
    %s40 = sadd.s32 %s33, 1
    %s41 = ssub.s32 %s33, %s40
    %p42 = scmp.eq.s32.totalorder %s41, 0
    %s44 = sadd.s32 %s43, 1
    %s45 = scalar_select %p42, %s43, %s44
    %p48 = pneg %p42
    %p49 = scmp.eq.s32.totalorder %s33, 1
    %p50 = por %p48, %p49
    %p51 = scmp.ne.s32.totalorder %s43, %s46
    %p52 = scmp.eq.s32.totalorder %s33, 0
    %p53 = por %p51, %p52
    %p54 = scmp.ne.s32.totalorder %s43, %s46
    %p55 = scmp.eq.s32.totalorder %s38, 1
    %p56 = por %p54, %p55
    %p57 = scmp.ne.s32.totalorder %s46, %s47
    %p58 = scmp.eq.s32.totalorder %s38, 0
    %p59 = por %p57, %p58
    %p60 = scmp.ne.s32.totalorder %s46, %s47
    %p61 = scmp.eq.s32.totalorder %s39, 1
    %p62 = por %p60, %p61
    %p64 = scmp.ne.s32.totalorder %s47, %s63
    %p65 = scmp.eq.s32.totalorder %s39, 0
    %p66 = por %p64, %p65
    %s67 = ssub.s32 %s33, %s40
    %p68 = scmp.eq.s32.totalorder %s67, 0
    %s70 = sadd.s32 %s69, 1
    %s71 = scalar_select %p68, %s69, %s70
    %p74 = pneg %p68
    %p75 = scmp.eq.s32.totalorder %s33, 1
    %p76 = por %p74, %p75
    %p77 = scmp.ne.s32.totalorder %s69, %s72
    %p78 = scmp.eq.s32.totalorder %s33, 0
    %p79 = por %p77, %p78
    %p80 = scmp.ne.s32.totalorder %s69, %s72
    %p81 = scmp.eq.s32.totalorder %s38, 1
    %p82 = por %p80, %p81
    %p83 = scmp.ne.s32.totalorder %s72, %s73
    %p84 = scmp.eq.s32.totalorder %s38, 0
    %p85 = por %p83, %p84
    %p86 = scmp.ne.s32.totalorder %s72, %s73
    %p87 = scmp.eq.s32.totalorder %s39, 1
    %p88 = por %p86, %p87
    %p90 = scmp.ne.s32.totalorder %s73, %s89
    %p91 = scmp.eq.s32.totalorder %s39, 0
    %p92 = por %p90, %p91
    %s94 = sadd.s32 %s93, 1
    %p97 = scmp.eq.s32.totalorder %s33, 1
    %p98 = scmp.ne.s32.totalorder %s93, %s95
    %p99 = scmp.eq.s32.totalorder %s33, 0
    %p100 = por %p98, %p99
    %p101 = scmp.ne.s32.totalorder %s93, %s95
    %p102 = scmp.eq.s32.totalorder %s38, 1
    %p103 = por %p101, %p102
    %p104 = scmp.ne.s32.totalorder %s95, %s96
    %p105 = scmp.eq.s32.totalorder %s38, 0
    %p106 = por %p104, %p105
    %p107 = scmp.ne.s32.totalorder %s95, %s96
    %p108 = scmp.eq.s32.totalorder %s39, 1
    %p109 = por %p107, %p108
    %p111 = scmp.ne.s32.totalorder %s96, %s110
    %p112 = scmp.eq.s32.totalorder %s39, 0
    %p113 = por %p111, %p112
    %s115 = sadd.s32 %s114, 1
    %p118 = scmp.eq.s32.totalorder %s33, 1
    %p119 = scmp.ne.s32.totalorder %s114, %s116
    %p120 = scmp.eq.s32.totalorder %s33, 0
    %p121 = por %p119, %p120
    %p122 = scmp.ne.s32.totalorder %s114, %s116
    %p123 = scmp.eq.s32.totalorder %s38, 1
    %p124 = por %p122, %p123
    %p125 = scmp.ne.s32.totalorder %s116, %s117
    %p126 = scmp.eq.s32.totalorder %s38, 0
    %p127 = por %p125, %p126
    %p128 = scmp.ne.s32.totalorder %s116, %s117
    %p129 = scmp.eq.s32.totalorder %s39, 1
    %p130 = por %p128, %p129
    %p132 = scmp.ne.s32.totalorder %s117, %s131
    %p133 = scmp.eq.s32.totalorder %s39, 0
    %p134 = por %p132, %p133
    %s135 = ssub.s32 %s33, %s40
    %p136 = scmp.eq.s32.totalorder %s135, 0
    %s138 = sadd.s32 %s137, 1
    %s139 = scalar_select %p136, %s137, %s138
    %p142 = pneg %p136
    %p143 = scmp.eq.s32.totalorder %s33, 1
    %p144 = por %p142, %p143
    %p145 = scmp.ne.s32.totalorder %s137, %s140
    %p146 = scmp.eq.s32.totalorder %s33, 0
    %p147 = por %p145, %p146
    %p148 = scmp.ne.s32.totalorder %s137, %s140
    %p149 = scmp.eq.s32.totalorder %s38, 1
    %p150 = por %p148, %p149
    %p151 = scmp.ne.s32.totalorder %s140, %s141
    %p152 = scmp.eq.s32.totalorder %s38, 0
    %p153 = por %p151, %p152
    %p154 = scmp.ne.s32.totalorder %s140, %s141
    %p155 = scmp.eq.s32.totalorder %s39, 1
    %p156 = por %p154, %p155
    %p158 = scmp.ne.s32.totalorder %s141, %s157
    %p159 = scmp.eq.s32.totalorder %s39, 0
    %p160 = por %p158, %p159
    %s161 = ssub.s32 %s33, %s40
    %p162 = scmp.eq.s32.totalorder %s161, 0
    %s164 = sadd.s32 %s163, 1
    %s165 = scalar_select %p162, %s163, %s164
    %p168 = pneg %p162
    %p169 = scmp.eq.s32.totalorder %s33, 1
    %p170 = por %p168, %p169
    %p171 = scmp.ne.s32.totalorder %s163, %s166
    %p172 = scmp.eq.s32.totalorder %s33, 0
    %p173 = por %p171, %p172
    %p174 = scmp.ne.s32.totalorder %s163, %s166
    %p175 = scmp.eq.s32.totalorder %s38, 1
    %p176 = por %p174, %p175
    %p177 = scmp.ne.s32.totalorder %s166, %s167
    %p178 = scmp.eq.s32.totalorder %s38, 0
    %p179 = por %p177, %p178
    %p180 = scmp.ne.s32.totalorder %s166, %s167
    %p181 = scmp.eq.s32.totalorder %s39, 1
    %p182 = por %p180, %p181
    %p184 = scmp.ne.s32.totalorder %s167, %s183
    %p185 = scmp.eq.s32.totalorder %s39, 0
    %p186 = por %p184, %p185
    %s188 = sadd.s32 %s187, 1
    %p191 = scmp.eq.s32.totalorder %s33, 1
    %p192 = scmp.ne.s32.totalorder %s187, %s189
    %p193 = scmp.eq.s32.totalorder %s33, 0
    %p194 = por %p192, %p193
    %p195 = scmp.ne.s32.totalorder %s187, %s189
    %p196 = scmp.eq.s32.totalorder %s38, 1
    %p197 = por %p195, %p196
    %p198 = scmp.ne.s32.totalorder %s189, %s190
    %p199 = scmp.eq.s32.totalorder %s38, 0
    %p200 = por %p198, %p199
    %p201 = scmp.ne.s32.totalorder %s189, %s190
    %p202 = scmp.eq.s32.totalorder %s39, 1
    %p203 = por %p201, %p202
    %p205 = scmp.ne.s32.totalorder %s190, %s204
    %p206 = scmp.eq.s32.totalorder %s39, 0
    %p207 = por %p205, %p206
    %s209 = sadd.s32 %s208, 1
    %p212 = scmp.eq.s32.totalorder %s33, 1
    %p213 = scmp.ne.s32.totalorder %s208, %s210
    %p214 = scmp.eq.s32.totalorder %s33, 0
    %p215 = por %p213, %p214
    %p216 = scmp.ne.s32.totalorder %s208, %s210
    %p217 = scmp.eq.s32.totalorder %s38, 1
    %p218 = por %p216, %p217
    %p219 = scmp.ne.s32.totalorder %s210, %s211
    %p220 = scmp.eq.s32.totalorder %s38, 0
    %p221 = por %p219, %p220
    %p222 = scmp.ne.s32.totalorder %s210, %s211
    %p223 = scmp.eq.s32.totalorder %s39, 1
    %p224 = por %p222, %p223
    %p226 = scmp.ne.s32.totalorder %s211, %s225
    %p227 = scmp.eq.s32.totalorder %s39, 0
    %p228 = por %p226, %p227
    %s230 = sadd.s32 %s229, 1
    %p233 = scmp.eq.s32.totalorder %s33, 1
    %p234 = scmp.ne.s32.totalorder %s229, %s231
    %p235 = scmp.eq.s32.totalorder %s33, 0
    %p236 = por %p234, %p235
    %p237 = scmp.ne.s32.totalorder %s229, %s231
    %p238 = scmp.eq.s32.totalorder %s38, 1
    %p239 = por %p237, %p238
    %p240 = scmp.ne.s32.totalorder %s231, %s232
    %p241 = scmp.eq.s32.totalorder %s38, 0
    %p242 = por %p240, %p241
    %p243 = scmp.ne.s32.totalorder %s231, %s232
    %p244 = scmp.eq.s32.totalorder %s39, 1
    %p245 = por %p243, %p244
    %p247 = scmp.ne.s32.totalorder %s232, %s246
    %p248 = scmp.eq.s32.totalorder %s39, 0
    %p249 = por %p247, %p248
    %s251 = sadd.s32 %s250, 1
    %p254 = scmp.eq.s32.totalorder %s33, 1
    %p255 = scmp.ne.s32.totalorder %s250, %s252
    %p256 = scmp.eq.s32.totalorder %s33, 0
    %p257 = por %p255, %p256
    %p258 = scmp.ne.s32.totalorder %s250, %s252
    %p259 = scmp.eq.s32.totalorder %s38, 1
    %p260 = por %p258, %p259
    %p261 = scmp.ne.s32.totalorder %s252, %s253
    %p262 = scmp.eq.s32.totalorder %s38, 0
    %p263 = por %p261, %p262
    %p264 = scmp.ne.s32.totalorder %s252, %s253
    %p265 = scmp.eq.s32.totalorder %s39, 1
    %p266 = por %p264, %p265
    %p268 = scmp.ne.s32.totalorder %s253, %s267
    %p269 = scmp.eq.s32.totalorder %s39, 0
    %p270 = por %p268, %p269
    %s272 = sadd.s32 %s271, 1
    %p275 = scmp.eq.s32.totalorder %s33, 1
    %p276 = scmp.ne.s32.totalorder %s271, %s273
    %p277 = scmp.eq.s32.totalorder %s33, 0
    %p278 = por %p276, %p277
    %p279 = scmp.ne.s32.totalorder %s271, %s273
    %p280 = scmp.eq.s32.totalorder %s38, 1
    %p281 = por %p279, %p280
    %p282 = scmp.ne.s32.totalorder %s273, %s274
    %p283 = scmp.eq.s32.totalorder %s38, 0
    %p284 = por %p282, %p283
    %p285 = scmp.ne.s32.totalorder %s273, %s274
    %p286 = scmp.eq.s32.totalorder %s39, 1
    %p287 = por %p285, %p286
    %p289 = scmp.ne.s32.totalorder %s274, %s288
    %p290 = scmp.eq.s32.totalorder %s39, 0
    %p291 = por %p289, %p290
    %s293 = sadd.s32 %s292, 1
    %p296 = scmp.eq.s32.totalorder %s33, 1
    %p297 = scmp.ne.s32.totalorder %s292, %s294
    %p298 = scmp.eq.s32.totalorder %s33, 0
    %p299 = por %p297, %p298
    %p300 = scmp.ne.s32.totalorder %s292, %s294
    %p301 = scmp.eq.s32.totalorder %s38, 1
    %p302 = por %p300, %p301
    %p303 = scmp.ne.s32.totalorder %s294, %s295
    %p304 = scmp.eq.s32.totalorder %s38, 0
    %p305 = por %p303, %p304
    %p306 = scmp.ne.s32.totalorder %s294, %s295
    %p307 = scmp.eq.s32.totalorder %s39, 1
    %p308 = por %p306, %p307
    %p310 = scmp.ne.s32.totalorder %s295, %s309
    %p311 = scmp.eq.s32.totalorder %s39, 0
    %p312 = por %p310, %p311
    %s314 = sadd.s32 %s313, 1
    %p317 = scmp.eq.s32.totalorder %s33, 1
    %p318 = scmp.ne.s32.totalorder %s313, %s315
    %p319 = scmp.eq.s32.totalorder %s33, 0
    %p320 = por %p318, %p319
    %p321 = scmp.ne.s32.totalorder %s313, %s315
    %p322 = scmp.eq.s32.totalorder %s38, 1
    %p323 = por %p321, %p322
    %p324 = scmp.ne.s32.totalorder %s315, %s316
    %p325 = scmp.eq.s32.totalorder %s38, 0
    %p326 = por %p324, %p325
    %p327 = scmp.ne.s32.totalorder %s315, %s316
    %p328 = scmp.eq.s32.totalorder %s39, 1
    %p329 = por %p327, %p328
    %p331 = scmp.ne.s32.totalorder %s316, %s330
    %p332 = scmp.eq.s32.totalorder %s39, 0
    %p333 = por %p331, %p332
    %s335 = sadd.s32 %s334, 1
    %p338 = scmp.eq.s32.totalorder %s33, 1
    %p339 = scmp.ne.s32.totalorder %s334, %s336
    %p340 = scmp.eq.s32.totalorder %s33, 0
    %p341 = por %p339, %p340
    %p342 = scmp.ne.s32.totalorder %s334, %s336
    %p343 = scmp.eq.s32.totalorder %s38, 1
    %p344 = por %p342, %p343
    %p345 = scmp.ne.s32.totalorder %s336, %s337
    %p346 = scmp.eq.s32.totalorder %s38, 0
    %p347 = por %p345, %p346
    %p348 = scmp.ne.s32.totalorder %s336, %s337
    %p349 = scmp.eq.s32.totalorder %s39, 1
    %p350 = por %p348, %p349
    %p352 = scmp.ne.s32.totalorder %s337, %s351
    %p353 = scmp.eq.s32.totalorder %s39, 0
    %p354 = por %p352, %p353
    %s356 = sadd.s32 %s355, 1
    %p359 = scmp.eq.s32.totalorder %s33, 1
    %p360 = scmp.ne.s32.totalorder %s355, %s357
    %p361 = scmp.eq.s32.totalorder %s33, 0
    %p362 = por %p360, %p361
    %p363 = scmp.ne.s32.totalorder %s355, %s357
    %p364 = scmp.eq.s32.totalorder %s38, 1
    %p365 = por %p363, %p364
    %p366 = scmp.ne.s32.totalorder %s357, %s358
    %p367 = scmp.eq.s32.totalorder %s38, 0
    %p368 = por %p366, %p367
    %p369 = scmp.ne.s32.totalorder %s357, %s358
    %p370 = scmp.eq.s32.totalorder %s39, 1
    %p371 = por %p369, %p370
    %p373 = scmp.ne.s32.totalorder %s358, %s372
    %p374 = scmp.eq.s32.totalorder %s39, 0
    %p375 = por %p373, %p374
    %s377 = sadd.s32 %s376, 1
    %p380 = scmp.eq.s32.totalorder %s33, 1
    %p381 = scmp.ne.s32.totalorder %s376, %s378
    %p382 = scmp.eq.s32.totalorder %s33, 0
    %p383 = por %p381, %p382
    %p384 = scmp.ne.s32.totalorder %s376, %s378
    %p385 = scmp.eq.s32.totalorder %s38, 1
    %p386 = por %p384, %p385
    %p387 = scmp.ne.s32.totalorder %s378, %s379
    %p388 = scmp.eq.s32.totalorder %s38, 0
    %p389 = por %p387, %p388
    %p390 = scmp.ne.s32.totalorder %s378, %s379
    %p391 = scmp.eq.s32.totalorder %s39, 1
    %p392 = por %p390, %p391
    %p394 = scmp.ne.s32.totalorder %s379, %s393
    %p395 = scmp.eq.s32.totalorder %s39, 0
    %p396 = por %p394, %p395
    %s398 = sadd.s32 %s397, 1
    %p401 = scmp.eq.s32.totalorder %s33, 1
    %p402 = scmp.ne.s32.totalorder %s397, %s399
    %p403 = scmp.eq.s32.totalorder %s33, 0
    %p404 = por %p402, %p403
    %p405 = scmp.ne.s32.totalorder %s397, %s399
    %p406 = scmp.eq.s32.totalorder %s38, 1
    %p407 = por %p405, %p406
    %p408 = scmp.ne.s32.totalorder %s399, %s400
    %p409 = scmp.eq.s32.totalorder %s38, 0
    %p410 = por %p408, %p409
    %p411 = scmp.ne.s32.totalorder %s399, %s400
    %p412 = scmp.eq.s32.totalorder %s39, 1
    %p413 = por %p411, %p412
    %p415 = scmp.ne.s32.totalorder %s400, %s414
    %p416 = scmp.eq.s32.totalorder %s39, 0
    %p417 = por %p415, %p416
    %s419 = sadd.s32 %s418, 1
    %p422 = scmp.eq.s32.totalorder %s33, 1
    %p423 = scmp.ne.s32.totalorder %s418, %s420
    %p424 = scmp.eq.s32.totalorder %s33, 0
    %p425 = por %p423, %p424
    %p426 = scmp.ne.s32.totalorder %s418, %s420
    %p427 = scmp.eq.s32.totalorder %s38, 1
    %p428 = por %p426, %p427
    %p429 = scmp.ne.s32.totalorder %s420, %s421
    %p430 = scmp.eq.s32.totalorder %s38, 0
    %p431 = por %p429, %p430
    %p432 = scmp.ne.s32.totalorder %s420, %s421
    %p433 = scmp.eq.s32.totalorder %s39, 1
    %p434 = por %p432, %p433
    %p436 = scmp.ne.s32.totalorder %s421, %s435
    %p437 = scmp.eq.s32.totalorder %s39, 0
    %p438 = por %p436, %p437
    %s440 = sadd.s32 %s439, 1
    %p443 = scmp.eq.s32.totalorder %s33, 1
    %p444 = scmp.ne.s32.totalorder %s439, %s441
    %p445 = scmp.eq.s32.totalorder %s33, 0
    %p446 = por %p444, %p445
    %p447 = scmp.ne.s32.totalorder %s439, %s441
    %p448 = scmp.eq.s32.totalorder %s38, 1
    %p449 = por %p447, %p448
    %p450 = scmp.ne.s32.totalorder %s441, %s442
    %p451 = scmp.eq.s32.totalorder %s38, 0
    %p452 = por %p450, %p451
    %p453 = scmp.ne.s32.totalorder %s441, %s442
    %p454 = scmp.eq.s32.totalorder %s39, 1
    %p455 = por %p453, %p454
    %p457 = scmp.ne.s32.totalorder %s442, %s456
    %p458 = scmp.eq.s32.totalorder %s39, 0
    %p459 = por %p457, %p458
    %s461 = sadd.s32 %s460, 1
    %p464 = scmp.eq.s32.totalorder %s33, 1
    %p465 = scmp.ne.s32.totalorder %s460, %s462
    %p466 = scmp.eq.s32.totalorder %s33, 0
    %p467 = por %p465, %p466
    %p468 = scmp.ne.s32.totalorder %s460, %s462
    %p469 = scmp.eq.s32.totalorder %s38, 1
    %p470 = por %p468, %p469
    %p471 = scmp.ne.s32.totalorder %s462, %s463
    %p472 = scmp.eq.s32.totalorder %s38, 0
    %p473 = por %p471, %p472
    %p474 = scmp.ne.s32.totalorder %s462, %s463
    %p475 = scmp.eq.s32.totalorder %s39, 1
    %p476 = por %p474, %p475
    %p478 = scmp.ne.s32.totalorder %s463, %s477
    %p479 = scmp.eq.s32.totalorder %s39, 0
    %p480 = por %p478, %p479
    %s482 = sadd.s32 %s481, 1
    %p485 = scmp.eq.s32.totalorder %s33, 1
    %p486 = scmp.ne.s32.totalorder %s481, %s483
    %p487 = scmp.eq.s32.totalorder %s33, 0
    %p488 = por %p486, %p487
    %p489 = scmp.ne.s32.totalorder %s481, %s483
    %p490 = scmp.eq.s32.totalorder %s38, 1
    %p491 = por %p489, %p490
    %p492 = scmp.ne.s32.totalorder %s483, %s484
    %p493 = scmp.eq.s32.totalorder %s38, 0
    %p494 = por %p492, %p493
    %p495 = scmp.ne.s32.totalorder %s483, %s484
    %p496 = scmp.eq.s32.totalorder %s39, 1
    %p497 = por %p495, %p496
    %p499 = scmp.ne.s32.totalorder %s484, %s498
    %p500 = scmp.eq.s32.totalorder %s39, 0
    %p501 = por %p499, %p500
    %s503 = sadd.s32 %s502, 1
    %p506 = scmp.eq.s32.totalorder %s33, 1
    %p507 = scmp.ne.s32.totalorder %s502, %s504
    %p508 = scmp.eq.s32.totalorder %s33, 0
    %p509 = por %p507, %p508
    %p510 = scmp.ne.s32.totalorder %s502, %s504
    %p511 = scmp.eq.s32.totalorder %s38, 1
    %p512 = por %p510, %p511
    %p513 = scmp.ne.s32.totalorder %s504, %s505
    %p514 = scmp.eq.s32.totalorder %s38, 0
    %p515 = por %p513, %p514
    %p516 = scmp.ne.s32.totalorder %s504, %s505
    %p517 = scmp.eq.s32.totalorder %s39, 1
    %p518 = por %p516, %p517
    %p520 = scmp.ne.s32.totalorder %s505, %s519
    %p521 = scmp.eq.s32.totalorder %s39, 0
    %p522 = por %p520, %p521
    %s523 = ssub.s32 %s33, %s40
    %p524 = scmp.eq.s32.totalorder %s523, 0
    %s526 = sadd.s32 %s525, 1
    %s527 = scalar_select %p524, %s525, %s526
    %p530 = pneg %p524
    %p531 = scmp.eq.s32.totalorder %s33, 1
    %p532 = por %p530, %p531
    %p533 = scmp.ne.s32.totalorder %s525, %s528
    %p534 = scmp.eq.s32.totalorder %s33, 0
    %p535 = por %p533, %p534
    %p536 = scmp.ne.s32.totalorder %s525, %s528
    %p537 = scmp.eq.s32.totalorder %s38, 1
    %p538 = por %p536, %p537
    %p539 = scmp.ne.s32.totalorder %s528, %s529
    %p540 = scmp.eq.s32.totalorder %s38, 0
    %p541 = por %p539, %p540
    %p542 = scmp.ne.s32.totalorder %s528, %s529
    %p543 = scmp.eq.s32.totalorder %s39, 1
    %p544 = por %p542, %p543
    %p546 = scmp.ne.s32.totalorder %s529, %s545
    %p547 = scmp.eq.s32.totalorder %s39, 0
    %p548 = por %p546, %p547
    %s549 = ssub.s32 %s33, %s40
    %p550 = scmp.eq.s32.totalorder %s549, 0
    %s552 = sadd.s32 %s551, 1
    %s553 = scalar_select %p550, %s551, %s552
    %p556 = pneg %p550
    %p557 = scmp.eq.s32.totalorder %s33, 1
    %p558 = por %p556, %p557
    %p559 = scmp.ne.s32.totalorder %s551, %s554
    %p560 = scmp.eq.s32.totalorder %s33, 0
    %p561 = por %p559, %p560
    %p562 = scmp.ne.s32.totalorder %s551, %s554
    %p563 = scmp.eq.s32.totalorder %s38, 1
    %p564 = por %p562, %p563
    %p565 = scmp.ne.s32.totalorder %s554, %s555
    %p566 = scmp.eq.s32.totalorder %s38, 0
    %p567 = por %p565, %p566
    %p568 = scmp.ne.s32.totalorder %s554, %s555
    %p569 = scmp.eq.s32.totalorder %s39, 1
    %p570 = por %p568, %p569
    %p572 = scmp.ne.s32.totalorder %s555, %s571
    %p573 = scmp.eq.s32.totalorder %s39, 0
    %p574 = por %p572, %p573
    %s575 = ssub.s32 %s33, %s40
    %p576 = scmp.eq.s32.totalorder %s575, 0
    %s578 = sadd.s32 %s577, 1
    %s579 = scalar_select %p576, %s577, %s578
    %p582 = pneg %p576
    %p583 = scmp.eq.s32.totalorder %s33, 1
    %p584 = por %p582, %p583
    %p585 = scmp.ne.s32.totalorder %s577, %s580
    %p586 = scmp.eq.s32.totalorder %s33, 0
    %p587 = por %p585, %p586
    %p588 = scmp.ne.s32.totalorder %s577, %s580
    %p589 = scmp.eq.s32.totalorder %s38, 1
    %p590 = por %p588, %p589
    %p591 = scmp.ne.s32.totalorder %s580, %s581
    %p592 = scmp.eq.s32.totalorder %s38, 0
    %p593 = por %p591, %p592
    %p594 = scmp.ne.s32.totalorder %s580, %s581
    %p595 = scmp.eq.s32.totalorder %s39, 1
    %p596 = por %p594, %p595
    %p598 = scmp.ne.s32.totalorder %s581, %s597
    %p599 = scmp.eq.s32.totalorder %s39, 0
    %p600 = por %p598, %p599
    %s601 = ssub.s32 %s33, %s40
    %p602 = scmp.eq.s32.totalorder %s601, 0
    %s604 = sadd.s32 %s603, 1
    %s605 = scalar_select %p602, %s603, %s604
    %p608 = pneg %p602
    %p609 = scmp.eq.s32.totalorder %s33, 1
    %p610 = por %p608, %p609
    %p611 = scmp.ne.s32.totalorder %s603, %s606
    %p612 = scmp.eq.s32.totalorder %s33, 0
    %p613 = por %p611, %p612
    %p614 = scmp.ne.s32.totalorder %s603, %s606
    %p615 = scmp.eq.s32.totalorder %s38, 1
    %p616 = por %p614, %p615
    %p617 = scmp.ne.s32.totalorder %s606, %s607
    %p618 = scmp.eq.s32.totalorder %s38, 0
    %p619 = por %p617, %p618
    %p620 = scmp.ne.s32.totalorder %s606, %s607
    %p621 = scmp.eq.s32.totalorder %s39, 1
    %p622 = por %p620, %p621
    %p624 = scmp.ne.s32.totalorder %s607, %s623
    %p625 = scmp.eq.s32.totalorder %s39, 0
    %p626 = por %p624, %p625
    %s627 = ssub.s32 %s33, %s40
    %p628 = scmp.eq.s32.totalorder %s627, 0
    %s630 = sadd.s32 %s629, 1
    %s631 = scalar_select %p628, %s629, %s630
    %p634 = pneg %p628
    %p635 = scmp.eq.s32.totalorder %s33, 1
    %p636 = por %p634, %p635
    %p637 = scmp.ne.s32.totalorder %s629, %s632
    %p638 = scmp.eq.s32.totalorder %s33, 0
    %p639 = por %p637, %p638
    %p640 = scmp.ne.s32.totalorder %s629, %s632
    %p641 = scmp.eq.s32.totalorder %s38, 1
    %p642 = por %p640, %p641
    %p643 = scmp.ne.s32.totalorder %s632, %s633
    %p644 = scmp.eq.s32.totalorder %s38, 0
    %p645 = por %p643, %p644
    %p646 = scmp.ne.s32.totalorder %s632, %s633
    %p647 = scmp.eq.s32.totalorder %s39, 1
    %p648 = por %p646, %p647
    %p650 = scmp.ne.s32.totalorder %s633, %s649
    %p651 = scmp.eq.s32.totalorder %s39, 0
    %p652 = por %p650, %p651
    %p653 = scmp.le.s32.totalorder 1, %s33
    %p654 = scmp.lt.s32.totalorder %s33, 3
    %p655 = pnand %p653, %p654
    %p656 = pneg %p655
    // Predicated region
    $region9: #{transformer_forward.6} parent=5 // pred_check
      _
    $region10: #{transformer_forward.6} parent=5 // pred_check_branch
      %658 = sbr.rel (%p655) target = $region12
    $region11: #{transformer_forward.6} parent=5 // pred_region
      %s659 = ssub.s32 %s33, 1
      // Predicated region
      $region13: #{transformer_forward.6} parent=11 // pred_check
        %p660 = pneg %p106
      $region14: #{transformer_forward.6} parent=11 // pred_check_branch
        %662 = sbr.rel (%p660) target = $region16
      $region15: #{transformer_forward.6} parent=11 // pred_region
        _
      $region16: #{transformer_forward.6} parent=11 // pred_fallthru
        _
      // Predicated region
      $region17: #{transformer_forward.6} parent=11 // pred_check
        %p663 = pneg %p127
      $region18: #{transformer_forward.6} parent=11 // pred_check_branch
        %665 = sbr.rel (%p663) target = $region20
      $region19: #{transformer_forward.6} parent=11 // pred_region
        _
      $region20: #{transformer_forward.6} parent=11 // pred_fallthru
        _
      // Predicated region
      $region21: #{transformer_forward.6} parent=11 // pred_check
        %p666 = pneg %p200
      $region22: #{transformer_forward.6} parent=11 // pred_check_branch
        %668 = sbr.rel (%p666) target = $region24
      $region23: #{transformer_forward.6} parent=11 // pred_region
        _
      $region24: #{transformer_forward.6} parent=11 // pred_fallthru
        _
      // Predicated region
      $region25: #{transformer_forward.6} parent=11 // pred_check
        %p669 = pneg %p221
      $region26: #{transformer_forward.6} parent=11 // pred_check_branch
        %671 = sbr.rel (%p669) target = $region28
      $region27: #{transformer_forward.6} parent=11 // pred_region
        _
      $region28: #{transformer_forward.6} parent=11 // pred_fallthru
        _
      // Predicated region
      $region29: #{transformer_forward.6} parent=11 // pred_check
        %p672 = pneg %p242
      $region30: #{transformer_forward.6} parent=11 // pred_check_branch
        %674 = sbr.rel (%p672) target = $region32
      $region31: #{transformer_forward.6} parent=11 // pred_region
        _
      $region32: #{transformer_forward.6} parent=11 // pred_fallthru
        _
      // Predicated region
      $region33: #{transformer_forward.6} parent=11 // pred_check
        %p675 = pneg %p263
      $region34: #{transformer_forward.6} parent=11 // pred_check_branch
        %677 = sbr.rel (%p675) target = $region36
      $region35: #{transformer_forward.6} parent=11 // pred_region
        _
      $region36: #{transformer_forward.6} parent=11 // pred_fallthru
        _
      // Predicated region
      $region37: #{transformer_forward.6} parent=11 // pred_check
        %p678 = pneg %p284
      $region38: #{transformer_forward.6} parent=11 // pred_check_branch
        %680 = sbr.rel (%p678) target = $region40
      $region39: #{transformer_forward.6} parent=11 // pred_region
        _
      $region40: #{transformer_forward.6} parent=11 // pred_fallthru
        _
      // Predicated region
      $region41: #{transformer_forward.6} parent=11 // pred_check
        %p681 = pneg %p305
      $region42: #{transformer_forward.6} parent=11 // pred_check_branch
        %683 = sbr.rel (%p681) target = $region44
      $region43: #{transformer_forward.6} parent=11 // pred_region
        _
      $region44: #{transformer_forward.6} parent=11 // pred_fallthru
        _
      // Predicated region
      $region45: #{transformer_forward.6} parent=11 // pred_check
        %p684 = pneg %p326
      $region46: #{transformer_forward.6} parent=11 // pred_check_branch
        %686 = sbr.rel (%p684) target = $region48
      $region47: #{transformer_forward.6} parent=11 // pred_region
        _
      $region48: #{transformer_forward.6} parent=11 // pred_fallthru
        _
      // Predicated region
      $region49: #{transformer_forward.6} parent=11 // pred_check
        %p687 = pneg %p347
      $region50: #{transformer_forward.6} parent=11 // pred_check_branch
        %689 = sbr.rel (%p687) target = $region52
      $region51: #{transformer_forward.6} parent=11 // pred_region
        _
      $region52: #{transformer_forward.6} parent=11 // pred_fallthru
        _
      // Predicated region
      $region53: #{transformer_forward.6} parent=11 // pred_check
        %p690 = pneg %p368
      $region54: #{transformer_forward.6} parent=11 // pred_check_branch
        %692 = sbr.rel (%p690) target = $region56
      $region55: #{transformer_forward.6} parent=11 // pred_region
        _
      $region56: #{transformer_forward.6} parent=11 // pred_fallthru
        _
      // Predicated region
      $region57: #{transformer_forward.6} parent=11 // pred_check
        %p693 = pneg %p389
      $region58: #{transformer_forward.6} parent=11 // pred_check_branch
        %695 = sbr.rel (%p693) target = $region60
      $region59: #{transformer_forward.6} parent=11 // pred_region
        _
      $region60: #{transformer_forward.6} parent=11 // pred_fallthru
        _
      // Predicated region
      $region61: #{transformer_forward.6} parent=11 // pred_check
        %p696 = pneg %p410
      $region62: #{transformer_forward.6} parent=11 // pred_check_branch
        %698 = sbr.rel (%p696) target = $region64
      $region63: #{transformer_forward.6} parent=11 // pred_region
        _
      $region64: #{transformer_forward.6} parent=11 // pred_fallthru
        _
      // Predicated region
      $region65: #{transformer_forward.6} parent=11 // pred_check
        %p699 = pneg %p431
      $region66: #{transformer_forward.6} parent=11 // pred_check_branch
        %701 = sbr.rel (%p699) target = $region68
      $region67: #{transformer_forward.6} parent=11 // pred_region
        _
      $region68: #{transformer_forward.6} parent=11 // pred_fallthru
        _
      // Predicated region
      $region69: #{transformer_forward.6} parent=11 // pred_check
        %p702 = pneg %p452
      $region70: #{transformer_forward.6} parent=11 // pred_check_branch
        %704 = sbr.rel (%p702) target = $region72
      $region71: #{transformer_forward.6} parent=11 // pred_region
        _
      $region72: #{transformer_forward.6} parent=11 // pred_fallthru
        _
      // Predicated region
      $region73: #{transformer_forward.6} parent=11 // pred_check
        %p705 = pneg %p473
      $region74: #{transformer_forward.6} parent=11 // pred_check_branch
        %707 = sbr.rel (%p705) target = $region76
      $region75: #{transformer_forward.6} parent=11 // pred_region
        _
      $region76: #{transformer_forward.6} parent=11 // pred_fallthru
        _
      // Predicated region
      $region77: #{transformer_forward.6} parent=11 // pred_check
        %p708 = pneg %p494
      $region78: #{transformer_forward.6} parent=11 // pred_check_branch
        %710 = sbr.rel (%p708) target = $region80
      $region79: #{transformer_forward.6} parent=11 // pred_region
        _
      $region80: #{transformer_forward.6} parent=11 // pred_fallthru
        _
      // Predicated region
      $region81: #{transformer_forward.6} parent=11 // pred_check
        %p711 = pneg %p515
      $region82: #{transformer_forward.6} parent=11 // pred_check_branch
        %713 = sbr.rel (%p711) target = $region84
      $region83: #{transformer_forward.6} parent=11 // pred_region
        _
      $region84: #{transformer_forward.6} parent=11 // pred_fallthru
        _
    $region12: #{transformer_forward.6} parent=5 // pred_fallthru
      _
    %p714 = scmp.lt.s32.totalorder %s33, 2
    // Predicated region
    $region85: #{transformer_forward.6} parent=5 // pred_check
      %p715 = pneg %p714
    $region86: #{transformer_forward.6} parent=5 // pred_check_branch
      %717 = sbr.rel (%p715) target = $region88
    $region87: #{transformer_forward.6} parent=5 // pred_region
      // Predicated region
      $region89: #{transformer_forward.6} parent=87 // pred_check
        %p718 = pneg %p53
      $region90: #{transformer_forward.6} parent=87 // pred_check_branch
        %720 = sbr.rel (%p718) target = $region92
      $region91: #{transformer_forward.6} parent=87 // pred_region
        %p721 = scmp.lt.s32.totalorder %s33, 1
        %s722 = scalar_select %p721, %s33, 1
        %s723 = scalar_lea.vmem %s0, %s722
      $region92: #{transformer_forward.6} parent=87 // pred_fallthru
        _
      // Predicated region
      $region93: #{transformer_forward.6} parent=87 // pred_check
        %p724 = pneg %p79
      $region94: #{transformer_forward.6} parent=87 // pred_check_branch
        %726 = sbr.rel (%p724) target = $region96
      $region95: #{transformer_forward.6} parent=87 // pred_region
        %p727 = scmp.lt.s32.totalorder %s33, 1
        %s728 = scalar_select %p727, %s33, 1
        %s729 = scalar_lea.vmem %s1, %s728
      $region96: #{transformer_forward.6} parent=87 // pred_fallthru
        _
      // Predicated region
      $region97: #{transformer_forward.6} parent=87 // pred_check
        %p730 = pneg %p147
      $region98: #{transformer_forward.6} parent=87 // pred_check_branch
        %732 = sbr.rel (%p730) target = $region100
      $region99: #{transformer_forward.6} parent=87 // pred_region
        %p733 = scmp.lt.s32.totalorder %s33, 1
        %s734 = scalar_select %p733, %s33, 1
        %s735 = smul.addr %s734, 8
        %s736 = scalar_lea.vmem %s4, %s735
      $region100: #{transformer_forward.6} parent=87 // pred_fallthru
        _
      // Predicated region
      $region101: #{transformer_forward.6} parent=87 // pred_check
        %p737 = pneg %p173
      $region102: #{transformer_forward.6} parent=87 // pred_check_branch
        %739 = sbr.rel (%p737) target = $region104
      $region103: #{transformer_forward.6} parent=87 // pred_region
        %p740 = scmp.lt.s32.totalorder %s33, 1
        %s741 = scalar_select %p740, %s33, 1
        %s742 = smul.addr %s741, 2
        %s743 = smul.addr %s742, 8
        %s744 = scalar_lea.vmem %s5, %s743
      $region104: #{transformer_forward.6} parent=87 // pred_fallthru
        _
    $region88: #{transformer_forward.6} parent=5 // pred_fallthru
      _
    %p745 = scmp.le.s32.totalorder 1, %s33
    %p746 = scmp.lt.s32.totalorder %s33, 3
    %p747 = pnand %p745, %p746
    %p748 = pneg %p747
    // Predicated region
    $region105: #{transformer_forward.6} parent=5 // pred_check
      _
    $region106: #{transformer_forward.6} parent=5 // pred_check_branch
      %750 = sbr.rel (%p747) target = $region108
    $region107: #{transformer_forward.6} parent=5 // pred_region
      %s751 = ssub.s32 %s33, 1
      %p752 = scmp.lt.s32.totalorder %s38, 1
      %s753 = scalar_select %p752, %s38, 1
      %s754 = scalar_lea.vmem %s0, %s753
      %p755 = pneg %p59
      %p756 = pneg %p56
      %p757 = scmp.lt.s32.totalorder %s38, 1
      %s758 = scalar_select %p757, %s38, 1
      %s759 = scalar_lea.vmem %s1, %s758
      %p760 = pneg %p85
      %p761 = pneg %p82
      %p762 = pneg %p106
      %p763 = pneg %p103
      %p764 = pneg %p127
      %p765 = pneg %p124
      %p766 = scmp.lt.s32.totalorder %s38, 1
      %s767 = scalar_select %p766, %s38, 1
      %s768 = smul.addr %s767, 8
      %s769 = scalar_lea.vmem %s4, %s768
      %p770 = pneg %p153
      %p771 = pneg %p150
      %p772 = scmp.lt.s32.totalorder %s38, 1
      %s773 = scalar_select %p772, %s38, 1
      %s774 = smul.addr %s773, 2
      %s775 = smul.addr %s774, 8
      %s776 = scalar_lea.vmem %s5, %s775
      %p777 = pneg %p179
      %p778 = pneg %p176
      %p779 = pneg %p200
      %p780 = pneg %p197
      %p781 = pneg %p221
      %p782 = pneg %p218
      %p783 = pneg %p242
      %p784 = pneg %p239
      %p785 = pneg %p263
      %p786 = pneg %p260
      %p787 = pneg %p284
      %p788 = pneg %p281
      %p789 = pneg %p305
      %p790 = pneg %p302
      %p791 = pneg %p326
      %p792 = pneg %p323
      %p793 = pneg %p347
      %p794 = pneg %p344
      %p795 = pneg %p368
      %p796 = pneg %p365
      %p797 = pneg %p389
      %p798 = pneg %p386
      %p799 = pneg %p410
      %p800 = pneg %p407
      %p801 = pneg %p431
      %p802 = pneg %p428
      %p803 = pneg %p452
      %p804 = pneg %p449
      %p805 = pneg %p473
      %p806 = pneg %p470
      %p807 = pneg %p494
      %p808 = pneg %p491
      %p809 = pneg %p515
      %p810 = pneg %p512
      %p811 = pneg %p541
      %p812 = pneg %p538
      %p813 = scmp.lt.s32.totalorder %s38, 1
      %s814 = scalar_select %p813, %s38, 1
      %s815 = smul.addr %s814, 8
      %s816 = scalar_lea.vmem %s22, %s815
      %p817 = pneg %p567
      %p818 = pneg %p564
      %p819 = scmp.lt.s32.totalorder %s38, 1
      %s820 = scalar_select %p819, %s38, 1
      %s821 = smul.addr %s820, 8
      %s822 = scalar_lea.vmem %s23, %s821
      %p823 = pneg %p593
      %p824 = pneg %p590
      %p825 = scmp.lt.s32.totalorder %s38, 1
      %s826 = scalar_select %p825, %s38, 1
      %s827 = scalar_lea.vmem %s24, %s826
      %p828 = pneg %p619
      %p829 = pneg %p616
      %p830 = scmp.lt.s32.totalorder %s38, 1
      %s831 = scalar_select %p830, %s38, 1
      %s832 = smul.addr %s831, 8
      %s833 = scalar_lea.vmem %s25, %s832
      %p834 = pneg %p645
      %p835 = pneg %p642
      %p836 = scmp.lt.s32.totalorder %s38, 1
      %s837 = scalar_select %p836, %s38, 1
      %s838 = scalar_lea.vmem %s26, %s837
      %p839 = scmp.lt.s32.totalorder %s38, 1
      %s840 = scalar_select %p839, %s38, 1
      %s841 = scalar_lea.vmem %s0, %s840
      %p842 = scmp.lt.s32.totalorder %s38, 1
      %s843 = scalar_select %p842, %s38, 1
      %s844 = scalar_lea.vmem %s1, %s843
      %p845 = scmp.lt.s32.totalorder %s38, 1
      %s846 = scalar_select %p845, %s38, 1
      %s847 = smul.addr %s846, 8
      %s848 = scalar_lea.vmem %s4, %s847
      %p849 = scmp.lt.s32.totalorder %s38, 1
      %s850 = scalar_select %p849, %s38, 1
      %s851 = smul.addr %s850, 2
      %s852 = smul.addr %s851, 8
      %s853 = scalar_lea.vmem %s5, %s852
      %p854 = scmp.lt.s32.totalorder %s38, 1
      %s855 = scalar_select %p854, %s38, 1
      %s856 = smul.addr %s855, 8
      %s857 = scalar_lea.vmem %s22, %s856
      %p858 = scmp.lt.s32.totalorder %s38, 1
      %s859 = scalar_select %p858, %s38, 1
      %s860 = smul.addr %s859, 8
      %s861 = scalar_lea.vmem %s23, %s860
      %p862 = scmp.lt.s32.totalorder %s38, 1
      %s863 = scalar_select %p862, %s38, 1
      %s864 = scalar_lea.vmem %s24, %s863
      %p865 = scmp.lt.s32.totalorder %s38, 1
      %s866 = scalar_select %p865, %s38, 1
      %s867 = smul.addr %s866, 8
      %s868 = scalar_lea.vmem %s25, %s867
      %p869 = scmp.lt.s32.totalorder %s38, 1
      %s870 = scalar_select %p869, %s38, 1
      %s871 = scalar_lea.vmem %s26, %s870
      %v873 = vld [vmem:[%s848] sm:$0xff]
      %v874 = vld [vmem:[%s853] sm:$0xff]
      %v875 = vld [vmem:[%s853 + $0x8] sm:$0xff]
      %v876 = vld [vmem:[%s841] sm:$0x1]
      %v877 = vld [vmem:[%s2] sm:$0x1]
      %v878 = vpack.c.bf16 %v873, %v873
      %v879 = vld [vmem:[%s6] sm:$0xf]
      %v880 = vld [vmem:[%s6 + $0x4] sm:$0xf]
      %v881 = vld [vmem:[%s6 + $0x8] sm:$0xf]
      %v882 = vld [vmem:[%s6 + $0xc] sm:$0xf]
      %v887 = vunpack.c.l.b16 %v879
      %v888 = vunpack.c.l.b16 %v880
      %v889 = vunpack.c.l.b16 %v881
      %v890 = vunpack.c.l.b16 %v882
      %v891 = vpack.c.b16 %v888, %v887
      %v892 = vpack.c.b16 %v890, %v889
      %vm895 = vcmask 261120
      %v897 = vsel %vm895, %v878, 0
      %899 = vmatprep.subr.bf16.mxu0 0
      %900 = vmatpush1.bf16.msra.mxu0 0
      %901 = vmatprep.subr.bf16.mxu0 0
      %902 = vmatpush1.bf16.msra.mxu0 0
      %903 = vmatprep.subr.bf16.mxu0 0
      %904 = vmatpush1.bf16.msra.mxu0 0
      %905 = vmatprep.subr.bf16.mxu0 0
      %906 = vmatpush1.bf16.msra.mxu0 0
      %907 = vmatprep.subr.bf16.mxu0 0
      %908 = vmatpush1.bf16.msra.mxu0 0
      %909 = vmatprep.subr.bf16.mxu0 0
      %910 = vmatpush1.bf16.msra.mxu0 0
      %911 = vmatprep.subr.bf16.mxu0 0
      %912 = vmatpush1.bf16.msra.mxu0 %v892
      %913 = vmatprep.subr.bf16.mxu0 0
      %914 = vmatpush1.bf16.msra.mxu0 %v891
      %915 = vmatprep.subr.bf16.mxu0 0
      %916 = vmatpush2.bf16.msra.mxu0 0
      %917 = vmatprep.subr.bf16.mxu0 0
      %918 = vmatpush2.bf16.msra.mxu0 0
      %919 = vmatprep.subr.bf16.mxu0 0
      %920 = vmatpush2.bf16.msra.mxu0 0
      %921 = vmatprep.subr.bf16.mxu0 0
      %922 = vmatpush2.bf16.msra.mxu0 0
      %923 = vmatprep.subr.bf16.mxu0 0
      %924 = vmatpush2.bf16.msra.mxu0 0
      %925 = vmatprep.subr.bf16.mxu0 0
      %926 = vmatpush2.bf16.msra.mxu0 0
      %927 = vmatprep.subr.bf16.mxu0 0
      %928 = vmatpush2.bf16.msra.mxu0 0
      %929 = vmatprep.subr.bf16.mxu0 0
      %930 = vmatpush2.bf16.msra.mxu0 0
      %931 = vmatprep.mubr.bf16.mxu0 0
      %932 = vmatmul.mubr.bf16.gmra.mxu0 %v897
      %v933 = vpop.f32.mrf.mxu0
      %v934 = vadd.f32 0.0, %v933
      %v935 = vpop.f32.mrf.mxu0
      %v936 = vpop.f32.mrf.mxu0
      %v937 = vpop.f32.mrf.mxu0
      %938 = vdwg.mxu0
      %v939 = vld [vmem:[%s7] sm:$0xf]
      %v940 = vld [vmem:[%s7 + $0x4] sm:$0xf]
      %v941 = vld [vmem:[%s7 + $0x8] sm:$0xf]
      %v942 = vld [vmem:[%s7 + $0xc] sm:$0xf]
      %v947 = vunpack.c.l.b16 %v939
      %v948 = vunpack.c.l.b16 %v940
      %v949 = vunpack.c.l.b16 %v941
      %v950 = vunpack.c.l.b16 %v942
      %v951 = vpack.c.b16 %v948, %v947
      %v952 = vpack.c.b16 %v950, %v949
      %955 = vmatprep.subr.bf16.mxu0 0
      %956 = vmatpush1.bf16.msra.mxu0 0
      %957 = vmatprep.subr.bf16.mxu0 0
      %958 = vmatpush1.bf16.msra.mxu0 0
      %959 = vmatprep.subr.bf16.mxu0 0
      %960 = vmatpush1.bf16.msra.mxu0 0
      %961 = vmatprep.subr.bf16.mxu0 0
      %962 = vmatpush1.bf16.msra.mxu0 0
      %963 = vmatprep.subr.bf16.mxu0 0
      %964 = vmatpush1.bf16.msra.mxu0 0
      %965 = vmatprep.subr.bf16.mxu0 0
      %966 = vmatpush1.bf16.msra.mxu0 0
      %967 = vmatprep.subr.bf16.mxu0 0
      %968 = vmatpush1.bf16.msra.mxu0 %v952
      %969 = vmatprep.subr.bf16.mxu0 0
      %970 = vmatpush1.bf16.msra.mxu0 %v951
      %971 = vmatprep.subr.bf16.mxu0 0
      %972 = vmatpush2.bf16.msra.mxu0 0
      %973 = vmatprep.subr.bf16.mxu0 0
      %974 = vmatpush2.bf16.msra.mxu0 0
      %975 = vmatprep.subr.bf16.mxu0 0
      %976 = vmatpush2.bf16.msra.mxu0 0
      %977 = vmatprep.subr.bf16.mxu0 0
      %978 = vmatpush2.bf16.msra.mxu0 0
      %979 = vmatprep.subr.bf16.mxu0 0
      %980 = vmatpush2.bf16.msra.mxu0 0
      %981 = vmatprep.subr.bf16.mxu0 0
      %982 = vmatpush2.bf16.msra.mxu0 0
      %983 = vmatprep.subr.bf16.mxu0 0
      %984 = vmatpush2.bf16.msra.mxu0 0
      %985 = vmatprep.subr.bf16.mxu0 0
      %986 = vmatpush2.bf16.msra.mxu0 0
      %987 = vmatprep.mubr.bf16.mxu0 0
      %988 = vmatmul.mubr.bf16.gmra.mxu0 %v897
      %v989 = vpop.f32.mrf.mxu0
      %v990 = vadd.f32 0.0, %v989
      %v991 = vpop.f32.mrf.mxu0
      %v992 = vpop.f32.mrf.mxu0
      %v993 = vpop.f32.mrf.mxu0
      %994 = vdwg.mxu0
      %vm995 = vcmp.gt.f32.partialorder %v876, 0.0
      %v996 = vsel %vm995, 1, 0
      %v997 = vlaneseq
      %v998 = vshrl.u32 %v997, 7
      %v999 = vsub.s32 0, %v998
      %v1000 = vrot.slane %v996, %v999
      %vm1001 = vcmp.eq.s32.totalorder %v1000, 1
      %v1002 = vlaneseq
      %v1003 = vshrl.u32 %v1002, 7
      %v1004 = vlaneseq
      %v1005 = vand.u32 %v1004, 127
      %vm1006 = vcmp.le.s32.totalorder %v1005, %v1003
      %vm1007 = vmand %vm1001, %vm1006
      %v1008 = vpack.c.bf16 %v990, %v990
      %vm1009 = vcmp.gt.f32.partialorder %v990, 0.0
      %v1010 = vadd.f32 %v990, 1.0
      %v1011 = vmul.f32 %v990, 1.442695
      %v1012 = vpow.pop %v1011
      %v1013 = vsel %vm1009, %v1010, %v1012
      %v1014 = vpack.c.bf16 %v1013, %v1013
      %1015 = vxpose.xlu0.c.b16.start [1/8] %v1014, 128
      %1016 = vxpose.xlu0.c.b16.cont [2/8] 0, 128
      %1017 = vxpose.xlu0.c.b16.cont [3/8] 0, 128
      %1018 = vxpose.xlu0.c.b16.cont [4/8] 0, 128
      %1019 = vxpose.xlu0.c.b16.cont [5/8] 0, 128
      %1020 = vxpose.xlu0.c.b16.cont [6/8] 0, 128
      %1021 = vxpose.xlu0.c.b16.cont [7/8] 0, 128
      %1022 = vxpose.xlu0.c.b16.end [8/8] 0, 128
      %v1023 = vpop.trf.xlu0
      %v1024 = vpop.trf.xlu0
      %v1025 = vpop.trf.xlu0
      %v1026 = vpop.trf.xlu0
      %v1027 = vpop.trf.xlu0
      %v1028 = vpop.trf.xlu0
      %v1029 = vpop.trf.xlu0
      %v1030 = vpop.trf.xlu0
      %1032 = vrot.lane.b32.xlu0 %v1008, 112
      %v1033 = vpop.permute.xlu0 %1032
      %vm1034 = vcmask 64512
      %v1036 = vsel %vm1034, %v1023, 0
      %vm1038 = vcmask 1043456
      %v1040 = vsel %vm1038, %v1033, 0
      %1042 = vmatprep.subr.bf16.mxu0 0
      %1043 = vmatpush1.bf16.msra.mxu0 0
      %1044 = vmatprep.subr.bf16.mxu0 0
      %1045 = vmatpush1.bf16.msra.mxu0 0
      %1046 = vmatprep.subr.bf16.mxu0 0
      %1047 = vmatpush1.bf16.msra.mxu0 0
      %1048 = vmatprep.subr.bf16.mxu0 0
      %1049 = vmatpush1.bf16.msra.mxu0 0
      %1050 = vmatprep.subr.bf16.mxu0 0
      %1051 = vmatpush1.bf16.msra.mxu0 0
      %1052 = vmatprep.subr.bf16.mxu0 0
      %1053 = vmatpush1.bf16.msra.mxu0 0
      %1054 = vmatprep.subr.bf16.mxu0 0
      %1055 = vmatpush1.bf16.msra.mxu0 0
      %1056 = vmatprep.subr.bf16.mxu0 0
      %1057 = vmatpush1.bf16.msra.mxu0 %v1040
      %1058 = vmatprep.subr.bf16.mxu0 0
      %1059 = vmatpush2.bf16.msra.mxu0 0
      %1060 = vmatprep.subr.bf16.mxu0 0
      %1061 = vmatpush2.bf16.msra.mxu0 0
      %1062 = vmatprep.subr.bf16.mxu0 0
      %1063 = vmatpush2.bf16.msra.mxu0 0
      %1064 = vmatprep.subr.bf16.mxu0 0
      %1065 = vmatpush2.bf16.msra.mxu0 0
      %1066 = vmatprep.subr.bf16.mxu0 0
      %1067 = vmatpush2.bf16.msra.mxu0 0
      %1068 = vmatprep.subr.bf16.mxu0 0
      %1069 = vmatpush2.bf16.msra.mxu0 0
      %1070 = vmatprep.subr.bf16.mxu0 0
      %1071 = vmatpush2.bf16.msra.mxu0 0
      %1072 = vmatprep.subr.bf16.mxu0 0
      %1073 = vmatpush2.bf16.msra.mxu0 0
      %1074 = vmatprep.mubr.bf16.mxu0 0
      %1075 = vmatmul.mubr.bf16.gmra.mxu0 %v1036
      %v1076 = vpop.f32.mrf.mxu0
      %v1077 = vadd.f32 0.0, %v1076
      %v1078 = vpop.f32.mrf.mxu0
      %v1079 = vpop.f32.mrf.mxu0
      %v1080 = vpop.f32.mrf.mxu0
      %1081 = vdwg.mxu0
      %v1082 = vsel %vm1034, %v1013, 0.0
      %v1083 = vrot.slane %v1082, 4
      %v1084 = vadd.f32 %v1082, %v1083
      %v1085 = vrot.slane %v1084, 2
      %v1086 = vadd.f32 %v1084, %v1085
      %v1087 = vrot.slane %v1086, 1
      %v1088 = vadd.f32 %v1086, %v1087
      %v1089 = vmul.f32 %v934, 0.35355338
      %v1090 = vpack.c.bf16 %v1089, %v1089
      %v1092 = vsel %vm1034, %v1090, 0
      %v1095 = vsel %vm1034, %v1008, 0
      %1097 = vmatprep.subr.bf16.mxu0 0
      %1098 = vmatpush1.bf16.xpose.msra.mxu0 0
      %1099 = vmatprep.subr.bf16.mxu0 0
      %1100 = vmatpush1.bf16.xpose.msra.mxu0 0
      %1101 = vmatprep.subr.bf16.mxu0 0
      %1102 = vmatpush1.bf16.xpose.msra.mxu0 0
      %1103 = vmatprep.subr.bf16.mxu0 0
      %1104 = vmatpush1.bf16.xpose.msra.mxu0 0
      %1105 = vmatprep.subr.bf16.mxu0 0
      %1106 = vmatpush1.bf16.xpose.msra.mxu0 0
      %1107 = vmatprep.subr.bf16.mxu0 0
      %1108 = vmatpush1.bf16.xpose.msra.mxu0 0
      %1109 = vmatprep.subr.bf16.mxu0 0
      %1110 = vmatpush1.bf16.xpose.msra.mxu0 0
      %1111 = vmatprep.subr.bf16.mxu0 0
      %1112 = vmatpush1.bf16.xpose.msra.mxu0 %v1095
      %1113 = vmatprep.subr.bf16.mxu0 0
      %1114 = vmatpush2.bf16.xpose.msra.mxu0 0
      %1115 = vmatprep.subr.bf16.mxu0 0
      %1116 = vmatpush2.bf16.xpose.msra.mxu0 0
      %1117 = vmatprep.subr.bf16.mxu0 0
      %1118 = vmatpush2.bf16.xpose.msra.mxu0 0
      %1119 = vmatprep.subr.bf16.mxu0 0
      %1120 = vmatpush2.bf16.xpose.msra.mxu0 0
      %1121 = vmatprep.subr.bf16.mxu0 0
      %1122 = vmatpush2.bf16.xpose.msra.mxu0 0
      %1123 = vmatprep.subr.bf16.mxu0 0
      %1124 = vmatpush2.bf16.xpose.msra.mxu0 0
      %1125 = vmatprep.subr.bf16.mxu0 0
      %1126 = vmatpush2.bf16.xpose.msra.mxu0 0
      %1127 = vmatprep.subr.bf16.mxu0 0
      %1128 = vmatpush2.bf16.xpose.msra.mxu0 0
      %1129 = vmatprep.mubr.bf16.mxu0 0
      %1130 = vmatmul.mubr.bf16.gmra.mxu0 %v1092
      %v1131 = vpop.f32.mrf.mxu0
      %v1132 = vadd.f32 0.0, %v1131
      %v1133 = vpop.f32.mrf.mxu0
      %v1134 = vpop.f32.mrf.mxu0
      %v1135 = vpop.f32.mrf.mxu0
      %1136 = vdwg.mxu0
      %v1137 = vsel %vm1007, %v1132, -1e+30
      %v1138 = vsel %vm1034, %v1137, -inf
      %1139 = vmax.xlane.f32.xlu0 %v1138
      %v1140 = vpop.xlane.xlu0 %1139
      %v1141 = vsub.f32 %v1137, %v1140
      %v1142 = vmul.f32 %v1141, 1.442695
      %v1143 = vpow.pop %v1142
      %v1144 = vsel %vm1034, %v1143, 0.0
      %1145 = vadd.xlane.f32.xlu0 %v1144
      %v1146 = vpop.xlane.xlu0 %1145
      %v1147 = vrcp.pop %v1146
      %v1148 = vmul.f32 %v1143, %v1147
      %v1149 = vpack.c.bf16 %v1148, %v1148
      %v1151 = vsel %vm1034, %v1149, 0
      %1153 = vmatprep.subr.bf16.mxu0 0
      %1154 = vmatpush1.bf16.msra.mxu0 0
      %1155 = vmatprep.subr.bf16.mxu0 0
      %1156 = vmatpush1.bf16.msra.mxu0 0
      %1157 = vmatprep.subr.bf16.mxu0 0
      %1158 = vmatpush1.bf16.msra.mxu0 0
      %1159 = vmatprep.subr.bf16.mxu0 0
      %1160 = vmatpush1.bf16.msra.mxu0 0
      %1161 = vmatprep.subr.bf16.mxu0 0
      %1162 = vmatpush1.bf16.msra.mxu0 0
      %1163 = vmatprep.subr.bf16.mxu0 0
      %1164 = vmatpush1.bf16.msra.mxu0 0
      %1165 = vmatprep.subr.bf16.mxu0 0
      %1166 = vmatpush1.bf16.msra.mxu0 0
      %1167 = vmatprep.subr.bf16.mxu0 0
      %1168 = vmatpush1.bf16.msra.mxu0 %v1040
      %1169 = vmatprep.subr.bf16.mxu0 0
      %1170 = vmatpush2.bf16.msra.mxu0 0
      %1171 = vmatprep.subr.bf16.mxu0 0
      %1172 = vmatpush2.bf16.msra.mxu0 0
      %1173 = vmatprep.subr.bf16.mxu0 0
      %1174 = vmatpush2.bf16.msra.mxu0 0
      %1175 = vmatprep.subr.bf16.mxu0 0
      %1176 = vmatpush2.bf16.msra.mxu0 0
      %1177 = vmatprep.subr.bf16.mxu0 0
      %1178 = vmatpush2.bf16.msra.mxu0 0
      %1179 = vmatprep.subr.bf16.mxu0 0
      %1180 = vmatpush2.bf16.msra.mxu0 0
      %1181 = vmatprep.subr.bf16.mxu0 0
      %1182 = vmatpush2.bf16.msra.mxu0 0
      %1183 = vmatprep.subr.bf16.mxu0 0
      %1184 = vmatpush2.bf16.msra.mxu0 0
      %1185 = vmatprep.mubr.bf16.mxu0 0
      %1186 = vmatmul.mubr.bf16.gmra.mxu0 %v1151
      %v1187 = vpop.f32.mrf.mxu0
      %v1188 = vadd.f32 0.0, %v1187
      %v1189 = vpop.f32.mrf.mxu0
      %v1190 = vpop.f32.mrf.mxu0
      %v1191 = vpop.f32.mrf.mxu0
      %1192 = vdwg.mxu0
      %1193 = vst.msk [vmem:[#allocation2] sm:$0xff] %vm1034, %v1188
      %1195 = vrot.lane.b32.xlu0 %v1090, 120
      %v1196 = vpop.permute.xlu0 %1195
      %v1198 = vsel %vm1034, %v1196, 0
      %1200 = vmatprep.subr.bf16.mxu0 0
      %1201 = vmatpush1.bf16.xpose.msra.mxu0 0
      %1202 = vmatprep.subr.bf16.mxu0 0
      %1203 = vmatpush1.bf16.xpose.msra.mxu0 0
      %1204 = vmatprep.subr.bf16.mxu0 0
      %1205 = vmatpush1.bf16.xpose.msra.mxu0 0
      %1206 = vmatprep.subr.bf16.mxu0 0
      %1207 = vmatpush1.bf16.xpose.msra.mxu0 0
      %1208 = vmatprep.subr.bf16.mxu0 0
      %1209 = vmatpush1.bf16.xpose.msra.mxu0 0
      %1210 = vmatprep.subr.bf16.mxu0 0
      %1211 = vmatpush1.bf16.xpose.msra.mxu0 0
      %1212 = vmatprep.subr.bf16.mxu0 0
      %1213 = vmatpush1.bf16.xpose.msra.mxu0 0
      %1214 = vmatprep.subr.bf16.mxu0 0
      %1215 = vmatpush1.bf16.xpose.msra.mxu0 %v1095
      %1216 = vmatprep.subr.bf16.mxu0 0
      %1217 = vmatpush2.bf16.xpose.msra.mxu0 0
      %1218 = vmatprep.subr.bf16.mxu0 0
      %1219 = vmatpush2.bf16.xpose.msra.mxu0 0
      %1220 = vmatprep.subr.bf16.mxu0 0
      %1221 = vmatpush2.bf16.xpose.msra.mxu0 0
      %1222 = vmatprep.subr.bf16.mxu0 0
      %1223 = vmatpush2.bf16.xpose.msra.mxu0 0
      %1224 = vmatprep.subr.bf16.mxu0 0
      %1225 = vmatpush2.bf16.xpose.msra.mxu0 0
      %1226 = vmatprep.subr.bf16.mxu0 0
      %1227 = vmatpush2.bf16.xpose.msra.mxu0 0
      %1228 = vmatprep.subr.bf16.mxu0 0
      %1229 = vmatpush2.bf16.xpose.msra.mxu0 0
      %1230 = vmatprep.subr.bf16.mxu0 0
      %1231 = vmatpush2.bf16.xpose.msra.mxu0 0
      %1232 = vmatprep.mubr.bf16.mxu0 0
      %1233 = vmatmul.mubr.bf16.gmra.mxu0 %v1198
      %v1234 = vpop.f32.mrf.mxu0
      %v1235 = vadd.f32 0.0, %v1234
      %v1236 = vpop.f32.mrf.mxu0
      %v1237 = vpop.f32.mrf.mxu0
      %v1238 = vpop.f32.mrf.mxu0
      %1239 = vdwg.mxu0
      %v1240 = vsel %vm1007, %v1235, -1e+30
      %v1241 = vsel %vm1034, %v1240, -inf
      %1242 = vmax.xlane.f32.xlu0 %v1241
      %v1243 = vpop.xlane.xlu0 %1242
      %v1244 = vsub.f32 %v1240, %v1243
      %v1245 = vmul.f32 %v1244, 1.442695
      %v1246 = vpow.pop %v1245
      %v1247 = vsel %vm1034, %v1246, 0.0
      %1248 = vadd.xlane.f32.xlu0 %v1247
      %v1249 = vpop.xlane.xlu0 %1248
      %v1250 = vrcp.pop %v1249
      %v1251 = vmul.f32 %v1246, %v1250
      %v1252 = vpack.c.bf16 %v1251, %v1251
      %v1254 = vsel %vm1034, %v1252, 0
      %1256 = vmatprep.subr.bf16.mxu0 0
      %1257 = vmatpush1.bf16.msra.mxu0 0
      %1258 = vmatprep.subr.bf16.mxu0 0
      %1259 = vmatpush1.bf16.msra.mxu0 0
      %1260 = vmatprep.subr.bf16.mxu0 0
      %1261 = vmatpush1.bf16.msra.mxu0 0
      %1262 = vmatprep.subr.bf16.mxu0 0
      %1263 = vmatpush1.bf16.msra.mxu0 0
      %1264 = vmatprep.subr.bf16.mxu0 0
      %1265 = vmatpush1.bf16.msra.mxu0 0
      %1266 = vmatprep.subr.bf16.mxu0 0
      %1267 = vmatpush1.bf16.msra.mxu0 0
      %1268 = vmatprep.subr.bf16.mxu0 0
      %1269 = vmatpush1.bf16.msra.mxu0 0
      %1270 = vmatprep.subr.bf16.mxu0 0
      %1271 = vmatpush1.bf16.msra.mxu0 %v1040
      %1272 = vmatprep.subr.bf16.mxu0 0
      %1273 = vmatpush2.bf16.msra.mxu0 0
      %1274 = vmatprep.subr.bf16.mxu0 0
      %1275 = vmatpush2.bf16.msra.mxu0 0
      %1276 = vmatprep.subr.bf16.mxu0 0
      %1277 = vmatpush2.bf16.msra.mxu0 0
      %1278 = vmatprep.subr.bf16.mxu0 0
      %1279 = vmatpush2.bf16.msra.mxu0 0
      %1280 = vmatprep.subr.bf16.mxu0 0
      %1281 = vmatpush2.bf16.msra.mxu0 0
      %1282 = vmatprep.subr.bf16.mxu0 0
      %1283 = vmatpush2.bf16.msra.mxu0 0
      %1284 = vmatprep.subr.bf16.mxu0 0
      %1285 = vmatpush2.bf16.msra.mxu0 0
      %1286 = vmatprep.subr.bf16.mxu0 0
      %1287 = vmatpush2.bf16.msra.mxu0 0
      %1288 = vmatprep.mubr.bf16.mxu0 0
      %1289 = vmatmul.mubr.bf16.gmra.mxu0 %v1254
      %v1290 = vpop.f32.mrf.mxu0
      %v1291 = vadd.f32 0.0, %v1290
      %v1292 = vpop.f32.mrf.mxu0
      %v1293 = vpop.f32.mrf.mxu0
      %v1294 = vpop.f32.mrf.mxu0
      %1295 = vdwg.mxu0
      %1297 = vrot.lane.b32.xlu0 %v1291, 8
      %v1298 = vpop.permute.xlu0 %1297
      %vm1300 = vcmask 130112
      %1301 = vst.msk [vmem:[#allocation2] sm:$0xff] %vm1300, %v1298
      %1303 = vrot.lane.b32.xlu0 %v1014, 120
      %v1304 = vpop.permute.xlu0 %1303
      %1306 = vxpose.xlu0.c.b16.start [1/8] %v1304, 128
      %1307 = vxpose.xlu0.c.b16.cont [2/8] 0, 128
      %1308 = vxpose.xlu0.c.b16.cont [3/8] 0, 128
      %1309 = vxpose.xlu0.c.b16.cont [4/8] 0, 128
      %1310 = vxpose.xlu0.c.b16.cont [5/8] 0, 128
      %1311 = vxpose.xlu0.c.b16.cont [6/8] 0, 128
      %1312 = vxpose.xlu0.c.b16.cont [7/8] 0, 128
      %1313 = vxpose.xlu0.c.b16.end [8/8] 0, 128
      %v1314 = vpop.trf.xlu0
      %v1315 = vpop.trf.xlu0
      %v1316 = vpop.trf.xlu0
      %v1317 = vpop.trf.xlu0
      %v1318 = vpop.trf.xlu0
      %v1319 = vpop.trf.xlu0
      %v1320 = vpop.trf.xlu0
      %v1321 = vpop.trf.xlu0
      %1322 = vrot.lane.b32.xlu0 %v1008, 104
      %v1323 = vpop.permute.xlu0 %1322
      %v1325 = vsel %vm1034, %v1314, 0
      %v1328 = vsel %vm1038, %v1323, 0
      %1330 = vmatprep.subr.bf16.mxu0 0
      %1331 = vmatpush1.bf16.msra.mxu0 0
      %1332 = vmatprep.subr.bf16.mxu0 0
      %1333 = vmatpush1.bf16.msra.mxu0 0
      %1334 = vmatprep.subr.bf16.mxu0 0
      %1335 = vmatpush1.bf16.msra.mxu0 0
      %1336 = vmatprep.subr.bf16.mxu0 0
      %1337 = vmatpush1.bf16.msra.mxu0 0
      %1338 = vmatprep.subr.bf16.mxu0 0
      %1339 = vmatpush1.bf16.msra.mxu0 0
      %1340 = vmatprep.subr.bf16.mxu0 0
      %1341 = vmatpush1.bf16.msra.mxu0 0
      %1342 = vmatprep.subr.bf16.mxu0 0
      %1343 = vmatpush1.bf16.msra.mxu0 0
      %1344 = vmatprep.subr.bf16.mxu0 0
      %1345 = vmatpush1.bf16.msra.mxu0 %v1328
      %1346 = vmatprep.subr.bf16.mxu0 0
      %1347 = vmatpush2.bf16.msra.mxu0 0
      %1348 = vmatprep.subr.bf16.mxu0 0
      %1349 = vmatpush2.bf16.msra.mxu0 0
      %1350 = vmatprep.subr.bf16.mxu0 0
      %1351 = vmatpush2.bf16.msra.mxu0 0
      %1352 = vmatprep.subr.bf16.mxu0 0
      %1353 = vmatpush2.bf16.msra.mxu0 0
      %1354 = vmatprep.subr.bf16.mxu0 0
      %1355 = vmatpush2.bf16.msra.mxu0 0
      %1356 = vmatprep.subr.bf16.mxu0 0
      %1357 = vmatpush2.bf16.msra.mxu0 0
      %1358 = vmatprep.subr.bf16.mxu0 0
      %1359 = vmatpush2.bf16.msra.mxu0 0
      %1360 = vmatprep.subr.bf16.mxu0 0
      %1361 = vmatpush2.bf16.msra.mxu0 0
      %1362 = vmatprep.mubr.bf16.mxu0 0
      %1363 = vmatmul.mubr.bf16.gmra.mxu0 %v1325
      %v1364 = vpop.f32.mrf.mxu0
      %v1365 = vadd.f32 0.0, %v1364
      %v1366 = vpop.f32.mrf.mxu0
      %v1367 = vpop.f32.mrf.mxu0
      %v1368 = vpop.f32.mrf.mxu0
      %1369 = vdwg.mxu0
      %v1370 = vsel %vm1300, %v1013, 0.0
      %v1371 = vrot.slane %v1370, 4
      %v1372 = vadd.f32 %v1370, %v1371
      %v1373 = vrot.slane %v1372, 2
      %v1374 = vadd.f32 %v1372, %v1373
      %v1375 = vrot.slane %v1374, 1
      %v1376 = vadd.f32 %v1374, %v1375
      %1377 = vrot.lane.b32.xlu0 %v1090, 112
      %v1378 = vpop.permute.xlu0 %1377
      %1379 = vrot.lane.b32.xlu0 %v1008, 120
      %v1380 = vpop.permute.xlu0 %1379
      %v1382 = vsel %vm1034, %v1378, 0
      %v1385 = vsel %vm1034, %v1380, 0
      %1387 = vmatprep.subr.bf16.mxu0 0
      %1388 = vmatpush1.bf16.xpose.msra.mxu0 0
      %1389 = vmatprep.subr.bf16.mxu0 0
      %1390 = vmatpush1.bf16.xpose.msra.mxu0 0
      %1391 = vmatprep.subr.bf16.mxu0 0
      %1392 = vmatpush1.bf16.xpose.msra.mxu0 0
      %1393 = vmatprep.subr.bf16.mxu0 0
      %1394 = vmatpush1.bf16.xpose.msra.mxu0 0
      %1395 = vmatprep.subr.bf16.mxu0 0
      %1396 = vmatpush1.bf16.xpose.msra.mxu0 0
      %1397 = vmatprep.subr.bf16.mxu0 0
      %1398 = vmatpush1.bf16.xpose.msra.mxu0 0
      %1399 = vmatprep.subr.bf16.mxu0 0
      %1400 = vmatpush1.bf16.xpose.msra.mxu0 0
      %1401 = vmatprep.subr.bf16.mxu0 0
      %1402 = vmatpush1.bf16.xpose.msra.mxu0 %v1385
      %1403 = vmatprep.subr.bf16.mxu0 0
      %1404 = vmatpush2.bf16.xpose.msra.mxu0 0
      %1405 = vmatprep.subr.bf16.mxu0 0
      %1406 = vmatpush2.bf16.xpose.msra.mxu0 0
      %1407 = vmatprep.subr.bf16.mxu0 0
      %1408 = vmatpush2.bf16.xpose.msra.mxu0 0
      %1409 = vmatprep.subr.bf16.mxu0 0
      %1410 = vmatpush2.bf16.xpose.msra.mxu0 0
      %1411 = vmatprep.subr.bf16.mxu0 0
      %1412 = vmatpush2.bf16.xpose.msra.mxu0 0
      %1413 = vmatprep.subr.bf16.mxu0 0
      %1414 = vmatpush2.bf16.xpose.msra.mxu0 0
      %1415 = vmatprep.subr.bf16.mxu0 0
      %1416 = vmatpush2.bf16.xpose.msra.mxu0 0
      %1417 = vmatprep.subr.bf16.mxu0 0
      %1418 = vmatpush2.bf16.xpose.msra.mxu0 0
      %1419 = vmatprep.mubr.bf16.mxu0 0
      %1420 = vmatmul.mubr.bf16.gmra.mxu0 %v1382
      %v1421 = vpop.f32.mrf.mxu0
      %v1422 = vadd.f32 0.0, %v1421
      %v1423 = vpop.f32.mrf.mxu0
      %v1424 = vpop.f32.mrf.mxu0
      %v1425 = vpop.f32.mrf.mxu0
      %1426 = vdwg.mxu0
      %v1427 = vsel %vm1007, %v1422, -1e+30
      %v1428 = vsel %vm1034, %v1427, -inf
      %1429 = vmax.xlane.f32.xlu0 %v1428
      %v1430 = vpop.xlane.xlu0 %1429
      %v1431 = vsub.f32 %v1427, %v1430
      %v1432 = vmul.f32 %v1431, 1.442695
      %v1433 = vpow.pop %v1432
      %v1434 = vsel %vm1034, %v1433, 0.0
      %1435 = vadd.xlane.f32.xlu0 %v1434
      %v1436 = vpop.xlane.xlu0 %1435
      %v1437 = vrcp.pop %v1436
      %v1438 = vmul.f32 %v1433, %v1437
      %v1439 = vpack.c.bf16 %v1438, %v1438
      %v1441 = vsel %vm1034, %v1439, 0
      %1443 = vmatprep.subr.bf16.mxu0 0
      %1444 = vmatpush1.bf16.msra.mxu0 0
      %1445 = vmatprep.subr.bf16.mxu0 0
      %1446 = vmatpush1.bf16.msra.mxu0 0
      %1447 = vmatprep.subr.bf16.mxu0 0
      %1448 = vmatpush1.bf16.msra.mxu0 0
      %1449 = vmatprep.subr.bf16.mxu0 0
      %1450 = vmatpush1.bf16.msra.mxu0 0
      %1451 = vmatprep.subr.bf16.mxu0 0
      %1452 = vmatpush1.bf16.msra.mxu0 0
      %1453 = vmatprep.subr.bf16.mxu0 0
      %1454 = vmatpush1.bf16.msra.mxu0 0
      %1455 = vmatprep.subr.bf16.mxu0 0
      %1456 = vmatpush1.bf16.msra.mxu0 0
      %1457 = vmatprep.subr.bf16.mxu0 0
      %1458 = vmatpush1.bf16.msra.mxu0 %v1328
      %1459 = vmatprep.subr.bf16.mxu0 0
      %1460 = vmatpush2.bf16.msra.mxu0 0
      %1461 = vmatprep.subr.bf16.mxu0 0
      %1462 = vmatpush2.bf16.msra.mxu0 0
      %1463 = vmatprep.subr.bf16.mxu0 0
      %1464 = vmatpush2.bf16.msra.mxu0 0
      %1465 = vmatprep.subr.bf16.mxu0 0
      %1466 = vmatpush2.bf16.msra.mxu0 0
      %1467 = vmatprep.subr.bf16.mxu0 0
      %1468 = vmatpush2.bf16.msra.mxu0 0
      %1469 = vmatprep.subr.bf16.mxu0 0
      %1470 = vmatpush2.bf16.msra.mxu0 0
      %1471 = vmatprep.subr.bf16.mxu0 0
      %1472 = vmatpush2.bf16.msra.mxu0 0
      %1473 = vmatprep.subr.bf16.mxu0 0
      %1474 = vmatpush2.bf16.msra.mxu0 0
      %1475 = vmatprep.mubr.bf16.mxu0 0
      %1476 = vmatmul.mubr.bf16.gmra.mxu0 %v1441
      %v1477 = vpop.f32.mrf.mxu0
      %v1478 = vadd.f32 0.0, %v1477
      %v1479 = vpop.f32.mrf.mxu0
      %v1480 = vpop.f32.mrf.mxu0
      %v1481 = vpop.f32.mrf.mxu0
      %1482 = vdwg.mxu0
      %1484 = vrot.lane.b32.xlu0 %v1478, 16
      %v1485 = vpop.permute.xlu0 %1484
      %vm1487 = vcmask 195712
      %1488 = vst.msk [vmem:[#allocation2] sm:$0xff] %vm1487, %v1485
      %1489 = vrot.lane.b32.xlu0 %v1090, 104
      %v1490 = vpop.permute.xlu0 %1489
      %v1492 = vsel %vm1034, %v1490, 0
      %1494 = vmatprep.subr.bf16.mxu0 0
      %1495 = vmatpush1.bf16.xpose.msra.mxu0 0
      %1496 = vmatprep.subr.bf16.mxu0 0
      %1497 = vmatpush1.bf16.xpose.msra.mxu0 0
      %1498 = vmatprep.subr.bf16.mxu0 0
      %1499 = vmatpush1.bf16.xpose.msra.mxu0 0
      %1500 = vmatprep.subr.bf16.mxu0 0
      %1501 = vmatpush1.bf16.xpose.msra.mxu0 0
      %1502 = vmatprep.subr.bf16.mxu0 0
      %1503 = vmatpush1.bf16.xpose.msra.mxu0 0
      %1504 = vmatprep.subr.bf16.mxu0 0
      %1505 = vmatpush1.bf16.xpose.msra.mxu0 0
      %1506 = vmatprep.subr.bf16.mxu0 0
      %1507 = vmatpush1.bf16.xpose.msra.mxu0 0
      %1508 = vmatprep.subr.bf16.mxu0 0
      %1509 = vmatpush1.bf16.xpose.msra.mxu0 %v1385
      %1510 = vmatprep.subr.bf16.mxu0 0
      %1511 = vmatpush2.bf16.xpose.msra.mxu0 0
      %1512 = vmatprep.subr.bf16.mxu0 0
      %1513 = vmatpush2.bf16.xpose.msra.mxu0 0
      %1514 = vmatprep.subr.bf16.mxu0 0
      %1515 = vmatpush2.bf16.xpose.msra.mxu0 0
      %1516 = vmatprep.subr.bf16.mxu0 0
      %1517 = vmatpush2.bf16.xpose.msra.mxu0 0
      %1518 = vmatprep.subr.bf16.mxu0 0
      %1519 = vmatpush2.bf16.xpose.msra.mxu0 0
      %1520 = vmatprep.subr.bf16.mxu0 0
      %1521 = vmatpush2.bf16.xpose.msra.mxu0 0
      %1522 = vmatprep.subr.bf16.mxu0 0
      %1523 = vmatpush2.bf16.xpose.msra.mxu0 0
      %1524 = vmatprep.subr.bf16.mxu0 0
      %1525 = vmatpush2.bf16.xpose.msra.mxu0 0
      %1526 = vmatprep.mubr.bf16.mxu0 0
      %1527 = vmatmul.mubr.bf16.gmra.mxu0 %v1492
      %v1528 = vpop.f32.mrf.mxu0
      %v1529 = vadd.f32 0.0, %v1528
      %v1530 = vpop.f32.mrf.mxu0
      %v1531 = vpop.f32.mrf.mxu0
      %v1532 = vpop.f32.mrf.mxu0
      %1533 = vdwg.mxu0
      %v1534 = vsel %vm1007, %v1529, -1e+30
      %v1535 = vsel %vm1034, %v1534, -inf
      %1536 = vmax.xlane.f32.xlu0 %v1535
      %v1537 = vpop.xlane.xlu0 %1536
      %v1538 = vsub.f32 %v1534, %v1537
      %v1539 = vmul.f32 %v1538, 1.442695
      %v1540 = vpow.pop %v1539
      %v1541 = vsel %vm1034, %v1540, 0.0
      %1542 = vadd.xlane.f32.xlu0 %v1541
      %v1543 = vpop.xlane.xlu0 %1542
      %v1544 = vrcp.pop %v1543
      %v1545 = vmul.f32 %v1540, %v1544
      %v1546 = vpack.c.bf16 %v1545, %v1545
      %v1548 = vsel %vm1034, %v1546, 0
      %1550 = vmatprep.subr.bf16.mxu0 0
      %1551 = vmatpush1.bf16.msra.mxu0 0
      %1552 = vmatprep.subr.bf16.mxu0 0
      %1553 = vmatpush1.bf16.msra.mxu0 0
      %1554 = vmatprep.subr.bf16.mxu0 0
      %1555 = vmatpush1.bf16.msra.mxu0 0
      %1556 = vmatprep.subr.bf16.mxu0 0
      %1557 = vmatpush1.bf16.msra.mxu0 0
      %1558 = vmatprep.subr.bf16.mxu0 0
      %1559 = vmatpush1.bf16.msra.mxu0 0
      %1560 = vmatprep.subr.bf16.mxu0 0
      %1561 = vmatpush1.bf16.msra.mxu0 0
      %1562 = vmatprep.subr.bf16.mxu0 0
      %1563 = vmatpush1.bf16.msra.mxu0 0
      %1564 = vmatprep.subr.bf16.mxu0 0
      %1565 = vmatpush1.bf16.msra.mxu0 %v1328
      %1566 = vmatprep.subr.bf16.mxu0 0
      %1567 = vmatpush2.bf16.msra.mxu0 0
      %1568 = vmatprep.subr.bf16.mxu0 0
      %1569 = vmatpush2.bf16.msra.mxu0 0
      %1570 = vmatprep.subr.bf16.mxu0 0
      %1571 = vmatpush2.bf16.msra.mxu0 0
      %1572 = vmatprep.subr.bf16.mxu0 0
      %1573 = vmatpush2.bf16.msra.mxu0 0
      %1574 = vmatprep.subr.bf16.mxu0 0
      %1575 = vmatpush2.bf16.msra.mxu0 0
      %1576 = vmatprep.subr.bf16.mxu0 0
      %1577 = vmatpush2.bf16.msra.mxu0 0
      %1578 = vmatprep.subr.bf16.mxu0 0
      %1579 = vmatpush2.bf16.msra.mxu0 0
      %1580 = vmatprep.subr.bf16.mxu0 0
      %1581 = vmatpush2.bf16.msra.mxu0 0
      %1582 = vmatprep.mubr.bf16.mxu0 0
      %1583 = vmatmul.mubr.bf16.gmra.mxu0 %v1548
      %v1584 = vpop.f32.mrf.mxu0
      %v1585 = vadd.f32 0.0, %v1584
      %v1586 = vpop.f32.mrf.mxu0
      %v1587 = vpop.f32.mrf.mxu0
      %v1588 = vpop.f32.mrf.mxu0
      %1589 = vdwg.mxu0
      %1591 = vrot.lane.b32.xlu0 %v1585, 24
      %v1592 = vpop.permute.xlu0 %1591
      %vm1594 = vcmask 261312
      %1595 = vst.msk [vmem:[#allocation2] sm:$0xff] %vm1594, %v1592
      %1597 = vrot.lane.b32.xlu0 %v1365, 8
      %v1598 = vpop.permute.xlu0 %1597
      %v1600 = vsel %vm1034, %v1077, %v1598
      %vm1601 = vcmask 130048
      %1602 = vst.msk [vmem:[%s861] sm:$0xff] %vm1601, %v1600
      %v1603 = vsel %vm1034, %v1088, %v1376
      %vm1604 = vcmask 122880
      %1605 = vst.msk [vmem:[%s864] sm:$0x1] %vm1604, %v1603
      %v1606 = vld [vmem:[#allocation2] sm:$0xff]
      %v1608 = vlaneseq
      %v1609 = vshrl.u32 %v1608, 7
      %v1610 = vsub.s32 0, %v1609
      %v1611 = vrot.slane %v877, %v1610
      %v1613 = vmul.f32 %v1606, %v1611
      %v1614 = vpack.c.bf16 %v1613, %v1613
      %v1615 = vld [vmem:[%s8] sm:$0xf]
      %v1616 = vld [vmem:[%s8 + $0x4] sm:$0xf]
      %v1617 = vld [vmem:[%s8 + $0x8] sm:$0xf]
      %v1618 = vld [vmem:[%s8 + $0xc] sm:$0xf]
      %v1623 = vunpack.c.l.b16 %v1615
      %v1624 = vunpack.c.l.b16 %v1616
      %v1625 = vunpack.c.l.b16 %v1617
      %v1626 = vunpack.c.l.b16 %v1618
      %v1627 = vpack.c.b16 %v1624, %v1623
      %v1628 = vpack.c.b16 %v1626, %v1625
      %v1632 = vsel %vm895, %v1614, 0
      %1634 = vmatprep.subr.bf16.mxu0 0
      %1635 = vmatpush1.bf16.msra.mxu0 0
      %1636 = vmatprep.subr.bf16.mxu0 0
      %1637 = vmatpush1.bf16.msra.mxu0 0
      %1638 = vmatprep.subr.bf16.mxu0 0
      %1639 = vmatpush1.bf16.msra.mxu0 0
      %1640 = vmatprep.subr.bf16.mxu0 0
      %1641 = vmatpush1.bf16.msra.mxu0 0
      %1642 = vmatprep.subr.bf16.mxu0 0
      %1643 = vmatpush1.bf16.msra.mxu0 0
      %1644 = vmatprep.subr.bf16.mxu0 0
      %1645 = vmatpush1.bf16.msra.mxu0 0
      %1646 = vmatprep.subr.bf16.mxu0 0
      %1647 = vmatpush1.bf16.msra.mxu0 %v1628
      %1648 = vmatprep.subr.bf16.mxu0 0
      %1649 = vmatpush1.bf16.msra.mxu0 %v1627
      %1650 = vmatprep.subr.bf16.mxu0 0
      %1651 = vmatpush2.bf16.msra.mxu0 0
      %1652 = vmatprep.subr.bf16.mxu0 0
      %1653 = vmatpush2.bf16.msra.mxu0 0
      %1654 = vmatprep.subr.bf16.mxu0 0
      %1655 = vmatpush2.bf16.msra.mxu0 0
      %1656 = vmatprep.subr.bf16.mxu0 0
      %1657 = vmatpush2.bf16.msra.mxu0 0
      %1658 = vmatprep.subr.bf16.mxu0 0
      %1659 = vmatpush2.bf16.msra.mxu0 0
      %1660 = vmatprep.subr.bf16.mxu0 0
      %1661 = vmatpush2.bf16.msra.mxu0 0
      %1662 = vmatprep.subr.bf16.mxu0 0
      %1663 = vmatpush2.bf16.msra.mxu0 0
      %1664 = vmatprep.subr.bf16.mxu0 0
      %1665 = vmatpush2.bf16.msra.mxu0 0
      %1666 = vmatprep.mubr.bf16.mxu0 0
      %1667 = vmatmul.mubr.bf16.gmra.mxu0 %v1632
      %v1668 = vpop.f32.mrf.mxu0
      %v1669 = vadd.f32 0.0, %v1668
      %v1670 = vpop.f32.mrf.mxu0
      %v1671 = vpop.f32.mrf.mxu0
      %v1672 = vpop.f32.mrf.mxu0
      %1673 = vdwg.mxu0
      %v1674 = vadd.f32 %v873, %v1669
      %v1675 = vld [vmem:[%s9] sm:$0x1]
      %v1676 = vld [vmem:[%s10] sm:$0x1]
      %v1677 = vsel %vm895, %v1674, 0.0
      %1678 = vadd.xlane.f32.xlu0 %v1677
      %v1679 = vpop.xlane.xlu0 %1678
      %v1680 = vrcp.pop 32.0
      %v1681 = vmul.f32 %v1679, %v1680
      %v1682 = vsub.f32 %v1674, %v1681
      %v1683 = vmul.f32 %v1682, %v1682
      %v1684 = vsel %vm895, %v1683, 0.0
      %1685 = vadd.xlane.f32.xlu0 %v1684
      %v1686 = vpop.xlane.xlu0 %1685
      %v1687 = vmul.f32 %v1686, %v1680
      %v1688 = vadd.f32 %v1687, 1e-05
      %v1689 = vrsqrt.pop %v1688
      %v1690 = vmul.f32 %v1682, %v1689
      %v1692 = vlaneseq
      %v1693 = vshrl.u32 %v1692, 7
      %v1694 = vsub.s32 0, %v1693
      %v1695 = vrot.slane %v1675, %v1694
      %v1697 = vmul.f32 %v1690, %v1695
      %v1699 = vlaneseq
      %v1700 = vshrl.u32 %v1699, 7
      %v1701 = vsub.s32 0, %v1700
      %v1702 = vrot.slane %v1676, %v1701
      %v1704 = vadd.f32 %v1697, %v1702
      %v1705 = vld [vmem:[%s844] sm:$0x1]
      %v1706 = vld [vmem:[%s3] sm:$0x1]
      %v1707 = vpack.c.bf16 %v1704, %v1704
      %v1708 = vld [vmem:[%s11] sm:$0xf]
      %v1709 = vld [vmem:[%s11 + $0x4] sm:$0xf]
      %v1710 = vld [vmem:[%s11 + $0x8] sm:$0xf]
      %v1711 = vld [vmem:[%s11 + $0xc] sm:$0xf]
      %v1716 = vunpack.c.l.b16 %v1708
      %v1717 = vunpack.c.l.b16 %v1709
      %v1718 = vunpack.c.l.b16 %v1710
      %v1719 = vunpack.c.l.b16 %v1711
      %v1720 = vpack.c.b16 %v1717, %v1716
      %v1721 = vpack.c.b16 %v1719, %v1718
      %v1725 = vsel %vm895, %v1707, 0
      %1727 = vmatprep.subr.bf16.mxu0 0
      %1728 = vmatpush1.bf16.msra.mxu0 0
      %1729 = vmatprep.subr.bf16.mxu0 0
      %1730 = vmatpush1.bf16.msra.mxu0 0
      %1731 = vmatprep.subr.bf16.mxu0 0
      %1732 = vmatpush1.bf16.msra.mxu0 0
      %1733 = vmatprep.subr.bf16.mxu0 0
      %1734 = vmatpush1.bf16.msra.mxu0 0
      %1735 = vmatprep.subr.bf16.mxu0 0
      %1736 = vmatpush1.bf16.msra.mxu0 0
      %1737 = vmatprep.subr.bf16.mxu0 0
      %1738 = vmatpush1.bf16.msra.mxu0 0
      %1739 = vmatprep.subr.bf16.mxu0 0
      %1740 = vmatpush1.bf16.msra.mxu0 %v1721
      %1741 = vmatprep.subr.bf16.mxu0 0
      %1742 = vmatpush1.bf16.msra.mxu0 %v1720
      %1743 = vmatprep.subr.bf16.mxu0 0
      %1744 = vmatpush2.bf16.msra.mxu0 0
      %1745 = vmatprep.subr.bf16.mxu0 0
      %1746 = vmatpush2.bf16.msra.mxu0 0
      %1747 = vmatprep.subr.bf16.mxu0 0
      %1748 = vmatpush2.bf16.msra.mxu0 0
      %1749 = vmatprep.subr.bf16.mxu0 0
      %1750 = vmatpush2.bf16.msra.mxu0 0
      %1751 = vmatprep.subr.bf16.mxu0 0
      %1752 = vmatpush2.bf16.msra.mxu0 0
      %1753 = vmatprep.subr.bf16.mxu0 0
      %1754 = vmatpush2.bf16.msra.mxu0 0
      %1755 = vmatprep.subr.bf16.mxu0 0
      %1756 = vmatpush2.bf16.msra.mxu0 0
      %1757 = vmatprep.subr.bf16.mxu0 0
      %1758 = vmatpush2.bf16.msra.mxu0 0
      %1759 = vmatprep.mubr.bf16.mxu0 0
      %1760 = vmatmul.mubr.bf16.gmra.mxu0 %v1725
      %v1761 = vpop.f32.mrf.mxu0
      %v1762 = vadd.f32 0.0, %v1761
      %v1763 = vpop.f32.mrf.mxu0
      %v1764 = vpop.f32.mrf.mxu0
      %v1765 = vpop.f32.mrf.mxu0
      %1766 = vdwg.mxu0
      %v1767 = vpack.c.bf16 %v875, %v874
      %v1768 = vld [vmem:[%s12] sm:$0xf]
      %v1769 = vld [vmem:[%s12 + $0x4] sm:$0xf]
      %v1770 = vld [vmem:[%s12 + $0x8] sm:$0xf]
      %v1771 = vld [vmem:[%s12 + $0xc] sm:$0xf]
      %v1776 = vunpack.c.l.b16 %v1768
      %v1777 = vunpack.c.l.b16 %v1769
      %v1778 = vunpack.c.l.b16 %v1770
      %v1779 = vunpack.c.l.b16 %v1771
      %v1780 = vpack.c.b16 %v1777, %v1776
      %v1781 = vpack.c.b16 %v1779, %v1778
      %v1785 = vsel %vm895, %v1767, 0
      %1787 = vmatprep.subr.bf16.mxu0 0
      %1788 = vmatpush1.bf16.msra.mxu0 0
      %1789 = vmatprep.subr.bf16.mxu0 0
      %1790 = vmatpush1.bf16.msra.mxu0 0
      %1791 = vmatprep.subr.bf16.mxu0 0
      %1792 = vmatpush1.bf16.msra.mxu0 0
      %1793 = vmatprep.subr.bf16.mxu0 0
      %1794 = vmatpush1.bf16.msra.mxu0 0
      %1795 = vmatprep.subr.bf16.mxu0 0
      %1796 = vmatpush1.bf16.msra.mxu0 0
      %1797 = vmatprep.subr.bf16.mxu0 0
      %1798 = vmatpush1.bf16.msra.mxu0 0
      %1799 = vmatprep.subr.bf16.mxu0 0
      %1800 = vmatpush1.bf16.msra.mxu0 %v1781
      %1801 = vmatprep.subr.bf16.mxu0 0
      %1802 = vmatpush1.bf16.msra.mxu0 %v1780
      %1803 = vmatprep.subr.bf16.mxu0 0
      %1804 = vmatpush2.bf16.msra.mxu0 0
      %1805 = vmatprep.subr.bf16.mxu0 0
      %1806 = vmatpush2.bf16.msra.mxu0 0
      %1807 = vmatprep.subr.bf16.mxu0 0
      %1808 = vmatpush2.bf16.msra.mxu0 0
      %1809 = vmatprep.subr.bf16.mxu0 0
      %1810 = vmatpush2.bf16.msra.mxu0 0
      %1811 = vmatprep.subr.bf16.mxu0 0
      %1812 = vmatpush2.bf16.msra.mxu0 0
      %1813 = vmatprep.subr.bf16.mxu0 0
      %1814 = vmatpush2.bf16.msra.mxu0 0
      %1815 = vmatprep.subr.bf16.mxu0 0
      %1816 = vmatpush2.bf16.msra.mxu0 0
      %1817 = vmatprep.subr.bf16.mxu0 0
      %1818 = vmatpush2.bf16.msra.mxu0 0
      %1819 = vmatprep.mubr.bf16.mxu0 0
      %1820 = vmatmul.mubr.bf16.gmra.mxu0 %v1785
      %v1821 = vpop.f32.mrf.mxu0
      %v1822 = vadd.f32 0.0, %v1821
      %v1823 = vpop.f32.mrf.mxu0
      %v1824 = vpop.f32.mrf.mxu0
      %v1825 = vadd.f32 0.0, %v1824
      %v1826 = vpop.f32.mrf.mxu0
      %1827 = vdwg.mxu0
      %vm1828 = vcmp.gt.f32.partialorder %v1705, 0.0
      %v1829 = vsel %vm1828, 1, 0
      %v1830 = vlaneseq
      %v1831 = vshrl.u32 %v1830, 7
      %v1832 = vsub.s32 0, %v1831
      %v1833 = vrot.slane %v1829, %v1832
      %vm1834 = vcmp.eq.s32.totalorder %v1833, 1
      %v1835 = vpack.c.bf16 %v1825, %v1822
      %vm1836 = vcmp.gt.f32.partialorder %v1822, 0.0
      %vm1837 = vcmp.gt.f32.partialorder %v1825, 0.0
      %v1838 = vadd.f32 %v1822, 1.0
      %v1839 = vadd.f32 %v1825, 1.0
      %v1840 = vmul.f32 %v1822, 1.442695
      %v1841 = vpow.pop %v1840
      %v1842 = vmul.f32 %v1825, 1.442695
      %v1843 = vpow.pop %v1842
      %v1844 = vsel %vm1836, %v1838, %v1841
      %v1845 = vsel %vm1837, %v1839, %v1843
      %v1846 = vpack.c.bf16 %v1845, %v1844
      %1847 = vxpose.xlu0.c.b16.start [1/8] %v1846, 128
      %1848 = vxpose.xlu0.c.b16.cont [2/8] 0, 128
      %1849 = vxpose.xlu0.c.b16.cont [3/8] 0, 128
      %1850 = vxpose.xlu0.c.b16.cont [4/8] 0, 128
      %1851 = vxpose.xlu0.c.b16.cont [5/8] 0, 128
      %1852 = vxpose.xlu0.c.b16.cont [6/8] 0, 128
      %1853 = vxpose.xlu0.c.b16.cont [7/8] 0, 128
      %1854 = vxpose.xlu0.c.b16.end [8/8] 0, 128
      %v1855 = vpop.trf.xlu0
      %v1856 = vpop.trf.xlu0
      %v1857 = vpop.trf.xlu0
      %v1858 = vpop.trf.xlu0
      %v1859 = vpop.trf.xlu0
      %v1860 = vpop.trf.xlu0
      %v1861 = vpop.trf.xlu0
      %v1862 = vpop.trf.xlu0
      %1864 = vrot.lane.b32.xlu0 %v1835, 112
      %v1865 = vpop.permute.xlu0 %1864
      %v1868 = vsel %vm1601, %v1855, 0
      %1870 = vmatprep.subr.bf16.mxu0 0
      %1871 = vmatpush1.bf16.msra.mxu0 0
      %1872 = vmatprep.subr.bf16.mxu0 0
      %1873 = vmatpush1.bf16.msra.mxu0 0
      %1874 = vmatprep.subr.bf16.mxu0 0
      %1875 = vmatpush1.bf16.msra.mxu0 0
      %1876 = vmatprep.subr.bf16.mxu0 0
      %1877 = vmatpush1.bf16.msra.mxu0 0
      %1878 = vmatprep.subr.bf16.mxu0 0
      %1879 = vmatpush1.bf16.msra.mxu0 0
      %1880 = vmatprep.subr.bf16.mxu0 0
      %1881 = vmatpush1.bf16.msra.mxu0 0
      %1882 = vmatprep.subr.bf16.mxu0 0
      %1883 = vmatpush1.bf16.msra.mxu0 0
      %1884 = vmatprep.subr.bf16.mxu0 0
      %1885 = vmatpush1.bf16.msra.mxu0 %v1865
      %1886 = vmatprep.subr.bf16.mxu0 0
      %1887 = vmatpush2.bf16.msra.mxu0 0
      %1888 = vmatprep.subr.bf16.mxu0 0
      %1889 = vmatpush2.bf16.msra.mxu0 0
      %1890 = vmatprep.subr.bf16.mxu0 0
      %1891 = vmatpush2.bf16.msra.mxu0 0
      %1892 = vmatprep.subr.bf16.mxu0 0
      %1893 = vmatpush2.bf16.msra.mxu0 0
      %1894 = vmatprep.subr.bf16.mxu0 0
      %1895 = vmatpush2.bf16.msra.mxu0 0
      %1896 = vmatprep.subr.bf16.mxu0 0
      %1897 = vmatpush2.bf16.msra.mxu0 0
      %1898 = vmatprep.subr.bf16.mxu0 0
      %1899 = vmatpush2.bf16.msra.mxu0 0
      %1900 = vmatprep.subr.bf16.mxu0 0
      %1901 = vmatpush2.bf16.msra.mxu0 0
      %1902 = vmatprep.mubr.bf16.mxu0 0
      %1903 = vmatmul.mubr.bf16.gmra.mxu0 %v1868
      %v1904 = vpop.f32.mrf.mxu0
      %v1905 = vadd.f32 0.0, %v1904
      %v1906 = vpop.f32.mrf.mxu0
      %v1907 = vpop.f32.mrf.mxu0
      %v1908 = vpop.f32.mrf.mxu0
      %1909 = vdwg.mxu0
      %v1910 = vsel %vm1034, %v1844, 0.0
      %v1911 = vsel %vm1034, %v1845, 0.0
      %v1912 = vadd.f32 %v1910, %v1911
      %v1913 = vrot.slane %v1912, 4
      %v1914 = vadd.f32 %v1912, %v1913
      %v1915 = vrot.slane %v1914, 2
      %v1916 = vadd.f32 %v1914, %v1915
      %v1917 = vrot.slane %v1916, 1
      %v1918 = vadd.f32 %v1916, %v1917
      %v1919 = vmul.f32 %v1762, 0.35355338
      %v1920 = vpack.c.bf16 %v1919, %v1919
      %v1922 = vsel %vm1034, %v1920, 0
      %v1925 = vsel %vm1034, %v1835, 0
      %1927 = vmatprep.subr.bf16.mxu0 0
      %1928 = vmatpush1.bf16.xpose.msra.mxu0 0
      %1929 = vmatprep.subr.bf16.mxu0 0
      %1930 = vmatpush1.bf16.xpose.msra.mxu0 0
      %1931 = vmatprep.subr.bf16.mxu0 0
      %1932 = vmatpush1.bf16.xpose.msra.mxu0 0
      %1933 = vmatprep.subr.bf16.mxu0 0
      %1934 = vmatpush1.bf16.xpose.msra.mxu0 0
      %1935 = vmatprep.subr.bf16.mxu0 0
      %1936 = vmatpush1.bf16.xpose.msra.mxu0 0
      %1937 = vmatprep.subr.bf16.mxu0 0
      %1938 = vmatpush1.bf16.xpose.msra.mxu0 0
      %1939 = vmatprep.subr.bf16.mxu0 0
      %1940 = vmatpush1.bf16.xpose.msra.mxu0 0
      %1941 = vmatprep.subr.bf16.mxu0 0
      %1942 = vmatpush1.bf16.xpose.msra.mxu0 %v1925
      %1943 = vmatprep.subr.bf16.mxu0 0
      %1944 = vmatpush2.bf16.xpose.msra.mxu0 0
      %1945 = vmatprep.subr.bf16.mxu0 0
      %1946 = vmatpush2.bf16.xpose.msra.mxu0 0
      %1947 = vmatprep.subr.bf16.mxu0 0
      %1948 = vmatpush2.bf16.xpose.msra.mxu0 0
      %1949 = vmatprep.subr.bf16.mxu0 0
      %1950 = vmatpush2.bf16.xpose.msra.mxu0 0
      %1951 = vmatprep.subr.bf16.mxu0 0
      %1952 = vmatpush2.bf16.xpose.msra.mxu0 0
      %1953 = vmatprep.subr.bf16.mxu0 0
      %1954 = vmatpush2.bf16.xpose.msra.mxu0 0
      %1955 = vmatprep.subr.bf16.mxu0 0
      %1956 = vmatpush2.bf16.xpose.msra.mxu0 0
      %1957 = vmatprep.subr.bf16.mxu0 0
      %1958 = vmatpush2.bf16.xpose.msra.mxu0 0
      %1959 = vmatprep.mubr.bf16.mxu0 0
      %1960 = vmatmul.mubr.bf16.gmra.mxu0 %v1922
      %v1961 = vpop.f32.mrf.mxu0
      %v1962 = vadd.f32 0.0, %v1961
      %v1963 = vpop.f32.mrf.mxu0
      %v1964 = vpop.f32.mrf.mxu0
      %v1965 = vpop.f32.mrf.mxu0
      %1966 = vdwg.mxu0
      %v1967 = vsel %vm1834, %v1962, -1e+30
      %v1968 = vsel %vm1601, %v1967, -inf
      %1969 = vmax.xlane.f32.xlu0 %v1968
      %v1970 = vpop.xlane.xlu0 %1969
      %v1971 = vsub.f32 %v1967, %v1970
      %v1972 = vmul.f32 %v1971, 1.442695
      %v1973 = vpow.pop %v1972
      %v1974 = vsel %vm1601, %v1973, 0.0
      %1975 = vadd.xlane.f32.xlu0 %v1974
      %v1976 = vpop.xlane.xlu0 %1975
      %v1977 = vrcp.pop %v1976
      %v1978 = vmul.f32 %v1973, %v1977
      %v1979 = vpack.c.bf16 %v1978, %v1978
      %v1981 = vsel %vm1601, %v1979, 0
      %1983 = vmatprep.subr.bf16.mxu0 0
      %1984 = vmatpush1.bf16.msra.mxu0 0
      %1985 = vmatprep.subr.bf16.mxu0 0
      %1986 = vmatpush1.bf16.msra.mxu0 0
      %1987 = vmatprep.subr.bf16.mxu0 0
      %1988 = vmatpush1.bf16.msra.mxu0 0
      %1989 = vmatprep.subr.bf16.mxu0 0
      %1990 = vmatpush1.bf16.msra.mxu0 0
      %1991 = vmatprep.subr.bf16.mxu0 0
      %1992 = vmatpush1.bf16.msra.mxu0 0
      %1993 = vmatprep.subr.bf16.mxu0 0
      %1994 = vmatpush1.bf16.msra.mxu0 0
      %1995 = vmatprep.subr.bf16.mxu0 0
      %1996 = vmatpush1.bf16.msra.mxu0 0
      %1997 = vmatprep.subr.bf16.mxu0 0
      %1998 = vmatpush1.bf16.msra.mxu0 %v1865
      %1999 = vmatprep.subr.bf16.mxu0 0
      %2000 = vmatpush2.bf16.msra.mxu0 0
      %2001 = vmatprep.subr.bf16.mxu0 0
      %2002 = vmatpush2.bf16.msra.mxu0 0
      %2003 = vmatprep.subr.bf16.mxu0 0
      %2004 = vmatpush2.bf16.msra.mxu0 0
      %2005 = vmatprep.subr.bf16.mxu0 0
      %2006 = vmatpush2.bf16.msra.mxu0 0
      %2007 = vmatprep.subr.bf16.mxu0 0
      %2008 = vmatpush2.bf16.msra.mxu0 0
      %2009 = vmatprep.subr.bf16.mxu0 0
      %2010 = vmatpush2.bf16.msra.mxu0 0
      %2011 = vmatprep.subr.bf16.mxu0 0
      %2012 = vmatpush2.bf16.msra.mxu0 0
      %2013 = vmatprep.subr.bf16.mxu0 0
      %2014 = vmatpush2.bf16.msra.mxu0 0
      %2015 = vmatprep.mubr.bf16.mxu0 0
      %2016 = vmatmul.mubr.bf16.gmra.mxu0 %v1981
      %v2017 = vpop.f32.mrf.mxu0
      %v2018 = vadd.f32 0.0, %v2017
      %v2019 = vpop.f32.mrf.mxu0
      %v2020 = vpop.f32.mrf.mxu0
      %v2021 = vpop.f32.mrf.mxu0
      %2022 = vdwg.mxu0
      %2023 = vst.msk [vmem:[#allocation2] sm:$0xff] %vm1034, %v2018
      %2025 = vrot.lane.b32.xlu0 %v1920, 120
      %v2026 = vpop.permute.xlu0 %2025
      %v2028 = vsel %vm1034, %v2026, 0
      %2030 = vmatprep.subr.bf16.mxu0 0
      %2031 = vmatpush1.bf16.xpose.msra.mxu0 0
      %2032 = vmatprep.subr.bf16.mxu0 0
      %2033 = vmatpush1.bf16.xpose.msra.mxu0 0
      %2034 = vmatprep.subr.bf16.mxu0 0
      %2035 = vmatpush1.bf16.xpose.msra.mxu0 0
      %2036 = vmatprep.subr.bf16.mxu0 0
      %2037 = vmatpush1.bf16.xpose.msra.mxu0 0
      %2038 = vmatprep.subr.bf16.mxu0 0
      %2039 = vmatpush1.bf16.xpose.msra.mxu0 0
      %2040 = vmatprep.subr.bf16.mxu0 0
      %2041 = vmatpush1.bf16.xpose.msra.mxu0 0
      %2042 = vmatprep.subr.bf16.mxu0 0
      %2043 = vmatpush1.bf16.xpose.msra.mxu0 0
      %2044 = vmatprep.subr.bf16.mxu0 0
      %2045 = vmatpush1.bf16.xpose.msra.mxu0 %v1925
      %2046 = vmatprep.subr.bf16.mxu0 0
      %2047 = vmatpush2.bf16.xpose.msra.mxu0 0
      %2048 = vmatprep.subr.bf16.mxu0 0
      %2049 = vmatpush2.bf16.xpose.msra.mxu0 0
      %2050 = vmatprep.subr.bf16.mxu0 0
      %2051 = vmatpush2.bf16.xpose.msra.mxu0 0
      %2052 = vmatprep.subr.bf16.mxu0 0
      %2053 = vmatpush2.bf16.xpose.msra.mxu0 0
      %2054 = vmatprep.subr.bf16.mxu0 0
      %2055 = vmatpush2.bf16.xpose.msra.mxu0 0
      %2056 = vmatprep.subr.bf16.mxu0 0
      %2057 = vmatpush2.bf16.xpose.msra.mxu0 0
      %2058 = vmatprep.subr.bf16.mxu0 0
      %2059 = vmatpush2.bf16.xpose.msra.mxu0 0
      %2060 = vmatprep.subr.bf16.mxu0 0
      %2061 = vmatpush2.bf16.xpose.msra.mxu0 0
      %2062 = vmatprep.mubr.bf16.mxu0 0
      %2063 = vmatmul.mubr.bf16.gmra.mxu0 %v2028
      %v2064 = vpop.f32.mrf.mxu0
      %v2065 = vadd.f32 0.0, %v2064
      %v2066 = vpop.f32.mrf.mxu0
      %v2067 = vpop.f32.mrf.mxu0
      %v2068 = vpop.f32.mrf.mxu0
      %2069 = vdwg.mxu0
      %v2070 = vsel %vm1834, %v2065, -1e+30
      %v2071 = vsel %vm1601, %v2070, -inf
      %2072 = vmax.xlane.f32.xlu0 %v2071
      %v2073 = vpop.xlane.xlu0 %2072
      %v2074 = vsub.f32 %v2070, %v2073
      %v2075 = vmul.f32 %v2074, 1.442695
      %v2076 = vpow.pop %v2075
      %v2077 = vsel %vm1601, %v2076, 0.0
      %2078 = vadd.xlane.f32.xlu0 %v2077
      %v2079 = vpop.xlane.xlu0 %2078
      %v2080 = vrcp.pop %v2079
      %v2081 = vmul.f32 %v2076, %v2080
      %v2082 = vpack.c.bf16 %v2081, %v2081
      %v2084 = vsel %vm1601, %v2082, 0
      %2086 = vmatprep.subr.bf16.mxu0 0
      %2087 = vmatpush1.bf16.msra.mxu0 0
      %2088 = vmatprep.subr.bf16.mxu0 0
      %2089 = vmatpush1.bf16.msra.mxu0 0
      %2090 = vmatprep.subr.bf16.mxu0 0
      %2091 = vmatpush1.bf16.msra.mxu0 0
      %2092 = vmatprep.subr.bf16.mxu0 0
      %2093 = vmatpush1.bf16.msra.mxu0 0
      %2094 = vmatprep.subr.bf16.mxu0 0
      %2095 = vmatpush1.bf16.msra.mxu0 0
      %2096 = vmatprep.subr.bf16.mxu0 0
      %2097 = vmatpush1.bf16.msra.mxu0 0
      %2098 = vmatprep.subr.bf16.mxu0 0
      %2099 = vmatpush1.bf16.msra.mxu0 0
      %2100 = vmatprep.subr.bf16.mxu0 0
      %2101 = vmatpush1.bf16.msra.mxu0 %v1865
      %2102 = vmatprep.subr.bf16.mxu0 0
      %2103 = vmatpush2.bf16.msra.mxu0 0
      %2104 = vmatprep.subr.bf16.mxu0 0
      %2105 = vmatpush2.bf16.msra.mxu0 0
      %2106 = vmatprep.subr.bf16.mxu0 0
      %2107 = vmatpush2.bf16.msra.mxu0 0
      %2108 = vmatprep.subr.bf16.mxu0 0
      %2109 = vmatpush2.bf16.msra.mxu0 0
      %2110 = vmatprep.subr.bf16.mxu0 0
      %2111 = vmatpush2.bf16.msra.mxu0 0
      %2112 = vmatprep.subr.bf16.mxu0 0
      %2113 = vmatpush2.bf16.msra.mxu0 0
      %2114 = vmatprep.subr.bf16.mxu0 0
      %2115 = vmatpush2.bf16.msra.mxu0 0
      %2116 = vmatprep.subr.bf16.mxu0 0
      %2117 = vmatpush2.bf16.msra.mxu0 0
      %2118 = vmatprep.mubr.bf16.mxu0 0
      %2119 = vmatmul.mubr.bf16.gmra.mxu0 %v2084
      %v2120 = vpop.f32.mrf.mxu0
      %v2121 = vadd.f32 0.0, %v2120
      %v2122 = vpop.f32.mrf.mxu0
      %v2123 = vpop.f32.mrf.mxu0
      %v2124 = vpop.f32.mrf.mxu0
      %2125 = vdwg.mxu0
      %2127 = vrot.lane.b32.xlu0 %v2121, 8
      %v2128 = vpop.permute.xlu0 %2127
      %2130 = vst.msk [vmem:[#allocation2] sm:$0xff] %vm1300, %v2128
      %2132 = vrot.lane.b32.xlu0 %v1846, 120
      %v2133 = vpop.permute.xlu0 %2132
      %2135 = vxpose.xlu0.c.b16.start [1/8] %v2133, 128
      %2136 = vxpose.xlu0.c.b16.cont [2/8] 0, 128
      %2137 = vxpose.xlu0.c.b16.cont [3/8] 0, 128
      %2138 = vxpose.xlu0.c.b16.cont [4/8] 0, 128
      %2139 = vxpose.xlu0.c.b16.cont [5/8] 0, 128
      %2140 = vxpose.xlu0.c.b16.cont [6/8] 0, 128
      %2141 = vxpose.xlu0.c.b16.cont [7/8] 0, 128
      %2142 = vxpose.xlu0.c.b16.end [8/8] 0, 128
      %v2143 = vpop.trf.xlu0
      %v2144 = vpop.trf.xlu0
      %v2145 = vpop.trf.xlu0
      %v2146 = vpop.trf.xlu0
      %v2147 = vpop.trf.xlu0
      %v2148 = vpop.trf.xlu0
      %v2149 = vpop.trf.xlu0
      %v2150 = vpop.trf.xlu0
      %2151 = vrot.lane.b32.xlu0 %v1835, 104
      %v2152 = vpop.permute.xlu0 %2151
      %v2155 = vsel %vm1601, %v2143, 0
      %2157 = vmatprep.subr.bf16.mxu0 0
      %2158 = vmatpush1.bf16.msra.mxu0 0
      %2159 = vmatprep.subr.bf16.mxu0 0
      %2160 = vmatpush1.bf16.msra.mxu0 0
      %2161 = vmatprep.subr.bf16.mxu0 0
      %2162 = vmatpush1.bf16.msra.mxu0 0
      %2163 = vmatprep.subr.bf16.mxu0 0
      %2164 = vmatpush1.bf16.msra.mxu0 0
      %2165 = vmatprep.subr.bf16.mxu0 0
      %2166 = vmatpush1.bf16.msra.mxu0 0
      %2167 = vmatprep.subr.bf16.mxu0 0
      %2168 = vmatpush1.bf16.msra.mxu0 0
      %2169 = vmatprep.subr.bf16.mxu0 0
      %2170 = vmatpush1.bf16.msra.mxu0 0
      %2171 = vmatprep.subr.bf16.mxu0 0
      %2172 = vmatpush1.bf16.msra.mxu0 %v2152
      %2173 = vmatprep.subr.bf16.mxu0 0
      %2174 = vmatpush2.bf16.msra.mxu0 0
      %2175 = vmatprep.subr.bf16.mxu0 0
      %2176 = vmatpush2.bf16.msra.mxu0 0
      %2177 = vmatprep.subr.bf16.mxu0 0
      %2178 = vmatpush2.bf16.msra.mxu0 0
      %2179 = vmatprep.subr.bf16.mxu0 0
      %2180 = vmatpush2.bf16.msra.mxu0 0
      %2181 = vmatprep.subr.bf16.mxu0 0
      %2182 = vmatpush2.bf16.msra.mxu0 0
      %2183 = vmatprep.subr.bf16.mxu0 0
      %2184 = vmatpush2.bf16.msra.mxu0 0
      %2185 = vmatprep.subr.bf16.mxu0 0
      %2186 = vmatpush2.bf16.msra.mxu0 0
      %2187 = vmatprep.subr.bf16.mxu0 0
      %2188 = vmatpush2.bf16.msra.mxu0 0
      %2189 = vmatprep.mubr.bf16.mxu0 0
      %2190 = vmatmul.mubr.bf16.gmra.mxu0 %v2155
      %v2191 = vpop.f32.mrf.mxu0
      %v2192 = vadd.f32 0.0, %v2191
      %v2193 = vpop.f32.mrf.mxu0
      %v2194 = vpop.f32.mrf.mxu0
      %v2195 = vpop.f32.mrf.mxu0
      %2196 = vdwg.mxu0
      %v2197 = vsel %vm1300, %v1844, 0.0
      %v2198 = vsel %vm1300, %v1845, 0.0
      %v2199 = vadd.f32 %v2197, %v2198
      %v2200 = vrot.slane %v2199, 4
      %v2201 = vadd.f32 %v2199, %v2200
      %v2202 = vrot.slane %v2201, 2
      %v2203 = vadd.f32 %v2201, %v2202
      %v2204 = vrot.slane %v2203, 1
      %v2205 = vadd.f32 %v2203, %v2204
      %2206 = vrot.lane.b32.xlu0 %v1920, 112
      %v2207 = vpop.permute.xlu0 %2206
      %2208 = vrot.lane.b32.xlu0 %v1835, 120
      %v2209 = vpop.permute.xlu0 %2208
      %v2211 = vsel %vm1034, %v2207, 0
      %v2214 = vsel %vm1034, %v2209, 0
      %2216 = vmatprep.subr.bf16.mxu0 0
      %2217 = vmatpush1.bf16.xpose.msra.mxu0 0
      %2218 = vmatprep.subr.bf16.mxu0 0
      %2219 = vmatpush1.bf16.xpose.msra.mxu0 0
      %2220 = vmatprep.subr.bf16.mxu0 0
      %2221 = vmatpush1.bf16.xpose.msra.mxu0 0
      %2222 = vmatprep.subr.bf16.mxu0 0
      %2223 = vmatpush1.bf16.xpose.msra.mxu0 0
      %2224 = vmatprep.subr.bf16.mxu0 0
      %2225 = vmatpush1.bf16.xpose.msra.mxu0 0
      %2226 = vmatprep.subr.bf16.mxu0 0
      %2227 = vmatpush1.bf16.xpose.msra.mxu0 0
      %2228 = vmatprep.subr.bf16.mxu0 0
      %2229 = vmatpush1.bf16.xpose.msra.mxu0 0
      %2230 = vmatprep.subr.bf16.mxu0 0
      %2231 = vmatpush1.bf16.xpose.msra.mxu0 %v2214
      %2232 = vmatprep.subr.bf16.mxu0 0
      %2233 = vmatpush2.bf16.xpose.msra.mxu0 0
      %2234 = vmatprep.subr.bf16.mxu0 0
      %2235 = vmatpush2.bf16.xpose.msra.mxu0 0
      %2236 = vmatprep.subr.bf16.mxu0 0
      %2237 = vmatpush2.bf16.xpose.msra.mxu0 0
      %2238 = vmatprep.subr.bf16.mxu0 0
      %2239 = vmatpush2.bf16.xpose.msra.mxu0 0
      %2240 = vmatprep.subr.bf16.mxu0 0
      %2241 = vmatpush2.bf16.xpose.msra.mxu0 0
      %2242 = vmatprep.subr.bf16.mxu0 0
      %2243 = vmatpush2.bf16.xpose.msra.mxu0 0
      %2244 = vmatprep.subr.bf16.mxu0 0
      %2245 = vmatpush2.bf16.xpose.msra.mxu0 0
      %2246 = vmatprep.subr.bf16.mxu0 0
      %2247 = vmatpush2.bf16.xpose.msra.mxu0 0
      %2248 = vmatprep.mubr.bf16.mxu0 0
      %2249 = vmatmul.mubr.bf16.gmra.mxu0 %v2211
      %v2250 = vpop.f32.mrf.mxu0
      %v2251 = vadd.f32 0.0, %v2250
      %v2252 = vpop.f32.mrf.mxu0
      %v2253 = vpop.f32.mrf.mxu0
      %v2254 = vpop.f32.mrf.mxu0
      %2255 = vdwg.mxu0
      %v2256 = vsel %vm1834, %v2251, -1e+30
      %v2257 = vsel %vm1601, %v2256, -inf
      %2258 = vmax.xlane.f32.xlu0 %v2257
      %v2259 = vpop.xlane.xlu0 %2258
      %v2260 = vsub.f32 %v2256, %v2259
      %v2261 = vmul.f32 %v2260, 1.442695
      %v2262 = vpow.pop %v2261
      %v2263 = vsel %vm1601, %v2262, 0.0
      %2264 = vadd.xlane.f32.xlu0 %v2263
      %v2265 = vpop.xlane.xlu0 %2264
      %v2266 = vrcp.pop %v2265
      %v2267 = vmul.f32 %v2262, %v2266
      %v2268 = vpack.c.bf16 %v2267, %v2267
      %v2270 = vsel %vm1601, %v2268, 0
      %2272 = vmatprep.subr.bf16.mxu0 0
      %2273 = vmatpush1.bf16.msra.mxu0 0
      %2274 = vmatprep.subr.bf16.mxu0 0
      %2275 = vmatpush1.bf16.msra.mxu0 0
      %2276 = vmatprep.subr.bf16.mxu0 0
      %2277 = vmatpush1.bf16.msra.mxu0 0
      %2278 = vmatprep.subr.bf16.mxu0 0
      %2279 = vmatpush1.bf16.msra.mxu0 0
      %2280 = vmatprep.subr.bf16.mxu0 0
      %2281 = vmatpush1.bf16.msra.mxu0 0
      %2282 = vmatprep.subr.bf16.mxu0 0
      %2283 = vmatpush1.bf16.msra.mxu0 0
      %2284 = vmatprep.subr.bf16.mxu0 0
      %2285 = vmatpush1.bf16.msra.mxu0 0
      %2286 = vmatprep.subr.bf16.mxu0 0
      %2287 = vmatpush1.bf16.msra.mxu0 %v2152
      %2288 = vmatprep.subr.bf16.mxu0 0
      %2289 = vmatpush2.bf16.msra.mxu0 0
      %2290 = vmatprep.subr.bf16.mxu0 0
      %2291 = vmatpush2.bf16.msra.mxu0 0
      %2292 = vmatprep.subr.bf16.mxu0 0
      %2293 = vmatpush2.bf16.msra.mxu0 0
      %2294 = vmatprep.subr.bf16.mxu0 0
      %2295 = vmatpush2.bf16.msra.mxu0 0
      %2296 = vmatprep.subr.bf16.mxu0 0
      %2297 = vmatpush2.bf16.msra.mxu0 0
      %2298 = vmatprep.subr.bf16.mxu0 0
      %2299 = vmatpush2.bf16.msra.mxu0 0
      %2300 = vmatprep.subr.bf16.mxu0 0
      %2301 = vmatpush2.bf16.msra.mxu0 0
      %2302 = vmatprep.subr.bf16.mxu0 0
      %2303 = vmatpush2.bf16.msra.mxu0 0
      %2304 = vmatprep.mubr.bf16.mxu0 0
      %2305 = vmatmul.mubr.bf16.gmra.mxu0 %v2270
      %v2306 = vpop.f32.mrf.mxu0
      %v2307 = vadd.f32 0.0, %v2306
      %v2308 = vpop.f32.mrf.mxu0
      %v2309 = vpop.f32.mrf.mxu0
      %v2310 = vpop.f32.mrf.mxu0
      %2311 = vdwg.mxu0
      %2313 = vrot.lane.b32.xlu0 %v2307, 16
      %v2314 = vpop.permute.xlu0 %2313
      %2316 = vst.msk [vmem:[#allocation2] sm:$0xff] %vm1487, %v2314
      %2317 = vrot.lane.b32.xlu0 %v1920, 104
      %v2318 = vpop.permute.xlu0 %2317
      %v2320 = vsel %vm1034, %v2318, 0
      %2322 = vmatprep.subr.bf16.mxu0 0
      %2323 = vmatpush1.bf16.xpose.msra.mxu0 0
      %2324 = vmatprep.subr.bf16.mxu0 0
      %2325 = vmatpush1.bf16.xpose.msra.mxu0 0
      %2326 = vmatprep.subr.bf16.mxu0 0
      %2327 = vmatpush1.bf16.xpose.msra.mxu0 0
      %2328 = vmatprep.subr.bf16.mxu0 0
      %2329 = vmatpush1.bf16.xpose.msra.mxu0 0
      %2330 = vmatprep.subr.bf16.mxu0 0
      %2331 = vmatpush1.bf16.xpose.msra.mxu0 0
      %2332 = vmatprep.subr.bf16.mxu0 0
      %2333 = vmatpush1.bf16.xpose.msra.mxu0 0
      %2334 = vmatprep.subr.bf16.mxu0 0
      %2335 = vmatpush1.bf16.xpose.msra.mxu0 0
      %2336 = vmatprep.subr.bf16.mxu0 0
      %2337 = vmatpush1.bf16.xpose.msra.mxu0 %v2214
      %2338 = vmatprep.subr.bf16.mxu0 0
      %2339 = vmatpush2.bf16.xpose.msra.mxu0 0
      %2340 = vmatprep.subr.bf16.mxu0 0
      %2341 = vmatpush2.bf16.xpose.msra.mxu0 0
      %2342 = vmatprep.subr.bf16.mxu0 0
      %2343 = vmatpush2.bf16.xpose.msra.mxu0 0
      %2344 = vmatprep.subr.bf16.mxu0 0
      %2345 = vmatpush2.bf16.xpose.msra.mxu0 0
      %2346 = vmatprep.subr.bf16.mxu0 0
      %2347 = vmatpush2.bf16.xpose.msra.mxu0 0
      %2348 = vmatprep.subr.bf16.mxu0 0
      %2349 = vmatpush2.bf16.xpose.msra.mxu0 0
      %2350 = vmatprep.subr.bf16.mxu0 0
      %2351 = vmatpush2.bf16.xpose.msra.mxu0 0
      %2352 = vmatprep.subr.bf16.mxu0 0
      %2353 = vmatpush2.bf16.xpose.msra.mxu0 0
      %2354 = vmatprep.mubr.bf16.mxu0 0
      %2355 = vmatmul.mubr.bf16.gmra.mxu0 %v2320
      %v2356 = vpop.f32.mrf.mxu0
      %v2357 = vadd.f32 0.0, %v2356
      %v2358 = vpop.f32.mrf.mxu0
      %v2359 = vpop.f32.mrf.mxu0
      %v2360 = vpop.f32.mrf.mxu0
      %2361 = vdwg.mxu0
      %v2362 = vsel %vm1834, %v2357, -1e+30
      %v2363 = vsel %vm1601, %v2362, -inf
      %2364 = vmax.xlane.f32.xlu0 %v2363
      %v2365 = vpop.xlane.xlu0 %2364
      %v2366 = vsub.f32 %v2362, %v2365
      %v2367 = vmul.f32 %v2366, 1.442695
      %v2368 = vpow.pop %v2367
      %v2369 = vsel %vm1601, %v2368, 0.0
      %2370 = vadd.xlane.f32.xlu0 %v2369
      %v2371 = vpop.xlane.xlu0 %2370
      %v2372 = vrcp.pop %v2371
      %v2373 = vmul.f32 %v2368, %v2372
      %v2374 = vpack.c.bf16 %v2373, %v2373
      %v2376 = vsel %vm1601, %v2374, 0
      %2378 = vmatprep.subr.bf16.mxu0 0
      %2379 = vmatpush1.bf16.msra.mxu0 0
      %2380 = vmatprep.subr.bf16.mxu0 0
      %2381 = vmatpush1.bf16.msra.mxu0 0
      %2382 = vmatprep.subr.bf16.mxu0 0
      %2383 = vmatpush1.bf16.msra.mxu0 0
      %2384 = vmatprep.subr.bf16.mxu0 0
      %2385 = vmatpush1.bf16.msra.mxu0 0
      %2386 = vmatprep.subr.bf16.mxu0 0
      %2387 = vmatpush1.bf16.msra.mxu0 0
      %2388 = vmatprep.subr.bf16.mxu0 0
      %2389 = vmatpush1.bf16.msra.mxu0 0
      %2390 = vmatprep.subr.bf16.mxu0 0
      %2391 = vmatpush1.bf16.msra.mxu0 0
      %2392 = vmatprep.subr.bf16.mxu0 0
      %2393 = vmatpush1.bf16.msra.mxu0 %v2152
      %2394 = vmatprep.subr.bf16.mxu0 0
      %2395 = vmatpush2.bf16.msra.mxu0 0
      %2396 = vmatprep.subr.bf16.mxu0 0
      %2397 = vmatpush2.bf16.msra.mxu0 0
      %2398 = vmatprep.subr.bf16.mxu0 0
      %2399 = vmatpush2.bf16.msra.mxu0 0
      %2400 = vmatprep.subr.bf16.mxu0 0
      %2401 = vmatpush2.bf16.msra.mxu0 0
      %2402 = vmatprep.subr.bf16.mxu0 0
      %2403 = vmatpush2.bf16.msra.mxu0 0
      %2404 = vmatprep.subr.bf16.mxu0 0
      %2405 = vmatpush2.bf16.msra.mxu0 0
      %2406 = vmatprep.subr.bf16.mxu0 0
      %2407 = vmatpush2.bf16.msra.mxu0 0
      %2408 = vmatprep.subr.bf16.mxu0 0
      %2409 = vmatpush2.bf16.msra.mxu0 0
      %2410 = vmatprep.mubr.bf16.mxu0 0
      %2411 = vmatmul.mubr.bf16.gmra.mxu0 %v2376
      %v2412 = vpop.f32.mrf.mxu0
      %v2413 = vadd.f32 0.0, %v2412
      %v2414 = vpop.f32.mrf.mxu0
      %v2415 = vpop.f32.mrf.mxu0
      %v2416 = vpop.f32.mrf.mxu0
      %2417 = vdwg.mxu0
      %2419 = vrot.lane.b32.xlu0 %v2413, 24
      %v2420 = vpop.permute.xlu0 %2419
      %2422 = vst.msk [vmem:[#allocation2] sm:$0xff] %vm1594, %v2420
      %2424 = vrot.lane.b32.xlu0 %v2192, 8
      %v2425 = vpop.permute.xlu0 %2424
      %v2427 = vsel %vm1034, %v1905, %v2425
      %2428 = vst.msk [vmem:[%s868] sm:$0xff] %vm1601, %v2427
      %v2429 = vsel %vm1034, %v1918, %v2205
      %2430 = vst.msk [vmem:[%s871] sm:$0x1] %vm1604, %v2429
      %v2431 = vld [vmem:[#allocation2] sm:$0xff]
      %v2433 = vlaneseq
      %v2434 = vshrl.u32 %v2433, 7
      %v2435 = vsub.s32 0, %v2434
      %v2436 = vrot.slane %v1706, %v2435
      %v2438 = vmul.f32 %v2431, %v2436
      %v2439 = vpack.c.bf16 %v2438, %v2438
      %v2440 = vld [vmem:[%s13] sm:$0xf]
      %v2441 = vld [vmem:[%s13 + $0x4] sm:$0xf]
      %v2442 = vld [vmem:[%s13 + $0x8] sm:$0xf]
      %v2443 = vld [vmem:[%s13 + $0xc] sm:$0xf]
      %v2448 = vunpack.c.l.b16 %v2440
      %v2449 = vunpack.c.l.b16 %v2441
      %v2450 = vunpack.c.l.b16 %v2442
      %v2451 = vunpack.c.l.b16 %v2443
      %v2452 = vpack.c.b16 %v2449, %v2448
      %v2453 = vpack.c.b16 %v2451, %v2450
      %v2457 = vsel %vm895, %v2439, 0
      %2459 = vmatprep.subr.bf16.mxu0 0
      %2460 = vmatpush1.bf16.msra.mxu0 0
      %2461 = vmatprep.subr.bf16.mxu0 0
      %2462 = vmatpush1.bf16.msra.mxu0 0
      %2463 = vmatprep.subr.bf16.mxu0 0
      %2464 = vmatpush1.bf16.msra.mxu0 0
      %2465 = vmatprep.subr.bf16.mxu0 0
      %2466 = vmatpush1.bf16.msra.mxu0 0
      %2467 = vmatprep.subr.bf16.mxu0 0
      %2468 = vmatpush1.bf16.msra.mxu0 0
      %2469 = vmatprep.subr.bf16.mxu0 0
      %2470 = vmatpush1.bf16.msra.mxu0 0
      %2471 = vmatprep.subr.bf16.mxu0 0
      %2472 = vmatpush1.bf16.msra.mxu0 %v2453
      %2473 = vmatprep.subr.bf16.mxu0 0
      %2474 = vmatpush1.bf16.msra.mxu0 %v2452
      %2475 = vmatprep.subr.bf16.mxu0 0
      %2476 = vmatpush2.bf16.msra.mxu0 0
      %2477 = vmatprep.subr.bf16.mxu0 0
      %2478 = vmatpush2.bf16.msra.mxu0 0
      %2479 = vmatprep.subr.bf16.mxu0 0
      %2480 = vmatpush2.bf16.msra.mxu0 0
      %2481 = vmatprep.subr.bf16.mxu0 0
      %2482 = vmatpush2.bf16.msra.mxu0 0
      %2483 = vmatprep.subr.bf16.mxu0 0
      %2484 = vmatpush2.bf16.msra.mxu0 0
      %2485 = vmatprep.subr.bf16.mxu0 0
      %2486 = vmatpush2.bf16.msra.mxu0 0
      %2487 = vmatprep.subr.bf16.mxu0 0
      %2488 = vmatpush2.bf16.msra.mxu0 0
      %2489 = vmatprep.subr.bf16.mxu0 0
      %2490 = vmatpush2.bf16.msra.mxu0 0
      %2491 = vmatprep.mubr.bf16.mxu0 0
      %2492 = vmatmul.mubr.bf16.gmra.mxu0 %v2457
      %v2493 = vpop.f32.mrf.mxu0
      %v2494 = vadd.f32 0.0, %v2493
      %v2495 = vpop.f32.mrf.mxu0
      %v2496 = vpop.f32.mrf.mxu0
      %v2497 = vpop.f32.mrf.mxu0
      %2498 = vdwg.mxu0
      %v2499 = vadd.f32 %v1704, %v2494
      %v2500 = vld [vmem:[%s14] sm:$0x1]
      %v2501 = vld [vmem:[%s15] sm:$0x1]
      %v2502 = vsel %vm895, %v2499, 0.0
      %2503 = vadd.xlane.f32.xlu0 %v2502
      %v2504 = vpop.xlane.xlu0 %2503
      %v2505 = vmul.f32 %v2504, %v1680
      %v2506 = vsub.f32 %v2499, %v2505
      %v2507 = vmul.f32 %v2506, %v2506
      %v2508 = vsel %vm895, %v2507, 0.0
      %2509 = vadd.xlane.f32.xlu0 %v2508
      %v2510 = vpop.xlane.xlu0 %2509
      %v2511 = vmul.f32 %v2510, %v1680
      %v2512 = vadd.f32 %v2511, 1e-05
      %v2513 = vrsqrt.pop %v2512
      %v2514 = vmul.f32 %v2506, %v2513
      %v2516 = vlaneseq
      %v2517 = vshrl.u32 %v2516, 7
      %v2518 = vsub.s32 0, %v2517
      %v2519 = vrot.slane %v2500, %v2518
      %v2521 = vmul.f32 %v2514, %v2519
      %v2523 = vlaneseq
      %v2524 = vshrl.u32 %v2523, 7
      %v2525 = vsub.s32 0, %v2524
      %v2526 = vrot.slane %v2501, %v2525
      %v2528 = vadd.f32 %v2521, %v2526
      %v2529 = vpack.c.bf16 %v2528, %v2528
      %v2530 = vld [vmem:[%s16] sm:$0xf]
      %v2531 = vld [vmem:[%s16 + $0x4] sm:$0xf]
      %v2532 = vld [vmem:[%s16 + $0x8] sm:$0xf]
      %v2533 = vld [vmem:[%s16 + $0xc] sm:$0xf]
      %v2534 = vld [vmem:[%s17] sm:$0x1]
      %v2536 = vlaneseq
      %v2537 = vshrl.u32 %v2536, 7
      %v2538 = vsub.s32 0, %v2537
      %v2539 = vrot.slane %v2534, %v2538
      %v2545 = vunpack.c.l.b16 %v2530
      %v2546 = vunpack.c.l.b16 %v2531
      %v2547 = vunpack.c.l.b16 %v2532
      %v2548 = vunpack.c.l.b16 %v2533
      %v2549 = vpack.c.b16 %v2546, %v2545
      %v2550 = vpack.c.b16 %v2548, %v2547
      %v2554 = vsel %vm895, %v2529, 0
      %2556 = vmatprep.subr.bf16.mxu0 0
      %2557 = vmatpush1.bf16.msra.mxu0 0
      %2558 = vmatprep.subr.bf16.mxu0 0
      %2559 = vmatpush1.bf16.msra.mxu0 0
      %2560 = vmatprep.subr.bf16.mxu0 0
      %2561 = vmatpush1.bf16.msra.mxu0 0
      %2562 = vmatprep.subr.bf16.mxu0 0
      %2563 = vmatpush1.bf16.msra.mxu0 0
      %2564 = vmatprep.subr.bf16.mxu0 0
      %2565 = vmatpush1.bf16.msra.mxu0 0
      %2566 = vmatprep.subr.bf16.mxu0 0
      %2567 = vmatpush1.bf16.msra.mxu0 0
      %2568 = vmatprep.subr.bf16.mxu0 0
      %2569 = vmatpush1.bf16.msra.mxu0 %v2550
      %2570 = vmatprep.subr.bf16.mxu0 0
      %2571 = vmatpush1.bf16.msra.mxu0 %v2549
      %2572 = vmatprep.subr.bf16.mxu0 0
      %2573 = vmatpush2.bf16.msra.mxu0 0
      %2574 = vmatprep.subr.bf16.mxu0 0
      %2575 = vmatpush2.bf16.msra.mxu0 0
      %2576 = vmatprep.subr.bf16.mxu0 0
      %2577 = vmatpush2.bf16.msra.mxu0 0
      %2578 = vmatprep.subr.bf16.mxu0 0
      %2579 = vmatpush2.bf16.msra.mxu0 0
      %2580 = vmatprep.subr.bf16.mxu0 0
      %2581 = vmatpush2.bf16.msra.mxu0 0
      %2582 = vmatprep.subr.bf16.mxu0 0
      %2583 = vmatpush2.bf16.msra.mxu0 0
      %2584 = vmatprep.subr.bf16.mxu0 0
      %2585 = vmatpush2.bf16.msra.mxu0 0
      %2586 = vmatprep.subr.bf16.mxu0 0
      %2587 = vmatpush2.bf16.msra.mxu0 0
      %2588 = vmatprep.mubr.bf16.mxu0 0
      %2589 = vmatmul.mubr.bf16.gmra.mxu0 %v2554
      %v2590 = vpop.f32.mrf.mxu0
      %v2591 = vadd.f32 %v2539, %v2590
      %v2592 = vpop.f32.mrf.mxu0
      %v2593 = vpop.f32.mrf.mxu0
      %v2594 = vpop.f32.mrf.mxu0
      %2595 = vdwg.mxu0
      %v2596 = vmax.f32 %v2591, 0.0
      %v2597 = vpack.c.bf16 %v2596, %v2596
      %v2598 = vld [vmem:[%s18] sm:$0xf]
      %v2599 = vld [vmem:[%s18 + $0x4] sm:$0xf]
      %v2600 = vld [vmem:[%s18 + $0x8] sm:$0xf]
      %v2601 = vld [vmem:[%s18 + $0xc] sm:$0xf]
      %v2602 = vld [vmem:[%s18 + $0x10] sm:$0xf]
      %v2603 = vld [vmem:[%s18 + $0x14] sm:$0xf]
      %v2604 = vld [vmem:[%s18 + $0x18] sm:$0xf]
      %v2605 = vld [vmem:[%s18 + $0x1c] sm:$0xf]
      %v2606 = vld [vmem:[%s19] sm:$0x1]
      %v2608 = vlaneseq
      %v2609 = vshrl.u32 %v2608, 7
      %v2610 = vsub.s32 0, %v2609
      %v2611 = vrot.slane %v2606, %v2610
      %v2621 = vunpack.c.l.b16 %v2598
      %v2622 = vunpack.c.l.b16 %v2599
      %v2623 = vunpack.c.l.b16 %v2600
      %v2624 = vunpack.c.l.b16 %v2601
      %v2625 = vunpack.c.l.b16 %v2602
      %v2626 = vunpack.c.l.b16 %v2603
      %v2627 = vunpack.c.l.b16 %v2604
      %v2628 = vunpack.c.l.b16 %v2605
      %v2629 = vpack.c.b16 %v2622, %v2621
      %v2630 = vpack.c.b16 %v2624, %v2623
      %v2631 = vpack.c.b16 %v2626, %v2625
      %v2632 = vpack.c.b16 %v2628, %v2627
      %vm2637 = vcmask 523264
      %v2639 = vsel %vm2637, %v2597, 0
      %2641 = vmatprep.subr.bf16.mxu0 0
      %2642 = vmatpush1.bf16.msra.mxu0 0
      %2643 = vmatprep.subr.bf16.mxu0 0
      %2644 = vmatpush1.bf16.msra.mxu0 0
      %2645 = vmatprep.subr.bf16.mxu0 0
      %2646 = vmatpush1.bf16.msra.mxu0 0
      %2647 = vmatprep.subr.bf16.mxu0 0
      %2648 = vmatpush1.bf16.msra.mxu0 0
      %2649 = vmatprep.subr.bf16.mxu0 0
      %2650 = vmatpush1.bf16.msra.mxu0 %v2632
      %2651 = vmatprep.subr.bf16.mxu0 0
      %2652 = vmatpush1.bf16.msra.mxu0 %v2631
      %2653 = vmatprep.subr.bf16.mxu0 0
      %2654 = vmatpush1.bf16.msra.mxu0 %v2630
      %2655 = vmatprep.subr.bf16.mxu0 0
      %2656 = vmatpush1.bf16.msra.mxu0 %v2629
      %2657 = vmatprep.subr.bf16.mxu0 0
      %2658 = vmatpush2.bf16.msra.mxu0 0
      %2659 = vmatprep.subr.bf16.mxu0 0
      %2660 = vmatpush2.bf16.msra.mxu0 0
      %2661 = vmatprep.subr.bf16.mxu0 0
      %2662 = vmatpush2.bf16.msra.mxu0 0
      %2663 = vmatprep.subr.bf16.mxu0 0
      %2664 = vmatpush2.bf16.msra.mxu0 0
      %2665 = vmatprep.subr.bf16.mxu0 0
      %2666 = vmatpush2.bf16.msra.mxu0 0
      %2667 = vmatprep.subr.bf16.mxu0 0
      %2668 = vmatpush2.bf16.msra.mxu0 0
      %2669 = vmatprep.subr.bf16.mxu0 0
      %2670 = vmatpush2.bf16.msra.mxu0 0
      %2671 = vmatprep.subr.bf16.mxu0 0
      %2672 = vmatpush2.bf16.msra.mxu0 0
      %2673 = vmatprep.mubr.bf16.mxu0 0
      %2674 = vmatmul.mubr.bf16.gmra.mxu0 %v2639
      %v2675 = vpop.f32.mrf.mxu0
      %v2676 = vadd.f32 %v2611, %v2675
      %v2677 = vpop.f32.mrf.mxu0
      %v2678 = vpop.f32.mrf.mxu0
      %v2679 = vpop.f32.mrf.mxu0
      %2680 = vdwg.mxu0
      %v2681 = vadd.f32 %v2528, %v2676
      %v2682 = vld [vmem:[%s20] sm:$0x1]
      %v2683 = vld [vmem:[%s21] sm:$0x1]
      %v2684 = vsel %vm895, %v2681, 0.0
      %2685 = vadd.xlane.f32.xlu0 %v2684
      %v2686 = vpop.xlane.xlu0 %2685
      %v2687 = vmul.f32 %v2686, %v1680
      %v2688 = vsub.f32 %v2681, %v2687
      %v2689 = vmul.f32 %v2688, %v2688
      %v2690 = vsel %vm895, %v2689, 0.0
      %2691 = vadd.xlane.f32.xlu0 %v2690
      %v2692 = vpop.xlane.xlu0 %2691
      %v2693 = vmul.f32 %v2692, %v1680
      %v2694 = vadd.f32 %v2693, 1e-05
      %v2695 = vrsqrt.pop %v2694
      %v2696 = vmul.f32 %v2688, %v2695
      %v2698 = vlaneseq
      %v2699 = vshrl.u32 %v2698, 7
      %v2700 = vsub.s32 0, %v2699
      %v2701 = vrot.slane %v2682, %v2700
      %v2703 = vmul.f32 %v2696, %v2701
      %v2705 = vlaneseq
      %v2706 = vshrl.u32 %v2705, 7
      %v2707 = vsub.s32 0, %v2706
      %v2708 = vrot.slane %v2683, %v2707
      %v2710 = vadd.f32 %v2703, %v2708
      %2711 = vst.msk [vmem:[%s857] sm:$0xff] %vm895, %v2710
      %p2712 = scmp.lt.s32.totalorder %s38, 1
      %s2713 = scalar_select %p2712, %s38, 1
      %s2714 = smul.addr %s2713, 8
      %s2715 = scalar_lea.vmem %s22, %s2714
      %p2716 = scmp.lt.s32.totalorder %s38, 1
      %s2717 = scalar_select %p2716, %s38, 1
      %s2718 = smul.addr %s2717, 8
      %s2719 = scalar_lea.vmem %s23, %s2718
      %p2720 = scmp.lt.s32.totalorder %s38, 1
      %s2721 = scalar_select %p2720, %s38, 1
      %s2722 = scalar_lea.vmem %s24, %s2721
      %p2723 = scmp.lt.s32.totalorder %s38, 1
      %s2724 = scalar_select %p2723, %s38, 1
      %s2725 = smul.addr %s2724, 8
      %s2726 = scalar_lea.vmem %s25, %s2725
      %p2727 = scmp.lt.s32.totalorder %s38, 1
      %s2728 = scalar_select %p2727, %s38, 1
      %s2729 = scalar_lea.vmem %s26, %s2728
      // Predicated region
      $region109: #{transformer_forward.6} parent=107 // pred_check
        %p2730 = pneg %p538
      $region110: #{transformer_forward.6} parent=107 // pred_check_branch
        %2732 = sbr.rel (%p2730) target = $region112
      $region111: #{transformer_forward.6} parent=107 // pred_region
        _
      $region112: #{transformer_forward.6} parent=107 // pred_fallthru
        _
      // Predicated region
      $region113: #{transformer_forward.6} parent=107 // pred_check
        %p2733 = pneg %p564
      $region114: #{transformer_forward.6} parent=107 // pred_check_branch
        %2735 = sbr.rel (%p2733) target = $region116
      $region115: #{transformer_forward.6} parent=107 // pred_region
        _
      $region116: #{transformer_forward.6} parent=107 // pred_fallthru
        _
      // Predicated region
      $region117: #{transformer_forward.6} parent=107 // pred_check
        %p2736 = pneg %p590
      $region118: #{transformer_forward.6} parent=107 // pred_check_branch
        %2738 = sbr.rel (%p2736) target = $region120
      $region119: #{transformer_forward.6} parent=107 // pred_region
        _
      $region120: #{transformer_forward.6} parent=107 // pred_fallthru
        _
      // Predicated region
      $region121: #{transformer_forward.6} parent=107 // pred_check
        %p2739 = pneg %p616
      $region122: #{transformer_forward.6} parent=107 // pred_check_branch
        %2741 = sbr.rel (%p2739) target = $region124
      $region123: #{transformer_forward.6} parent=107 // pred_region
        _
      $region124: #{transformer_forward.6} parent=107 // pred_fallthru
        _
      // Predicated region
      $region125: #{transformer_forward.6} parent=107 // pred_check
        %p2742 = pneg %p642
      $region126: #{transformer_forward.6} parent=107 // pred_check_branch
        %2744 = sbr.rel (%p2742) target = $region128
      $region127: #{transformer_forward.6} parent=107 // pred_region
        _
      $region128: #{transformer_forward.6} parent=107 // pred_fallthru
        _
    $region108: #{transformer_forward.6} parent=5 // pred_fallthru
      _
    %p2745 = scmp.le.s32.totalorder 2, %s33
    // Predicated region
    $region129: #{transformer_forward.6} parent=5 // pred_check
      %p2746 = pneg %p2745
    $region130: #{transformer_forward.6} parent=5 // pred_check_branch
      %2748 = sbr.rel (%p2746) target = $region132
    $region131: #{transformer_forward.6} parent=5 // pred_region
      %s2749 = ssub.s32 %s33, 2
      // Predicated region
      $region133: #{transformer_forward.6} parent=131 // pred_check
        %p2750 = pneg %p544
      $region134: #{transformer_forward.6} parent=131 // pred_check_branch
        %2752 = sbr.rel (%p2750) target = $region136
      $region135: #{transformer_forward.6} parent=131 // pred_region
        %p2753 = scmp.lt.s32.totalorder %s39, 1
        %s2754 = scalar_select %p2753, %s39, 1
        %s2755 = smul.addr %s2754, 8
        %s2756 = scalar_lea.vmem %s22, %s2755
      $region136: #{transformer_forward.6} parent=131 // pred_fallthru
        _
      // Predicated region
      $region137: #{transformer_forward.6} parent=131 // pred_check
        %p2757 = pneg %p570
      $region138: #{transformer_forward.6} parent=131 // pred_check_branch
        %2759 = sbr.rel (%p2757) target = $region140
      $region139: #{transformer_forward.6} parent=131 // pred_region
        %p2760 = scmp.lt.s32.totalorder %s39, 1
        %s2761 = scalar_select %p2760, %s39, 1
        %s2762 = smul.addr %s2761, 8
        %s2763 = scalar_lea.vmem %s23, %s2762
      $region140: #{transformer_forward.6} parent=131 // pred_fallthru
        _
      // Predicated region
      $region141: #{transformer_forward.6} parent=131 // pred_check
        %p2764 = pneg %p596
      $region142: #{transformer_forward.6} parent=131 // pred_check_branch
        %2766 = sbr.rel (%p2764) target = $region144
      $region143: #{transformer_forward.6} parent=131 // pred_region
        %p2767 = scmp.lt.s32.totalorder %s39, 1
        %s2768 = scalar_select %p2767, %s39, 1
        %s2769 = scalar_lea.vmem %s24, %s2768
      $region144: #{transformer_forward.6} parent=131 // pred_fallthru
        _
      // Predicated region
      $region145: #{transformer_forward.6} parent=131 // pred_check
        %p2770 = pneg %p622
      $region146: #{transformer_forward.6} parent=131 // pred_check_branch
        %2772 = sbr.rel (%p2770) target = $region148
      $region147: #{transformer_forward.6} parent=131 // pred_region
        %p2773 = scmp.lt.s32.totalorder %s39, 1
        %s2774 = scalar_select %p2773, %s39, 1
        %s2775 = smul.addr %s2774, 8
        %s2776 = scalar_lea.vmem %s25, %s2775
      $region148: #{transformer_forward.6} parent=131 // pred_fallthru
        _
      // Predicated region
      $region149: #{transformer_forward.6} parent=131 // pred_check
        %p2777 = pneg %p648
      $region150: #{transformer_forward.6} parent=131 // pred_check_branch
        %2779 = sbr.rel (%p2777) target = $region152
      $region151: #{transformer_forward.6} parent=131 // pred_region
        %p2780 = scmp.lt.s32.totalorder %s39, 1
        %s2781 = scalar_select %p2780, %s39, 1
        %s2782 = scalar_lea.vmem %s26, %s2781
      $region152: #{transformer_forward.6} parent=131 // pred_fallthru
        _
    $region132: #{transformer_forward.6} parent=5 // pred_fallthru
      _
  $region6: #{transformer_forward.6} parent=0 // loop_footer
    %s37 = sadd.s32 1, %s33
  $region7: #{transformer_forward.6} parent=0 // loop_footer_branch
    %32 = sbr.rel target = $region3
  $region8: #{transformer_forward.6} parent=0 // loop_exit
    _

</llo_original>
